<compile_context>
chip_gen: v6e
topology: v6e:2x2x1
jax: 0.10.0
libtpu: 0.0.40
codegen_flags: <defaults>
</compile_context>

<pallas_src>
import numpy as np

import jax
import jax.numpy as jnp
from jax.experimental import pallas as pl
from jax.experimental.pallas import tpu as pltpu


# Column layout used throughout the fused conv pipeline:
#   col = tap2 * 512 + phase2 * 128 + s2
#     tap2   = i2*3 + j2    conv2 kernel tap              (9 blocks of 512 lanes)
#     phase2 = dh2*2 + dw2  2x2-pool phase of conv2       (4 blocks of 128 lanes)
#     s2     = hq*6 + wq    final 6x6 spatial position    (36 used of 128 lanes)
_COLS = 9 * 512


def _patch_gather_indices():
    """Constant gather indices: 32x32 image -> replicated conv1 patches.

    P1[q, tap1, col] = x[4*hq + 2*dh2 + 2*i2 + dh1 + i1,
                         4*wq + 2*dw2 + 2*j2 + dw1 + j1]
    where q = dh1*2 + dw1 is conv1's 2x2-pool phase and tap1 = i1*3 + j1.
    """
    rows = np.zeros((4, 9, _COLS), np.int32)
    cols = np.zeros((4, 9, _COLS), np.int32)
    mask = np.zeros((_COLS,), np.float32)
    for dh1 in range(2):
        for dw1 in range(2):
            q = dh1 * 2 + dw1
            for i1 in range(3):
                for j1 in range(3):
                    t1 = i1 * 3 + j1
                    for i2 in range(3):
                        for j2 in range(3):
                            t2 = i2 * 3 + j2
                            for dh2 in range(2):
                                for dw2 in range(2):
                                    ph = dh2 * 2 + dw2
                                    for hq in range(6):
                                        for wq in range(6):
                                            col = t2 * 512 + ph * 128 + hq * 6 + wq
                                            rows[q, t1, col] = (4 * hq + 2 * dh2
                                                                + 2 * i2 + dh1 + i1)
                                            cols[q, t1, col] = (4 * wq + 2 * dw2
                                                                + 2 * j2 + dw1 + j1)
                                            mask[col] = 1.0
    return rows, cols, mask


_ROW_IDX, _COL_IDX, _LANE_MASK = _patch_gather_indices()


# ------------------------------ Pallas kernel -------------------------------

def _lenet_fused_kernel(p1_ref, w1_ref, b1_ref, w2_ref, b2_ref,
                        a1_ref, fb1_ref, w3_ref, fb2_ref, w4_ref, fb3_ref,
                        out_ref):
    f32 = jnp.float32

    # conv1 (1->6, 3x3) + bias + ReLU, with its 2x2 max-pool fused as an
    # elementwise max over the four pool phases q (pure VPU, no reductions).
    w1 = w1_ref[...]                                             # (6, 9)
    b1 = b1_ref[...]                                             # (6, 1)
    pooled1 = None
    for q in range(4):
        y = jnp.dot(w1, p1_ref[0, q], preferred_element_type=f32)  # (6, 4608)
        y = jnp.maximum(y + b1, 0.0)
        pooled1 = y if pooled1 is None else jnp.maximum(pooled1, y)

    # conv2 (6->16, 3x3) as a sum over its 9 taps; each tap's inputs sit in a
    # lane-aligned 512-wide block of pooled1.
    acc = jnp.zeros((16, 512), f32)
    for t2 in range(9):
        acc += jnp.dot(w2_ref[t2], pooled1[:, t2 * 512:(t2 + 1) * 512],
                       preferred_element_type=f32)
    r2 = jnp.maximum(acc + b2_ref[...], 0.0)                     # (16, 512)

    # 2x2 max-pool of conv2: elementwise max of four lane-aligned 128 blocks.
    p2 = jnp.maximum(jnp.maximum(r2[:, 0:128], r2[:, 128:256]),
                     jnp.maximum(r2[:, 256:384], r2[:, 384:512]))  # (16, 128)

    # fc1 (16*6*6 -> 120): flatten-free -- the NCHW flatten order and the
    # 36->128 lane padding were folded into a1 at init time (padded rows = 0).
    h = jnp.zeros((1, 120), f32)
    for c in range(16):
        h += jnp.dot(p2[c:c + 1, :], a1_ref[c], preferred_element_type=f32)
    h = jnp.maximum(h + fb1_ref[...], 0.0)                       # (1, 120)

    # fc2 (120 -> 84) + ReLU
    h = jnp.maximum(
        jnp.dot(h, w3_ref[...], preferred_element_type=f32) + fb2_ref[...],
        0.0)                                                     # (1, 84)

    # fc3 (84 -> 10), zero-padded to 128 lanes -> lane-dense HBM store.
    out_ref[0] = (jnp.dot(h, w4_ref[...], preferred_element_type=f32)
                  + fb3_ref[...])                                # (1, 128)


# ------------------------- parameter prep (hoisted) --------------------------

def prepare_params(params):
    """All weight re-layouts done once, outside the forward path."""
    (w1, b1, w2, b2, fw1, fb1, fw2, fb2, fw3, fb3) = params
    f32 = jnp.float32
    w1t = w1.reshape(6, 9).astype(f32)                           # (c1, tap1)
    b1c = b1.reshape(6, 1).astype(f32)
    w2t = jnp.transpose(w2, (2, 3, 0, 1)).reshape(9, 16, 6).astype(f32)  # (tap2,c2,c1)
    b2c = b2.reshape(16, 1).astype(f32)
    # fc1: fold the NCHW flatten (k = c2*36 + hq*6 + wq) and the 36->128 lane
    # padding into the weight:  a1[c2, s2, f] = fw1[f, c2*36 + s2].
    a1 = jnp.transpose(fw1.reshape(120, 16, 36), (1, 2, 0))
    a1 = jnp.pad(a1, ((0, 0), (0, 128 - 36), (0, 0))).astype(f32)  # (16,128,120)
    fb1r = fb1.reshape(1, 120).astype(f32)
    w3 = fw2.T.astype(f32)                                       # (120, 84)
    fb2r = fb2.reshape(1, 84).astype(f32)
    w4 = jnp.pad(fw3.T, ((0, 0), (0, 128 - 10))).astype(f32)     # (84, 128)
    fb3r = jnp.pad(fb3.reshape(1, 10), ((0, 0), (0, 128 - 10))).astype(f32)
    return (w1t, b1c, w2t, b2c, a1, fb1r, w3, fb2r, w4, fb3r)


# --------------------------------- forward ----------------------------------

def net_forward(x_nchw, prepped):
    """Fused LeNet forward: one pallas_call over a batch-parallel grid."""
    (w1t, b1c, w2t, b2c, a1, fb1r, w3, fb2r, w4, fb3r) = prepped
    n = x_nchw.shape[0]
    img = x_nchw[:, 0].astype(jnp.float32)                       # (N, 32, 32)

    # Single constant-index gather: raw image -> conv1 patches replicated in
    # the exact column order the fused kernel consumes (input-side glue only).
    p1 = img[:, _ROW_IDX, _COL_IDX] * _LANE_MASK                 # (N, 4, 9, 4608)

    flops = n * (4 * 2 * 6 * 9 * _COLS + 9 * 2 * 16 * 6 * 512
                 + 16 * 2 * 128 * 120 + 2 * 120 * 84 + 2 * 84 * 128)
    bytes_accessed = 4 * (p1.size + w1t.size + b1c.size + w2t.size + b2c.size
                          + a1.size + fb1r.size + w3.size + fb2r.size
                          + w4.size + fb3r.size + n * 128)

    out = pl.pallas_call(
        _lenet_fused_kernel,
        out_shape=jax.ShapeDtypeStruct((n, 1, 128), jnp.float32),
        grid=(n,),
        in_specs=[
            pl.BlockSpec((1, 4, 9, _COLS), lambda i: (i, 0, 0, 0)),
            pl.BlockSpec((6, 9), lambda i: (0, 0)),
            pl.BlockSpec((6, 1), lambda i: (0, 0)),
            pl.BlockSpec((9, 16, 6), lambda i: (0, 0, 0)),
            pl.BlockSpec((16, 1), lambda i: (0, 0)),
            pl.BlockSpec((16, 128, 120), lambda i: (0, 0, 0)),
            pl.BlockSpec((1, 120), lambda i: (0, 0)),
            pl.BlockSpec((120, 84), lambda i: (0, 0)),
            pl.BlockSpec((1, 84), lambda i: (0, 0)),
            pl.BlockSpec((84, 128), lambda i: (0, 0)),
            pl.BlockSpec((1, 128), lambda i: (0, 0)),
        ],
        out_specs=pl.BlockSpec((1, 1, 128), lambda i: (i, 0, 0)),
        compiler_params=pltpu.CompilerParams(
            dimension_semantics=("parallel",),
            vmem_limit_bytes=32 * 1024 * 1024),
        cost_estimate=pl.CostEstimate(
            flops=flops, transcendentals=0, bytes_accessed=bytes_accessed),
    )(p1, w1t, b1c, w2t, b2c, a1, fb1r, w3, fb2r, w4, fb3r)

    return out[:, 0, :10]


# ------------------------------ init & reference ----------------------------

def init_params(key):
    """Deterministic init mirroring PyTorch's default U(-1/sqrt(fan_in), ...)."""
    def uniform(k, shape, fan_in):
        bound = 1.0 / (fan_in ** 0.5)
        return jax.random.uniform(k, shape, jnp.float32, -bound, bound)

    ks = jax.random.split(key, 10)
    w1 = uniform(ks[0], (6, 1, 3, 3), 9)
    b1 = uniform(ks[1], (6,), 9)
    w2 = uniform(ks[2], (16, 6, 3, 3), 54)
    b2 = uniform(ks[3], (16,), 54)
    fw1 = uniform(ks[4], (120, 576), 576)
    fb1 = uniform(ks[5], (120,), 576)
    fw2 = uniform(ks[6], (84, 120), 120)
    fb2 = uniform(ks[7], (84,), 120)
    fw3 = uniform(ks[8], (10, 84), 84)
    fb3 = uniform(ks[9], (10,), 84)
    return (w1, b1, w2, b2, fw1, fb1, fw2, fb2, fw3, fb3)


def _reference_forward(x, params):
    """Trusted NumPy (float64) re-implementation of the PyTorch module."""
    (w1, b1, w2, b2, fw1, fb1, fw2, fb2, fw3, fb3) = [
        np.asarray(p, np.float64) for p in params]
    x = np.asarray(x, np.float64)

    def conv_valid(inp, w, b):
        n, _, hh, ww = inp.shape
        cout, _, kh, kw = w.shape
        ho, wo = hh - kh + 1, ww - kw + 1
        out = np.zeros((n, cout, ho, wo))
        for i in range(kh):
            for j in range(kw):
                out += np.einsum('nchw,oc->nohw',
                                 inp[:, :, i:i + ho, j:j + wo], w[:, :, i, j])
        return out + b.reshape(1, cout, 1, 1)

    def pool2x2(inp):
        n, c, hh, ww = inp.shape
        hp, wp = hh // 2, ww // 2
        v = inp[:, :, :hp * 2, :wp * 2].reshape(n, c, hp, 2, wp, 2)
        return v.max(axis=(3, 5))

    y = pool2x2(np.maximum(conv_valid(x, w1, b1), 0.0))
    y = pool2x2(np.maximum(conv_valid(y, w2, b2), 0.0))
    y = y.reshape(y.shape[0], -1)
    y = np.maximum(y @ fw1.T + fb1, 0.0)
    y = np.maximum(y @ fw2.T + fb2, 0.0)
    return y @ fw3.T + fb3


if __name__ == "__main__":
    key = jax.random.PRNGKey(0)
    pkey, xkey = jax.random.split(key)
    params = init_params(pkey)
    prepped = prepare_params(params)

    # fc1 (16*6*6 inputs) pins the input to a single-channel 32x32 image.
    x = jax.random.normal(xkey, (2, 1, 32, 32), jnp.float32)

    fwd = jax.jit(net_forward)
    out = jax.block_until_ready(fwd(x, prepped))
    assert out.shape == (2, 10) and out.dtype == jnp.float32

    # Numerical sanity check against the NumPy reference (tolerance leaves
    # room for the MXU's f32 matmul pass emulation).
    ref = _reference_forward(x, params)
    err = float(np.max(np.abs(np.asarray(out, np.float64) - ref)))
    assert np.allclose(np.asarray(out, np.float64), ref,
                       rtol=5e-2, atol=5e-2), err

    print("KERNEL_OK")
</pallas_src>

<mosaic_0001>
module attributes {stable_mosaic.version = 11 : i64} {
  func.func @_lenet_fused_kernel(%arg0: i32, %arg1: memref<1x4x9x4608xf32, #tpu.memory_space<vmem>>, %arg2: memref<6x9xf32, #tpu.memory_space<vmem>>, %arg3: memref<6x1xf32, #tpu.memory_space<vmem>>, %arg4: memref<9x16x6xf32, #tpu.memory_space<vmem>>, %arg5: memref<16x1xf32, #tpu.memory_space<vmem>>, %arg6: memref<16x128x120xf32, #tpu.memory_space<vmem>>, %arg7: memref<1x120xf32, #tpu.memory_space<vmem>>, %arg8: memref<120x84xf32, #tpu.memory_space<vmem>>, %arg9: memref<1x84xf32, #tpu.memory_space<vmem>>, %arg10: memref<84x128xf32, #tpu.memory_space<vmem>>, %arg11: memref<1x128xf32, #tpu.memory_space<vmem>>, %arg12: memref<1x1x128xf32, #tpu.memory_space<vmem>>) attributes {dimension_semantics = [#tpu.dimension_semantics<parallel>], iteration_bounds = array<i64: 2>, scalar_prefetch = 0 : i64, scratch_operands = 0 : i64, tpu.core_type = #tpu.core_type<tc>, window_params = [{transform_indices = @transform_0, window_bounds = array<i64: 1, 4, 9, 4608>}, {pipeline_mode = #tpu.pipeline_mode<synchronous>, transform_indices = @transform_1, window_bounds = array<i64: 6, 9>}, {pipeline_mode = #tpu.pipeline_mode<synchronous>, transform_indices = @transform_2, window_bounds = array<i64: 6, 1>}, {pipeline_mode = #tpu.pipeline_mode<synchronous>, transform_indices = @transform_3, window_bounds = array<i64: 9, 16, 6>}, {pipeline_mode = #tpu.pipeline_mode<synchronous>, transform_indices = @transform_4, window_bounds = array<i64: 16, 1>}, {pipeline_mode = #tpu.pipeline_mode<synchronous>, transform_indices = @transform_5, window_bounds = array<i64: 16, 128, 120>}, {pipeline_mode = #tpu.pipeline_mode<synchronous>, transform_indices = @transform_6, window_bounds = array<i64: 1, 120>}, {pipeline_mode = #tpu.pipeline_mode<synchronous>, transform_indices = @transform_7, window_bounds = array<i64: 120, 84>}, {pipeline_mode = #tpu.pipeline_mode<synchronous>, transform_indices = @transform_8, window_bounds = array<i64: 1, 84>}, {pipeline_mode = #tpu.pipeline_mode<synchronous>, transform_indices = @transform_9, window_bounds = array<i64: 84, 128>}, {pipeline_mode = #tpu.pipeline_mode<synchronous>, transform_indices = @transform_10, window_bounds = array<i64: 1, 128>}, {transform_indices = @transform_11, window_bounds = array<i64: 1, 1, 128>}]} {
    %c0 = arith.constant 0 : index
    %c0_0 = arith.constant 0 : index
    %0 = vector.load %arg2[%c0, %c0_0] : memref<6x9xf32, #tpu.memory_space<vmem>>, vector<6x9xf32>
    %c0_1 = arith.constant 0 : index
    %c0_2 = arith.constant 0 : index
    %1 = vector.load %arg3[%c0_1, %c0_2] : memref<6x1xf32, #tpu.memory_space<vmem>>, vector<6x1xf32>
    %c0_3 = arith.constant 0 : index
    %c0_4 = arith.constant 0 : index
    %c0_5 = arith.constant 0 : index
    %c0_6 = arith.constant 0 : index
    %2 = vector.load %arg1[%c0_3, %c0_4, %c0_5, %c0_6] : memref<1x4x9x4608xf32, #tpu.memory_space<vmem>>, vector<1x1x9x4608xf32>
    %3 = vector.shape_cast %2 : vector<1x1x9x4608xf32> to vector<9x4608xf32>
    %cst = arith.constant dense<0.000000e+00> : vector<6x4608xf32>
    %4 = tpu.matmul %0, %3, %cst {dimension_numbers = #tpu.dot_dimension_numbers<[1], [0], [0], [1], [0, 0, 1, 1], [], []>} : vector<6x9xf32>, vector<9x4608xf32>, vector<6x4608xf32> -> vector<6x4608xf32>
    %5 = vector.broadcast %1 : vector<6x1xf32> to vector<6x4608xf32>
    %6 = arith.addf %4, %5 : vector<6x4608xf32>
    %cst_7 = arith.constant 0.000000e+00 : f32
    %7 = vector.broadcast %cst_7 : f32 to vector<6x4608xf32>
    %8 = arith.maximumf %6, %7 : vector<6x4608xf32>
    %c0_8 = arith.constant 0 : index
    %c1 = arith.constant 1 : index
    %c0_9 = arith.constant 0 : index
    %c0_10 = arith.constant 0 : index
    %9 = vector.load %arg1[%c0_8, %c1, %c0_9, %c0_10] : memref<1x4x9x4608xf32, #tpu.memory_space<vmem>>, vector<1x1x9x4608xf32>
    %10 = vector.shape_cast %9 : vector<1x1x9x4608xf32> to vector<9x4608xf32>
    %cst_11 = arith.constant dense<0.000000e+00> : vector<6x4608xf32>
    %11 = tpu.matmul %0, %10, %cst_11 {dimension_numbers = #tpu.dot_dimension_numbers<[1], [0], [0], [1], [0, 0, 1, 1], [], []>} : vector<6x9xf32>, vector<9x4608xf32>, vector<6x4608xf32> -> vector<6x4608xf32>
    %12 = vector.broadcast %1 : vector<6x1xf32> to vector<6x4608xf32>
    %13 = arith.addf %11, %12 : vector<6x4608xf32>
    %cst_12 = arith.constant 0.000000e+00 : f32
    %14 = vector.broadcast %cst_12 : f32 to vector<6x4608xf32>
    %15 = arith.maximumf %13, %14 : vector<6x4608xf32>
    %16 = arith.maximumf %8, %15 : vector<6x4608xf32>
    %c0_13 = arith.constant 0 : index
    %c2 = arith.constant 2 : index
    %c0_14 = arith.constant 0 : index
    %c0_15 = arith.constant 0 : index
    %17 = vector.load %arg1[%c0_13, %c2, %c0_14, %c0_15] : memref<1x4x9x4608xf32, #tpu.memory_space<vmem>>, vector<1x1x9x4608xf32>
    %18 = vector.shape_cast %17 : vector<1x1x9x4608xf32> to vector<9x4608xf32>
    %cst_16 = arith.constant dense<0.000000e+00> : vector<6x4608xf32>
    %19 = tpu.matmul %0, %18, %cst_16 {dimension_numbers = #tpu.dot_dimension_numbers<[1], [0], [0], [1], [0, 0, 1, 1], [], []>} : vector<6x9xf32>, vector<9x4608xf32>, vector<6x4608xf32> -> vector<6x4608xf32>
    %20 = vector.broadcast %1 : vector<6x1xf32> to vector<6x4608xf32>
    %21 = arith.addf %19, %20 : vector<6x4608xf32>
    %cst_17 = arith.constant 0.000000e+00 : f32
    %22 = vector.broadcast %cst_17 : f32 to vector<6x4608xf32>
    %23 = arith.maximumf %21, %22 : vector<6x4608xf32>
    %24 = arith.maximumf %16, %23 : vector<6x4608xf32>
    %c0_18 = arith.constant 0 : index
    %c3 = arith.constant 3 : index
    %c0_19 = arith.constant 0 : index
    %c0_20 = arith.constant 0 : index
    %25 = vector.load %arg1[%c0_18, %c3, %c0_19, %c0_20] : memref<1x4x9x4608xf32, #tpu.memory_space<vmem>>, vector<1x1x9x4608xf32>
    %26 = vector.shape_cast %25 : vector<1x1x9x4608xf32> to vector<9x4608xf32>
    %cst_21 = arith.constant dense<0.000000e+00> : vector<6x4608xf32>
    %27 = tpu.matmul %0, %26, %cst_21 {dimension_numbers = #tpu.dot_dimension_numbers<[1], [0], [0], [1], [0, 0, 1, 1], [], []>} : vector<6x9xf32>, vector<9x4608xf32>, vector<6x4608xf32> -> vector<6x4608xf32>
    %28 = vector.broadcast %1 : vector<6x1xf32> to vector<6x4608xf32>
    %29 = arith.addf %27, %28 : vector<6x4608xf32>
    %cst_22 = arith.constant 0.000000e+00 : f32
    %30 = vector.broadcast %cst_22 : f32 to vector<6x4608xf32>
    %31 = arith.maximumf %29, %30 : vector<6x4608xf32>
    %32 = arith.maximumf %24, %31 : vector<6x4608xf32>
    %cst_23 = arith.constant 0.000000e+00 : f32
    %33 = vector.broadcast %cst_23 : f32 to vector<16x512xf32>
    %c0_24 = arith.constant 0 : index
    %c0_25 = arith.constant 0 : index
    %c0_26 = arith.constant 0 : index
    %34 = vector.load %arg4[%c0_24, %c0_25, %c0_26] : memref<9x16x6xf32, #tpu.memory_space<vmem>>, vector<1x16x6xf32>
    %35 = vector.shape_cast %34 : vector<1x16x6xf32> to vector<16x6xf32>
    %36 = vector.extract_strided_slice %32 {offsets = [0, 0], sizes = [6, 512], strides = [1, 1]} : vector<6x4608xf32> to vector<6x512xf32>
    %cst_27 = arith.constant dense<0.000000e+00> : vector<16x512xf32>
    %37 = tpu.matmul %35, %36, %cst_27 {dimension_numbers = #tpu.dot_dimension_numbers<[1], [0], [0], [1], [0, 0, 1, 1], [], []>} : vector<16x6xf32>, vector<6x512xf32>, vector<16x512xf32> -> vector<16x512xf32>
    %38 = arith.addf %33, %37 : vector<16x512xf32>
    %c1_28 = arith.constant 1 : index
    %c0_29 = arith.constant 0 : index
    %c0_30 = arith.constant 0 : index
    %39 = vector.load %arg4[%c1_28, %c0_29, %c0_30] : memref<9x16x6xf32, #tpu.memory_space<vmem>>, vector<1x16x6xf32>
    %40 = vector.shape_cast %39 : vector<1x16x6xf32> to vector<16x6xf32>
    %41 = vector.extract_strided_slice %32 {offsets = [0, 512], sizes = [6, 512], strides = [1, 1]} : vector<6x4608xf32> to vector<6x512xf32>
    %cst_31 = arith.constant dense<0.000000e+00> : vector<16x512xf32>
    %42 = tpu.matmul %40, %41, %cst_31 {dimension_numbers = #tpu.dot_dimension_numbers<[1], [0], [0], [1], [0, 0, 1, 1], [], []>} : vector<16x6xf32>, vector<6x512xf32>, vector<16x512xf32> -> vector<16x512xf32>
    %43 = arith.addf %38, %42 : vector<16x512xf32>
    %c2_32 = arith.constant 2 : index
    %c0_33 = arith.constant 0 : index
    %c0_34 = arith.constant 0 : index
    %44 = vector.load %arg4[%c2_32, %c0_33, %c0_34] : memref<9x16x6xf32, #tpu.memory_space<vmem>>, vector<1x16x6xf32>
    %45 = vector.shape_cast %44 : vector<1x16x6xf32> to vector<16x6xf32>
    %46 = vector.extract_strided_slice %32 {offsets = [0, 1024], sizes = [6, 512], strides = [1, 1]} : vector<6x4608xf32> to vector<6x512xf32>
    %cst_35 = arith.constant dense<0.000000e+00> : vector<16x512xf32>
    %47 = tpu.matmul %45, %46, %cst_35 {dimension_numbers = #tpu.dot_dimension_numbers<[1], [0], [0], [1], [0, 0, 1, 1], [], []>} : vector<16x6xf32>, vector<6x512xf32>, vector<16x512xf32> -> vector<16x512xf32>
    %48 = arith.addf %43, %47 : vector<16x512xf32>
    %c3_36 = arith.constant 3 : index
    %c0_37 = arith.constant 0 : index
    %c0_38 = arith.constant 0 : index
    %49 = vector.load %arg4[%c3_36, %c0_37, %c0_38] : memref<9x16x6xf32, #tpu.memory_space<vmem>>, vector<1x16x6xf32>
    %50 = vector.shape_cast %49 : vector<1x16x6xf32> to vector<16x6xf32>
    %51 = vector.extract_strided_slice %32 {offsets = [0, 1536], sizes = [6, 512], strides = [1, 1]} : vector<6x4608xf32> to vector<6x512xf32>
    %cst_39 = arith.constant dense<0.000000e+00> : vector<16x512xf32>
    %52 = tpu.matmul %50, %51, %cst_39 {dimension_numbers = #tpu.dot_dimension_numbers<[1], [0], [0], [1], [0, 0, 1, 1], [], []>} : vector<16x6xf32>, vector<6x512xf32>, vector<16x512xf32> -> vector<16x512xf32>
    %53 = arith.addf %48, %52 : vector<16x512xf32>
    %c4 = arith.constant 4 : index
    %c0_40 = arith.constant 0 : index
    %c0_41 = arith.constant 0 : index
    %54 = vector.load %arg4[%c4, %c0_40, %c0_41] : memref<9x16x6xf32, #tpu.memory_space<vmem>>, vector<1x16x6xf32>
    %55 = vector.shape_cast %54 : vector<1x16x6xf32> to vector<16x6xf32>
    %56 = vector.extract_strided_slice %32 {offsets = [0, 2048], sizes = [6, 512], strides = [1, 1]} : vector<6x4608xf32> to vector<6x512xf32>
    %cst_42 = arith.constant dense<0.000000e+00> : vector<16x512xf32>
    %57 = tpu.matmul %55, %56, %cst_42 {dimension_numbers = #tpu.dot_dimension_numbers<[1], [0], [0], [1], [0, 0, 1, 1], [], []>} : vector<16x6xf32>, vector<6x512xf32>, vector<16x512xf32> -> vector<16x512xf32>
    %58 = arith.addf %53, %57 : vector<16x512xf32>
    %c5 = arith.constant 5 : index
    %c0_43 = arith.constant 0 : index
    %c0_44 = arith.constant 0 : index
    %59 = vector.load %arg4[%c5, %c0_43, %c0_44] : memref<9x16x6xf32, #tpu.memory_space<vmem>>, vector<1x16x6xf32>
    %60 = vector.shape_cast %59 : vector<1x16x6xf32> to vector<16x6xf32>
    %61 = vector.extract_strided_slice %32 {offsets = [0, 2560], sizes = [6, 512], strides = [1, 1]} : vector<6x4608xf32> to vector<6x512xf32>
    %cst_45 = arith.constant dense<0.000000e+00> : vector<16x512xf32>
    %62 = tpu.matmul %60, %61, %cst_45 {dimension_numbers = #tpu.dot_dimension_numbers<[1], [0], [0], [1], [0, 0, 1, 1], [], []>} : vector<16x6xf32>, vector<6x512xf32>, vector<16x512xf32> -> vector<16x512xf32>
    %63 = arith.addf %58, %62 : vector<16x512xf32>
    %c6 = arith.constant 6 : index
    %c0_46 = arith.constant 0 : index
    %c0_47 = arith.constant 0 : index
    %64 = vector.load %arg4[%c6, %c0_46, %c0_47] : memref<9x16x6xf32, #tpu.memory_space<vmem>>, vector<1x16x6xf32>
    %65 = vector.shape_cast %64 : vector<1x16x6xf32> to vector<16x6xf32>
    %66 = vector.extract_strided_slice %32 {offsets = [0, 3072], sizes = [6, 512], strides = [1, 1]} : vector<6x4608xf32> to vector<6x512xf32>
    %cst_48 = arith.constant dense<0.000000e+00> : vector<16x512xf32>
    %67 = tpu.matmul %65, %66, %cst_48 {dimension_numbers = #tpu.dot_dimension_numbers<[1], [0], [0], [1], [0, 0, 1, 1], [], []>} : vector<16x6xf32>, vector<6x512xf32>, vector<16x512xf32> -> vector<16x512xf32>
    %68 = arith.addf %63, %67 : vector<16x512xf32>
    %c7 = arith.constant 7 : index
    %c0_49 = arith.constant 0 : index
    %c0_50 = arith.constant 0 : index
    %69 = vector.load %arg4[%c7, %c0_49, %c0_50] : memref<9x16x6xf32, #tpu.memory_space<vmem>>, vector<1x16x6xf32>
    %70 = vector.shape_cast %69 : vector<1x16x6xf32> to vector<16x6xf32>
    %71 = vector.extract_strided_slice %32 {offsets = [0, 3584], sizes = [6, 512], strides = [1, 1]} : vector<6x4608xf32> to vector<6x512xf32>
    %cst_51 = arith.constant dense<0.000000e+00> : vector<16x512xf32>
    %72 = tpu.matmul %70, %71, %cst_51 {dimension_numbers = #tpu.dot_dimension_numbers<[1], [0], [0], [1], [0, 0, 1, 1], [], []>} : vector<16x6xf32>, vector<6x512xf32>, vector<16x512xf32> -> vector<16x512xf32>
    %73 = arith.addf %68, %72 : vector<16x512xf32>
    %c8 = arith.constant 8 : index
    %c0_52 = arith.constant 0 : index
    %c0_53 = arith.constant 0 : index
    %74 = vector.load %arg4[%c8, %c0_52, %c0_53] : memref<9x16x6xf32, #tpu.memory_space<vmem>>, vector<1x16x6xf32>
    %75 = vector.shape_cast %74 : vector<1x16x6xf32> to vector<16x6xf32>
    %76 = vector.extract_strided_slice %32 {offsets = [0, 4096], sizes = [6, 512], strides = [1, 1]} : vector<6x4608xf32> to vector<6x512xf32>
    %cst_54 = arith.constant dense<0.000000e+00> : vector<16x512xf32>
    %77 = tpu.matmul %75, %76, %cst_54 {dimension_numbers = #tpu.dot_dimension_numbers<[1], [0], [0], [1], [0, 0, 1, 1], [], []>} : vector<16x6xf32>, vector<6x512xf32>, vector<16x512xf32> -> vector<16x512xf32>
    %78 = arith.addf %73, %77 : vector<16x512xf32>
    %c0_55 = arith.constant 0 : index
    %c0_56 = arith.constant 0 : index
    %79 = vector.load %arg5[%c0_55, %c0_56] : memref<16x1xf32, #tpu.memory_space<vmem>>, vector<16x1xf32>
    %80 = vector.broadcast %79 : vector<16x1xf32> to vector<16x512xf32>
    %81 = arith.addf %78, %80 : vector<16x512xf32>
    %cst_57 = arith.constant 0.000000e+00 : f32
    %82 = vector.broadcast %cst_57 : f32 to vector<16x512xf32>
    %83 = arith.maximumf %81, %82 : vector<16x512xf32>
    %84 = vector.extract_strided_slice %83 {offsets = [0, 0], sizes = [16, 128], strides = [1, 1]} : vector<16x512xf32> to vector<16x128xf32>
    %85 = vector.extract_strided_slice %83 {offsets = [0, 128], sizes = [16, 128], strides = [1, 1]} : vector<16x512xf32> to vector<16x128xf32>
    %86 = arith.maximumf %84, %85 : vector<16x128xf32>
    %87 = vector.extract_strided_slice %83 {offsets = [0, 256], sizes = [16, 128], strides = [1, 1]} : vector<16x512xf32> to vector<16x128xf32>
    %88 = vector.extract_strided_slice %83 {offsets = [0, 384], sizes = [16, 128], strides = [1, 1]} : vector<16x512xf32> to vector<16x128xf32>
    %89 = arith.maximumf %87, %88 : vector<16x128xf32>
    %90 = arith.maximumf %86, %89 : vector<16x128xf32>
    %cst_58 = arith.constant 0.000000e+00 : f32
    %91 = vector.broadcast %cst_58 : f32 to vector<1x120xf32>
    %92 = vector.extract_strided_slice %90 {offsets = [0, 0], sizes = [1, 128], strides = [1, 1]} : vector<16x128xf32> to vector<1x128xf32>
    %c0_59 = arith.constant 0 : index
    %c0_60 = arith.constant 0 : index
    %c0_61 = arith.constant 0 : index
    %93 = vector.load %arg6[%c0_59, %c0_60, %c0_61] : memref<16x128x120xf32, #tpu.memory_space<vmem>>, vector<1x128x120xf32>
    %94 = vector.shape_cast %93 : vector<1x128x120xf32> to vector<128x120xf32>
    %cst_62 = arith.constant dense<0.000000e+00> : vector<1x120xf32>
    %95 = tpu.matmul %92, %94, %cst_62 {dimension_numbers = #tpu.dot_dimension_numbers<[1], [0], [0], [1], [0, 0, 1, 1], [], []>} : vector<1x128xf32>, vector<128x120xf32>, vector<1x120xf32> -> vector<1x120xf32>
    %96 = arith.addf %91, %95 : vector<1x120xf32>
    %97 = vector.extract_strided_slice %90 {offsets = [1, 0], sizes = [1, 128], strides = [1, 1]} : vector<16x128xf32> to vector<1x128xf32>
    %c1_63 = arith.constant 1 : index
    %c0_64 = arith.constant 0 : index
    %c0_65 = arith.constant 0 : index
    %98 = vector.load %arg6[%c1_63, %c0_64, %c0_65] : memref<16x128x120xf32, #tpu.memory_space<vmem>>, vector<1x128x120xf32>
    %99 = vector.shape_cast %98 : vector<1x128x120xf32> to vector<128x120xf32>
    %cst_66 = arith.constant dense<0.000000e+00> : vector<1x120xf32>
    %100 = tpu.matmul %97, %99, %cst_66 {dimension_numbers = #tpu.dot_dimension_numbers<[1], [0], [0], [1], [0, 0, 1, 1], [], []>} : vector<1x128xf32>, vector<128x120xf32>, vector<1x120xf32> -> vector<1x120xf32>
    %101 = arith.addf %96, %100 : vector<1x120xf32>
    %102 = vector.extract_strided_slice %90 {offsets = [2, 0], sizes = [1, 128], strides = [1, 1]} : vector<16x128xf32> to vector<1x128xf32>
    %c2_67 = arith.constant 2 : index
    %c0_68 = arith.constant 0 : index
    %c0_69 = arith.constant 0 : index
    %103 = vector.load %arg6[%c2_67, %c0_68, %c0_69] : memref<16x128x120xf32, #tpu.memory_space<vmem>>, vector<1x128x120xf32>
    %104 = vector.shape_cast %103 : vector<1x128x120xf32> to vector<128x120xf32>
    %cst_70 = arith.constant dense<0.000000e+00> : vector<1x120xf32>
    %105 = tpu.matmul %102, %104, %cst_70 {dimension_numbers = #tpu.dot_dimension_numbers<[1], [0], [0], [1], [0, 0, 1, 1], [], []>} : vector<1x128xf32>, vector<128x120xf32>, vector<1x120xf32> -> vector<1x120xf32>
    %106 = arith.addf %101, %105 : vector<1x120xf32>
    %107 = vector.extract_strided_slice %90 {offsets = [3, 0], sizes = [1, 128], strides = [1, 1]} : vector<16x128xf32> to vector<1x128xf32>
    %c3_71 = arith.constant 3 : index
    %c0_72 = arith.constant 0 : index
    %c0_73 = arith.constant 0 : index
    %108 = vector.load %arg6[%c3_71, %c0_72, %c0_73] : memref<16x128x120xf32, #tpu.memory_space<vmem>>, vector<1x128x120xf32>
    %109 = vector.shape_cast %108 : vector<1x128x120xf32> to vector<128x120xf32>
    %cst_74 = arith.constant dense<0.000000e+00> : vector<1x120xf32>
    %110 = tpu.matmul %107, %109, %cst_74 {dimension_numbers = #tpu.dot_dimension_numbers<[1], [0], [0], [1], [0, 0, 1, 1], [], []>} : vector<1x128xf32>, vector<128x120xf32>, vector<1x120xf32> -> vector<1x120xf32>
    %111 = arith.addf %106, %110 : vector<1x120xf32>
    %112 = vector.extract_strided_slice %90 {offsets = [4, 0], sizes = [1, 128], strides = [1, 1]} : vector<16x128xf32> to vector<1x128xf32>
    %c4_75 = arith.constant 4 : index
    %c0_76 = arith.constant 0 : index
    %c0_77 = arith.constant 0 : index
    %113 = vector.load %arg6[%c4_75, %c0_76, %c0_77] : memref<16x128x120xf32, #tpu.memory_space<vmem>>, vector<1x128x120xf32>
    %114 = vector.shape_cast %113 : vector<1x128x120xf32> to vector<128x120xf32>
    %cst_78 = arith.constant dense<0.000000e+00> : vector<1x120xf32>
    %115 = tpu.matmul %112, %114, %cst_78 {dimension_numbers = #tpu.dot_dimension_numbers<[1], [0], [0], [1], [0, 0, 1, 1], [], []>} : vector<1x128xf32>, vector<128x120xf32>, vector<1x120xf32> -> vector<1x120xf32>
    %116 = arith.addf %111, %115 : vector<1x120xf32>
    %117 = vector.extract_strided_slice %90 {offsets = [5, 0], sizes = [1, 128], strides = [1, 1]} : vector<16x128xf32> to vector<1x128xf32>
    %c5_79 = arith.constant 5 : index
    %c0_80 = arith.constant 0 : index
    %c0_81 = arith.constant 0 : index
    %118 = vector.load %arg6[%c5_79, %c0_80, %c0_81] : memref<16x128x120xf32, #tpu.memory_space<vmem>>, vector<1x128x120xf32>
    %119 = vector.shape_cast %118 : vector<1x128x120xf32> to vector<128x120xf32>
    %cst_82 = arith.constant dense<0.000000e+00> : vector<1x120xf32>
    %120 = tpu.matmul %117, %119, %cst_82 {dimension_numbers = #tpu.dot_dimension_numbers<[1], [0], [0], [1], [0, 0, 1, 1], [], []>} : vector<1x128xf32>, vector<128x120xf32>, vector<1x120xf32> -> vector<1x120xf32>
    %121 = arith.addf %116, %120 : vector<1x120xf32>
    %122 = vector.extract_strided_slice %90 {offsets = [6, 0], sizes = [1, 128], strides = [1, 1]} : vector<16x128xf32> to vector<1x128xf32>
    %c6_83 = arith.constant 6 : index
    %c0_84 = arith.constant 0 : index
    %c0_85 = arith.constant 0 : index
    %123 = vector.load %arg6[%c6_83, %c0_84, %c0_85] : memref<16x128x120xf32, #tpu.memory_space<vmem>>, vector<1x128x120xf32>
    %124 = vector.shape_cast %123 : vector<1x128x120xf32> to vector<128x120xf32>
    %cst_86 = arith.constant dense<0.000000e+00> : vector<1x120xf32>
    %125 = tpu.matmul %122, %124, %cst_86 {dimension_numbers = #tpu.dot_dimension_numbers<[1], [0], [0], [1], [0, 0, 1, 1], [], []>} : vector<1x128xf32>, vector<128x120xf32>, vector<1x120xf32> -> vector<1x120xf32>
    %126 = arith.addf %121, %125 : vector<1x120xf32>
    %127 = vector.extract_strided_slice %90 {offsets = [7, 0], sizes = [1, 128], strides = [1, 1]} : vector<16x128xf32> to vector<1x128xf32>
    %c7_87 = arith.constant 7 : index
    %c0_88 = arith.constant 0 : index
    %c0_89 = arith.constant 0 : index
    %128 = vector.load %arg6[%c7_87, %c0_88, %c0_89] : memref<16x128x120xf32, #tpu.memory_space<vmem>>, vector<1x128x120xf32>
    %129 = vector.shape_cast %128 : vector<1x128x120xf32> to vector<128x120xf32>
    %cst_90 = arith.constant dense<0.000000e+00> : vector<1x120xf32>
    %130 = tpu.matmul %127, %129, %cst_90 {dimension_numbers = #tpu.dot_dimension_numbers<[1], [0], [0], [1], [0, 0, 1, 1], [], []>} : vector<1x128xf32>, vector<128x120xf32>, vector<1x120xf32> -> vector<1x120xf32>
    %131 = arith.addf %126, %130 : vector<1x120xf32>
    %132 = vector.extract_strided_slice %90 {offsets = [8, 0], sizes = [1, 128], strides = [1, 1]} : vector<16x128xf32> to vector<1x128xf32>
    %c8_91 = arith.constant 8 : index
    %c0_92 = arith.constant 0 : index
    %c0_93 = arith.constant 0 : index
    %133 = vector.load %arg6[%c8_91, %c0_92, %c0_93] : memref<16x128x120xf32, #tpu.memory_space<vmem>>, vector<1x128x120xf32>
    %134 = vector.shape_cast %133 : vector<1x128x120xf32> to vector<128x120xf32>
    %cst_94 = arith.constant dense<0.000000e+00> : vector<1x120xf32>
    %135 = tpu.matmul %132, %134, %cst_94 {dimension_numbers = #tpu.dot_dimension_numbers<[1], [0], [0], [1], [0, 0, 1, 1], [], []>} : vector<1x128xf32>, vector<128x120xf32>, vector<1x120xf32> -> vector<1x120xf32>
    %136 = arith.addf %131, %135 : vector<1x120xf32>
    %137 = vector.extract_strided_slice %90 {offsets = [9, 0], sizes = [1, 128], strides = [1, 1]} : vector<16x128xf32> to vector<1x128xf32>
    %c9 = arith.constant 9 : index
    %c0_95 = arith.constant 0 : index
    %c0_96 = arith.constant 0 : index
    %138 = vector.load %arg6[%c9, %c0_95, %c0_96] : memref<16x128x120xf32, #tpu.memory_space<vmem>>, vector<1x128x120xf32>
    %139 = vector.shape_cast %138 : vector<1x128x120xf32> to vector<128x120xf32>
    %cst_97 = arith.constant dense<0.000000e+00> : vector<1x120xf32>
    %140 = tpu.matmul %137, %139, %cst_97 {dimension_numbers = #tpu.dot_dimension_numbers<[1], [0], [0], [1], [0, 0, 1, 1], [], []>} : vector<1x128xf32>, vector<128x120xf32>, vector<1x120xf32> -> vector<1x120xf32>
    %141 = arith.addf %136, %140 : vector<1x120xf32>
    %142 = vector.extract_strided_slice %90 {offsets = [10, 0], sizes = [1, 128], strides = [1, 1]} : vector<16x128xf32> to vector<1x128xf32>
    %c10 = arith.constant 10 : index
    %c0_98 = arith.constant 0 : index
    %c0_99 = arith.constant 0 : index
    %143 = vector.load %arg6[%c10, %c0_98, %c0_99] : memref<16x128x120xf32, #tpu.memory_space<vmem>>, vector<1x128x120xf32>
    %144 = vector.shape_cast %143 : vector<1x128x120xf32> to vector<128x120xf32>
    %cst_100 = arith.constant dense<0.000000e+00> : vector<1x120xf32>
    %145 = tpu.matmul %142, %144, %cst_100 {dimension_numbers = #tpu.dot_dimension_numbers<[1], [0], [0], [1], [0, 0, 1, 1], [], []>} : vector<1x128xf32>, vector<128x120xf32>, vector<1x120xf32> -> vector<1x120xf32>
    %146 = arith.addf %141, %145 : vector<1x120xf32>
    %147 = vector.extract_strided_slice %90 {offsets = [11, 0], sizes = [1, 128], strides = [1, 1]} : vector<16x128xf32> to vector<1x128xf32>
    %c11 = arith.constant 11 : index
    %c0_101 = arith.constant 0 : index
    %c0_102 = arith.constant 0 : index
    %148 = vector.load %arg6[%c11, %c0_101, %c0_102] : memref<16x128x120xf32, #tpu.memory_space<vmem>>, vector<1x128x120xf32>
    %149 = vector.shape_cast %148 : vector<1x128x120xf32> to vector<128x120xf32>
    %cst_103 = arith.constant dense<0.000000e+00> : vector<1x120xf32>
    %150 = tpu.matmul %147, %149, %cst_103 {dimension_numbers = #tpu.dot_dimension_numbers<[1], [0], [0], [1], [0, 0, 1, 1], [], []>} : vector<1x128xf32>, vector<128x120xf32>, vector<1x120xf32> -> vector<1x120xf32>
    %151 = arith.addf %146, %150 : vector<1x120xf32>
    %152 = vector.extract_strided_slice %90 {offsets = [12, 0], sizes = [1, 128], strides = [1, 1]} : vector<16x128xf32> to vector<1x128xf32>
    %c12 = arith.constant 12 : index
    %c0_104 = arith.constant 0 : index
    %c0_105 = arith.constant 0 : index
    %153 = vector.load %arg6[%c12, %c0_104, %c0_105] : memref<16x128x120xf32, #tpu.memory_space<vmem>>, vector<1x128x120xf32>
    %154 = vector.shape_cast %153 : vector<1x128x120xf32> to vector<128x120xf32>
    %cst_106 = arith.constant dense<0.000000e+00> : vector<1x120xf32>
    %155 = tpu.matmul %152, %154, %cst_106 {dimension_numbers = #tpu.dot_dimension_numbers<[1], [0], [0], [1], [0, 0, 1, 1], [], []>} : vector<1x128xf32>, vector<128x120xf32>, vector<1x120xf32> -> vector<1x120xf32>
    %156 = arith.addf %151, %155 : vector<1x120xf32>
    %157 = vector.extract_strided_slice %90 {offsets = [13, 0], sizes = [1, 128], strides = [1, 1]} : vector<16x128xf32> to vector<1x128xf32>
    %c13 = arith.constant 13 : index
    %c0_107 = arith.constant 0 : index
    %c0_108 = arith.constant 0 : index
    %158 = vector.load %arg6[%c13, %c0_107, %c0_108] : memref<16x128x120xf32, #tpu.memory_space<vmem>>, vector<1x128x120xf32>
    %159 = vector.shape_cast %158 : vector<1x128x120xf32> to vector<128x120xf32>
    %cst_109 = arith.constant dense<0.000000e+00> : vector<1x120xf32>
    %160 = tpu.matmul %157, %159, %cst_109 {dimension_numbers = #tpu.dot_dimension_numbers<[1], [0], [0], [1], [0, 0, 1, 1], [], []>} : vector<1x128xf32>, vector<128x120xf32>, vector<1x120xf32> -> vector<1x120xf32>
    %161 = arith.addf %156, %160 : vector<1x120xf32>
    %162 = vector.extract_strided_slice %90 {offsets = [14, 0], sizes = [1, 128], strides = [1, 1]} : vector<16x128xf32> to vector<1x128xf32>
    %c14 = arith.constant 14 : index
    %c0_110 = arith.constant 0 : index
    %c0_111 = arith.constant 0 : index
    %163 = vector.load %arg6[%c14, %c0_110, %c0_111] : memref<16x128x120xf32, #tpu.memory_space<vmem>>, vector<1x128x120xf32>
    %164 = vector.shape_cast %163 : vector<1x128x120xf32> to vector<128x120xf32>
    %cst_112 = arith.constant dense<0.000000e+00> : vector<1x120xf32>
    %165 = tpu.matmul %162, %164, %cst_112 {dimension_numbers = #tpu.dot_dimension_numbers<[1], [0], [0], [1], [0, 0, 1, 1], [], []>} : vector<1x128xf32>, vector<128x120xf32>, vector<1x120xf32> -> vector<1x120xf32>
    %166 = arith.addf %161, %165 : vector<1x120xf32>
    %167 = vector.extract_strided_slice %90 {offsets = [15, 0], sizes = [1, 128], strides = [1, 1]} : vector<16x128xf32> to vector<1x128xf32>
    %c15 = arith.constant 15 : index
    %c0_113 = arith.constant 0 : index
    %c0_114 = arith.constant 0 : index
    %168 = vector.load %arg6[%c15, %c0_113, %c0_114] : memref<16x128x120xf32, #tpu.memory_space<vmem>>, vector<1x128x120xf32>
    %169 = vector.shape_cast %168 : vector<1x128x120xf32> to vector<128x120xf32>
    %cst_115 = arith.constant dense<0.000000e+00> : vector<1x120xf32>
    %170 = tpu.matmul %167, %169, %cst_115 {dimension_numbers = #tpu.dot_dimension_numbers<[1], [0], [0], [1], [0, 0, 1, 1], [], []>} : vector<1x128xf32>, vector<128x120xf32>, vector<1x120xf32> -> vector<1x120xf32>
    %171 = arith.addf %166, %170 : vector<1x120xf32>
    %c0_116 = arith.constant 0 : index
    %c0_117 = arith.constant 0 : index
    %172 = vector.load %arg7[%c0_116, %c0_117] : memref<1x120xf32, #tpu.memory_space<vmem>>, vector<1x120xf32>
    %173 = arith.addf %171, %172 : vector<1x120xf32>
    %cst_118 = arith.constant 0.000000e+00 : f32
    %174 = vector.broadcast %cst_118 : f32 to vector<1x120xf32>
    %175 = arith.maximumf %173, %174 : vector<1x120xf32>
    %c0_119 = arith.constant 0 : index
    %c0_120 = arith.constant 0 : index
    %176 = vector.load %arg8[%c0_119, %c0_120] : memref<120x84xf32, #tpu.memory_space<vmem>>, vector<120x84xf32>
    %cst_121 = arith.constant dense<0.000000e+00> : vector<1x84xf32>
    %177 = tpu.matmul %175, %176, %cst_121 {dimension_numbers = #tpu.dot_dimension_numbers<[1], [0], [0], [1], [0, 0, 1, 1], [], []>} : vector<1x120xf32>, vector<120x84xf32>, vector<1x84xf32> -> vector<1x84xf32>
    %c0_122 = arith.constant 0 : index
    %c0_123 = arith.constant 0 : index
    %178 = vector.load %arg9[%c0_122, %c0_123] : memref<1x84xf32, #tpu.memory_space<vmem>>, vector<1x84xf32>
    %179 = arith.addf %177, %178 : vector<1x84xf32>
    %cst_124 = arith.constant 0.000000e+00 : f32
    %180 = vector.broadcast %cst_124 : f32 to vector<1x84xf32>
    %181 = arith.maximumf %179, %180 : vector<1x84xf32>
    %c0_125 = arith.constant 0 : index
    %c0_126 = arith.constant 0 : index
    %182 = vector.load %arg10[%c0_125, %c0_126] : memref<84x128xf32, #tpu.memory_space<vmem>>, vector<84x128xf32>
    %cst_127 = arith.constant dense<0.000000e+00> : vector<1x128xf32>
    %183 = tpu.matmul %181, %182, %cst_127 {dimension_numbers = #tpu.dot_dimension_numbers<[1], [0], [0], [1], [0, 0, 1, 1], [], []>} : vector<1x84xf32>, vector<84x128xf32>, vector<1x128xf32> -> vector<1x128xf32>
    %c0_128 = arith.constant 0 : index
    %c0_129 = arith.constant 0 : index
    %184 = vector.load %arg11[%c0_128, %c0_129] : memref<1x128xf32, #tpu.memory_space<vmem>>, vector<1x128xf32>
    %185 = arith.addf %183, %184 : vector<1x128xf32>
    %c0_130 = arith.constant 0 : index
    %c0_131 = arith.constant 0 : index
    %c0_132 = arith.constant 0 : index
    %186 = vector.load %arg12[%c0_130, %c0_131, %c0_132] : memref<1x1x128xf32, #tpu.memory_space<vmem>>, vector<1x1x128xf32>
    %187 = vector.shape_cast %186 : vector<1x1x128xf32> to vector<1x128xf32>
    %188 = vector.shape_cast %185 : vector<1x128xf32> to vector<1x1x128xf32>
    tpu.vector_store %arg12[%c0_130, %c0_131, %c0_132], %188 {strides = array<i32>} : memref<1x1x128xf32, #tpu.memory_space<vmem>>, vector<1x1x128xf32>,
    return
  }
  func.func @transform_0(%arg0: i32) -> (i32, i32, i32, i32) {
    %c0_i32 = arith.constant 0 : i32
    %c0_i32_0 = arith.constant 0 : i32
    %c0_i32_1 = arith.constant 0 : i32
    %c0_i32_2 = arith.constant 0 : i32
    return %arg0, %c0_i32, %c0_i32_0, %c0_i32_1 : i32, i32, i32, i32
  }
  func.func @transform_1(%arg0: i32) -> (i32, i32) {
    %c0_i32 = arith.constant 0 : i32
    %c0_i32_0 = arith.constant 0 : i32
    %c0_i32_1 = arith.constant 0 : i32
    return %c0_i32, %c0_i32_0 : i32, i32
  }
  func.func @transform_2(%arg0: i32) -> (i32, i32) {
    %c0_i32 = arith.constant 0 : i32
    %c0_i32_0 = arith.constant 0 : i32
    %c0_i32_1 = arith.constant 0 : i32
    return %c0_i32, %c0_i32_0 : i32, i32
  }
  func.func @transform_3(%arg0: i32) -> (i32, i32, i32) {
    %c0_i32 = arith.constant 0 : i32
    %c0_i32_0 = arith.constant 0 : i32
    %c0_i32_1 = arith.constant 0 : i32
    %c0_i32_2 = arith.constant 0 : i32
    return %c0_i32, %c0_i32_0, %c0_i32_1 : i32, i32, i32
  }
  func.func @transform_4(%arg0: i32) -> (i32, i32) {
    %c0_i32 = arith.constant 0 : i32
    %c0_i32_0 = arith.constant 0 : i32
    %c0_i32_1 = arith.constant 0 : i32
    return %c0_i32, %c0_i32_0 : i32, i32
  }
  func.func @transform_5(%arg0: i32) -> (i32, i32, i32) {
    %c0_i32 = arith.constant 0 : i32
    %c0_i32_0 = arith.constant 0 : i32
    %c0_i32_1 = arith.constant 0 : i32
    %c0_i32_2 = arith.constant 0 : i32
    return %c0_i32, %c0_i32_0, %c0_i32_1 : i32, i32, i32
  }
  func.func @transform_6(%arg0: i32) -> (i32, i32) {
    %c0_i32 = arith.constant 0 : i32
    %c0_i32_0 = arith.constant 0 : i32
    %c0_i32_1 = arith.constant 0 : i32
    return %c0_i32, %c0_i32_0 : i32, i32
  }
  func.func @transform_7(%arg0: i32) -> (i32, i32) {
    %c0_i32 = arith.constant 0 : i32
    %c0_i32_0 = arith.constant 0 : i32
    %c0_i32_1 = arith.constant 0 : i32
    return %c0_i32, %c0_i32_0 : i32, i32
  }
  func.func @transform_8(%arg0: i32) -> (i32, i32) {
    %c0_i32 = arith.constant 0 : i32
    %c0_i32_0 = arith.constant 0 : i32
    %c0_i32_1 = arith.constant 0 : i32
    return %c0_i32, %c0_i32_0 : i32, i32
  }
  func.func @transform_9(%arg0: i32) -> (i32, i32) {
    %c0_i32 = arith.constant 0 : i32
    %c0_i32_0 = arith.constant 0 : i32
    %c0_i32_1 = arith.constant 0 : i32
    return %c0_i32, %c0_i32_0 : i32, i32
  }
  func.func @transform_10(%arg0: i32) -> (i32, i32) {
    %c0_i32 = arith.constant 0 : i32
    %c0_i32_0 = arith.constant 0 : i32
    %c0_i32_1 = arith.constant 0 : i32
    return %c0_i32, %c0_i32_0 : i32, i32
  }
  func.func @transform_11(%arg0: i32) -> (i32, i32, i32) {
    %c0_i32 = arith.constant 0 : i32
    %c0_i32_0 = arith.constant 0 : i32
    %c0_i32_1 = arith.constant 0 : i32
    return %arg0, %c0_i32, %c0_i32_0 : i32, i32, i32
  }
}

</mosaic_0001>

<llo_original>
// kernel: net_forward.1
$region0: #{net_forward.1}
  #allocation0 [shape = 'u32[]', space=smem, size = 0x4, offset = 0x4, fixed_abs, tag = 'smem constant byte address 0x4 - core index']
  #allocation1 [shape = 'u32[144,128]{1,0:T(1,128)}', space=vmem, size = 0x12000, scoped, tag = 'internal scratch']
  %s0 = inlined_call_operand.vmem [shape: f32[2,4,9,4608], index: 0, kind: input, shape index: {}]
  %s1 = inlined_call_operand.vmem [shape: f32[6,9], index: 1, kind: input, shape index: {}]
  %s2 = inlined_call_operand.vmem [shape: f32[6,1], index: 2, kind: input, shape index: {}]
  %s3 = inlined_call_operand.vmem [shape: f32[9,16,6], index: 3, kind: input, shape index: {}]
  %s4 = inlined_call_operand.vmem [shape: f32[16,1], index: 4, kind: input, shape index: {}]
  %s5 = inlined_call_operand.vmem [shape: f32[16,128,120], index: 5, kind: input, shape index: {}]
  %s6 = inlined_call_operand.vmem [shape: f32[1,120], index: 6, kind: input, shape index: {}]
  %s7 = inlined_call_operand.vmem [shape: f32[120,84], index: 7, kind: input, shape index: {}]
  %s8 = inlined_call_operand.vmem [shape: f32[1,84], index: 8, kind: input, shape index: {}]
  %s9 = inlined_call_operand.vmem [shape: f32[84,128], index: 9, kind: input, shape index: {}]
  %s10 = inlined_call_operand.vmem [shape: f32[1,128], index: 10, kind: input, shape index: {}]
  %s11 = inlined_call_operand.hbm [shape: f32[2,1,128], index: 11, kind: output, shape index: {}]
  %s12 = sld [smem:[#allocation0]]
  $region77: #{net_forward.1} parent=0
    _
  %s14 = ssub.s32 1, %s12
  %s15 = scalar_select 0, %s14, %s12
  $region1: #{net_forward.1} parent=0
    #allocation2 [shape = 'u8[1024]{0}', space=vmem, size = 0x400, scoped, tag = 'output window, operand 0']
    #allocation3 [shape = 's32[2]{0}', space=sflag, size = 0x8, scoped, tag = 'scoped memory for net_forward.1']
    %16 = vsyncpa [#allocation3], 0
    %s17 = scalar_lea.sflag [#allocation3], 1
    %18 = vsyncpa %s17, 0
    loop: start=0, step=1, limit=4
    $region2: #{net_forward.1} parent=1 // loop_pre_header
      _
    $region3: #{net_forward.1} parent=1 // loop_header
      %s20 = sphi 0, %s24
      %p21 = scmp.ge.s32.totalorder %s20, 4
      %s30 = sphi 0, %s32
      %s33 = sphi 0, %s30
      %s34 = sphi 0, %s33
      %s50 = sphi 0, %s34
      %s54 = sphi 0, %s54
      %s56 = sphi 0, %s54
      %s57 = sphi 0, %s56
      %s71 = sphi 0, %s57
      %s75 = sphi 0, %s75
      %s77 = sphi 0, %s75
      %s78 = sphi 0, %s77
      %s92 = sphi 0, %s78
      %s96 = sphi 0, %s96
      %s98 = sphi 0, %s96
      %s99 = sphi 0, %s98
      %s113 = sphi 0, %s99
      %s117 = sphi 0, %s117
      %s119 = sphi 0, %s117
      %s120 = sphi 0, %s119
      %s134 = sphi 0, %s120
      %s138 = sphi 0, %s138
      %s140 = sphi 0, %s138
      %s141 = sphi 0, %s140
      %s155 = sphi 0, %s141
      %s159 = sphi 0, %s159
      %s161 = sphi 0, %s159
      %s162 = sphi 0, %s161
      %s176 = sphi 0, %s162
      %s180 = sphi 0, %s180
      %s182 = sphi 0, %s180
      %s183 = sphi 0, %s182
      %s197 = sphi 0, %s183
      %s201 = sphi 0, %s201
      %s203 = sphi 0, %s201
      %s204 = sphi 0, %s203
      %s218 = sphi 0, %s204
      %s222 = sphi 0, %s222
      %s224 = sphi 0, %s222
      %s225 = sphi 0, %s224
      %s239 = sphi 0, %s225
      %s243 = sphi 0, %s243
      %s245 = sphi 0, %s243
      %s246 = sphi 0, %s245
      %s260 = sphi 0, %s246
      %s266 = sphi 0, %s268
      %s269 = sphi 0, %s266
      %s270 = sphi 0, %s269
      %s286 = sphi 0, %s270
    $region4: #{net_forward.1} parent=1 // loop_header_branch
      %23 = sbr.rel (%p21) target = $region8
    $region5: #{net_forward.1} parent=1 // loop_body
      %s25 = ssub.s32 %s20, 1
      %s26 = ssub.s32 %s20, 2
      %s27 = sadd.s32 %s20, 1
      %s28 = ssub.s32 %s20, %s27
      %p29 = scmp.eq.s32.totalorder %s28, 0
      %s31 = sadd.s32 %s30, 1
      %s32 = scalar_select %p29, %s30, %s31
      %p35 = pneg %p29
      %p36 = scmp.eq.s32.totalorder %s20, 1
      %p37 = por %p35, %p36
      %p38 = scmp.ne.s32.totalorder %s30, %s33
      %p39 = scmp.eq.s32.totalorder %s20, 0
      %p40 = por %p38, %p39
      %p41 = scmp.ne.s32.totalorder %s30, %s33
      %p42 = scmp.eq.s32.totalorder %s25, 1
      %p43 = por %p41, %p42
      %p44 = scmp.ne.s32.totalorder %s33, %s34
      %p45 = scmp.eq.s32.totalorder %s25, 0
      %p46 = por %p44, %p45
      %p47 = scmp.ne.s32.totalorder %s33, %s34
      %p48 = scmp.eq.s32.totalorder %s26, 1
      %p49 = por %p47, %p48
      %p51 = scmp.ne.s32.totalorder %s34, %s50
      %p52 = scmp.eq.s32.totalorder %s26, 0
      %p53 = por %p51, %p52
      %s55 = sadd.s32 %s54, 1
      %p58 = scmp.eq.s32.totalorder %s20, 1
      %p59 = scmp.ne.s32.totalorder %s54, %s56
      %p60 = scmp.eq.s32.totalorder %s20, 0
      %p61 = por %p59, %p60
      %p62 = scmp.ne.s32.totalorder %s54, %s56
      %p63 = scmp.eq.s32.totalorder %s25, 1
      %p64 = por %p62, %p63
      %p65 = scmp.ne.s32.totalorder %s56, %s57
      %p66 = scmp.eq.s32.totalorder %s25, 0
      %p67 = por %p65, %p66
      %p68 = scmp.ne.s32.totalorder %s56, %s57
      %p69 = scmp.eq.s32.totalorder %s26, 1
      %p70 = por %p68, %p69
      %p72 = scmp.ne.s32.totalorder %s57, %s71
      %p73 = scmp.eq.s32.totalorder %s26, 0
      %p74 = por %p72, %p73
      %s76 = sadd.s32 %s75, 1
      %p79 = scmp.eq.s32.totalorder %s20, 1
      %p80 = scmp.ne.s32.totalorder %s75, %s77
      %p81 = scmp.eq.s32.totalorder %s20, 0
      %p82 = por %p80, %p81
      %p83 = scmp.ne.s32.totalorder %s75, %s77
      %p84 = scmp.eq.s32.totalorder %s25, 1
      %p85 = por %p83, %p84
      %p86 = scmp.ne.s32.totalorder %s77, %s78
      %p87 = scmp.eq.s32.totalorder %s25, 0
      %p88 = por %p86, %p87
      %p89 = scmp.ne.s32.totalorder %s77, %s78
      %p90 = scmp.eq.s32.totalorder %s26, 1
      %p91 = por %p89, %p90
      %p93 = scmp.ne.s32.totalorder %s78, %s92
      %p94 = scmp.eq.s32.totalorder %s26, 0
      %p95 = por %p93, %p94
      %s97 = sadd.s32 %s96, 1
      %p100 = scmp.eq.s32.totalorder %s20, 1
      %p101 = scmp.ne.s32.totalorder %s96, %s98
      %p102 = scmp.eq.s32.totalorder %s20, 0
      %p103 = por %p101, %p102
      %p104 = scmp.ne.s32.totalorder %s96, %s98
      %p105 = scmp.eq.s32.totalorder %s25, 1
      %p106 = por %p104, %p105
      %p107 = scmp.ne.s32.totalorder %s98, %s99
      %p108 = scmp.eq.s32.totalorder %s25, 0
      %p109 = por %p107, %p108
      %p110 = scmp.ne.s32.totalorder %s98, %s99
      %p111 = scmp.eq.s32.totalorder %s26, 1
      %p112 = por %p110, %p111
      %p114 = scmp.ne.s32.totalorder %s99, %s113
      %p115 = scmp.eq.s32.totalorder %s26, 0
      %p116 = por %p114, %p115
      %s118 = sadd.s32 %s117, 1
      %p121 = scmp.eq.s32.totalorder %s20, 1
      %p122 = scmp.ne.s32.totalorder %s117, %s119
      %p123 = scmp.eq.s32.totalorder %s20, 0
      %p124 = por %p122, %p123
      %p125 = scmp.ne.s32.totalorder %s117, %s119
      %p126 = scmp.eq.s32.totalorder %s25, 1
      %p127 = por %p125, %p126
      %p128 = scmp.ne.s32.totalorder %s119, %s120
      %p129 = scmp.eq.s32.totalorder %s25, 0
      %p130 = por %p128, %p129
      %p131 = scmp.ne.s32.totalorder %s119, %s120
      %p132 = scmp.eq.s32.totalorder %s26, 1
      %p133 = por %p131, %p132
      %p135 = scmp.ne.s32.totalorder %s120, %s134
      %p136 = scmp.eq.s32.totalorder %s26, 0
      %p137 = por %p135, %p136
      %s139 = sadd.s32 %s138, 1
      %p142 = scmp.eq.s32.totalorder %s20, 1
      %p143 = scmp.ne.s32.totalorder %s138, %s140
      %p144 = scmp.eq.s32.totalorder %s20, 0
      %p145 = por %p143, %p144
      %p146 = scmp.ne.s32.totalorder %s138, %s140
      %p147 = scmp.eq.s32.totalorder %s25, 1
      %p148 = por %p146, %p147
      %p149 = scmp.ne.s32.totalorder %s140, %s141
      %p150 = scmp.eq.s32.totalorder %s25, 0
      %p151 = por %p149, %p150
      %p152 = scmp.ne.s32.totalorder %s140, %s141
      %p153 = scmp.eq.s32.totalorder %s26, 1
      %p154 = por %p152, %p153
      %p156 = scmp.ne.s32.totalorder %s141, %s155
      %p157 = scmp.eq.s32.totalorder %s26, 0
      %p158 = por %p156, %p157
      %s160 = sadd.s32 %s159, 1
      %p163 = scmp.eq.s32.totalorder %s20, 1
      %p164 = scmp.ne.s32.totalorder %s159, %s161
      %p165 = scmp.eq.s32.totalorder %s20, 0
      %p166 = por %p164, %p165
      %p167 = scmp.ne.s32.totalorder %s159, %s161
      %p168 = scmp.eq.s32.totalorder %s25, 1
      %p169 = por %p167, %p168
      %p170 = scmp.ne.s32.totalorder %s161, %s162
      %p171 = scmp.eq.s32.totalorder %s25, 0
      %p172 = por %p170, %p171
      %p173 = scmp.ne.s32.totalorder %s161, %s162
      %p174 = scmp.eq.s32.totalorder %s26, 1
      %p175 = por %p173, %p174
      %p177 = scmp.ne.s32.totalorder %s162, %s176
      %p178 = scmp.eq.s32.totalorder %s26, 0
      %p179 = por %p177, %p178
      %s181 = sadd.s32 %s180, 1
      %p184 = scmp.eq.s32.totalorder %s20, 1
      %p185 = scmp.ne.s32.totalorder %s180, %s182
      %p186 = scmp.eq.s32.totalorder %s20, 0
      %p187 = por %p185, %p186
      %p188 = scmp.ne.s32.totalorder %s180, %s182
      %p189 = scmp.eq.s32.totalorder %s25, 1
      %p190 = por %p188, %p189
      %p191 = scmp.ne.s32.totalorder %s182, %s183
      %p192 = scmp.eq.s32.totalorder %s25, 0
      %p193 = por %p191, %p192
      %p194 = scmp.ne.s32.totalorder %s182, %s183
      %p195 = scmp.eq.s32.totalorder %s26, 1
      %p196 = por %p194, %p195
      %p198 = scmp.ne.s32.totalorder %s183, %s197
      %p199 = scmp.eq.s32.totalorder %s26, 0
      %p200 = por %p198, %p199
      %s202 = sadd.s32 %s201, 1
      %p205 = scmp.eq.s32.totalorder %s20, 1
      %p206 = scmp.ne.s32.totalorder %s201, %s203
      %p207 = scmp.eq.s32.totalorder %s20, 0
      %p208 = por %p206, %p207
      %p209 = scmp.ne.s32.totalorder %s201, %s203
      %p210 = scmp.eq.s32.totalorder %s25, 1
      %p211 = por %p209, %p210
      %p212 = scmp.ne.s32.totalorder %s203, %s204
      %p213 = scmp.eq.s32.totalorder %s25, 0
      %p214 = por %p212, %p213
      %p215 = scmp.ne.s32.totalorder %s203, %s204
      %p216 = scmp.eq.s32.totalorder %s26, 1
      %p217 = por %p215, %p216
      %p219 = scmp.ne.s32.totalorder %s204, %s218
      %p220 = scmp.eq.s32.totalorder %s26, 0
      %p221 = por %p219, %p220
      %s223 = sadd.s32 %s222, 1
      %p226 = scmp.eq.s32.totalorder %s20, 1
      %p227 = scmp.ne.s32.totalorder %s222, %s224
      %p228 = scmp.eq.s32.totalorder %s20, 0
      %p229 = por %p227, %p228
      %p230 = scmp.ne.s32.totalorder %s222, %s224
      %p231 = scmp.eq.s32.totalorder %s25, 1
      %p232 = por %p230, %p231
      %p233 = scmp.ne.s32.totalorder %s224, %s225
      %p234 = scmp.eq.s32.totalorder %s25, 0
      %p235 = por %p233, %p234
      %p236 = scmp.ne.s32.totalorder %s224, %s225
      %p237 = scmp.eq.s32.totalorder %s26, 1
      %p238 = por %p236, %p237
      %p240 = scmp.ne.s32.totalorder %s225, %s239
      %p241 = scmp.eq.s32.totalorder %s26, 0
      %p242 = por %p240, %p241
      %s244 = sadd.s32 %s243, 1
      %p247 = scmp.eq.s32.totalorder %s20, 1
      %p248 = scmp.ne.s32.totalorder %s243, %s245
      %p249 = scmp.eq.s32.totalorder %s20, 0
      %p250 = por %p248, %p249
      %p251 = scmp.ne.s32.totalorder %s243, %s245
      %p252 = scmp.eq.s32.totalorder %s25, 1
      %p253 = por %p251, %p252
      %p254 = scmp.ne.s32.totalorder %s245, %s246
      %p255 = scmp.eq.s32.totalorder %s25, 0
      %p256 = por %p254, %p255
      %p257 = scmp.ne.s32.totalorder %s245, %s246
      %p258 = scmp.eq.s32.totalorder %s26, 1
      %p259 = por %p257, %p258
      %p261 = scmp.ne.s32.totalorder %s246, %s260
      %p262 = scmp.eq.s32.totalorder %s26, 0
      %p263 = por %p261, %p262
      %s264 = ssub.s32 %s20, %s27
      %p265 = scmp.eq.s32.totalorder %s264, 0
      %s267 = sadd.s32 %s266, 1
      %s268 = scalar_select %p265, %s266, %s267
      %p271 = pneg %p265
      %p272 = scmp.eq.s32.totalorder %s20, 1
      %p273 = por %p271, %p272
      %p274 = scmp.ne.s32.totalorder %s266, %s269
      %p275 = scmp.eq.s32.totalorder %s20, 0
      %p276 = por %p274, %p275
      %p277 = scmp.ne.s32.totalorder %s266, %s269
      %p278 = scmp.eq.s32.totalorder %s25, 1
      %p279 = por %p277, %p278
      %p280 = scmp.ne.s32.totalorder %s269, %s270
      %p281 = scmp.eq.s32.totalorder %s25, 0
      %p282 = por %p280, %p281
      %p283 = scmp.ne.s32.totalorder %s269, %s270
      %p284 = scmp.eq.s32.totalorder %s26, 1
      %p285 = por %p283, %p284
      %p287 = scmp.ne.s32.totalorder %s270, %s286
      %p288 = scmp.eq.s32.totalorder %s26, 0
      %p289 = por %p287, %p288
      %p290 = scmp.le.s32.totalorder 1, %s20
      %p291 = scmp.lt.s32.totalorder %s20, 3
      %p292 = pnand %p290, %p291
      %p293 = pneg %p292
      // Predicated region
      $region9: #{net_forward.1} parent=5 // pred_check
        _
      $region10: #{net_forward.1} parent=5 // pred_check_branch
        %295 = sbr.rel (%p292) target = $region12
      $region11: #{net_forward.1} parent=5 // pred_region
        %s296 = ssub.s32 %s20, 1
        // Predicated region
        $region13: #{net_forward.1} parent=11 // pred_check
          %p297 = pneg %p67
        $region14: #{net_forward.1} parent=11 // pred_check_branch
          %299 = sbr.rel (%p297) target = $region16
        $region15: #{net_forward.1} parent=11 // pred_region
          _
        $region16: #{net_forward.1} parent=11 // pred_fallthru
          _
        // Predicated region
        $region17: #{net_forward.1} parent=11 // pred_check
          %p300 = pneg %p88
        $region18: #{net_forward.1} parent=11 // pred_check_branch
          %302 = sbr.rel (%p300) target = $region20
        $region19: #{net_forward.1} parent=11 // pred_region
          _
        $region20: #{net_forward.1} parent=11 // pred_fallthru
          _
        // Predicated region
        $region21: #{net_forward.1} parent=11 // pred_check
          %p303 = pneg %p109
        $region22: #{net_forward.1} parent=11 // pred_check_branch
          %305 = sbr.rel (%p303) target = $region24
        $region23: #{net_forward.1} parent=11 // pred_region
          _
        $region24: #{net_forward.1} parent=11 // pred_fallthru
          _
        // Predicated region
        $region25: #{net_forward.1} parent=11 // pred_check
          %p306 = pneg %p130
        $region26: #{net_forward.1} parent=11 // pred_check_branch
          %308 = sbr.rel (%p306) target = $region28
        $region27: #{net_forward.1} parent=11 // pred_region
          _
        $region28: #{net_forward.1} parent=11 // pred_fallthru
          _
        // Predicated region
        $region29: #{net_forward.1} parent=11 // pred_check
          %p309 = pneg %p151
        $region30: #{net_forward.1} parent=11 // pred_check_branch
          %311 = sbr.rel (%p309) target = $region32
        $region31: #{net_forward.1} parent=11 // pred_region
          _
        $region32: #{net_forward.1} parent=11 // pred_fallthru
          _
        // Predicated region
        $region33: #{net_forward.1} parent=11 // pred_check
          %p312 = pneg %p172
        $region34: #{net_forward.1} parent=11 // pred_check_branch
          %314 = sbr.rel (%p312) target = $region36
        $region35: #{net_forward.1} parent=11 // pred_region
          _
        $region36: #{net_forward.1} parent=11 // pred_fallthru
          _
        // Predicated region
        $region37: #{net_forward.1} parent=11 // pred_check
          %p315 = pneg %p193
        $region38: #{net_forward.1} parent=11 // pred_check_branch
          %317 = sbr.rel (%p315) target = $region40
        $region39: #{net_forward.1} parent=11 // pred_region
          _
        $region40: #{net_forward.1} parent=11 // pred_fallthru
          _
        // Predicated region
        $region41: #{net_forward.1} parent=11 // pred_check
          %p318 = pneg %p214
        $region42: #{net_forward.1} parent=11 // pred_check_branch
          %320 = sbr.rel (%p318) target = $region44
        $region43: #{net_forward.1} parent=11 // pred_region
          _
        $region44: #{net_forward.1} parent=11 // pred_fallthru
          _
        // Predicated region
        $region45: #{net_forward.1} parent=11 // pred_check
          %p321 = pneg %p235
        $region46: #{net_forward.1} parent=11 // pred_check_branch
          %323 = sbr.rel (%p321) target = $region48
        $region47: #{net_forward.1} parent=11 // pred_region
          _
        $region48: #{net_forward.1} parent=11 // pred_fallthru
          _
        // Predicated region
        $region49: #{net_forward.1} parent=11 // pred_check
          %p324 = pneg %p256
        $region50: #{net_forward.1} parent=11 // pred_check_branch
          %326 = sbr.rel (%p324) target = $region52
        $region51: #{net_forward.1} parent=11 // pred_region
          _
        $region52: #{net_forward.1} parent=11 // pred_fallthru
          _
      $region12: #{net_forward.1} parent=5 // pred_fallthru
        _
      %p327 = scmp.lt.s32.totalorder %s20, 2
      // Predicated region
      $region53: #{net_forward.1} parent=5 // pred_check
        %p328 = pneg %p327
      $region54: #{net_forward.1} parent=5 // pred_check_branch
        %330 = sbr.rel (%p328) target = $region56
      $region55: #{net_forward.1} parent=5 // pred_region
        // Predicated region
        $region57: #{net_forward.1} parent=55 // pred_check
          %p331 = pneg %p40
        $region58: #{net_forward.1} parent=55 // pred_check_branch
          %333 = sbr.rel (%p331) target = $region60
        $region59: #{net_forward.1} parent=55 // pred_region
          %p334 = scmp.lt.s32.totalorder %s20, 1
          %s335 = scalar_select %p334, %s20, 1
          %s336 = smul.addr %s335, 288
          %s337 = smul.addr %s336, 8
          %s338 = scalar_lea.vmem %s0, %s337
        $region60: #{net_forward.1} parent=55 // pred_fallthru
          _
      $region56: #{net_forward.1} parent=5 // pred_fallthru
        _
      %p339 = scmp.le.s32.totalorder 1, %s20
      %p340 = scmp.lt.s32.totalorder %s20, 3
      %p341 = pnand %p339, %p340
      %p342 = pneg %p341
      // Predicated region
      $region61: #{net_forward.1} parent=5 // pred_check
        _
      $region62: #{net_forward.1} parent=5 // pred_check_branch
        %344 = sbr.rel (%p341) target = $region64
      $region63: #{net_forward.1} parent=5 // pred_region
        %s345 = ssub.s32 %s20, 1
        %p346 = scmp.lt.s32.totalorder %s25, 1
        %s347 = scalar_select %p346, %s25, 1
        %s348 = smul.addr %s347, 288
        %s349 = smul.addr %s348, 8
        %s350 = scalar_lea.vmem %s0, %s349
        %p351 = pneg %p46
        %p352 = pneg %p43
        %p353 = pneg %p67
        %p354 = pneg %p64
        %p355 = pneg %p88
        %p356 = pneg %p85
        %p357 = pneg %p109
        %p358 = pneg %p106
        %p359 = pneg %p130
        %p360 = pneg %p127
        %p361 = pneg %p151
        %p362 = pneg %p148
        %p363 = pneg %p172
        %p364 = pneg %p169
        %p365 = pneg %p193
        %p366 = pneg %p190
        %p367 = pneg %p214
        %p368 = pneg %p211
        %p369 = pneg %p235
        %p370 = pneg %p232
        %p371 = pneg %p256
        %p372 = pneg %p253
        %p373 = pneg %p282
        %p374 = pneg %p279
        %s375 = sand.u32 %s269, 1
        %s376 = scalar_lea.sflag [#allocation3], %s375
        %s377 = sand.u32 %s269, 1
        %s378 = scalar_lea.vmem [#allocation2], %s377
        %p379 = scmp.lt.s32.totalorder %s25, 1
        %s380 = scalar_select %p379, %s25, 1
        %s381 = smul.addr %s380, 288
        %s382 = smul.addr %s381, 8
        %s383 = scalar_lea.vmem %s0, %s382
        %v384 = vld [vmem:[%s1] sm:$0x3f]
        %v385 = vld [vmem:[%s2] sm:$0x3f]
        %v386 = vld [vmem:[%s383] sm:$0xff]
        %v387 = vld [vmem:[%s383 + $0x8] sm:$0xff]
        %v388 = vld [vmem:[%s383 + $0x10] sm:$0xff]
        %v389 = vld [vmem:[%s383 + $0x18] sm:$0xff]
        %v390 = vld [vmem:[%s383 + $0x20] sm:$0xff]
        %v391 = vld [vmem:[%s383 + $0x28] sm:$0xff]
        %v392 = vld [vmem:[%s383 + $0x30] sm:$0xff]
        %v393 = vld [vmem:[%s383 + $0x38] sm:$0xff]
        %v394 = vld [vmem:[%s383 + $0x40] sm:$0xff]
        %v395 = vld [vmem:[%s383 + $0x48] sm:$0xff]
        %v396 = vld [vmem:[%s383 + $0x50] sm:$0xff]
        %v397 = vld [vmem:[%s383 + $0x58] sm:$0xff]
        %v398 = vld [vmem:[%s383 + $0x60] sm:$0xff]
        %v399 = vld [vmem:[%s383 + $0x68] sm:$0xff]
        %v400 = vld [vmem:[%s383 + $0x70] sm:$0xff]
        %v401 = vld [vmem:[%s383 + $0x78] sm:$0xff]
        %v402 = vld [vmem:[%s383 + $0x80] sm:$0xff]
        %v403 = vld [vmem:[%s383 + $0x88] sm:$0xff]
        %v404 = vld [vmem:[%s383 + $0x90] sm:$0xff]
        %v405 = vld [vmem:[%s383 + $0x98] sm:$0xff]
        %v406 = vld [vmem:[%s383 + $0xa0] sm:$0xff]
        %v407 = vld [vmem:[%s383 + $0xa8] sm:$0xff]
        %v408 = vld [vmem:[%s383 + $0xb0] sm:$0xff]
        %v409 = vld [vmem:[%s383 + $0xb8] sm:$0xff]
        %v410 = vld [vmem:[%s383 + $0xc0] sm:$0xff]
        %v411 = vld [vmem:[%s383 + $0xc8] sm:$0xff]
        %v412 = vld [vmem:[%s383 + $0xd0] sm:$0xff]
        %v413 = vld [vmem:[%s383 + $0xd8] sm:$0xff]
        %v414 = vld [vmem:[%s383 + $0xe0] sm:$0xff]
        %v415 = vld [vmem:[%s383 + $0xe8] sm:$0xff]
        %v416 = vld [vmem:[%s383 + $0xf0] sm:$0xff]
        %v417 = vld [vmem:[%s383 + $0xf8] sm:$0xff]
        %v418 = vld [vmem:[%s383 + $0x100] sm:$0xff]
        %v419 = vld [vmem:[%s383 + $0x108] sm:$0xff]
        %v420 = vld [vmem:[%s383 + $0x110] sm:$0xff]
        %v421 = vld [vmem:[%s383 + $0x118] sm:$0xff]
        %v422 = vld [vmem:[%s383 + $0x120] sm:$0x1]
        %v423 = vld [vmem:[%s383 + $0x128] sm:$0x1]
        %v424 = vld [vmem:[%s383 + $0x130] sm:$0x1]
        %v425 = vld [vmem:[%s383 + $0x138] sm:$0x1]
        %v426 = vld [vmem:[%s383 + $0x140] sm:$0x1]
        %v427 = vld [vmem:[%s383 + $0x148] sm:$0x1]
        %v428 = vld [vmem:[%s383 + $0x150] sm:$0x1]
        %v429 = vld [vmem:[%s383 + $0x158] sm:$0x1]
        %v430 = vld [vmem:[%s383 + $0x160] sm:$0x1]
        %v431 = vld [vmem:[%s383 + $0x168] sm:$0x1]
        %v432 = vld [vmem:[%s383 + $0x170] sm:$0x1]
        %v433 = vld [vmem:[%s383 + $0x178] sm:$0x1]
        %v434 = vld [vmem:[%s383 + $0x180] sm:$0x1]
        %v435 = vld [vmem:[%s383 + $0x188] sm:$0x1]
        %v436 = vld [vmem:[%s383 + $0x190] sm:$0x1]
        %v437 = vld [vmem:[%s383 + $0x198] sm:$0x1]
        %v438 = vld [vmem:[%s383 + $0x1a0] sm:$0x1]
        %v439 = vld [vmem:[%s383 + $0x1a8] sm:$0x1]
        %v440 = vld [vmem:[%s383 + $0x1b0] sm:$0x1]
        %v441 = vld [vmem:[%s383 + $0x1b8] sm:$0x1]
        %v442 = vld [vmem:[%s383 + $0x1c0] sm:$0x1]
        %v443 = vld [vmem:[%s383 + $0x1c8] sm:$0x1]
        %v444 = vld [vmem:[%s383 + $0x1d0] sm:$0x1]
        %v445 = vld [vmem:[%s383 + $0x1d8] sm:$0x1]
        %v446 = vld [vmem:[%s383 + $0x1e0] sm:$0x1]
        %v447 = vld [vmem:[%s383 + $0x1e8] sm:$0x1]
        %v448 = vld [vmem:[%s383 + $0x1f0] sm:$0x1]
        %v449 = vld [vmem:[%s383 + $0x1f8] sm:$0x1]
        %v450 = vld [vmem:[%s383 + $0x200] sm:$0x1]
        %v451 = vld [vmem:[%s383 + $0x208] sm:$0x1]
        %v452 = vld [vmem:[%s383 + $0x210] sm:$0x1]
        %v453 = vld [vmem:[%s383 + $0x218] sm:$0x1]
        %v454 = vld [vmem:[%s383 + $0x220] sm:$0x1]
        %v455 = vld [vmem:[%s383 + $0x228] sm:$0x1]
        %v456 = vld [vmem:[%s383 + $0x230] sm:$0x1]
        %v457 = vld [vmem:[%s383 + $0x238] sm:$0x1]
        %459 = vset.pattern.permute.xlu0 0
        %460 = vperm.xlu0 %459, %v385
        %v461 = vpop.permute.xlu0 %460
        %vm463 = vcmask 72704
        %v465 = vsel %vm463, %v384, 0
        %vm467 = vcmask 1040384
        %v469 = vsel %vm467, %v422, 0
        %v472 = vsel %vm467, %v423, 0
        %v475 = vsel %vm467, %v424, 0
        %v478 = vsel %vm467, %v425, 0
        %v481 = vsel %vm467, %v426, 0
        %v484 = vsel %vm467, %v427, 0
        %v487 = vsel %vm467, %v428, 0
        %v490 = vsel %vm467, %v429, 0
        %v493 = vsel %vm467, %v430, 0
        %v496 = vsel %vm467, %v431, 0
        %v499 = vsel %vm467, %v432, 0
        %v502 = vsel %vm467, %v433, 0
        %v505 = vsel %vm467, %v434, 0
        %v508 = vsel %vm467, %v435, 0
        %v511 = vsel %vm467, %v436, 0
        %v514 = vsel %vm467, %v437, 0
        %v517 = vsel %vm467, %v438, 0
        %v520 = vsel %vm467, %v439, 0
        %v523 = vsel %vm467, %v440, 0
        %v526 = vsel %vm467, %v441, 0
        %v529 = vsel %vm467, %v442, 0
        %v532 = vsel %vm467, %v443, 0
        %v535 = vsel %vm467, %v444, 0
        %v538 = vsel %vm467, %v445, 0
        %v541 = vsel %vm467, %v446, 0
        %v544 = vsel %vm467, %v447, 0
        %v547 = vsel %vm467, %v448, 0
        %v550 = vsel %vm467, %v449, 0
        %v553 = vsel %vm467, %v450, 0
        %v556 = vsel %vm467, %v451, 0
        %v559 = vsel %vm467, %v452, 0
        %v562 = vsel %vm467, %v453, 0
        %v565 = vsel %vm467, %v454, 0
        %v568 = vsel %vm467, %v455, 0
        %v571 = vsel %vm467, %v456, 0
        %v574 = vsel %vm467, %v457, 0
        %576 = vmatprep.subr.mxu0 0.0
        %577 = vmatpush1.msra.mxu0 0.0
        %578 = vmatprep.subr.mxu0 0.0
        %579 = vmatpush1.msra.mxu0 0.0
        %580 = vmatprep.subr.mxu0 0.0
        %581 = vmatpush1.msra.mxu0 0.0
        %582 = vmatprep.subr.mxu0 0.0
        %583 = vmatpush1.msra.mxu0 0.0
        %584 = vmatprep.subr.mxu0 0.0
        %585 = vmatpush1.msra.mxu0 0.0
        %586 = vmatprep.subr.mxu0 0.0
        %587 = vmatpush1.msra.mxu0 0.0
        %588 = vmatprep.subr.mxu0 0.0
        %589 = vmatpush1.msra.mxu0 0.0
        %590 = vmatprep.subr.mxu0 0.0
        %591 = vmatpush1.msra.mxu0 0.0
        %592 = vmatprep.subr.mxu0 0.0
        %593 = vmatpush1.msra.mxu0 0.0
        %594 = vmatprep.subr.mxu0 0.0
        %595 = vmatpush1.msra.mxu0 0.0
        %596 = vmatprep.subr.mxu0 0.0
        %597 = vmatpush1.msra.mxu0 0.0
        %598 = vmatprep.subr.mxu0 0.0
        %599 = vmatpush1.msra.mxu0 0.0
        %600 = vmatprep.subr.mxu0 0.0
        %601 = vmatpush1.msra.mxu0 0.0
        %602 = vmatprep.subr.mxu0 0.0
        %603 = vmatpush1.msra.mxu0 0.0
        %604 = vmatprep.subr.mxu0 %v472
        %605 = vmatpush1.msra.mxu0 %v469
        %606 = vmatprep.subr.mxu0 %v387
        %607 = vmatpush1.msra.mxu0 %v386
        %608 = vmatprep.subr.mxu0 0.0
        %609 = vmatpush2.msra.mxu0 0.0
        %610 = vmatprep.subr.mxu0 0.0
        %611 = vmatpush2.msra.mxu0 0.0
        %612 = vmatprep.subr.mxu0 0.0
        %613 = vmatpush2.msra.mxu0 0.0
        %614 = vmatprep.subr.mxu0 0.0
        %615 = vmatpush2.msra.mxu0 0.0
        %616 = vmatprep.subr.mxu0 0.0
        %617 = vmatpush2.msra.mxu0 0.0
        %618 = vmatprep.subr.mxu0 0.0
        %619 = vmatpush2.msra.mxu0 0.0
        %620 = vmatprep.subr.mxu0 0.0
        %621 = vmatpush2.msra.mxu0 0.0
        %622 = vmatprep.subr.mxu0 0.0
        %623 = vmatpush2.msra.mxu0 0.0
        %624 = vmatprep.subr.mxu0 0.0
        %625 = vmatpush2.msra.mxu0 0.0
        %626 = vmatprep.subr.mxu0 0.0
        %627 = vmatpush2.msra.mxu0 0.0
        %628 = vmatprep.subr.mxu0 0.0
        %629 = vmatpush2.msra.mxu0 0.0
        %630 = vmatprep.subr.mxu0 0.0
        %631 = vmatpush2.msra.mxu0 0.0
        %632 = vmatprep.subr.mxu0 0.0
        %633 = vmatpush2.msra.mxu0 0.0
        %634 = vmatprep.subr.mxu0 0.0
        %635 = vmatpush2.msra.mxu0 0.0
        %636 = vmatprep.subr.mxu0 0.0
        %637 = vmatpush2.msra.mxu0 0.0
        %638 = vmatprep.subr.mxu0 0.0
        %639 = vmatpush2.msra.mxu0 0.0
        %640 = vmatprep.mubr.f32.mxu0 0.0
        %641 = vmatmul.mubr.f32.gmra.mxu0 %v465
        %v642 = vpop.f32.mrf.mxu0
        %v643 = vadd.f32 %v461, %v642
        %v644 = vpop.f32.mrf.mxu0
        %v645 = vadd.f32 %v461, %v644
        %646 = vdwg.mxu0
        %647 = vmatprep.subr.mxu0 0.0
        %648 = vmatpush1.msra.mxu0 0.0
        %649 = vmatprep.subr.mxu0 0.0
        %650 = vmatpush1.msra.mxu0 0.0
        %651 = vmatprep.subr.mxu0 0.0
        %652 = vmatpush1.msra.mxu0 0.0
        %653 = vmatprep.subr.mxu0 0.0
        %654 = vmatpush1.msra.mxu0 0.0
        %655 = vmatprep.subr.mxu0 0.0
        %656 = vmatpush1.msra.mxu0 0.0
        %657 = vmatprep.subr.mxu0 0.0
        %658 = vmatpush1.msra.mxu0 0.0
        %659 = vmatprep.subr.mxu0 0.0
        %660 = vmatpush1.msra.mxu0 0.0
        %661 = vmatprep.subr.mxu0 0.0
        %662 = vmatpush1.msra.mxu0 0.0
        %663 = vmatprep.subr.mxu0 0.0
        %664 = vmatpush1.msra.mxu0 0.0
        %665 = vmatprep.subr.mxu0 0.0
        %666 = vmatpush1.msra.mxu0 0.0
        %667 = vmatprep.subr.mxu0 0.0
        %668 = vmatpush1.msra.mxu0 0.0
        %669 = vmatprep.subr.mxu0 0.0
        %670 = vmatpush1.msra.mxu0 0.0
        %671 = vmatprep.subr.mxu0 0.0
        %672 = vmatpush1.msra.mxu0 0.0
        %673 = vmatprep.subr.mxu0 0.0
        %674 = vmatpush1.msra.mxu0 0.0
        %675 = vmatprep.subr.mxu0 %v478
        %676 = vmatpush1.msra.mxu0 %v475
        %677 = vmatprep.subr.mxu0 %v389
        %678 = vmatpush1.msra.mxu0 %v388
        %679 = vmatprep.subr.mxu0 0.0
        %680 = vmatpush2.msra.mxu0 0.0
        %681 = vmatprep.subr.mxu0 0.0
        %682 = vmatpush2.msra.mxu0 0.0
        %683 = vmatprep.subr.mxu0 0.0
        %684 = vmatpush2.msra.mxu0 0.0
        %685 = vmatprep.subr.mxu0 0.0
        %686 = vmatpush2.msra.mxu0 0.0
        %687 = vmatprep.subr.mxu0 0.0
        %688 = vmatpush2.msra.mxu0 0.0
        %689 = vmatprep.subr.mxu0 0.0
        %690 = vmatpush2.msra.mxu0 0.0
        %691 = vmatprep.subr.mxu0 0.0
        %692 = vmatpush2.msra.mxu0 0.0
        %693 = vmatprep.subr.mxu0 0.0
        %694 = vmatpush2.msra.mxu0 0.0
        %695 = vmatprep.subr.mxu0 0.0
        %696 = vmatpush2.msra.mxu0 0.0
        %697 = vmatprep.subr.mxu0 0.0
        %698 = vmatpush2.msra.mxu0 0.0
        %699 = vmatprep.subr.mxu0 0.0
        %700 = vmatpush2.msra.mxu0 0.0
        %701 = vmatprep.subr.mxu0 0.0
        %702 = vmatpush2.msra.mxu0 0.0
        %703 = vmatprep.subr.mxu0 0.0
        %704 = vmatpush2.msra.mxu0 0.0
        %705 = vmatprep.subr.mxu0 0.0
        %706 = vmatpush2.msra.mxu0 0.0
        %707 = vmatprep.subr.mxu0 0.0
        %708 = vmatpush2.msra.mxu0 0.0
        %709 = vmatprep.subr.mxu0 0.0
        %710 = vmatpush2.msra.mxu0 0.0
        %711 = vmatprep.mubr.f32.mxu0 0.0
        %712 = vmatmul.mubr.f32.gmra.mxu0 %v465
        %v713 = vpop.f32.mrf.mxu0
        %v714 = vadd.f32 %v461, %v713
        %v715 = vpop.f32.mrf.mxu0
        %v716 = vadd.f32 %v461, %v715
        %717 = vdwg.mxu0
        %718 = vmatprep.subr.mxu0 0.0
        %719 = vmatpush1.msra.mxu0 0.0
        %720 = vmatprep.subr.mxu0 0.0
        %721 = vmatpush1.msra.mxu0 0.0
        %722 = vmatprep.subr.mxu0 0.0
        %723 = vmatpush1.msra.mxu0 0.0
        %724 = vmatprep.subr.mxu0 0.0
        %725 = vmatpush1.msra.mxu0 0.0
        %726 = vmatprep.subr.mxu0 0.0
        %727 = vmatpush1.msra.mxu0 0.0
        %728 = vmatprep.subr.mxu0 0.0
        %729 = vmatpush1.msra.mxu0 0.0
        %730 = vmatprep.subr.mxu0 0.0
        %731 = vmatpush1.msra.mxu0 0.0
        %732 = vmatprep.subr.mxu0 0.0
        %733 = vmatpush1.msra.mxu0 0.0
        %734 = vmatprep.subr.mxu0 0.0
        %735 = vmatpush1.msra.mxu0 0.0
        %736 = vmatprep.subr.mxu0 0.0
        %737 = vmatpush1.msra.mxu0 0.0
        %738 = vmatprep.subr.mxu0 0.0
        %739 = vmatpush1.msra.mxu0 0.0
        %740 = vmatprep.subr.mxu0 0.0
        %741 = vmatpush1.msra.mxu0 0.0
        %742 = vmatprep.subr.mxu0 0.0
        %743 = vmatpush1.msra.mxu0 0.0
        %744 = vmatprep.subr.mxu0 0.0
        %745 = vmatpush1.msra.mxu0 0.0
        %746 = vmatprep.subr.mxu0 %v484
        %747 = vmatpush1.msra.mxu0 %v481
        %748 = vmatprep.subr.mxu0 %v391
        %749 = vmatpush1.msra.mxu0 %v390
        %750 = vmatprep.subr.mxu0 0.0
        %751 = vmatpush2.msra.mxu0 0.0
        %752 = vmatprep.subr.mxu0 0.0
        %753 = vmatpush2.msra.mxu0 0.0
        %754 = vmatprep.subr.mxu0 0.0
        %755 = vmatpush2.msra.mxu0 0.0
        %756 = vmatprep.subr.mxu0 0.0
        %757 = vmatpush2.msra.mxu0 0.0
        %758 = vmatprep.subr.mxu0 0.0
        %759 = vmatpush2.msra.mxu0 0.0
        %760 = vmatprep.subr.mxu0 0.0
        %761 = vmatpush2.msra.mxu0 0.0
        %762 = vmatprep.subr.mxu0 0.0
        %763 = vmatpush2.msra.mxu0 0.0
        %764 = vmatprep.subr.mxu0 0.0
        %765 = vmatpush2.msra.mxu0 0.0
        %766 = vmatprep.subr.mxu0 0.0
        %767 = vmatpush2.msra.mxu0 0.0
        %768 = vmatprep.subr.mxu0 0.0
        %769 = vmatpush2.msra.mxu0 0.0
        %770 = vmatprep.subr.mxu0 0.0
        %771 = vmatpush2.msra.mxu0 0.0
        %772 = vmatprep.subr.mxu0 0.0
        %773 = vmatpush2.msra.mxu0 0.0
        %774 = vmatprep.subr.mxu0 0.0
        %775 = vmatpush2.msra.mxu0 0.0
        %776 = vmatprep.subr.mxu0 0.0
        %777 = vmatpush2.msra.mxu0 0.0
        %778 = vmatprep.subr.mxu0 0.0
        %779 = vmatpush2.msra.mxu0 0.0
        %780 = vmatprep.subr.mxu0 0.0
        %781 = vmatpush2.msra.mxu0 0.0
        %782 = vmatprep.mubr.f32.mxu0 0.0
        %783 = vmatmul.mubr.f32.gmra.mxu0 %v465
        %v784 = vpop.f32.mrf.mxu0
        %v785 = vadd.f32 %v461, %v784
        %v786 = vpop.f32.mrf.mxu0
        %v787 = vadd.f32 %v461, %v786
        %788 = vdwg.mxu0
        %789 = vmatprep.subr.mxu0 0.0
        %790 = vmatpush1.msra.mxu0 0.0
        %791 = vmatprep.subr.mxu0 0.0
        %792 = vmatpush1.msra.mxu0 0.0
        %793 = vmatprep.subr.mxu0 0.0
        %794 = vmatpush1.msra.mxu0 0.0
        %795 = vmatprep.subr.mxu0 0.0
        %796 = vmatpush1.msra.mxu0 0.0
        %797 = vmatprep.subr.mxu0 0.0
        %798 = vmatpush1.msra.mxu0 0.0
        %799 = vmatprep.subr.mxu0 0.0
        %800 = vmatpush1.msra.mxu0 0.0
        %801 = vmatprep.subr.mxu0 0.0
        %802 = vmatpush1.msra.mxu0 0.0
        %803 = vmatprep.subr.mxu0 0.0
        %804 = vmatpush1.msra.mxu0 0.0
        %805 = vmatprep.subr.mxu0 0.0
        %806 = vmatpush1.msra.mxu0 0.0
        %807 = vmatprep.subr.mxu0 0.0
        %808 = vmatpush1.msra.mxu0 0.0
        %809 = vmatprep.subr.mxu0 0.0
        %810 = vmatpush1.msra.mxu0 0.0
        %811 = vmatprep.subr.mxu0 0.0
        %812 = vmatpush1.msra.mxu0 0.0
        %813 = vmatprep.subr.mxu0 0.0
        %814 = vmatpush1.msra.mxu0 0.0
        %815 = vmatprep.subr.mxu0 0.0
        %816 = vmatpush1.msra.mxu0 0.0
        %817 = vmatprep.subr.mxu0 %v490
        %818 = vmatpush1.msra.mxu0 %v487
        %819 = vmatprep.subr.mxu0 %v393
        %820 = vmatpush1.msra.mxu0 %v392
        %821 = vmatprep.subr.mxu0 0.0
        %822 = vmatpush2.msra.mxu0 0.0
        %823 = vmatprep.subr.mxu0 0.0
        %824 = vmatpush2.msra.mxu0 0.0
        %825 = vmatprep.subr.mxu0 0.0
        %826 = vmatpush2.msra.mxu0 0.0
        %827 = vmatprep.subr.mxu0 0.0
        %828 = vmatpush2.msra.mxu0 0.0
        %829 = vmatprep.subr.mxu0 0.0
        %830 = vmatpush2.msra.mxu0 0.0
        %831 = vmatprep.subr.mxu0 0.0
        %832 = vmatpush2.msra.mxu0 0.0
        %833 = vmatprep.subr.mxu0 0.0
        %834 = vmatpush2.msra.mxu0 0.0
        %835 = vmatprep.subr.mxu0 0.0
        %836 = vmatpush2.msra.mxu0 0.0
        %837 = vmatprep.subr.mxu0 0.0
        %838 = vmatpush2.msra.mxu0 0.0
        %839 = vmatprep.subr.mxu0 0.0
        %840 = vmatpush2.msra.mxu0 0.0
        %841 = vmatprep.subr.mxu0 0.0
        %842 = vmatpush2.msra.mxu0 0.0
        %843 = vmatprep.subr.mxu0 0.0
        %844 = vmatpush2.msra.mxu0 0.0
        %845 = vmatprep.subr.mxu0 0.0
        %846 = vmatpush2.msra.mxu0 0.0
        %847 = vmatprep.subr.mxu0 0.0
        %848 = vmatpush2.msra.mxu0 0.0
        %849 = vmatprep.subr.mxu0 0.0
        %850 = vmatpush2.msra.mxu0 0.0
        %851 = vmatprep.subr.mxu0 0.0
        %852 = vmatpush2.msra.mxu0 0.0
        %853 = vmatprep.mubr.f32.mxu0 0.0
        %854 = vmatmul.mubr.f32.gmra.mxu0 %v465
        %v855 = vpop.f32.mrf.mxu0
        %v856 = vadd.f32 %v461, %v855
        %v857 = vpop.f32.mrf.mxu0
        %v858 = vadd.f32 %v461, %v857
        %859 = vdwg.mxu0
        %860 = vmatprep.subr.mxu0 0.0
        %861 = vmatpush1.msra.mxu0 0.0
        %862 = vmatprep.subr.mxu0 0.0
        %863 = vmatpush1.msra.mxu0 0.0
        %864 = vmatprep.subr.mxu0 0.0
        %865 = vmatpush1.msra.mxu0 0.0
        %866 = vmatprep.subr.mxu0 0.0
        %867 = vmatpush1.msra.mxu0 0.0
        %868 = vmatprep.subr.mxu0 0.0
        %869 = vmatpush1.msra.mxu0 0.0
        %870 = vmatprep.subr.mxu0 0.0
        %871 = vmatpush1.msra.mxu0 0.0
        %872 = vmatprep.subr.mxu0 0.0
        %873 = vmatpush1.msra.mxu0 0.0
        %874 = vmatprep.subr.mxu0 0.0
        %875 = vmatpush1.msra.mxu0 0.0
        %876 = vmatprep.subr.mxu0 0.0
        %877 = vmatpush1.msra.mxu0 0.0
        %878 = vmatprep.subr.mxu0 0.0
        %879 = vmatpush1.msra.mxu0 0.0
        %880 = vmatprep.subr.mxu0 0.0
        %881 = vmatpush1.msra.mxu0 0.0
        %882 = vmatprep.subr.mxu0 0.0
        %883 = vmatpush1.msra.mxu0 0.0
        %884 = vmatprep.subr.mxu0 0.0
        %885 = vmatpush1.msra.mxu0 0.0
        %886 = vmatprep.subr.mxu0 0.0
        %887 = vmatpush1.msra.mxu0 0.0
        %888 = vmatprep.subr.mxu0 %v496
        %889 = vmatpush1.msra.mxu0 %v493
        %890 = vmatprep.subr.mxu0 %v395
        %891 = vmatpush1.msra.mxu0 %v394
        %892 = vmatprep.subr.mxu0 0.0
        %893 = vmatpush2.msra.mxu0 0.0
        %894 = vmatprep.subr.mxu0 0.0
        %895 = vmatpush2.msra.mxu0 0.0
        %896 = vmatprep.subr.mxu0 0.0
        %897 = vmatpush2.msra.mxu0 0.0
        %898 = vmatprep.subr.mxu0 0.0
        %899 = vmatpush2.msra.mxu0 0.0
        %900 = vmatprep.subr.mxu0 0.0
        %901 = vmatpush2.msra.mxu0 0.0
        %902 = vmatprep.subr.mxu0 0.0
        %903 = vmatpush2.msra.mxu0 0.0
        %904 = vmatprep.subr.mxu0 0.0
        %905 = vmatpush2.msra.mxu0 0.0
        %906 = vmatprep.subr.mxu0 0.0
        %907 = vmatpush2.msra.mxu0 0.0
        %908 = vmatprep.subr.mxu0 0.0
        %909 = vmatpush2.msra.mxu0 0.0
        %910 = vmatprep.subr.mxu0 0.0
        %911 = vmatpush2.msra.mxu0 0.0
        %912 = vmatprep.subr.mxu0 0.0
        %913 = vmatpush2.msra.mxu0 0.0
        %914 = vmatprep.subr.mxu0 0.0
        %915 = vmatpush2.msra.mxu0 0.0
        %916 = vmatprep.subr.mxu0 0.0
        %917 = vmatpush2.msra.mxu0 0.0
        %918 = vmatprep.subr.mxu0 0.0
        %919 = vmatpush2.msra.mxu0 0.0
        %920 = vmatprep.subr.mxu0 0.0
        %921 = vmatpush2.msra.mxu0 0.0
        %922 = vmatprep.subr.mxu0 0.0
        %923 = vmatpush2.msra.mxu0 0.0
        %924 = vmatprep.mubr.f32.mxu0 0.0
        %925 = vmatmul.mubr.f32.gmra.mxu0 %v465
        %v926 = vpop.f32.mrf.mxu0
        %v927 = vadd.f32 %v461, %v926
        %v928 = vpop.f32.mrf.mxu0
        %v929 = vadd.f32 %v461, %v928
        %930 = vdwg.mxu0
        %931 = vmatprep.subr.mxu0 0.0
        %932 = vmatpush1.msra.mxu0 0.0
        %933 = vmatprep.subr.mxu0 0.0
        %934 = vmatpush1.msra.mxu0 0.0
        %935 = vmatprep.subr.mxu0 0.0
        %936 = vmatpush1.msra.mxu0 0.0
        %937 = vmatprep.subr.mxu0 0.0
        %938 = vmatpush1.msra.mxu0 0.0
        %939 = vmatprep.subr.mxu0 0.0
        %940 = vmatpush1.msra.mxu0 0.0
        %941 = vmatprep.subr.mxu0 0.0
        %942 = vmatpush1.msra.mxu0 0.0
        %943 = vmatprep.subr.mxu0 0.0
        %944 = vmatpush1.msra.mxu0 0.0
        %945 = vmatprep.subr.mxu0 0.0
        %946 = vmatpush1.msra.mxu0 0.0
        %947 = vmatprep.subr.mxu0 0.0
        %948 = vmatpush1.msra.mxu0 0.0
        %949 = vmatprep.subr.mxu0 0.0
        %950 = vmatpush1.msra.mxu0 0.0
        %951 = vmatprep.subr.mxu0 0.0
        %952 = vmatpush1.msra.mxu0 0.0
        %953 = vmatprep.subr.mxu0 0.0
        %954 = vmatpush1.msra.mxu0 0.0
        %955 = vmatprep.subr.mxu0 0.0
        %956 = vmatpush1.msra.mxu0 0.0
        %957 = vmatprep.subr.mxu0 0.0
        %958 = vmatpush1.msra.mxu0 0.0
        %959 = vmatprep.subr.mxu0 %v502
        %960 = vmatpush1.msra.mxu0 %v499
        %961 = vmatprep.subr.mxu0 %v397
        %962 = vmatpush1.msra.mxu0 %v396
        %963 = vmatprep.subr.mxu0 0.0
        %964 = vmatpush2.msra.mxu0 0.0
        %965 = vmatprep.subr.mxu0 0.0
        %966 = vmatpush2.msra.mxu0 0.0
        %967 = vmatprep.subr.mxu0 0.0
        %968 = vmatpush2.msra.mxu0 0.0
        %969 = vmatprep.subr.mxu0 0.0
        %970 = vmatpush2.msra.mxu0 0.0
        %971 = vmatprep.subr.mxu0 0.0
        %972 = vmatpush2.msra.mxu0 0.0
        %973 = vmatprep.subr.mxu0 0.0
        %974 = vmatpush2.msra.mxu0 0.0
        %975 = vmatprep.subr.mxu0 0.0
        %976 = vmatpush2.msra.mxu0 0.0
        %977 = vmatprep.subr.mxu0 0.0
        %978 = vmatpush2.msra.mxu0 0.0
        %979 = vmatprep.subr.mxu0 0.0
        %980 = vmatpush2.msra.mxu0 0.0
        %981 = vmatprep.subr.mxu0 0.0
        %982 = vmatpush2.msra.mxu0 0.0
        %983 = vmatprep.subr.mxu0 0.0
        %984 = vmatpush2.msra.mxu0 0.0
        %985 = vmatprep.subr.mxu0 0.0
        %986 = vmatpush2.msra.mxu0 0.0
        %987 = vmatprep.subr.mxu0 0.0
        %988 = vmatpush2.msra.mxu0 0.0
        %989 = vmatprep.subr.mxu0 0.0
        %990 = vmatpush2.msra.mxu0 0.0
        %991 = vmatprep.subr.mxu0 0.0
        %992 = vmatpush2.msra.mxu0 0.0
        %993 = vmatprep.subr.mxu0 0.0
        %994 = vmatpush2.msra.mxu0 0.0
        %995 = vmatprep.mubr.f32.mxu0 0.0
        %996 = vmatmul.mubr.f32.gmra.mxu0 %v465
        %v997 = vpop.f32.mrf.mxu0
        %v998 = vadd.f32 %v461, %v997
        %v999 = vpop.f32.mrf.mxu0
        %v1000 = vadd.f32 %v461, %v999
        %1001 = vdwg.mxu0
        %1002 = vmatprep.subr.mxu0 0.0
        %1003 = vmatpush1.msra.mxu0 0.0
        %1004 = vmatprep.subr.mxu0 0.0
        %1005 = vmatpush1.msra.mxu0 0.0
        %1006 = vmatprep.subr.mxu0 0.0
        %1007 = vmatpush1.msra.mxu0 0.0
        %1008 = vmatprep.subr.mxu0 0.0
        %1009 = vmatpush1.msra.mxu0 0.0
        %1010 = vmatprep.subr.mxu0 0.0
        %1011 = vmatpush1.msra.mxu0 0.0
        %1012 = vmatprep.subr.mxu0 0.0
        %1013 = vmatpush1.msra.mxu0 0.0
        %1014 = vmatprep.subr.mxu0 0.0
        %1015 = vmatpush1.msra.mxu0 0.0
        %1016 = vmatprep.subr.mxu0 0.0
        %1017 = vmatpush1.msra.mxu0 0.0
        %1018 = vmatprep.subr.mxu0 0.0
        %1019 = vmatpush1.msra.mxu0 0.0
        %1020 = vmatprep.subr.mxu0 0.0
        %1021 = vmatpush1.msra.mxu0 0.0
        %1022 = vmatprep.subr.mxu0 0.0
        %1023 = vmatpush1.msra.mxu0 0.0
        %1024 = vmatprep.subr.mxu0 0.0
        %1025 = vmatpush1.msra.mxu0 0.0
        %1026 = vmatprep.subr.mxu0 0.0
        %1027 = vmatpush1.msra.mxu0 0.0
        %1028 = vmatprep.subr.mxu0 0.0
        %1029 = vmatpush1.msra.mxu0 0.0
        %1030 = vmatprep.subr.mxu0 %v508
        %1031 = vmatpush1.msra.mxu0 %v505
        %1032 = vmatprep.subr.mxu0 %v399
        %1033 = vmatpush1.msra.mxu0 %v398
        %1034 = vmatprep.subr.mxu0 0.0
        %1035 = vmatpush2.msra.mxu0 0.0
        %1036 = vmatprep.subr.mxu0 0.0
        %1037 = vmatpush2.msra.mxu0 0.0
        %1038 = vmatprep.subr.mxu0 0.0
        %1039 = vmatpush2.msra.mxu0 0.0
        %1040 = vmatprep.subr.mxu0 0.0
        %1041 = vmatpush2.msra.mxu0 0.0
        %1042 = vmatprep.subr.mxu0 0.0
        %1043 = vmatpush2.msra.mxu0 0.0
        %1044 = vmatprep.subr.mxu0 0.0
        %1045 = vmatpush2.msra.mxu0 0.0
        %1046 = vmatprep.subr.mxu0 0.0
        %1047 = vmatpush2.msra.mxu0 0.0
        %1048 = vmatprep.subr.mxu0 0.0
        %1049 = vmatpush2.msra.mxu0 0.0
        %1050 = vmatprep.subr.mxu0 0.0
        %1051 = vmatpush2.msra.mxu0 0.0
        %1052 = vmatprep.subr.mxu0 0.0
        %1053 = vmatpush2.msra.mxu0 0.0
        %1054 = vmatprep.subr.mxu0 0.0
        %1055 = vmatpush2.msra.mxu0 0.0
        %1056 = vmatprep.subr.mxu0 0.0
        %1057 = vmatpush2.msra.mxu0 0.0
        %1058 = vmatprep.subr.mxu0 0.0
        %1059 = vmatpush2.msra.mxu0 0.0
        %1060 = vmatprep.subr.mxu0 0.0
        %1061 = vmatpush2.msra.mxu0 0.0
        %1062 = vmatprep.subr.mxu0 0.0
        %1063 = vmatpush2.msra.mxu0 0.0
        %1064 = vmatprep.subr.mxu0 0.0
        %1065 = vmatpush2.msra.mxu0 0.0
        %1066 = vmatprep.mubr.f32.mxu0 0.0
        %1067 = vmatmul.mubr.f32.gmra.mxu0 %v465
        %v1068 = vpop.f32.mrf.mxu0
        %v1069 = vadd.f32 %v461, %v1068
        %v1070 = vpop.f32.mrf.mxu0
        %v1071 = vadd.f32 %v461, %v1070
        %1072 = vdwg.mxu0
        %1073 = vmatprep.subr.mxu0 0.0
        %1074 = vmatpush1.msra.mxu0 0.0
        %1075 = vmatprep.subr.mxu0 0.0
        %1076 = vmatpush1.msra.mxu0 0.0
        %1077 = vmatprep.subr.mxu0 0.0
        %1078 = vmatpush1.msra.mxu0 0.0
        %1079 = vmatprep.subr.mxu0 0.0
        %1080 = vmatpush1.msra.mxu0 0.0
        %1081 = vmatprep.subr.mxu0 0.0
        %1082 = vmatpush1.msra.mxu0 0.0
        %1083 = vmatprep.subr.mxu0 0.0
        %1084 = vmatpush1.msra.mxu0 0.0
        %1085 = vmatprep.subr.mxu0 0.0
        %1086 = vmatpush1.msra.mxu0 0.0
        %1087 = vmatprep.subr.mxu0 0.0
        %1088 = vmatpush1.msra.mxu0 0.0
        %1089 = vmatprep.subr.mxu0 0.0
        %1090 = vmatpush1.msra.mxu0 0.0
        %1091 = vmatprep.subr.mxu0 0.0
        %1092 = vmatpush1.msra.mxu0 0.0
        %1093 = vmatprep.subr.mxu0 0.0
        %1094 = vmatpush1.msra.mxu0 0.0
        %1095 = vmatprep.subr.mxu0 0.0
        %1096 = vmatpush1.msra.mxu0 0.0
        %1097 = vmatprep.subr.mxu0 0.0
        %1098 = vmatpush1.msra.mxu0 0.0
        %1099 = vmatprep.subr.mxu0 0.0
        %1100 = vmatpush1.msra.mxu0 0.0
        %1101 = vmatprep.subr.mxu0 %v514
        %1102 = vmatpush1.msra.mxu0 %v511
        %1103 = vmatprep.subr.mxu0 %v401
        %1104 = vmatpush1.msra.mxu0 %v400
        %1105 = vmatprep.subr.mxu0 0.0
        %1106 = vmatpush2.msra.mxu0 0.0
        %1107 = vmatprep.subr.mxu0 0.0
        %1108 = vmatpush2.msra.mxu0 0.0
        %1109 = vmatprep.subr.mxu0 0.0
        %1110 = vmatpush2.msra.mxu0 0.0
        %1111 = vmatprep.subr.mxu0 0.0
        %1112 = vmatpush2.msra.mxu0 0.0
        %1113 = vmatprep.subr.mxu0 0.0
        %1114 = vmatpush2.msra.mxu0 0.0
        %1115 = vmatprep.subr.mxu0 0.0
        %1116 = vmatpush2.msra.mxu0 0.0
        %1117 = vmatprep.subr.mxu0 0.0
        %1118 = vmatpush2.msra.mxu0 0.0
        %1119 = vmatprep.subr.mxu0 0.0
        %1120 = vmatpush2.msra.mxu0 0.0
        %1121 = vmatprep.subr.mxu0 0.0
        %1122 = vmatpush2.msra.mxu0 0.0
        %1123 = vmatprep.subr.mxu0 0.0
        %1124 = vmatpush2.msra.mxu0 0.0
        %1125 = vmatprep.subr.mxu0 0.0
        %1126 = vmatpush2.msra.mxu0 0.0
        %1127 = vmatprep.subr.mxu0 0.0
        %1128 = vmatpush2.msra.mxu0 0.0
        %1129 = vmatprep.subr.mxu0 0.0
        %1130 = vmatpush2.msra.mxu0 0.0
        %1131 = vmatprep.subr.mxu0 0.0
        %1132 = vmatpush2.msra.mxu0 0.0
        %1133 = vmatprep.subr.mxu0 0.0
        %1134 = vmatpush2.msra.mxu0 0.0
        %1135 = vmatprep.subr.mxu0 0.0
        %1136 = vmatpush2.msra.mxu0 0.0
        %1137 = vmatprep.mubr.f32.mxu0 0.0
        %1138 = vmatmul.mubr.f32.gmra.mxu0 %v465
        %v1139 = vpop.f32.mrf.mxu0
        %v1140 = vadd.f32 %v461, %v1139
        %v1141 = vpop.f32.mrf.mxu0
        %v1142 = vadd.f32 %v461, %v1141
        %1143 = vdwg.mxu0
        %1144 = vmatprep.subr.mxu0 0.0
        %1145 = vmatpush1.msra.mxu0 0.0
        %1146 = vmatprep.subr.mxu0 0.0
        %1147 = vmatpush1.msra.mxu0 0.0
        %1148 = vmatprep.subr.mxu0 0.0
        %1149 = vmatpush1.msra.mxu0 0.0
        %1150 = vmatprep.subr.mxu0 0.0
        %1151 = vmatpush1.msra.mxu0 0.0
        %1152 = vmatprep.subr.mxu0 0.0
        %1153 = vmatpush1.msra.mxu0 0.0
        %1154 = vmatprep.subr.mxu0 0.0
        %1155 = vmatpush1.msra.mxu0 0.0
        %1156 = vmatprep.subr.mxu0 0.0
        %1157 = vmatpush1.msra.mxu0 0.0
        %1158 = vmatprep.subr.mxu0 0.0
        %1159 = vmatpush1.msra.mxu0 0.0
        %1160 = vmatprep.subr.mxu0 0.0
        %1161 = vmatpush1.msra.mxu0 0.0
        %1162 = vmatprep.subr.mxu0 0.0
        %1163 = vmatpush1.msra.mxu0 0.0
        %1164 = vmatprep.subr.mxu0 0.0
        %1165 = vmatpush1.msra.mxu0 0.0
        %1166 = vmatprep.subr.mxu0 0.0
        %1167 = vmatpush1.msra.mxu0 0.0
        %1168 = vmatprep.subr.mxu0 0.0
        %1169 = vmatpush1.msra.mxu0 0.0
        %1170 = vmatprep.subr.mxu0 0.0
        %1171 = vmatpush1.msra.mxu0 0.0
        %1172 = vmatprep.subr.mxu0 %v520
        %1173 = vmatpush1.msra.mxu0 %v517
        %1174 = vmatprep.subr.mxu0 %v403
        %1175 = vmatpush1.msra.mxu0 %v402
        %1176 = vmatprep.subr.mxu0 0.0
        %1177 = vmatpush2.msra.mxu0 0.0
        %1178 = vmatprep.subr.mxu0 0.0
        %1179 = vmatpush2.msra.mxu0 0.0
        %1180 = vmatprep.subr.mxu0 0.0
        %1181 = vmatpush2.msra.mxu0 0.0
        %1182 = vmatprep.subr.mxu0 0.0
        %1183 = vmatpush2.msra.mxu0 0.0
        %1184 = vmatprep.subr.mxu0 0.0
        %1185 = vmatpush2.msra.mxu0 0.0
        %1186 = vmatprep.subr.mxu0 0.0
        %1187 = vmatpush2.msra.mxu0 0.0
        %1188 = vmatprep.subr.mxu0 0.0
        %1189 = vmatpush2.msra.mxu0 0.0
        %1190 = vmatprep.subr.mxu0 0.0
        %1191 = vmatpush2.msra.mxu0 0.0
        %1192 = vmatprep.subr.mxu0 0.0
        %1193 = vmatpush2.msra.mxu0 0.0
        %1194 = vmatprep.subr.mxu0 0.0
        %1195 = vmatpush2.msra.mxu0 0.0
        %1196 = vmatprep.subr.mxu0 0.0
        %1197 = vmatpush2.msra.mxu0 0.0
        %1198 = vmatprep.subr.mxu0 0.0
        %1199 = vmatpush2.msra.mxu0 0.0
        %1200 = vmatprep.subr.mxu0 0.0
        %1201 = vmatpush2.msra.mxu0 0.0
        %1202 = vmatprep.subr.mxu0 0.0
        %1203 = vmatpush2.msra.mxu0 0.0
        %1204 = vmatprep.subr.mxu0 0.0
        %1205 = vmatpush2.msra.mxu0 0.0
        %1206 = vmatprep.subr.mxu0 0.0
        %1207 = vmatpush2.msra.mxu0 0.0
        %1208 = vmatprep.mubr.f32.mxu0 0.0
        %1209 = vmatmul.mubr.f32.gmra.mxu0 %v465
        %v1210 = vpop.f32.mrf.mxu0
        %v1211 = vadd.f32 %v461, %v1210
        %v1212 = vpop.f32.mrf.mxu0
        %v1213 = vadd.f32 %v461, %v1212
        %1214 = vdwg.mxu0
        %1215 = vmatprep.subr.mxu0 0.0
        %1216 = vmatpush1.msra.mxu0 0.0
        %1217 = vmatprep.subr.mxu0 0.0
        %1218 = vmatpush1.msra.mxu0 0.0
        %1219 = vmatprep.subr.mxu0 0.0
        %1220 = vmatpush1.msra.mxu0 0.0
        %1221 = vmatprep.subr.mxu0 0.0
        %1222 = vmatpush1.msra.mxu0 0.0
        %1223 = vmatprep.subr.mxu0 0.0
        %1224 = vmatpush1.msra.mxu0 0.0
        %1225 = vmatprep.subr.mxu0 0.0
        %1226 = vmatpush1.msra.mxu0 0.0
        %1227 = vmatprep.subr.mxu0 0.0
        %1228 = vmatpush1.msra.mxu0 0.0
        %1229 = vmatprep.subr.mxu0 0.0
        %1230 = vmatpush1.msra.mxu0 0.0
        %1231 = vmatprep.subr.mxu0 0.0
        %1232 = vmatpush1.msra.mxu0 0.0
        %1233 = vmatprep.subr.mxu0 0.0
        %1234 = vmatpush1.msra.mxu0 0.0
        %1235 = vmatprep.subr.mxu0 0.0
        %1236 = vmatpush1.msra.mxu0 0.0
        %1237 = vmatprep.subr.mxu0 0.0
        %1238 = vmatpush1.msra.mxu0 0.0
        %1239 = vmatprep.subr.mxu0 0.0
        %1240 = vmatpush1.msra.mxu0 0.0
        %1241 = vmatprep.subr.mxu0 0.0
        %1242 = vmatpush1.msra.mxu0 0.0
        %1243 = vmatprep.subr.mxu0 %v526
        %1244 = vmatpush1.msra.mxu0 %v523
        %1245 = vmatprep.subr.mxu0 %v405
        %1246 = vmatpush1.msra.mxu0 %v404
        %1247 = vmatprep.subr.mxu0 0.0
        %1248 = vmatpush2.msra.mxu0 0.0
        %1249 = vmatprep.subr.mxu0 0.0
        %1250 = vmatpush2.msra.mxu0 0.0
        %1251 = vmatprep.subr.mxu0 0.0
        %1252 = vmatpush2.msra.mxu0 0.0
        %1253 = vmatprep.subr.mxu0 0.0
        %1254 = vmatpush2.msra.mxu0 0.0
        %1255 = vmatprep.subr.mxu0 0.0
        %1256 = vmatpush2.msra.mxu0 0.0
        %1257 = vmatprep.subr.mxu0 0.0
        %1258 = vmatpush2.msra.mxu0 0.0
        %1259 = vmatprep.subr.mxu0 0.0
        %1260 = vmatpush2.msra.mxu0 0.0
        %1261 = vmatprep.subr.mxu0 0.0
        %1262 = vmatpush2.msra.mxu0 0.0
        %1263 = vmatprep.subr.mxu0 0.0
        %1264 = vmatpush2.msra.mxu0 0.0
        %1265 = vmatprep.subr.mxu0 0.0
        %1266 = vmatpush2.msra.mxu0 0.0
        %1267 = vmatprep.subr.mxu0 0.0
        %1268 = vmatpush2.msra.mxu0 0.0
        %1269 = vmatprep.subr.mxu0 0.0
        %1270 = vmatpush2.msra.mxu0 0.0
        %1271 = vmatprep.subr.mxu0 0.0
        %1272 = vmatpush2.msra.mxu0 0.0
        %1273 = vmatprep.subr.mxu0 0.0
        %1274 = vmatpush2.msra.mxu0 0.0
        %1275 = vmatprep.subr.mxu0 0.0
        %1276 = vmatpush2.msra.mxu0 0.0
        %1277 = vmatprep.subr.mxu0 0.0
        %1278 = vmatpush2.msra.mxu0 0.0
        %1279 = vmatprep.mubr.f32.mxu0 0.0
        %1280 = vmatmul.mubr.f32.gmra.mxu0 %v465
        %v1281 = vpop.f32.mrf.mxu0
        %v1282 = vadd.f32 %v461, %v1281
        %v1283 = vpop.f32.mrf.mxu0
        %v1284 = vadd.f32 %v461, %v1283
        %1285 = vdwg.mxu0
        %1286 = vmatprep.subr.mxu0 0.0
        %1287 = vmatpush1.msra.mxu0 0.0
        %1288 = vmatprep.subr.mxu0 0.0
        %1289 = vmatpush1.msra.mxu0 0.0
        %1290 = vmatprep.subr.mxu0 0.0
        %1291 = vmatpush1.msra.mxu0 0.0
        %1292 = vmatprep.subr.mxu0 0.0
        %1293 = vmatpush1.msra.mxu0 0.0
        %1294 = vmatprep.subr.mxu0 0.0
        %1295 = vmatpush1.msra.mxu0 0.0
        %1296 = vmatprep.subr.mxu0 0.0
        %1297 = vmatpush1.msra.mxu0 0.0
        %1298 = vmatprep.subr.mxu0 0.0
        %1299 = vmatpush1.msra.mxu0 0.0
        %1300 = vmatprep.subr.mxu0 0.0
        %1301 = vmatpush1.msra.mxu0 0.0
        %1302 = vmatprep.subr.mxu0 0.0
        %1303 = vmatpush1.msra.mxu0 0.0
        %1304 = vmatprep.subr.mxu0 0.0
        %1305 = vmatpush1.msra.mxu0 0.0
        %1306 = vmatprep.subr.mxu0 0.0
        %1307 = vmatpush1.msra.mxu0 0.0
        %1308 = vmatprep.subr.mxu0 0.0
        %1309 = vmatpush1.msra.mxu0 0.0
        %1310 = vmatprep.subr.mxu0 0.0
        %1311 = vmatpush1.msra.mxu0 0.0
        %1312 = vmatprep.subr.mxu0 0.0
        %1313 = vmatpush1.msra.mxu0 0.0
        %1314 = vmatprep.subr.mxu0 %v532
        %1315 = vmatpush1.msra.mxu0 %v529
        %1316 = vmatprep.subr.mxu0 %v407
        %1317 = vmatpush1.msra.mxu0 %v406
        %1318 = vmatprep.subr.mxu0 0.0
        %1319 = vmatpush2.msra.mxu0 0.0
        %1320 = vmatprep.subr.mxu0 0.0
        %1321 = vmatpush2.msra.mxu0 0.0
        %1322 = vmatprep.subr.mxu0 0.0
        %1323 = vmatpush2.msra.mxu0 0.0
        %1324 = vmatprep.subr.mxu0 0.0
        %1325 = vmatpush2.msra.mxu0 0.0
        %1326 = vmatprep.subr.mxu0 0.0
        %1327 = vmatpush2.msra.mxu0 0.0
        %1328 = vmatprep.subr.mxu0 0.0
        %1329 = vmatpush2.msra.mxu0 0.0
        %1330 = vmatprep.subr.mxu0 0.0
        %1331 = vmatpush2.msra.mxu0 0.0
        %1332 = vmatprep.subr.mxu0 0.0
        %1333 = vmatpush2.msra.mxu0 0.0
        %1334 = vmatprep.subr.mxu0 0.0
        %1335 = vmatpush2.msra.mxu0 0.0
        %1336 = vmatprep.subr.mxu0 0.0
        %1337 = vmatpush2.msra.mxu0 0.0
        %1338 = vmatprep.subr.mxu0 0.0
        %1339 = vmatpush2.msra.mxu0 0.0
        %1340 = vmatprep.subr.mxu0 0.0
        %1341 = vmatpush2.msra.mxu0 0.0
        %1342 = vmatprep.subr.mxu0 0.0
        %1343 = vmatpush2.msra.mxu0 0.0
        %1344 = vmatprep.subr.mxu0 0.0
        %1345 = vmatpush2.msra.mxu0 0.0
        %1346 = vmatprep.subr.mxu0 0.0
        %1347 = vmatpush2.msra.mxu0 0.0
        %1348 = vmatprep.subr.mxu0 0.0
        %1349 = vmatpush2.msra.mxu0 0.0
        %1350 = vmatprep.mubr.f32.mxu0 0.0
        %1351 = vmatmul.mubr.f32.gmra.mxu0 %v465
        %v1352 = vpop.f32.mrf.mxu0
        %v1353 = vadd.f32 %v461, %v1352
        %v1354 = vpop.f32.mrf.mxu0
        %v1355 = vadd.f32 %v461, %v1354
        %1356 = vdwg.mxu0
        %1357 = vmatprep.subr.mxu0 0.0
        %1358 = vmatpush1.msra.mxu0 0.0
        %1359 = vmatprep.subr.mxu0 0.0
        %1360 = vmatpush1.msra.mxu0 0.0
        %1361 = vmatprep.subr.mxu0 0.0
        %1362 = vmatpush1.msra.mxu0 0.0
        %1363 = vmatprep.subr.mxu0 0.0
        %1364 = vmatpush1.msra.mxu0 0.0
        %1365 = vmatprep.subr.mxu0 0.0
        %1366 = vmatpush1.msra.mxu0 0.0
        %1367 = vmatprep.subr.mxu0 0.0
        %1368 = vmatpush1.msra.mxu0 0.0
        %1369 = vmatprep.subr.mxu0 0.0
        %1370 = vmatpush1.msra.mxu0 0.0
        %1371 = vmatprep.subr.mxu0 0.0
        %1372 = vmatpush1.msra.mxu0 0.0
        %1373 = vmatprep.subr.mxu0 0.0
        %1374 = vmatpush1.msra.mxu0 0.0
        %1375 = vmatprep.subr.mxu0 0.0
        %1376 = vmatpush1.msra.mxu0 0.0
        %1377 = vmatprep.subr.mxu0 0.0
        %1378 = vmatpush1.msra.mxu0 0.0
        %1379 = vmatprep.subr.mxu0 0.0
        %1380 = vmatpush1.msra.mxu0 0.0
        %1381 = vmatprep.subr.mxu0 0.0
        %1382 = vmatpush1.msra.mxu0 0.0
        %1383 = vmatprep.subr.mxu0 0.0
        %1384 = vmatpush1.msra.mxu0 0.0
        %1385 = vmatprep.subr.mxu0 %v538
        %1386 = vmatpush1.msra.mxu0 %v535
        %1387 = vmatprep.subr.mxu0 %v409
        %1388 = vmatpush1.msra.mxu0 %v408
        %1389 = vmatprep.subr.mxu0 0.0
        %1390 = vmatpush2.msra.mxu0 0.0
        %1391 = vmatprep.subr.mxu0 0.0
        %1392 = vmatpush2.msra.mxu0 0.0
        %1393 = vmatprep.subr.mxu0 0.0
        %1394 = vmatpush2.msra.mxu0 0.0
        %1395 = vmatprep.subr.mxu0 0.0
        %1396 = vmatpush2.msra.mxu0 0.0
        %1397 = vmatprep.subr.mxu0 0.0
        %1398 = vmatpush2.msra.mxu0 0.0
        %1399 = vmatprep.subr.mxu0 0.0
        %1400 = vmatpush2.msra.mxu0 0.0
        %1401 = vmatprep.subr.mxu0 0.0
        %1402 = vmatpush2.msra.mxu0 0.0
        %1403 = vmatprep.subr.mxu0 0.0
        %1404 = vmatpush2.msra.mxu0 0.0
        %1405 = vmatprep.subr.mxu0 0.0
        %1406 = vmatpush2.msra.mxu0 0.0
        %1407 = vmatprep.subr.mxu0 0.0
        %1408 = vmatpush2.msra.mxu0 0.0
        %1409 = vmatprep.subr.mxu0 0.0
        %1410 = vmatpush2.msra.mxu0 0.0
        %1411 = vmatprep.subr.mxu0 0.0
        %1412 = vmatpush2.msra.mxu0 0.0
        %1413 = vmatprep.subr.mxu0 0.0
        %1414 = vmatpush2.msra.mxu0 0.0
        %1415 = vmatprep.subr.mxu0 0.0
        %1416 = vmatpush2.msra.mxu0 0.0
        %1417 = vmatprep.subr.mxu0 0.0
        %1418 = vmatpush2.msra.mxu0 0.0
        %1419 = vmatprep.subr.mxu0 0.0
        %1420 = vmatpush2.msra.mxu0 0.0
        %1421 = vmatprep.mubr.f32.mxu0 0.0
        %1422 = vmatmul.mubr.f32.gmra.mxu0 %v465
        %v1423 = vpop.f32.mrf.mxu0
        %v1424 = vadd.f32 %v461, %v1423
        %v1425 = vpop.f32.mrf.mxu0
        %v1426 = vadd.f32 %v461, %v1425
        %1427 = vdwg.mxu0
        %1428 = vmatprep.subr.mxu0 0.0
        %1429 = vmatpush1.msra.mxu0 0.0
        %1430 = vmatprep.subr.mxu0 0.0
        %1431 = vmatpush1.msra.mxu0 0.0
        %1432 = vmatprep.subr.mxu0 0.0
        %1433 = vmatpush1.msra.mxu0 0.0
        %1434 = vmatprep.subr.mxu0 0.0
        %1435 = vmatpush1.msra.mxu0 0.0
        %1436 = vmatprep.subr.mxu0 0.0
        %1437 = vmatpush1.msra.mxu0 0.0
        %1438 = vmatprep.subr.mxu0 0.0
        %1439 = vmatpush1.msra.mxu0 0.0
        %1440 = vmatprep.subr.mxu0 0.0
        %1441 = vmatpush1.msra.mxu0 0.0
        %1442 = vmatprep.subr.mxu0 0.0
        %1443 = vmatpush1.msra.mxu0 0.0
        %1444 = vmatprep.subr.mxu0 0.0
        %1445 = vmatpush1.msra.mxu0 0.0
        %1446 = vmatprep.subr.mxu0 0.0
        %1447 = vmatpush1.msra.mxu0 0.0
        %1448 = vmatprep.subr.mxu0 0.0
        %1449 = vmatpush1.msra.mxu0 0.0
        %1450 = vmatprep.subr.mxu0 0.0
        %1451 = vmatpush1.msra.mxu0 0.0
        %1452 = vmatprep.subr.mxu0 0.0
        %1453 = vmatpush1.msra.mxu0 0.0
        %1454 = vmatprep.subr.mxu0 0.0
        %1455 = vmatpush1.msra.mxu0 0.0
        %1456 = vmatprep.subr.mxu0 %v544
        %1457 = vmatpush1.msra.mxu0 %v541
        %1458 = vmatprep.subr.mxu0 %v411
        %1459 = vmatpush1.msra.mxu0 %v410
        %1460 = vmatprep.subr.mxu0 0.0
        %1461 = vmatpush2.msra.mxu0 0.0
        %1462 = vmatprep.subr.mxu0 0.0
        %1463 = vmatpush2.msra.mxu0 0.0
        %1464 = vmatprep.subr.mxu0 0.0
        %1465 = vmatpush2.msra.mxu0 0.0
        %1466 = vmatprep.subr.mxu0 0.0
        %1467 = vmatpush2.msra.mxu0 0.0
        %1468 = vmatprep.subr.mxu0 0.0
        %1469 = vmatpush2.msra.mxu0 0.0
        %1470 = vmatprep.subr.mxu0 0.0
        %1471 = vmatpush2.msra.mxu0 0.0
        %1472 = vmatprep.subr.mxu0 0.0
        %1473 = vmatpush2.msra.mxu0 0.0
        %1474 = vmatprep.subr.mxu0 0.0
        %1475 = vmatpush2.msra.mxu0 0.0
        %1476 = vmatprep.subr.mxu0 0.0
        %1477 = vmatpush2.msra.mxu0 0.0
        %1478 = vmatprep.subr.mxu0 0.0
        %1479 = vmatpush2.msra.mxu0 0.0
        %1480 = vmatprep.subr.mxu0 0.0
        %1481 = vmatpush2.msra.mxu0 0.0
        %1482 = vmatprep.subr.mxu0 0.0
        %1483 = vmatpush2.msra.mxu0 0.0
        %1484 = vmatprep.subr.mxu0 0.0
        %1485 = vmatpush2.msra.mxu0 0.0
        %1486 = vmatprep.subr.mxu0 0.0
        %1487 = vmatpush2.msra.mxu0 0.0
        %1488 = vmatprep.subr.mxu0 0.0
        %1489 = vmatpush2.msra.mxu0 0.0
        %1490 = vmatprep.subr.mxu0 0.0
        %1491 = vmatpush2.msra.mxu0 0.0
        %1492 = vmatprep.mubr.f32.mxu0 0.0
        %1493 = vmatmul.mubr.f32.gmra.mxu0 %v465
        %v1494 = vpop.f32.mrf.mxu0
        %v1495 = vadd.f32 %v461, %v1494
        %v1496 = vpop.f32.mrf.mxu0
        %v1497 = vadd.f32 %v461, %v1496
        %1498 = vdwg.mxu0
        %1499 = vmatprep.subr.mxu0 0.0
        %1500 = vmatpush1.msra.mxu0 0.0
        %1501 = vmatprep.subr.mxu0 0.0
        %1502 = vmatpush1.msra.mxu0 0.0
        %1503 = vmatprep.subr.mxu0 0.0
        %1504 = vmatpush1.msra.mxu0 0.0
        %1505 = vmatprep.subr.mxu0 0.0
        %1506 = vmatpush1.msra.mxu0 0.0
        %1507 = vmatprep.subr.mxu0 0.0
        %1508 = vmatpush1.msra.mxu0 0.0
        %1509 = vmatprep.subr.mxu0 0.0
        %1510 = vmatpush1.msra.mxu0 0.0
        %1511 = vmatprep.subr.mxu0 0.0
        %1512 = vmatpush1.msra.mxu0 0.0
        %1513 = vmatprep.subr.mxu0 0.0
        %1514 = vmatpush1.msra.mxu0 0.0
        %1515 = vmatprep.subr.mxu0 0.0
        %1516 = vmatpush1.msra.mxu0 0.0
        %1517 = vmatprep.subr.mxu0 0.0
        %1518 = vmatpush1.msra.mxu0 0.0
        %1519 = vmatprep.subr.mxu0 0.0
        %1520 = vmatpush1.msra.mxu0 0.0
        %1521 = vmatprep.subr.mxu0 0.0
        %1522 = vmatpush1.msra.mxu0 0.0
        %1523 = vmatprep.subr.mxu0 0.0
        %1524 = vmatpush1.msra.mxu0 0.0
        %1525 = vmatprep.subr.mxu0 0.0
        %1526 = vmatpush1.msra.mxu0 0.0
        %1527 = vmatprep.subr.mxu0 %v550
        %1528 = vmatpush1.msra.mxu0 %v547
        %1529 = vmatprep.subr.mxu0 %v413
        %1530 = vmatpush1.msra.mxu0 %v412
        %1531 = vmatprep.subr.mxu0 0.0
        %1532 = vmatpush2.msra.mxu0 0.0
        %1533 = vmatprep.subr.mxu0 0.0
        %1534 = vmatpush2.msra.mxu0 0.0
        %1535 = vmatprep.subr.mxu0 0.0
        %1536 = vmatpush2.msra.mxu0 0.0
        %1537 = vmatprep.subr.mxu0 0.0
        %1538 = vmatpush2.msra.mxu0 0.0
        %1539 = vmatprep.subr.mxu0 0.0
        %1540 = vmatpush2.msra.mxu0 0.0
        %1541 = vmatprep.subr.mxu0 0.0
        %1542 = vmatpush2.msra.mxu0 0.0
        %1543 = vmatprep.subr.mxu0 0.0
        %1544 = vmatpush2.msra.mxu0 0.0
        %1545 = vmatprep.subr.mxu0 0.0
        %1546 = vmatpush2.msra.mxu0 0.0
        %1547 = vmatprep.subr.mxu0 0.0
        %1548 = vmatpush2.msra.mxu0 0.0
        %1549 = vmatprep.subr.mxu0 0.0
        %1550 = vmatpush2.msra.mxu0 0.0
        %1551 = vmatprep.subr.mxu0 0.0
        %1552 = vmatpush2.msra.mxu0 0.0
        %1553 = vmatprep.subr.mxu0 0.0
        %1554 = vmatpush2.msra.mxu0 0.0
        %1555 = vmatprep.subr.mxu0 0.0
        %1556 = vmatpush2.msra.mxu0 0.0
        %1557 = vmatprep.subr.mxu0 0.0
        %1558 = vmatpush2.msra.mxu0 0.0
        %1559 = vmatprep.subr.mxu0 0.0
        %1560 = vmatpush2.msra.mxu0 0.0
        %1561 = vmatprep.subr.mxu0 0.0
        %1562 = vmatpush2.msra.mxu0 0.0
        %1563 = vmatprep.mubr.f32.mxu0 0.0
        %1564 = vmatmul.mubr.f32.gmra.mxu0 %v465
        %v1565 = vpop.f32.mrf.mxu0
        %v1566 = vadd.f32 %v461, %v1565
        %v1567 = vpop.f32.mrf.mxu0
        %v1568 = vadd.f32 %v461, %v1567
        %1569 = vdwg.mxu0
        %1570 = vmatprep.subr.mxu0 0.0
        %1571 = vmatpush1.msra.mxu0 0.0
        %1572 = vmatprep.subr.mxu0 0.0
        %1573 = vmatpush1.msra.mxu0 0.0
        %1574 = vmatprep.subr.mxu0 0.0
        %1575 = vmatpush1.msra.mxu0 0.0
        %1576 = vmatprep.subr.mxu0 0.0
        %1577 = vmatpush1.msra.mxu0 0.0
        %1578 = vmatprep.subr.mxu0 0.0
        %1579 = vmatpush1.msra.mxu0 0.0
        %1580 = vmatprep.subr.mxu0 0.0
        %1581 = vmatpush1.msra.mxu0 0.0
        %1582 = vmatprep.subr.mxu0 0.0
        %1583 = vmatpush1.msra.mxu0 0.0
        %1584 = vmatprep.subr.mxu0 0.0
        %1585 = vmatpush1.msra.mxu0 0.0
        %1586 = vmatprep.subr.mxu0 0.0
        %1587 = vmatpush1.msra.mxu0 0.0
        %1588 = vmatprep.subr.mxu0 0.0
        %1589 = vmatpush1.msra.mxu0 0.0
        %1590 = vmatprep.subr.mxu0 0.0
        %1591 = vmatpush1.msra.mxu0 0.0
        %1592 = vmatprep.subr.mxu0 0.0
        %1593 = vmatpush1.msra.mxu0 0.0
        %1594 = vmatprep.subr.mxu0 0.0
        %1595 = vmatpush1.msra.mxu0 0.0
        %1596 = vmatprep.subr.mxu0 0.0
        %1597 = vmatpush1.msra.mxu0 0.0
        %1598 = vmatprep.subr.mxu0 %v556
        %1599 = vmatpush1.msra.mxu0 %v553
        %1600 = vmatprep.subr.mxu0 %v415
        %1601 = vmatpush1.msra.mxu0 %v414
        %1602 = vmatprep.subr.mxu0 0.0
        %1603 = vmatpush2.msra.mxu0 0.0
        %1604 = vmatprep.subr.mxu0 0.0
        %1605 = vmatpush2.msra.mxu0 0.0
        %1606 = vmatprep.subr.mxu0 0.0
        %1607 = vmatpush2.msra.mxu0 0.0
        %1608 = vmatprep.subr.mxu0 0.0
        %1609 = vmatpush2.msra.mxu0 0.0
        %1610 = vmatprep.subr.mxu0 0.0
        %1611 = vmatpush2.msra.mxu0 0.0
        %1612 = vmatprep.subr.mxu0 0.0
        %1613 = vmatpush2.msra.mxu0 0.0
        %1614 = vmatprep.subr.mxu0 0.0
        %1615 = vmatpush2.msra.mxu0 0.0
        %1616 = vmatprep.subr.mxu0 0.0
        %1617 = vmatpush2.msra.mxu0 0.0
        %1618 = vmatprep.subr.mxu0 0.0
        %1619 = vmatpush2.msra.mxu0 0.0
        %1620 = vmatprep.subr.mxu0 0.0
        %1621 = vmatpush2.msra.mxu0 0.0
        %1622 = vmatprep.subr.mxu0 0.0
        %1623 = vmatpush2.msra.mxu0 0.0
        %1624 = vmatprep.subr.mxu0 0.0
        %1625 = vmatpush2.msra.mxu0 0.0
        %1626 = vmatprep.subr.mxu0 0.0
        %1627 = vmatpush2.msra.mxu0 0.0
        %1628 = vmatprep.subr.mxu0 0.0
        %1629 = vmatpush2.msra.mxu0 0.0
        %1630 = vmatprep.subr.mxu0 0.0
        %1631 = vmatpush2.msra.mxu0 0.0
        %1632 = vmatprep.subr.mxu0 0.0
        %1633 = vmatpush2.msra.mxu0 0.0
        %1634 = vmatprep.mubr.f32.mxu0 0.0
        %1635 = vmatmul.mubr.f32.gmra.mxu0 %v465
        %v1636 = vpop.f32.mrf.mxu0
        %v1637 = vadd.f32 %v461, %v1636
        %v1638 = vpop.f32.mrf.mxu0
        %v1639 = vadd.f32 %v461, %v1638
        %1640 = vdwg.mxu0
        %1641 = vmatprep.subr.mxu0 0.0
        %1642 = vmatpush1.msra.mxu0 0.0
        %1643 = vmatprep.subr.mxu0 0.0
        %1644 = vmatpush1.msra.mxu0 0.0
        %1645 = vmatprep.subr.mxu0 0.0
        %1646 = vmatpush1.msra.mxu0 0.0
        %1647 = vmatprep.subr.mxu0 0.0
        %1648 = vmatpush1.msra.mxu0 0.0
        %1649 = vmatprep.subr.mxu0 0.0
        %1650 = vmatpush1.msra.mxu0 0.0
        %1651 = vmatprep.subr.mxu0 0.0
        %1652 = vmatpush1.msra.mxu0 0.0
        %1653 = vmatprep.subr.mxu0 0.0
        %1654 = vmatpush1.msra.mxu0 0.0
        %1655 = vmatprep.subr.mxu0 0.0
        %1656 = vmatpush1.msra.mxu0 0.0
        %1657 = vmatprep.subr.mxu0 0.0
        %1658 = vmatpush1.msra.mxu0 0.0
        %1659 = vmatprep.subr.mxu0 0.0
        %1660 = vmatpush1.msra.mxu0 0.0
        %1661 = vmatprep.subr.mxu0 0.0
        %1662 = vmatpush1.msra.mxu0 0.0
        %1663 = vmatprep.subr.mxu0 0.0
        %1664 = vmatpush1.msra.mxu0 0.0
        %1665 = vmatprep.subr.mxu0 0.0
        %1666 = vmatpush1.msra.mxu0 0.0
        %1667 = vmatprep.subr.mxu0 0.0
        %1668 = vmatpush1.msra.mxu0 0.0
        %1669 = vmatprep.subr.mxu0 %v562
        %1670 = vmatpush1.msra.mxu0 %v559
        %1671 = vmatprep.subr.mxu0 %v417
        %1672 = vmatpush1.msra.mxu0 %v416
        %1673 = vmatprep.subr.mxu0 0.0
        %1674 = vmatpush2.msra.mxu0 0.0
        %1675 = vmatprep.subr.mxu0 0.0
        %1676 = vmatpush2.msra.mxu0 0.0
        %1677 = vmatprep.subr.mxu0 0.0
        %1678 = vmatpush2.msra.mxu0 0.0
        %1679 = vmatprep.subr.mxu0 0.0
        %1680 = vmatpush2.msra.mxu0 0.0
        %1681 = vmatprep.subr.mxu0 0.0
        %1682 = vmatpush2.msra.mxu0 0.0
        %1683 = vmatprep.subr.mxu0 0.0
        %1684 = vmatpush2.msra.mxu0 0.0
        %1685 = vmatprep.subr.mxu0 0.0
        %1686 = vmatpush2.msra.mxu0 0.0
        %1687 = vmatprep.subr.mxu0 0.0
        %1688 = vmatpush2.msra.mxu0 0.0
        %1689 = vmatprep.subr.mxu0 0.0
        %1690 = vmatpush2.msra.mxu0 0.0
        %1691 = vmatprep.subr.mxu0 0.0
        %1692 = vmatpush2.msra.mxu0 0.0
        %1693 = vmatprep.subr.mxu0 0.0
        %1694 = vmatpush2.msra.mxu0 0.0
        %1695 = vmatprep.subr.mxu0 0.0
        %1696 = vmatpush2.msra.mxu0 0.0
        %1697 = vmatprep.subr.mxu0 0.0
        %1698 = vmatpush2.msra.mxu0 0.0
        %1699 = vmatprep.subr.mxu0 0.0
        %1700 = vmatpush2.msra.mxu0 0.0
        %1701 = vmatprep.subr.mxu0 0.0
        %1702 = vmatpush2.msra.mxu0 0.0
        %1703 = vmatprep.subr.mxu0 0.0
        %1704 = vmatpush2.msra.mxu0 0.0
        %1705 = vmatprep.mubr.f32.mxu0 0.0
        %1706 = vmatmul.mubr.f32.gmra.mxu0 %v465
        %v1707 = vpop.f32.mrf.mxu0
        %v1708 = vadd.f32 %v461, %v1707
        %v1709 = vpop.f32.mrf.mxu0
        %v1710 = vadd.f32 %v461, %v1709
        %1711 = vdwg.mxu0
        %1712 = vmatprep.subr.mxu0 0.0
        %1713 = vmatpush1.msra.mxu0 0.0
        %1714 = vmatprep.subr.mxu0 0.0
        %1715 = vmatpush1.msra.mxu0 0.0
        %1716 = vmatprep.subr.mxu0 0.0
        %1717 = vmatpush1.msra.mxu0 0.0
        %1718 = vmatprep.subr.mxu0 0.0
        %1719 = vmatpush1.msra.mxu0 0.0
        %1720 = vmatprep.subr.mxu0 0.0
        %1721 = vmatpush1.msra.mxu0 0.0
        %1722 = vmatprep.subr.mxu0 0.0
        %1723 = vmatpush1.msra.mxu0 0.0
        %1724 = vmatprep.subr.mxu0 0.0
        %1725 = vmatpush1.msra.mxu0 0.0
        %1726 = vmatprep.subr.mxu0 0.0
        %1727 = vmatpush1.msra.mxu0 0.0
        %1728 = vmatprep.subr.mxu0 0.0
        %1729 = vmatpush1.msra.mxu0 0.0
        %1730 = vmatprep.subr.mxu0 0.0
        %1731 = vmatpush1.msra.mxu0 0.0
        %1732 = vmatprep.subr.mxu0 0.0
        %1733 = vmatpush1.msra.mxu0 0.0
        %1734 = vmatprep.subr.mxu0 0.0
        %1735 = vmatpush1.msra.mxu0 0.0
        %1736 = vmatprep.subr.mxu0 0.0
        %1737 = vmatpush1.msra.mxu0 0.0
        %1738 = vmatprep.subr.mxu0 0.0
        %1739 = vmatpush1.msra.mxu0 0.0
        %1740 = vmatprep.subr.mxu0 %v568
        %1741 = vmatpush1.msra.mxu0 %v565
        %1742 = vmatprep.subr.mxu0 %v419
        %1743 = vmatpush1.msra.mxu0 %v418
        %1744 = vmatprep.subr.mxu0 0.0
        %1745 = vmatpush2.msra.mxu0 0.0
        %1746 = vmatprep.subr.mxu0 0.0
        %1747 = vmatpush2.msra.mxu0 0.0
        %1748 = vmatprep.subr.mxu0 0.0
        %1749 = vmatpush2.msra.mxu0 0.0
        %1750 = vmatprep.subr.mxu0 0.0
        %1751 = vmatpush2.msra.mxu0 0.0
        %1752 = vmatprep.subr.mxu0 0.0
        %1753 = vmatpush2.msra.mxu0 0.0
        %1754 = vmatprep.subr.mxu0 0.0
        %1755 = vmatpush2.msra.mxu0 0.0
        %1756 = vmatprep.subr.mxu0 0.0
        %1757 = vmatpush2.msra.mxu0 0.0
        %1758 = vmatprep.subr.mxu0 0.0
        %1759 = vmatpush2.msra.mxu0 0.0
        %1760 = vmatprep.subr.mxu0 0.0
        %1761 = vmatpush2.msra.mxu0 0.0
        %1762 = vmatprep.subr.mxu0 0.0
        %1763 = vmatpush2.msra.mxu0 0.0
        %1764 = vmatprep.subr.mxu0 0.0
        %1765 = vmatpush2.msra.mxu0 0.0
        %1766 = vmatprep.subr.mxu0 0.0
        %1767 = vmatpush2.msra.mxu0 0.0
        %1768 = vmatprep.subr.mxu0 0.0
        %1769 = vmatpush2.msra.mxu0 0.0
        %1770 = vmatprep.subr.mxu0 0.0
        %1771 = vmatpush2.msra.mxu0 0.0
        %1772 = vmatprep.subr.mxu0 0.0
        %1773 = vmatpush2.msra.mxu0 0.0
        %1774 = vmatprep.subr.mxu0 0.0
        %1775 = vmatpush2.msra.mxu0 0.0
        %1776 = vmatprep.mubr.f32.mxu0 0.0
        %1777 = vmatmul.mubr.f32.gmra.mxu0 %v465
        %v1778 = vpop.f32.mrf.mxu0
        %v1779 = vadd.f32 %v461, %v1778
        %v1780 = vpop.f32.mrf.mxu0
        %v1781 = vadd.f32 %v461, %v1780
        %1782 = vdwg.mxu0
        %1783 = vmatprep.subr.mxu0 0.0
        %1784 = vmatpush1.msra.mxu0 0.0
        %1785 = vmatprep.subr.mxu0 0.0
        %1786 = vmatpush1.msra.mxu0 0.0
        %1787 = vmatprep.subr.mxu0 0.0
        %1788 = vmatpush1.msra.mxu0 0.0
        %1789 = vmatprep.subr.mxu0 0.0
        %1790 = vmatpush1.msra.mxu0 0.0
        %1791 = vmatprep.subr.mxu0 0.0
        %1792 = vmatpush1.msra.mxu0 0.0
        %1793 = vmatprep.subr.mxu0 0.0
        %1794 = vmatpush1.msra.mxu0 0.0
        %1795 = vmatprep.subr.mxu0 0.0
        %1796 = vmatpush1.msra.mxu0 0.0
        %1797 = vmatprep.subr.mxu0 0.0
        %1798 = vmatpush1.msra.mxu0 0.0
        %1799 = vmatprep.subr.mxu0 0.0
        %1800 = vmatpush1.msra.mxu0 0.0
        %1801 = vmatprep.subr.mxu0 0.0
        %1802 = vmatpush1.msra.mxu0 0.0
        %1803 = vmatprep.subr.mxu0 0.0
        %1804 = vmatpush1.msra.mxu0 0.0
        %1805 = vmatprep.subr.mxu0 0.0
        %1806 = vmatpush1.msra.mxu0 0.0
        %1807 = vmatprep.subr.mxu0 0.0
        %1808 = vmatpush1.msra.mxu0 0.0
        %1809 = vmatprep.subr.mxu0 0.0
        %1810 = vmatpush1.msra.mxu0 0.0
        %1811 = vmatprep.subr.mxu0 %v574
        %1812 = vmatpush1.msra.mxu0 %v571
        %1813 = vmatprep.subr.mxu0 %v421
        %1814 = vmatpush1.msra.mxu0 %v420
        %1815 = vmatprep.subr.mxu0 0.0
        %1816 = vmatpush2.msra.mxu0 0.0
        %1817 = vmatprep.subr.mxu0 0.0
        %1818 = vmatpush2.msra.mxu0 0.0
        %1819 = vmatprep.subr.mxu0 0.0
        %1820 = vmatpush2.msra.mxu0 0.0
        %1821 = vmatprep.subr.mxu0 0.0
        %1822 = vmatpush2.msra.mxu0 0.0
        %1823 = vmatprep.subr.mxu0 0.0
        %1824 = vmatpush2.msra.mxu0 0.0
        %1825 = vmatprep.subr.mxu0 0.0
        %1826 = vmatpush2.msra.mxu0 0.0
        %1827 = vmatprep.subr.mxu0 0.0
        %1828 = vmatpush2.msra.mxu0 0.0
        %1829 = vmatprep.subr.mxu0 0.0
        %1830 = vmatpush2.msra.mxu0 0.0
        %1831 = vmatprep.subr.mxu0 0.0
        %1832 = vmatpush2.msra.mxu0 0.0
        %1833 = vmatprep.subr.mxu0 0.0
        %1834 = vmatpush2.msra.mxu0 0.0
        %1835 = vmatprep.subr.mxu0 0.0
        %1836 = vmatpush2.msra.mxu0 0.0
        %1837 = vmatprep.subr.mxu0 0.0
        %1838 = vmatpush2.msra.mxu0 0.0
        %1839 = vmatprep.subr.mxu0 0.0
        %1840 = vmatpush2.msra.mxu0 0.0
        %1841 = vmatprep.subr.mxu0 0.0
        %1842 = vmatpush2.msra.mxu0 0.0
        %1843 = vmatprep.subr.mxu0 0.0
        %1844 = vmatpush2.msra.mxu0 0.0
        %1845 = vmatprep.subr.mxu0 0.0
        %1846 = vmatpush2.msra.mxu0 0.0
        %1847 = vmatprep.mubr.f32.mxu0 0.0
        %1848 = vmatmul.mubr.f32.gmra.mxu0 %v465
        %v1849 = vpop.f32.mrf.mxu0
        %v1850 = vadd.f32 %v461, %v1849
        %v1851 = vpop.f32.mrf.mxu0
        %v1852 = vadd.f32 %v461, %v1851
        %1853 = vdwg.mxu0
        %v1854 = vmax.f32 %v643, 0.0
        %v1855 = vmax.f32 %v645, 0.0
        %v1856 = vmax.f32 %v714, 0.0
        %v1857 = vmax.f32 %v716, 0.0
        %v1858 = vmax.f32 %v785, 0.0
        %v1859 = vmax.f32 %v787, 0.0
        %v1860 = vmax.f32 %v856, 0.0
        %v1861 = vmax.f32 %v858, 0.0
        %v1862 = vmax.f32 %v927, 0.0
        %v1863 = vmax.f32 %v929, 0.0
        %v1864 = vmax.f32 %v998, 0.0
        %v1865 = vmax.f32 %v1000, 0.0
        %v1866 = vmax.f32 %v1069, 0.0
        %v1867 = vmax.f32 %v1071, 0.0
        %v1868 = vmax.f32 %v1140, 0.0
        %v1869 = vmax.f32 %v1142, 0.0
        %v1870 = vmax.f32 %v1211, 0.0
        %v1871 = vmax.f32 %v1213, 0.0
        %v1872 = vmax.f32 %v1282, 0.0
        %v1873 = vmax.f32 %v1284, 0.0
        %v1874 = vmax.f32 %v1353, 0.0
        %v1875 = vmax.f32 %v1355, 0.0
        %v1876 = vmax.f32 %v1424, 0.0
        %v1877 = vmax.f32 %v1426, 0.0
        %v1878 = vmax.f32 %v1495, 0.0
        %v1879 = vmax.f32 %v1497, 0.0
        %v1880 = vmax.f32 %v1566, 0.0
        %v1881 = vmax.f32 %v1568, 0.0
        %v1882 = vmax.f32 %v1637, 0.0
        %v1883 = vmax.f32 %v1639, 0.0
        %v1884 = vmax.f32 %v1708, 0.0
        %v1885 = vmax.f32 %v1710, 0.0
        %v1886 = vmax.f32 %v1779, 0.0
        %v1887 = vmax.f32 %v1781, 0.0
        %v1888 = vmax.f32 %v1850, 0.0
        %v1889 = vmax.f32 %v1852, 0.0
        %s1890 = scalar_lea.vmem %s383, 576
        %v1891 = vld [vmem:[%s1890] sm:$0xff]
        %v1892 = vld [vmem:[%s1890 + $0x8] sm:$0xff]
        %v1893 = vld [vmem:[%s1890 + $0x10] sm:$0xff]
        %v1894 = vld [vmem:[%s1890 + $0x18] sm:$0xff]
        %v1895 = vld [vmem:[%s1890 + $0x20] sm:$0xff]
        %v1896 = vld [vmem:[%s1890 + $0x28] sm:$0xff]
        %v1897 = vld [vmem:[%s1890 + $0x30] sm:$0xff]
        %v1898 = vld [vmem:[%s1890 + $0x38] sm:$0xff]
        %v1899 = vld [vmem:[%s1890 + $0x40] sm:$0xff]
        %v1900 = vld [vmem:[%s1890 + $0x48] sm:$0xff]
        %v1901 = vld [vmem:[%s1890 + $0x50] sm:$0xff]
        %v1902 = vld [vmem:[%s1890 + $0x58] sm:$0xff]
        %v1903 = vld [vmem:[%s1890 + $0x60] sm:$0xff]
        %v1904 = vld [vmem:[%s1890 + $0x68] sm:$0xff]
        %v1905 = vld [vmem:[%s1890 + $0x70] sm:$0xff]
        %v1906 = vld [vmem:[%s1890 + $0x78] sm:$0xff]
        %v1907 = vld [vmem:[%s1890 + $0x80] sm:$0xff]
        %v1908 = vld [vmem:[%s1890 + $0x88] sm:$0xff]
        %v1909 = vld [vmem:[%s1890 + $0x90] sm:$0xff]
        %v1910 = vld [vmem:[%s1890 + $0x98] sm:$0xff]
        %v1911 = vld [vmem:[%s1890 + $0xa0] sm:$0xff]
        %v1912 = vld [vmem:[%s1890 + $0xa8] sm:$0xff]
        %v1913 = vld [vmem:[%s1890 + $0xb0] sm:$0xff]
        %v1914 = vld [vmem:[%s1890 + $0xb8] sm:$0xff]
        %v1915 = vld [vmem:[%s1890 + $0xc0] sm:$0xff]
        %v1916 = vld [vmem:[%s1890 + $0xc8] sm:$0xff]
        %v1917 = vld [vmem:[%s1890 + $0xd0] sm:$0xff]
        %v1918 = vld [vmem:[%s1890 + $0xd8] sm:$0xff]
        %v1919 = vld [vmem:[%s1890 + $0xe0] sm:$0xff]
        %v1920 = vld [vmem:[%s1890 + $0xe8] sm:$0xff]
        %v1921 = vld [vmem:[%s1890 + $0xf0] sm:$0xff]
        %v1922 = vld [vmem:[%s1890 + $0xf8] sm:$0xff]
        %v1923 = vld [vmem:[%s1890 + $0x100] sm:$0xff]
        %v1924 = vld [vmem:[%s1890 + $0x108] sm:$0xff]
        %v1925 = vld [vmem:[%s1890 + $0x110] sm:$0xff]
        %v1926 = vld [vmem:[%s1890 + $0x118] sm:$0xff]
        %v1927 = vld [vmem:[%s1890 + $0x120] sm:$0x1]
        %v1928 = vld [vmem:[%s1890 + $0x128] sm:$0x1]
        %v1929 = vld [vmem:[%s1890 + $0x130] sm:$0x1]
        %v1930 = vld [vmem:[%s1890 + $0x138] sm:$0x1]
        %v1931 = vld [vmem:[%s1890 + $0x140] sm:$0x1]
        %v1932 = vld [vmem:[%s1890 + $0x148] sm:$0x1]
        %v1933 = vld [vmem:[%s1890 + $0x150] sm:$0x1]
        %v1934 = vld [vmem:[%s1890 + $0x158] sm:$0x1]
        %v1935 = vld [vmem:[%s1890 + $0x160] sm:$0x1]
        %v1936 = vld [vmem:[%s1890 + $0x168] sm:$0x1]
        %v1937 = vld [vmem:[%s1890 + $0x170] sm:$0x1]
        %v1938 = vld [vmem:[%s1890 + $0x178] sm:$0x1]
        %v1939 = vld [vmem:[%s1890 + $0x180] sm:$0x1]
        %v1940 = vld [vmem:[%s1890 + $0x188] sm:$0x1]
        %v1941 = vld [vmem:[%s1890 + $0x190] sm:$0x1]
        %v1942 = vld [vmem:[%s1890 + $0x198] sm:$0x1]
        %v1943 = vld [vmem:[%s1890 + $0x1a0] sm:$0x1]
        %v1944 = vld [vmem:[%s1890 + $0x1a8] sm:$0x1]
        %v1945 = vld [vmem:[%s1890 + $0x1b0] sm:$0x1]
        %v1946 = vld [vmem:[%s1890 + $0x1b8] sm:$0x1]
        %v1947 = vld [vmem:[%s1890 + $0x1c0] sm:$0x1]
        %v1948 = vld [vmem:[%s1890 + $0x1c8] sm:$0x1]
        %v1949 = vld [vmem:[%s1890 + $0x1d0] sm:$0x1]
        %v1950 = vld [vmem:[%s1890 + $0x1d8] sm:$0x1]
        %v1951 = vld [vmem:[%s1890 + $0x1e0] sm:$0x1]
        %v1952 = vld [vmem:[%s1890 + $0x1e8] sm:$0x1]
        %v1953 = vld [vmem:[%s1890 + $0x1f0] sm:$0x1]
        %v1954 = vld [vmem:[%s1890 + $0x1f8] sm:$0x1]
        %v1955 = vld [vmem:[%s1890 + $0x200] sm:$0x1]
        %v1956 = vld [vmem:[%s1890 + $0x208] sm:$0x1]
        %v1957 = vld [vmem:[%s1890 + $0x210] sm:$0x1]
        %v1958 = vld [vmem:[%s1890 + $0x218] sm:$0x1]
        %v1959 = vld [vmem:[%s1890 + $0x220] sm:$0x1]
        %v1960 = vld [vmem:[%s1890 + $0x228] sm:$0x1]
        %v1961 = vld [vmem:[%s1890 + $0x230] sm:$0x1]
        %v1962 = vld [vmem:[%s1890 + $0x238] sm:$0x1]
        %v1964 = vsel %vm467, %v1927, 0
        %v1967 = vsel %vm467, %v1928, 0
        %v1970 = vsel %vm467, %v1929, 0
        %v1973 = vsel %vm467, %v1930, 0
        %v1976 = vsel %vm467, %v1931, 0
        %v1979 = vsel %vm467, %v1932, 0
        %v1982 = vsel %vm467, %v1933, 0
        %v1985 = vsel %vm467, %v1934, 0
        %v1988 = vsel %vm467, %v1935, 0
        %v1991 = vsel %vm467, %v1936, 0
        %v1994 = vsel %vm467, %v1937, 0
        %v1997 = vsel %vm467, %v1938, 0
        %v2000 = vsel %vm467, %v1939, 0
        %v2003 = vsel %vm467, %v1940, 0
        %v2006 = vsel %vm467, %v1941, 0
        %v2009 = vsel %vm467, %v1942, 0
        %v2012 = vsel %vm467, %v1943, 0
        %v2015 = vsel %vm467, %v1944, 0
        %v2018 = vsel %vm467, %v1945, 0
        %v2021 = vsel %vm467, %v1946, 0
        %v2024 = vsel %vm467, %v1947, 0
        %v2027 = vsel %vm467, %v1948, 0
        %v2030 = vsel %vm467, %v1949, 0
        %v2033 = vsel %vm467, %v1950, 0
        %v2036 = vsel %vm467, %v1951, 0
        %v2039 = vsel %vm467, %v1952, 0
        %v2042 = vsel %vm467, %v1953, 0
        %v2045 = vsel %vm467, %v1954, 0
        %v2048 = vsel %vm467, %v1955, 0
        %v2051 = vsel %vm467, %v1956, 0
        %v2054 = vsel %vm467, %v1957, 0
        %v2057 = vsel %vm467, %v1958, 0
        %v2060 = vsel %vm467, %v1959, 0
        %v2063 = vsel %vm467, %v1960, 0
        %v2066 = vsel %vm467, %v1961, 0
        %v2069 = vsel %vm467, %v1962, 0
        %2071 = vmatprep.subr.mxu0 0.0
        %2072 = vmatpush1.msra.mxu0 0.0
        %2073 = vmatprep.subr.mxu0 0.0
        %2074 = vmatpush1.msra.mxu0 0.0
        %2075 = vmatprep.subr.mxu0 0.0
        %2076 = vmatpush1.msra.mxu0 0.0
        %2077 = vmatprep.subr.mxu0 0.0
        %2078 = vmatpush1.msra.mxu0 0.0
        %2079 = vmatprep.subr.mxu0 0.0
        %2080 = vmatpush1.msra.mxu0 0.0
        %2081 = vmatprep.subr.mxu0 0.0
        %2082 = vmatpush1.msra.mxu0 0.0
        %2083 = vmatprep.subr.mxu0 0.0
        %2084 = vmatpush1.msra.mxu0 0.0
        %2085 = vmatprep.subr.mxu0 0.0
        %2086 = vmatpush1.msra.mxu0 0.0
        %2087 = vmatprep.subr.mxu0 0.0
        %2088 = vmatpush1.msra.mxu0 0.0
        %2089 = vmatprep.subr.mxu0 0.0
        %2090 = vmatpush1.msra.mxu0 0.0
        %2091 = vmatprep.subr.mxu0 0.0
        %2092 = vmatpush1.msra.mxu0 0.0
        %2093 = vmatprep.subr.mxu0 0.0
        %2094 = vmatpush1.msra.mxu0 0.0
        %2095 = vmatprep.subr.mxu0 0.0
        %2096 = vmatpush1.msra.mxu0 0.0
        %2097 = vmatprep.subr.mxu0 0.0
        %2098 = vmatpush1.msra.mxu0 0.0
        %2099 = vmatprep.subr.mxu0 %v1967
        %2100 = vmatpush1.msra.mxu0 %v1964
        %2101 = vmatprep.subr.mxu0 %v1892
        %2102 = vmatpush1.msra.mxu0 %v1891
        %2103 = vmatprep.subr.mxu0 0.0
        %2104 = vmatpush2.msra.mxu0 0.0
        %2105 = vmatprep.subr.mxu0 0.0
        %2106 = vmatpush2.msra.mxu0 0.0
        %2107 = vmatprep.subr.mxu0 0.0
        %2108 = vmatpush2.msra.mxu0 0.0
        %2109 = vmatprep.subr.mxu0 0.0
        %2110 = vmatpush2.msra.mxu0 0.0
        %2111 = vmatprep.subr.mxu0 0.0
        %2112 = vmatpush2.msra.mxu0 0.0
        %2113 = vmatprep.subr.mxu0 0.0
        %2114 = vmatpush2.msra.mxu0 0.0
        %2115 = vmatprep.subr.mxu0 0.0
        %2116 = vmatpush2.msra.mxu0 0.0
        %2117 = vmatprep.subr.mxu0 0.0
        %2118 = vmatpush2.msra.mxu0 0.0
        %2119 = vmatprep.subr.mxu0 0.0
        %2120 = vmatpush2.msra.mxu0 0.0
        %2121 = vmatprep.subr.mxu0 0.0
        %2122 = vmatpush2.msra.mxu0 0.0
        %2123 = vmatprep.subr.mxu0 0.0
        %2124 = vmatpush2.msra.mxu0 0.0
        %2125 = vmatprep.subr.mxu0 0.0
        %2126 = vmatpush2.msra.mxu0 0.0
        %2127 = vmatprep.subr.mxu0 0.0
        %2128 = vmatpush2.msra.mxu0 0.0
        %2129 = vmatprep.subr.mxu0 0.0
        %2130 = vmatpush2.msra.mxu0 0.0
        %2131 = vmatprep.subr.mxu0 0.0
        %2132 = vmatpush2.msra.mxu0 0.0
        %2133 = vmatprep.subr.mxu0 0.0
        %2134 = vmatpush2.msra.mxu0 0.0
        %2135 = vmatprep.mubr.f32.mxu0 0.0
        %2136 = vmatmul.mubr.f32.gmra.mxu0 %v465
        %v2137 = vpop.f32.mrf.mxu0
        %v2138 = vadd.f32 %v461, %v2137
        %v2139 = vpop.f32.mrf.mxu0
        %v2140 = vadd.f32 %v461, %v2139
        %2141 = vdwg.mxu0
        %2142 = vmatprep.subr.mxu0 0.0
        %2143 = vmatpush1.msra.mxu0 0.0
        %2144 = vmatprep.subr.mxu0 0.0
        %2145 = vmatpush1.msra.mxu0 0.0
        %2146 = vmatprep.subr.mxu0 0.0
        %2147 = vmatpush1.msra.mxu0 0.0
        %2148 = vmatprep.subr.mxu0 0.0
        %2149 = vmatpush1.msra.mxu0 0.0
        %2150 = vmatprep.subr.mxu0 0.0
        %2151 = vmatpush1.msra.mxu0 0.0
        %2152 = vmatprep.subr.mxu0 0.0
        %2153 = vmatpush1.msra.mxu0 0.0
        %2154 = vmatprep.subr.mxu0 0.0
        %2155 = vmatpush1.msra.mxu0 0.0
        %2156 = vmatprep.subr.mxu0 0.0
        %2157 = vmatpush1.msra.mxu0 0.0
        %2158 = vmatprep.subr.mxu0 0.0
        %2159 = vmatpush1.msra.mxu0 0.0
        %2160 = vmatprep.subr.mxu0 0.0
        %2161 = vmatpush1.msra.mxu0 0.0
        %2162 = vmatprep.subr.mxu0 0.0
        %2163 = vmatpush1.msra.mxu0 0.0
        %2164 = vmatprep.subr.mxu0 0.0
        %2165 = vmatpush1.msra.mxu0 0.0
        %2166 = vmatprep.subr.mxu0 0.0
        %2167 = vmatpush1.msra.mxu0 0.0
        %2168 = vmatprep.subr.mxu0 0.0
        %2169 = vmatpush1.msra.mxu0 0.0
        %2170 = vmatprep.subr.mxu0 %v1973
        %2171 = vmatpush1.msra.mxu0 %v1970
        %2172 = vmatprep.subr.mxu0 %v1894
        %2173 = vmatpush1.msra.mxu0 %v1893
        %2174 = vmatprep.subr.mxu0 0.0
        %2175 = vmatpush2.msra.mxu0 0.0
        %2176 = vmatprep.subr.mxu0 0.0
        %2177 = vmatpush2.msra.mxu0 0.0
        %2178 = vmatprep.subr.mxu0 0.0
        %2179 = vmatpush2.msra.mxu0 0.0
        %2180 = vmatprep.subr.mxu0 0.0
        %2181 = vmatpush2.msra.mxu0 0.0
        %2182 = vmatprep.subr.mxu0 0.0
        %2183 = vmatpush2.msra.mxu0 0.0
        %2184 = vmatprep.subr.mxu0 0.0
        %2185 = vmatpush2.msra.mxu0 0.0
        %2186 = vmatprep.subr.mxu0 0.0
        %2187 = vmatpush2.msra.mxu0 0.0
        %2188 = vmatprep.subr.mxu0 0.0
        %2189 = vmatpush2.msra.mxu0 0.0
        %2190 = vmatprep.subr.mxu0 0.0
        %2191 = vmatpush2.msra.mxu0 0.0
        %2192 = vmatprep.subr.mxu0 0.0
        %2193 = vmatpush2.msra.mxu0 0.0
        %2194 = vmatprep.subr.mxu0 0.0
        %2195 = vmatpush2.msra.mxu0 0.0
        %2196 = vmatprep.subr.mxu0 0.0
        %2197 = vmatpush2.msra.mxu0 0.0
        %2198 = vmatprep.subr.mxu0 0.0
        %2199 = vmatpush2.msra.mxu0 0.0
        %2200 = vmatprep.subr.mxu0 0.0
        %2201 = vmatpush2.msra.mxu0 0.0
        %2202 = vmatprep.subr.mxu0 0.0
        %2203 = vmatpush2.msra.mxu0 0.0
        %2204 = vmatprep.subr.mxu0 0.0
        %2205 = vmatpush2.msra.mxu0 0.0
        %2206 = vmatprep.mubr.f32.mxu0 0.0
        %2207 = vmatmul.mubr.f32.gmra.mxu0 %v465
        %v2208 = vpop.f32.mrf.mxu0
        %v2209 = vadd.f32 %v461, %v2208
        %v2210 = vpop.f32.mrf.mxu0
        %v2211 = vadd.f32 %v461, %v2210
        %2212 = vdwg.mxu0
        %2213 = vmatprep.subr.mxu0 0.0
        %2214 = vmatpush1.msra.mxu0 0.0
        %2215 = vmatprep.subr.mxu0 0.0
        %2216 = vmatpush1.msra.mxu0 0.0
        %2217 = vmatprep.subr.mxu0 0.0
        %2218 = vmatpush1.msra.mxu0 0.0
        %2219 = vmatprep.subr.mxu0 0.0
        %2220 = vmatpush1.msra.mxu0 0.0
        %2221 = vmatprep.subr.mxu0 0.0
        %2222 = vmatpush1.msra.mxu0 0.0
        %2223 = vmatprep.subr.mxu0 0.0
        %2224 = vmatpush1.msra.mxu0 0.0
        %2225 = vmatprep.subr.mxu0 0.0
        %2226 = vmatpush1.msra.mxu0 0.0
        %2227 = vmatprep.subr.mxu0 0.0
        %2228 = vmatpush1.msra.mxu0 0.0
        %2229 = vmatprep.subr.mxu0 0.0
        %2230 = vmatpush1.msra.mxu0 0.0
        %2231 = vmatprep.subr.mxu0 0.0
        %2232 = vmatpush1.msra.mxu0 0.0
        %2233 = vmatprep.subr.mxu0 0.0
        %2234 = vmatpush1.msra.mxu0 0.0
        %2235 = vmatprep.subr.mxu0 0.0
        %2236 = vmatpush1.msra.mxu0 0.0
        %2237 = vmatprep.subr.mxu0 0.0
        %2238 = vmatpush1.msra.mxu0 0.0
        %2239 = vmatprep.subr.mxu0 0.0
        %2240 = vmatpush1.msra.mxu0 0.0
        %2241 = vmatprep.subr.mxu0 %v1979
        %2242 = vmatpush1.msra.mxu0 %v1976
        %2243 = vmatprep.subr.mxu0 %v1896
        %2244 = vmatpush1.msra.mxu0 %v1895
        %2245 = vmatprep.subr.mxu0 0.0
        %2246 = vmatpush2.msra.mxu0 0.0
        %2247 = vmatprep.subr.mxu0 0.0
        %2248 = vmatpush2.msra.mxu0 0.0
        %2249 = vmatprep.subr.mxu0 0.0
        %2250 = vmatpush2.msra.mxu0 0.0
        %2251 = vmatprep.subr.mxu0 0.0
        %2252 = vmatpush2.msra.mxu0 0.0
        %2253 = vmatprep.subr.mxu0 0.0
        %2254 = vmatpush2.msra.mxu0 0.0
        %2255 = vmatprep.subr.mxu0 0.0
        %2256 = vmatpush2.msra.mxu0 0.0
        %2257 = vmatprep.subr.mxu0 0.0
        %2258 = vmatpush2.msra.mxu0 0.0
        %2259 = vmatprep.subr.mxu0 0.0
        %2260 = vmatpush2.msra.mxu0 0.0
        %2261 = vmatprep.subr.mxu0 0.0
        %2262 = vmatpush2.msra.mxu0 0.0
        %2263 = vmatprep.subr.mxu0 0.0
        %2264 = vmatpush2.msra.mxu0 0.0
        %2265 = vmatprep.subr.mxu0 0.0
        %2266 = vmatpush2.msra.mxu0 0.0
        %2267 = vmatprep.subr.mxu0 0.0
        %2268 = vmatpush2.msra.mxu0 0.0
        %2269 = vmatprep.subr.mxu0 0.0
        %2270 = vmatpush2.msra.mxu0 0.0
        %2271 = vmatprep.subr.mxu0 0.0
        %2272 = vmatpush2.msra.mxu0 0.0
        %2273 = vmatprep.subr.mxu0 0.0
        %2274 = vmatpush2.msra.mxu0 0.0
        %2275 = vmatprep.subr.mxu0 0.0
        %2276 = vmatpush2.msra.mxu0 0.0
        %2277 = vmatprep.mubr.f32.mxu0 0.0
        %2278 = vmatmul.mubr.f32.gmra.mxu0 %v465
        %v2279 = vpop.f32.mrf.mxu0
        %v2280 = vadd.f32 %v461, %v2279
        %v2281 = vpop.f32.mrf.mxu0
        %v2282 = vadd.f32 %v461, %v2281
        %2283 = vdwg.mxu0
        %2284 = vmatprep.subr.mxu0 0.0
        %2285 = vmatpush1.msra.mxu0 0.0
        %2286 = vmatprep.subr.mxu0 0.0
        %2287 = vmatpush1.msra.mxu0 0.0
        %2288 = vmatprep.subr.mxu0 0.0
        %2289 = vmatpush1.msra.mxu0 0.0
        %2290 = vmatprep.subr.mxu0 0.0
        %2291 = vmatpush1.msra.mxu0 0.0
        %2292 = vmatprep.subr.mxu0 0.0
        %2293 = vmatpush1.msra.mxu0 0.0
        %2294 = vmatprep.subr.mxu0 0.0
        %2295 = vmatpush1.msra.mxu0 0.0
        %2296 = vmatprep.subr.mxu0 0.0
        %2297 = vmatpush1.msra.mxu0 0.0
        %2298 = vmatprep.subr.mxu0 0.0
        %2299 = vmatpush1.msra.mxu0 0.0
        %2300 = vmatprep.subr.mxu0 0.0
        %2301 = vmatpush1.msra.mxu0 0.0
        %2302 = vmatprep.subr.mxu0 0.0
        %2303 = vmatpush1.msra.mxu0 0.0
        %2304 = vmatprep.subr.mxu0 0.0
        %2305 = vmatpush1.msra.mxu0 0.0
        %2306 = vmatprep.subr.mxu0 0.0
        %2307 = vmatpush1.msra.mxu0 0.0
        %2308 = vmatprep.subr.mxu0 0.0
        %2309 = vmatpush1.msra.mxu0 0.0
        %2310 = vmatprep.subr.mxu0 0.0
        %2311 = vmatpush1.msra.mxu0 0.0
        %2312 = vmatprep.subr.mxu0 %v1985
        %2313 = vmatpush1.msra.mxu0 %v1982
        %2314 = vmatprep.subr.mxu0 %v1898
        %2315 = vmatpush1.msra.mxu0 %v1897
        %2316 = vmatprep.subr.mxu0 0.0
        %2317 = vmatpush2.msra.mxu0 0.0
        %2318 = vmatprep.subr.mxu0 0.0
        %2319 = vmatpush2.msra.mxu0 0.0
        %2320 = vmatprep.subr.mxu0 0.0
        %2321 = vmatpush2.msra.mxu0 0.0
        %2322 = vmatprep.subr.mxu0 0.0
        %2323 = vmatpush2.msra.mxu0 0.0
        %2324 = vmatprep.subr.mxu0 0.0
        %2325 = vmatpush2.msra.mxu0 0.0
        %2326 = vmatprep.subr.mxu0 0.0
        %2327 = vmatpush2.msra.mxu0 0.0
        %2328 = vmatprep.subr.mxu0 0.0
        %2329 = vmatpush2.msra.mxu0 0.0
        %2330 = vmatprep.subr.mxu0 0.0
        %2331 = vmatpush2.msra.mxu0 0.0
        %2332 = vmatprep.subr.mxu0 0.0
        %2333 = vmatpush2.msra.mxu0 0.0
        %2334 = vmatprep.subr.mxu0 0.0
        %2335 = vmatpush2.msra.mxu0 0.0
        %2336 = vmatprep.subr.mxu0 0.0
        %2337 = vmatpush2.msra.mxu0 0.0
        %2338 = vmatprep.subr.mxu0 0.0
        %2339 = vmatpush2.msra.mxu0 0.0
        %2340 = vmatprep.subr.mxu0 0.0
        %2341 = vmatpush2.msra.mxu0 0.0
        %2342 = vmatprep.subr.mxu0 0.0
        %2343 = vmatpush2.msra.mxu0 0.0
        %2344 = vmatprep.subr.mxu0 0.0
        %2345 = vmatpush2.msra.mxu0 0.0
        %2346 = vmatprep.subr.mxu0 0.0
        %2347 = vmatpush2.msra.mxu0 0.0
        %2348 = vmatprep.mubr.f32.mxu0 0.0
        %2349 = vmatmul.mubr.f32.gmra.mxu0 %v465
        %v2350 = vpop.f32.mrf.mxu0
        %v2351 = vadd.f32 %v461, %v2350
        %v2352 = vpop.f32.mrf.mxu0
        %v2353 = vadd.f32 %v461, %v2352
        %2354 = vdwg.mxu0
        %2355 = vmatprep.subr.mxu0 0.0
        %2356 = vmatpush1.msra.mxu0 0.0
        %2357 = vmatprep.subr.mxu0 0.0
        %2358 = vmatpush1.msra.mxu0 0.0
        %2359 = vmatprep.subr.mxu0 0.0
        %2360 = vmatpush1.msra.mxu0 0.0
        %2361 = vmatprep.subr.mxu0 0.0
        %2362 = vmatpush1.msra.mxu0 0.0
        %2363 = vmatprep.subr.mxu0 0.0
        %2364 = vmatpush1.msra.mxu0 0.0
        %2365 = vmatprep.subr.mxu0 0.0
        %2366 = vmatpush1.msra.mxu0 0.0
        %2367 = vmatprep.subr.mxu0 0.0
        %2368 = vmatpush1.msra.mxu0 0.0
        %2369 = vmatprep.subr.mxu0 0.0
        %2370 = vmatpush1.msra.mxu0 0.0
        %2371 = vmatprep.subr.mxu0 0.0
        %2372 = vmatpush1.msra.mxu0 0.0
        %2373 = vmatprep.subr.mxu0 0.0
        %2374 = vmatpush1.msra.mxu0 0.0
        %2375 = vmatprep.subr.mxu0 0.0
        %2376 = vmatpush1.msra.mxu0 0.0
        %2377 = vmatprep.subr.mxu0 0.0
        %2378 = vmatpush1.msra.mxu0 0.0
        %2379 = vmatprep.subr.mxu0 0.0
        %2380 = vmatpush1.msra.mxu0 0.0
        %2381 = vmatprep.subr.mxu0 0.0
        %2382 = vmatpush1.msra.mxu0 0.0
        %2383 = vmatprep.subr.mxu0 %v1991
        %2384 = vmatpush1.msra.mxu0 %v1988
        %2385 = vmatprep.subr.mxu0 %v1900
        %2386 = vmatpush1.msra.mxu0 %v1899
        %2387 = vmatprep.subr.mxu0 0.0
        %2388 = vmatpush2.msra.mxu0 0.0
        %2389 = vmatprep.subr.mxu0 0.0
        %2390 = vmatpush2.msra.mxu0 0.0
        %2391 = vmatprep.subr.mxu0 0.0
        %2392 = vmatpush2.msra.mxu0 0.0
        %2393 = vmatprep.subr.mxu0 0.0
        %2394 = vmatpush2.msra.mxu0 0.0
        %2395 = vmatprep.subr.mxu0 0.0
        %2396 = vmatpush2.msra.mxu0 0.0
        %2397 = vmatprep.subr.mxu0 0.0
        %2398 = vmatpush2.msra.mxu0 0.0
        %2399 = vmatprep.subr.mxu0 0.0
        %2400 = vmatpush2.msra.mxu0 0.0
        %2401 = vmatprep.subr.mxu0 0.0
        %2402 = vmatpush2.msra.mxu0 0.0
        %2403 = vmatprep.subr.mxu0 0.0
        %2404 = vmatpush2.msra.mxu0 0.0
        %2405 = vmatprep.subr.mxu0 0.0
        %2406 = vmatpush2.msra.mxu0 0.0
        %2407 = vmatprep.subr.mxu0 0.0
        %2408 = vmatpush2.msra.mxu0 0.0
        %2409 = vmatprep.subr.mxu0 0.0
        %2410 = vmatpush2.msra.mxu0 0.0
        %2411 = vmatprep.subr.mxu0 0.0
        %2412 = vmatpush2.msra.mxu0 0.0
        %2413 = vmatprep.subr.mxu0 0.0
        %2414 = vmatpush2.msra.mxu0 0.0
        %2415 = vmatprep.subr.mxu0 0.0
        %2416 = vmatpush2.msra.mxu0 0.0
        %2417 = vmatprep.subr.mxu0 0.0
        %2418 = vmatpush2.msra.mxu0 0.0
        %2419 = vmatprep.mubr.f32.mxu0 0.0
        %2420 = vmatmul.mubr.f32.gmra.mxu0 %v465
        %v2421 = vpop.f32.mrf.mxu0
        %v2422 = vadd.f32 %v461, %v2421
        %v2423 = vpop.f32.mrf.mxu0
        %v2424 = vadd.f32 %v461, %v2423
        %2425 = vdwg.mxu0
        %2426 = vmatprep.subr.mxu0 0.0
        %2427 = vmatpush1.msra.mxu0 0.0
        %2428 = vmatprep.subr.mxu0 0.0
        %2429 = vmatpush1.msra.mxu0 0.0
        %2430 = vmatprep.subr.mxu0 0.0
        %2431 = vmatpush1.msra.mxu0 0.0
        %2432 = vmatprep.subr.mxu0 0.0
        %2433 = vmatpush1.msra.mxu0 0.0
        %2434 = vmatprep.subr.mxu0 0.0
        %2435 = vmatpush1.msra.mxu0 0.0
        %2436 = vmatprep.subr.mxu0 0.0
        %2437 = vmatpush1.msra.mxu0 0.0
        %2438 = vmatprep.subr.mxu0 0.0
        %2439 = vmatpush1.msra.mxu0 0.0
        %2440 = vmatprep.subr.mxu0 0.0
        %2441 = vmatpush1.msra.mxu0 0.0
        %2442 = vmatprep.subr.mxu0 0.0
        %2443 = vmatpush1.msra.mxu0 0.0
        %2444 = vmatprep.subr.mxu0 0.0
        %2445 = vmatpush1.msra.mxu0 0.0
        %2446 = vmatprep.subr.mxu0 0.0
        %2447 = vmatpush1.msra.mxu0 0.0
        %2448 = vmatprep.subr.mxu0 0.0
        %2449 = vmatpush1.msra.mxu0 0.0
        %2450 = vmatprep.subr.mxu0 0.0
        %2451 = vmatpush1.msra.mxu0 0.0
        %2452 = vmatprep.subr.mxu0 0.0
        %2453 = vmatpush1.msra.mxu0 0.0
        %2454 = vmatprep.subr.mxu0 %v1997
        %2455 = vmatpush1.msra.mxu0 %v1994
        %2456 = vmatprep.subr.mxu0 %v1902
        %2457 = vmatpush1.msra.mxu0 %v1901
        %2458 = vmatprep.subr.mxu0 0.0
        %2459 = vmatpush2.msra.mxu0 0.0
        %2460 = vmatprep.subr.mxu0 0.0
        %2461 = vmatpush2.msra.mxu0 0.0
        %2462 = vmatprep.subr.mxu0 0.0
        %2463 = vmatpush2.msra.mxu0 0.0
        %2464 = vmatprep.subr.mxu0 0.0
        %2465 = vmatpush2.msra.mxu0 0.0
        %2466 = vmatprep.subr.mxu0 0.0
        %2467 = vmatpush2.msra.mxu0 0.0
        %2468 = vmatprep.subr.mxu0 0.0
        %2469 = vmatpush2.msra.mxu0 0.0
        %2470 = vmatprep.subr.mxu0 0.0
        %2471 = vmatpush2.msra.mxu0 0.0
        %2472 = vmatprep.subr.mxu0 0.0
        %2473 = vmatpush2.msra.mxu0 0.0
        %2474 = vmatprep.subr.mxu0 0.0
        %2475 = vmatpush2.msra.mxu0 0.0
        %2476 = vmatprep.subr.mxu0 0.0
        %2477 = vmatpush2.msra.mxu0 0.0
        %2478 = vmatprep.subr.mxu0 0.0
        %2479 = vmatpush2.msra.mxu0 0.0
        %2480 = vmatprep.subr.mxu0 0.0
        %2481 = vmatpush2.msra.mxu0 0.0
        %2482 = vmatprep.subr.mxu0 0.0
        %2483 = vmatpush2.msra.mxu0 0.0
        %2484 = vmatprep.subr.mxu0 0.0
        %2485 = vmatpush2.msra.mxu0 0.0
        %2486 = vmatprep.subr.mxu0 0.0
        %2487 = vmatpush2.msra.mxu0 0.0
        %2488 = vmatprep.subr.mxu0 0.0
        %2489 = vmatpush2.msra.mxu0 0.0
        %2490 = vmatprep.mubr.f32.mxu0 0.0
        %2491 = vmatmul.mubr.f32.gmra.mxu0 %v465
        %v2492 = vpop.f32.mrf.mxu0
        %v2493 = vadd.f32 %v461, %v2492
        %v2494 = vpop.f32.mrf.mxu0
        %v2495 = vadd.f32 %v461, %v2494
        %2496 = vdwg.mxu0
        %2497 = vmatprep.subr.mxu0 0.0
        %2498 = vmatpush1.msra.mxu0 0.0
        %2499 = vmatprep.subr.mxu0 0.0
        %2500 = vmatpush1.msra.mxu0 0.0
        %2501 = vmatprep.subr.mxu0 0.0
        %2502 = vmatpush1.msra.mxu0 0.0
        %2503 = vmatprep.subr.mxu0 0.0
        %2504 = vmatpush1.msra.mxu0 0.0
        %2505 = vmatprep.subr.mxu0 0.0
        %2506 = vmatpush1.msra.mxu0 0.0
        %2507 = vmatprep.subr.mxu0 0.0
        %2508 = vmatpush1.msra.mxu0 0.0
        %2509 = vmatprep.subr.mxu0 0.0
        %2510 = vmatpush1.msra.mxu0 0.0
        %2511 = vmatprep.subr.mxu0 0.0
        %2512 = vmatpush1.msra.mxu0 0.0
        %2513 = vmatprep.subr.mxu0 0.0
        %2514 = vmatpush1.msra.mxu0 0.0
        %2515 = vmatprep.subr.mxu0 0.0
        %2516 = vmatpush1.msra.mxu0 0.0
        %2517 = vmatprep.subr.mxu0 0.0
        %2518 = vmatpush1.msra.mxu0 0.0
        %2519 = vmatprep.subr.mxu0 0.0
        %2520 = vmatpush1.msra.mxu0 0.0
        %2521 = vmatprep.subr.mxu0 0.0
        %2522 = vmatpush1.msra.mxu0 0.0
        %2523 = vmatprep.subr.mxu0 0.0
        %2524 = vmatpush1.msra.mxu0 0.0
        %2525 = vmatprep.subr.mxu0 %v2003
        %2526 = vmatpush1.msra.mxu0 %v2000
        %2527 = vmatprep.subr.mxu0 %v1904
        %2528 = vmatpush1.msra.mxu0 %v1903
        %2529 = vmatprep.subr.mxu0 0.0
        %2530 = vmatpush2.msra.mxu0 0.0
        %2531 = vmatprep.subr.mxu0 0.0
        %2532 = vmatpush2.msra.mxu0 0.0
        %2533 = vmatprep.subr.mxu0 0.0
        %2534 = vmatpush2.msra.mxu0 0.0
        %2535 = vmatprep.subr.mxu0 0.0
        %2536 = vmatpush2.msra.mxu0 0.0
        %2537 = vmatprep.subr.mxu0 0.0
        %2538 = vmatpush2.msra.mxu0 0.0
        %2539 = vmatprep.subr.mxu0 0.0
        %2540 = vmatpush2.msra.mxu0 0.0
        %2541 = vmatprep.subr.mxu0 0.0
        %2542 = vmatpush2.msra.mxu0 0.0
        %2543 = vmatprep.subr.mxu0 0.0
        %2544 = vmatpush2.msra.mxu0 0.0
        %2545 = vmatprep.subr.mxu0 0.0
        %2546 = vmatpush2.msra.mxu0 0.0
        %2547 = vmatprep.subr.mxu0 0.0
        %2548 = vmatpush2.msra.mxu0 0.0
        %2549 = vmatprep.subr.mxu0 0.0
        %2550 = vmatpush2.msra.mxu0 0.0
        %2551 = vmatprep.subr.mxu0 0.0
        %2552 = vmatpush2.msra.mxu0 0.0
        %2553 = vmatprep.subr.mxu0 0.0
        %2554 = vmatpush2.msra.mxu0 0.0
        %2555 = vmatprep.subr.mxu0 0.0
        %2556 = vmatpush2.msra.mxu0 0.0
        %2557 = vmatprep.subr.mxu0 0.0
        %2558 = vmatpush2.msra.mxu0 0.0
        %2559 = vmatprep.subr.mxu0 0.0
        %2560 = vmatpush2.msra.mxu0 0.0
        %2561 = vmatprep.mubr.f32.mxu0 0.0
        %2562 = vmatmul.mubr.f32.gmra.mxu0 %v465
        %v2563 = vpop.f32.mrf.mxu0
        %v2564 = vadd.f32 %v461, %v2563
        %v2565 = vpop.f32.mrf.mxu0
        %v2566 = vadd.f32 %v461, %v2565
        %2567 = vdwg.mxu0
        %2568 = vmatprep.subr.mxu0 0.0
        %2569 = vmatpush1.msra.mxu0 0.0
        %2570 = vmatprep.subr.mxu0 0.0
        %2571 = vmatpush1.msra.mxu0 0.0
        %2572 = vmatprep.subr.mxu0 0.0
        %2573 = vmatpush1.msra.mxu0 0.0
        %2574 = vmatprep.subr.mxu0 0.0
        %2575 = vmatpush1.msra.mxu0 0.0
        %2576 = vmatprep.subr.mxu0 0.0
        %2577 = vmatpush1.msra.mxu0 0.0
        %2578 = vmatprep.subr.mxu0 0.0
        %2579 = vmatpush1.msra.mxu0 0.0
        %2580 = vmatprep.subr.mxu0 0.0
        %2581 = vmatpush1.msra.mxu0 0.0
        %2582 = vmatprep.subr.mxu0 0.0
        %2583 = vmatpush1.msra.mxu0 0.0
        %2584 = vmatprep.subr.mxu0 0.0
        %2585 = vmatpush1.msra.mxu0 0.0
        %2586 = vmatprep.subr.mxu0 0.0
        %2587 = vmatpush1.msra.mxu0 0.0
        %2588 = vmatprep.subr.mxu0 0.0
        %2589 = vmatpush1.msra.mxu0 0.0
        %2590 = vmatprep.subr.mxu0 0.0
        %2591 = vmatpush1.msra.mxu0 0.0
        %2592 = vmatprep.subr.mxu0 0.0
        %2593 = vmatpush1.msra.mxu0 0.0
        %2594 = vmatprep.subr.mxu0 0.0
        %2595 = vmatpush1.msra.mxu0 0.0
        %2596 = vmatprep.subr.mxu0 %v2009
        %2597 = vmatpush1.msra.mxu0 %v2006
        %2598 = vmatprep.subr.mxu0 %v1906
        %2599 = vmatpush1.msra.mxu0 %v1905
        %2600 = vmatprep.subr.mxu0 0.0
        %2601 = vmatpush2.msra.mxu0 0.0
        %2602 = vmatprep.subr.mxu0 0.0
        %2603 = vmatpush2.msra.mxu0 0.0
        %2604 = vmatprep.subr.mxu0 0.0
        %2605 = vmatpush2.msra.mxu0 0.0
        %2606 = vmatprep.subr.mxu0 0.0
        %2607 = vmatpush2.msra.mxu0 0.0
        %2608 = vmatprep.subr.mxu0 0.0
        %2609 = vmatpush2.msra.mxu0 0.0
        %2610 = vmatprep.subr.mxu0 0.0
        %2611 = vmatpush2.msra.mxu0 0.0
        %2612 = vmatprep.subr.mxu0 0.0
        %2613 = vmatpush2.msra.mxu0 0.0
        %2614 = vmatprep.subr.mxu0 0.0
        %2615 = vmatpush2.msra.mxu0 0.0
        %2616 = vmatprep.subr.mxu0 0.0
        %2617 = vmatpush2.msra.mxu0 0.0
        %2618 = vmatprep.subr.mxu0 0.0
        %2619 = vmatpush2.msra.mxu0 0.0
        %2620 = vmatprep.subr.mxu0 0.0
        %2621 = vmatpush2.msra.mxu0 0.0
        %2622 = vmatprep.subr.mxu0 0.0
        %2623 = vmatpush2.msra.mxu0 0.0
        %2624 = vmatprep.subr.mxu0 0.0
        %2625 = vmatpush2.msra.mxu0 0.0
        %2626 = vmatprep.subr.mxu0 0.0
        %2627 = vmatpush2.msra.mxu0 0.0
        %2628 = vmatprep.subr.mxu0 0.0
        %2629 = vmatpush2.msra.mxu0 0.0
        %2630 = vmatprep.subr.mxu0 0.0
        %2631 = vmatpush2.msra.mxu0 0.0
        %2632 = vmatprep.mubr.f32.mxu0 0.0
        %2633 = vmatmul.mubr.f32.gmra.mxu0 %v465
        %v2634 = vpop.f32.mrf.mxu0
        %v2635 = vadd.f32 %v461, %v2634
        %v2636 = vpop.f32.mrf.mxu0
        %v2637 = vadd.f32 %v461, %v2636
        %2638 = vdwg.mxu0
        %2639 = vmatprep.subr.mxu0 0.0
        %2640 = vmatpush1.msra.mxu0 0.0
        %2641 = vmatprep.subr.mxu0 0.0
        %2642 = vmatpush1.msra.mxu0 0.0
        %2643 = vmatprep.subr.mxu0 0.0
        %2644 = vmatpush1.msra.mxu0 0.0
        %2645 = vmatprep.subr.mxu0 0.0
        %2646 = vmatpush1.msra.mxu0 0.0
        %2647 = vmatprep.subr.mxu0 0.0
        %2648 = vmatpush1.msra.mxu0 0.0
        %2649 = vmatprep.subr.mxu0 0.0
        %2650 = vmatpush1.msra.mxu0 0.0
        %2651 = vmatprep.subr.mxu0 0.0
        %2652 = vmatpush1.msra.mxu0 0.0
        %2653 = vmatprep.subr.mxu0 0.0
        %2654 = vmatpush1.msra.mxu0 0.0
        %2655 = vmatprep.subr.mxu0 0.0
        %2656 = vmatpush1.msra.mxu0 0.0
        %2657 = vmatprep.subr.mxu0 0.0
        %2658 = vmatpush1.msra.mxu0 0.0
        %2659 = vmatprep.subr.mxu0 0.0
        %2660 = vmatpush1.msra.mxu0 0.0
        %2661 = vmatprep.subr.mxu0 0.0
        %2662 = vmatpush1.msra.mxu0 0.0
        %2663 = vmatprep.subr.mxu0 0.0
        %2664 = vmatpush1.msra.mxu0 0.0
        %2665 = vmatprep.subr.mxu0 0.0
        %2666 = vmatpush1.msra.mxu0 0.0
        %2667 = vmatprep.subr.mxu0 %v2015
        %2668 = vmatpush1.msra.mxu0 %v2012
        %2669 = vmatprep.subr.mxu0 %v1908
        %2670 = vmatpush1.msra.mxu0 %v1907
        %2671 = vmatprep.subr.mxu0 0.0
        %2672 = vmatpush2.msra.mxu0 0.0
        %2673 = vmatprep.subr.mxu0 0.0
        %2674 = vmatpush2.msra.mxu0 0.0
        %2675 = vmatprep.subr.mxu0 0.0
        %2676 = vmatpush2.msra.mxu0 0.0
        %2677 = vmatprep.subr.mxu0 0.0
        %2678 = vmatpush2.msra.mxu0 0.0
        %2679 = vmatprep.subr.mxu0 0.0
        %2680 = vmatpush2.msra.mxu0 0.0
        %2681 = vmatprep.subr.mxu0 0.0
        %2682 = vmatpush2.msra.mxu0 0.0
        %2683 = vmatprep.subr.mxu0 0.0
        %2684 = vmatpush2.msra.mxu0 0.0
        %2685 = vmatprep.subr.mxu0 0.0
        %2686 = vmatpush2.msra.mxu0 0.0
        %2687 = vmatprep.subr.mxu0 0.0
        %2688 = vmatpush2.msra.mxu0 0.0
        %2689 = vmatprep.subr.mxu0 0.0
        %2690 = vmatpush2.msra.mxu0 0.0
        %2691 = vmatprep.subr.mxu0 0.0
        %2692 = vmatpush2.msra.mxu0 0.0
        %2693 = vmatprep.subr.mxu0 0.0
        %2694 = vmatpush2.msra.mxu0 0.0
        %2695 = vmatprep.subr.mxu0 0.0
        %2696 = vmatpush2.msra.mxu0 0.0
        %2697 = vmatprep.subr.mxu0 0.0
        %2698 = vmatpush2.msra.mxu0 0.0
        %2699 = vmatprep.subr.mxu0 0.0
        %2700 = vmatpush2.msra.mxu0 0.0
        %2701 = vmatprep.subr.mxu0 0.0
        %2702 = vmatpush2.msra.mxu0 0.0
        %2703 = vmatprep.mubr.f32.mxu0 0.0
        %2704 = vmatmul.mubr.f32.gmra.mxu0 %v465
        %v2705 = vpop.f32.mrf.mxu0
        %v2706 = vadd.f32 %v461, %v2705
        %v2707 = vpop.f32.mrf.mxu0
        %v2708 = vadd.f32 %v461, %v2707
        %2709 = vdwg.mxu0
        %2710 = vmatprep.subr.mxu0 0.0
        %2711 = vmatpush1.msra.mxu0 0.0
        %2712 = vmatprep.subr.mxu0 0.0
        %2713 = vmatpush1.msra.mxu0 0.0
        %2714 = vmatprep.subr.mxu0 0.0
        %2715 = vmatpush1.msra.mxu0 0.0
        %2716 = vmatprep.subr.mxu0 0.0
        %2717 = vmatpush1.msra.mxu0 0.0
        %2718 = vmatprep.subr.mxu0 0.0
        %2719 = vmatpush1.msra.mxu0 0.0
        %2720 = vmatprep.subr.mxu0 0.0
        %2721 = vmatpush1.msra.mxu0 0.0
        %2722 = vmatprep.subr.mxu0 0.0
        %2723 = vmatpush1.msra.mxu0 0.0
        %2724 = vmatprep.subr.mxu0 0.0
        %2725 = vmatpush1.msra.mxu0 0.0
        %2726 = vmatprep.subr.mxu0 0.0
        %2727 = vmatpush1.msra.mxu0 0.0
        %2728 = vmatprep.subr.mxu0 0.0
        %2729 = vmatpush1.msra.mxu0 0.0
        %2730 = vmatprep.subr.mxu0 0.0
        %2731 = vmatpush1.msra.mxu0 0.0
        %2732 = vmatprep.subr.mxu0 0.0
        %2733 = vmatpush1.msra.mxu0 0.0
        %2734 = vmatprep.subr.mxu0 0.0
        %2735 = vmatpush1.msra.mxu0 0.0
        %2736 = vmatprep.subr.mxu0 0.0
        %2737 = vmatpush1.msra.mxu0 0.0
        %2738 = vmatprep.subr.mxu0 %v2021
        %2739 = vmatpush1.msra.mxu0 %v2018
        %2740 = vmatprep.subr.mxu0 %v1910
        %2741 = vmatpush1.msra.mxu0 %v1909
        %2742 = vmatprep.subr.mxu0 0.0
        %2743 = vmatpush2.msra.mxu0 0.0
        %2744 = vmatprep.subr.mxu0 0.0
        %2745 = vmatpush2.msra.mxu0 0.0
        %2746 = vmatprep.subr.mxu0 0.0
        %2747 = vmatpush2.msra.mxu0 0.0
        %2748 = vmatprep.subr.mxu0 0.0
        %2749 = vmatpush2.msra.mxu0 0.0
        %2750 = vmatprep.subr.mxu0 0.0
        %2751 = vmatpush2.msra.mxu0 0.0
        %2752 = vmatprep.subr.mxu0 0.0
        %2753 = vmatpush2.msra.mxu0 0.0
        %2754 = vmatprep.subr.mxu0 0.0
        %2755 = vmatpush2.msra.mxu0 0.0
        %2756 = vmatprep.subr.mxu0 0.0
        %2757 = vmatpush2.msra.mxu0 0.0
        %2758 = vmatprep.subr.mxu0 0.0
        %2759 = vmatpush2.msra.mxu0 0.0
        %2760 = vmatprep.subr.mxu0 0.0
        %2761 = vmatpush2.msra.mxu0 0.0
        %2762 = vmatprep.subr.mxu0 0.0
        %2763 = vmatpush2.msra.mxu0 0.0
        %2764 = vmatprep.subr.mxu0 0.0
        %2765 = vmatpush2.msra.mxu0 0.0
        %2766 = vmatprep.subr.mxu0 0.0
        %2767 = vmatpush2.msra.mxu0 0.0
        %2768 = vmatprep.subr.mxu0 0.0
        %2769 = vmatpush2.msra.mxu0 0.0
        %2770 = vmatprep.subr.mxu0 0.0
        %2771 = vmatpush2.msra.mxu0 0.0
        %2772 = vmatprep.subr.mxu0 0.0
        %2773 = vmatpush2.msra.mxu0 0.0
        %2774 = vmatprep.mubr.f32.mxu0 0.0
        %2775 = vmatmul.mubr.f32.gmra.mxu0 %v465
        %v2776 = vpop.f32.mrf.mxu0
        %v2777 = vadd.f32 %v461, %v2776
        %v2778 = vpop.f32.mrf.mxu0
        %v2779 = vadd.f32 %v461, %v2778
        %2780 = vdwg.mxu0
        %2781 = vmatprep.subr.mxu0 0.0
        %2782 = vmatpush1.msra.mxu0 0.0
        %2783 = vmatprep.subr.mxu0 0.0
        %2784 = vmatpush1.msra.mxu0 0.0
        %2785 = vmatprep.subr.mxu0 0.0
        %2786 = vmatpush1.msra.mxu0 0.0
        %2787 = vmatprep.subr.mxu0 0.0
        %2788 = vmatpush1.msra.mxu0 0.0
        %2789 = vmatprep.subr.mxu0 0.0
        %2790 = vmatpush1.msra.mxu0 0.0
        %2791 = vmatprep.subr.mxu0 0.0
        %2792 = vmatpush1.msra.mxu0 0.0
        %2793 = vmatprep.subr.mxu0 0.0
        %2794 = vmatpush1.msra.mxu0 0.0
        %2795 = vmatprep.subr.mxu0 0.0
        %2796 = vmatpush1.msra.mxu0 0.0
        %2797 = vmatprep.subr.mxu0 0.0
        %2798 = vmatpush1.msra.mxu0 0.0
        %2799 = vmatprep.subr.mxu0 0.0
        %2800 = vmatpush1.msra.mxu0 0.0
        %2801 = vmatprep.subr.mxu0 0.0
        %2802 = vmatpush1.msra.mxu0 0.0
        %2803 = vmatprep.subr.mxu0 0.0
        %2804 = vmatpush1.msra.mxu0 0.0
        %2805 = vmatprep.subr.mxu0 0.0
        %2806 = vmatpush1.msra.mxu0 0.0
        %2807 = vmatprep.subr.mxu0 0.0
        %2808 = vmatpush1.msra.mxu0 0.0
        %2809 = vmatprep.subr.mxu0 %v2027
        %2810 = vmatpush1.msra.mxu0 %v2024
        %2811 = vmatprep.subr.mxu0 %v1912
        %2812 = vmatpush1.msra.mxu0 %v1911
        %2813 = vmatprep.subr.mxu0 0.0
        %2814 = vmatpush2.msra.mxu0 0.0
        %2815 = vmatprep.subr.mxu0 0.0
        %2816 = vmatpush2.msra.mxu0 0.0
        %2817 = vmatprep.subr.mxu0 0.0
        %2818 = vmatpush2.msra.mxu0 0.0
        %2819 = vmatprep.subr.mxu0 0.0
        %2820 = vmatpush2.msra.mxu0 0.0
        %2821 = vmatprep.subr.mxu0 0.0
        %2822 = vmatpush2.msra.mxu0 0.0
        %2823 = vmatprep.subr.mxu0 0.0
        %2824 = vmatpush2.msra.mxu0 0.0
        %2825 = vmatprep.subr.mxu0 0.0
        %2826 = vmatpush2.msra.mxu0 0.0
        %2827 = vmatprep.subr.mxu0 0.0
        %2828 = vmatpush2.msra.mxu0 0.0
        %2829 = vmatprep.subr.mxu0 0.0
        %2830 = vmatpush2.msra.mxu0 0.0
        %2831 = vmatprep.subr.mxu0 0.0
        %2832 = vmatpush2.msra.mxu0 0.0
        %2833 = vmatprep.subr.mxu0 0.0
        %2834 = vmatpush2.msra.mxu0 0.0
        %2835 = vmatprep.subr.mxu0 0.0
        %2836 = vmatpush2.msra.mxu0 0.0
        %2837 = vmatprep.subr.mxu0 0.0
        %2838 = vmatpush2.msra.mxu0 0.0
        %2839 = vmatprep.subr.mxu0 0.0
        %2840 = vmatpush2.msra.mxu0 0.0
        %2841 = vmatprep.subr.mxu0 0.0
        %2842 = vmatpush2.msra.mxu0 0.0
        %2843 = vmatprep.subr.mxu0 0.0
        %2844 = vmatpush2.msra.mxu0 0.0
        %2845 = vmatprep.mubr.f32.mxu0 0.0
        %2846 = vmatmul.mubr.f32.gmra.mxu0 %v465
        %v2847 = vpop.f32.mrf.mxu0
        %v2848 = vadd.f32 %v461, %v2847
        %v2849 = vpop.f32.mrf.mxu0
        %v2850 = vadd.f32 %v461, %v2849
        %2851 = vdwg.mxu0
        %2852 = vmatprep.subr.mxu0 0.0
        %2853 = vmatpush1.msra.mxu0 0.0
        %2854 = vmatprep.subr.mxu0 0.0
        %2855 = vmatpush1.msra.mxu0 0.0
        %2856 = vmatprep.subr.mxu0 0.0
        %2857 = vmatpush1.msra.mxu0 0.0
        %2858 = vmatprep.subr.mxu0 0.0
        %2859 = vmatpush1.msra.mxu0 0.0
        %2860 = vmatprep.subr.mxu0 0.0
        %2861 = vmatpush1.msra.mxu0 0.0
        %2862 = vmatprep.subr.mxu0 0.0
        %2863 = vmatpush1.msra.mxu0 0.0
        %2864 = vmatprep.subr.mxu0 0.0
        %2865 = vmatpush1.msra.mxu0 0.0
        %2866 = vmatprep.subr.mxu0 0.0
        %2867 = vmatpush1.msra.mxu0 0.0
        %2868 = vmatprep.subr.mxu0 0.0
        %2869 = vmatpush1.msra.mxu0 0.0
        %2870 = vmatprep.subr.mxu0 0.0
        %2871 = vmatpush1.msra.mxu0 0.0
        %2872 = vmatprep.subr.mxu0 0.0
        %2873 = vmatpush1.msra.mxu0 0.0
        %2874 = vmatprep.subr.mxu0 0.0
        %2875 = vmatpush1.msra.mxu0 0.0
        %2876 = vmatprep.subr.mxu0 0.0
        %2877 = vmatpush1.msra.mxu0 0.0
        %2878 = vmatprep.subr.mxu0 0.0
        %2879 = vmatpush1.msra.mxu0 0.0
        %2880 = vmatprep.subr.mxu0 %v2033
        %2881 = vmatpush1.msra.mxu0 %v2030
        %2882 = vmatprep.subr.mxu0 %v1914
        %2883 = vmatpush1.msra.mxu0 %v1913
        %2884 = vmatprep.subr.mxu0 0.0
        %2885 = vmatpush2.msra.mxu0 0.0
        %2886 = vmatprep.subr.mxu0 0.0
        %2887 = vmatpush2.msra.mxu0 0.0
        %2888 = vmatprep.subr.mxu0 0.0
        %2889 = vmatpush2.msra.mxu0 0.0
        %2890 = vmatprep.subr.mxu0 0.0
        %2891 = vmatpush2.msra.mxu0 0.0
        %2892 = vmatprep.subr.mxu0 0.0
        %2893 = vmatpush2.msra.mxu0 0.0
        %2894 = vmatprep.subr.mxu0 0.0
        %2895 = vmatpush2.msra.mxu0 0.0
        %2896 = vmatprep.subr.mxu0 0.0
        %2897 = vmatpush2.msra.mxu0 0.0
        %2898 = vmatprep.subr.mxu0 0.0
        %2899 = vmatpush2.msra.mxu0 0.0
        %2900 = vmatprep.subr.mxu0 0.0
        %2901 = vmatpush2.msra.mxu0 0.0
        %2902 = vmatprep.subr.mxu0 0.0
        %2903 = vmatpush2.msra.mxu0 0.0
        %2904 = vmatprep.subr.mxu0 0.0
        %2905 = vmatpush2.msra.mxu0 0.0
        %2906 = vmatprep.subr.mxu0 0.0
        %2907 = vmatpush2.msra.mxu0 0.0
        %2908 = vmatprep.subr.mxu0 0.0
        %2909 = vmatpush2.msra.mxu0 0.0
        %2910 = vmatprep.subr.mxu0 0.0
        %2911 = vmatpush2.msra.mxu0 0.0
        %2912 = vmatprep.subr.mxu0 0.0
        %2913 = vmatpush2.msra.mxu0 0.0
        %2914 = vmatprep.subr.mxu0 0.0
        %2915 = vmatpush2.msra.mxu0 0.0
        %2916 = vmatprep.mubr.f32.mxu0 0.0
        %2917 = vmatmul.mubr.f32.gmra.mxu0 %v465
        %v2918 = vpop.f32.mrf.mxu0
        %v2919 = vadd.f32 %v461, %v2918
        %v2920 = vpop.f32.mrf.mxu0
        %v2921 = vadd.f32 %v461, %v2920
        %2922 = vdwg.mxu0
        %2923 = vmatprep.subr.mxu0 0.0
        %2924 = vmatpush1.msra.mxu0 0.0
        %2925 = vmatprep.subr.mxu0 0.0
        %2926 = vmatpush1.msra.mxu0 0.0
        %2927 = vmatprep.subr.mxu0 0.0
        %2928 = vmatpush1.msra.mxu0 0.0
        %2929 = vmatprep.subr.mxu0 0.0
        %2930 = vmatpush1.msra.mxu0 0.0
        %2931 = vmatprep.subr.mxu0 0.0
        %2932 = vmatpush1.msra.mxu0 0.0
        %2933 = vmatprep.subr.mxu0 0.0
        %2934 = vmatpush1.msra.mxu0 0.0
        %2935 = vmatprep.subr.mxu0 0.0
        %2936 = vmatpush1.msra.mxu0 0.0
        %2937 = vmatprep.subr.mxu0 0.0
        %2938 = vmatpush1.msra.mxu0 0.0
        %2939 = vmatprep.subr.mxu0 0.0
        %2940 = vmatpush1.msra.mxu0 0.0
        %2941 = vmatprep.subr.mxu0 0.0
        %2942 = vmatpush1.msra.mxu0 0.0
        %2943 = vmatprep.subr.mxu0 0.0
        %2944 = vmatpush1.msra.mxu0 0.0
        %2945 = vmatprep.subr.mxu0 0.0
        %2946 = vmatpush1.msra.mxu0 0.0
        %2947 = vmatprep.subr.mxu0 0.0
        %2948 = vmatpush1.msra.mxu0 0.0
        %2949 = vmatprep.subr.mxu0 0.0
        %2950 = vmatpush1.msra.mxu0 0.0
        %2951 = vmatprep.subr.mxu0 %v2039
        %2952 = vmatpush1.msra.mxu0 %v2036
        %2953 = vmatprep.subr.mxu0 %v1916
        %2954 = vmatpush1.msra.mxu0 %v1915
        %2955 = vmatprep.subr.mxu0 0.0
        %2956 = vmatpush2.msra.mxu0 0.0
        %2957 = vmatprep.subr.mxu0 0.0
        %2958 = vmatpush2.msra.mxu0 0.0
        %2959 = vmatprep.subr.mxu0 0.0
        %2960 = vmatpush2.msra.mxu0 0.0
        %2961 = vmatprep.subr.mxu0 0.0
        %2962 = vmatpush2.msra.mxu0 0.0
        %2963 = vmatprep.subr.mxu0 0.0
        %2964 = vmatpush2.msra.mxu0 0.0
        %2965 = vmatprep.subr.mxu0 0.0
        %2966 = vmatpush2.msra.mxu0 0.0
        %2967 = vmatprep.subr.mxu0 0.0
        %2968 = vmatpush2.msra.mxu0 0.0
        %2969 = vmatprep.subr.mxu0 0.0
        %2970 = vmatpush2.msra.mxu0 0.0
        %2971 = vmatprep.subr.mxu0 0.0
        %2972 = vmatpush2.msra.mxu0 0.0
        %2973 = vmatprep.subr.mxu0 0.0
        %2974 = vmatpush2.msra.mxu0 0.0
        %2975 = vmatprep.subr.mxu0 0.0
        %2976 = vmatpush2.msra.mxu0 0.0
        %2977 = vmatprep.subr.mxu0 0.0
        %2978 = vmatpush2.msra.mxu0 0.0
        %2979 = vmatprep.subr.mxu0 0.0
        %2980 = vmatpush2.msra.mxu0 0.0
        %2981 = vmatprep.subr.mxu0 0.0
        %2982 = vmatpush2.msra.mxu0 0.0
        %2983 = vmatprep.subr.mxu0 0.0
        %2984 = vmatpush2.msra.mxu0 0.0
        %2985 = vmatprep.subr.mxu0 0.0
        %2986 = vmatpush2.msra.mxu0 0.0
        %2987 = vmatprep.mubr.f32.mxu0 0.0
        %2988 = vmatmul.mubr.f32.gmra.mxu0 %v465
        %v2989 = vpop.f32.mrf.mxu0
        %v2990 = vadd.f32 %v461, %v2989
        %v2991 = vpop.f32.mrf.mxu0
        %v2992 = vadd.f32 %v461, %v2991
        %2993 = vdwg.mxu0
        %2994 = vmatprep.subr.mxu0 0.0
        %2995 = vmatpush1.msra.mxu0 0.0
        %2996 = vmatprep.subr.mxu0 0.0
        %2997 = vmatpush1.msra.mxu0 0.0
        %2998 = vmatprep.subr.mxu0 0.0
        %2999 = vmatpush1.msra.mxu0 0.0
        %3000 = vmatprep.subr.mxu0 0.0
        %3001 = vmatpush1.msra.mxu0 0.0
        %3002 = vmatprep.subr.mxu0 0.0
        %3003 = vmatpush1.msra.mxu0 0.0
        %3004 = vmatprep.subr.mxu0 0.0
        %3005 = vmatpush1.msra.mxu0 0.0
        %3006 = vmatprep.subr.mxu0 0.0
        %3007 = vmatpush1.msra.mxu0 0.0
        %3008 = vmatprep.subr.mxu0 0.0
        %3009 = vmatpush1.msra.mxu0 0.0
        %3010 = vmatprep.subr.mxu0 0.0
        %3011 = vmatpush1.msra.mxu0 0.0
        %3012 = vmatprep.subr.mxu0 0.0
        %3013 = vmatpush1.msra.mxu0 0.0
        %3014 = vmatprep.subr.mxu0 0.0
        %3015 = vmatpush1.msra.mxu0 0.0
        %3016 = vmatprep.subr.mxu0 0.0
        %3017 = vmatpush1.msra.mxu0 0.0
        %3018 = vmatprep.subr.mxu0 0.0
        %3019 = vmatpush1.msra.mxu0 0.0
        %3020 = vmatprep.subr.mxu0 0.0
        %3021 = vmatpush1.msra.mxu0 0.0
        %3022 = vmatprep.subr.mxu0 %v2045
        %3023 = vmatpush1.msra.mxu0 %v2042
        %3024 = vmatprep.subr.mxu0 %v1918
        %3025 = vmatpush1.msra.mxu0 %v1917
        %3026 = vmatprep.subr.mxu0 0.0
        %3027 = vmatpush2.msra.mxu0 0.0
        %3028 = vmatprep.subr.mxu0 0.0
        %3029 = vmatpush2.msra.mxu0 0.0
        %3030 = vmatprep.subr.mxu0 0.0
        %3031 = vmatpush2.msra.mxu0 0.0
        %3032 = vmatprep.subr.mxu0 0.0
        %3033 = vmatpush2.msra.mxu0 0.0
        %3034 = vmatprep.subr.mxu0 0.0
        %3035 = vmatpush2.msra.mxu0 0.0
        %3036 = vmatprep.subr.mxu0 0.0
        %3037 = vmatpush2.msra.mxu0 0.0
        %3038 = vmatprep.subr.mxu0 0.0
        %3039 = vmatpush2.msra.mxu0 0.0
        %3040 = vmatprep.subr.mxu0 0.0
        %3041 = vmatpush2.msra.mxu0 0.0
        %3042 = vmatprep.subr.mxu0 0.0
        %3043 = vmatpush2.msra.mxu0 0.0
        %3044 = vmatprep.subr.mxu0 0.0
        %3045 = vmatpush2.msra.mxu0 0.0
        %3046 = vmatprep.subr.mxu0 0.0
        %3047 = vmatpush2.msra.mxu0 0.0
        %3048 = vmatprep.subr.mxu0 0.0
        %3049 = vmatpush2.msra.mxu0 0.0
        %3050 = vmatprep.subr.mxu0 0.0
        %3051 = vmatpush2.msra.mxu0 0.0
        %3052 = vmatprep.subr.mxu0 0.0
        %3053 = vmatpush2.msra.mxu0 0.0
        %3054 = vmatprep.subr.mxu0 0.0
        %3055 = vmatpush2.msra.mxu0 0.0
        %3056 = vmatprep.subr.mxu0 0.0
        %3057 = vmatpush2.msra.mxu0 0.0
        %3058 = vmatprep.mubr.f32.mxu0 0.0
        %3059 = vmatmul.mubr.f32.gmra.mxu0 %v465
        %v3060 = vpop.f32.mrf.mxu0
        %v3061 = vadd.f32 %v461, %v3060
        %v3062 = vpop.f32.mrf.mxu0
        %v3063 = vadd.f32 %v461, %v3062
        %3064 = vdwg.mxu0
        %3065 = vmatprep.subr.mxu0 0.0
        %3066 = vmatpush1.msra.mxu0 0.0
        %3067 = vmatprep.subr.mxu0 0.0
        %3068 = vmatpush1.msra.mxu0 0.0
        %3069 = vmatprep.subr.mxu0 0.0
        %3070 = vmatpush1.msra.mxu0 0.0
        %3071 = vmatprep.subr.mxu0 0.0
        %3072 = vmatpush1.msra.mxu0 0.0
        %3073 = vmatprep.subr.mxu0 0.0
        %3074 = vmatpush1.msra.mxu0 0.0
        %3075 = vmatprep.subr.mxu0 0.0
        %3076 = vmatpush1.msra.mxu0 0.0
        %3077 = vmatprep.subr.mxu0 0.0
        %3078 = vmatpush1.msra.mxu0 0.0
        %3079 = vmatprep.subr.mxu0 0.0
        %3080 = vmatpush1.msra.mxu0 0.0
        %3081 = vmatprep.subr.mxu0 0.0
        %3082 = vmatpush1.msra.mxu0 0.0
        %3083 = vmatprep.subr.mxu0 0.0
        %3084 = vmatpush1.msra.mxu0 0.0
        %3085 = vmatprep.subr.mxu0 0.0
        %3086 = vmatpush1.msra.mxu0 0.0
        %3087 = vmatprep.subr.mxu0 0.0
        %3088 = vmatpush1.msra.mxu0 0.0
        %3089 = vmatprep.subr.mxu0 0.0
        %3090 = vmatpush1.msra.mxu0 0.0
        %3091 = vmatprep.subr.mxu0 0.0
        %3092 = vmatpush1.msra.mxu0 0.0
        %3093 = vmatprep.subr.mxu0 %v2051
        %3094 = vmatpush1.msra.mxu0 %v2048
        %3095 = vmatprep.subr.mxu0 %v1920
        %3096 = vmatpush1.msra.mxu0 %v1919
        %3097 = vmatprep.subr.mxu0 0.0
        %3098 = vmatpush2.msra.mxu0 0.0
        %3099 = vmatprep.subr.mxu0 0.0
        %3100 = vmatpush2.msra.mxu0 0.0
        %3101 = vmatprep.subr.mxu0 0.0
        %3102 = vmatpush2.msra.mxu0 0.0
        %3103 = vmatprep.subr.mxu0 0.0
        %3104 = vmatpush2.msra.mxu0 0.0
        %3105 = vmatprep.subr.mxu0 0.0
        %3106 = vmatpush2.msra.mxu0 0.0
        %3107 = vmatprep.subr.mxu0 0.0
        %3108 = vmatpush2.msra.mxu0 0.0
        %3109 = vmatprep.subr.mxu0 0.0
        %3110 = vmatpush2.msra.mxu0 0.0
        %3111 = vmatprep.subr.mxu0 0.0
        %3112 = vmatpush2.msra.mxu0 0.0
        %3113 = vmatprep.subr.mxu0 0.0
        %3114 = vmatpush2.msra.mxu0 0.0
        %3115 = vmatprep.subr.mxu0 0.0
        %3116 = vmatpush2.msra.mxu0 0.0
        %3117 = vmatprep.subr.mxu0 0.0
        %3118 = vmatpush2.msra.mxu0 0.0
        %3119 = vmatprep.subr.mxu0 0.0
        %3120 = vmatpush2.msra.mxu0 0.0
        %3121 = vmatprep.subr.mxu0 0.0
        %3122 = vmatpush2.msra.mxu0 0.0
        %3123 = vmatprep.subr.mxu0 0.0
        %3124 = vmatpush2.msra.mxu0 0.0
        %3125 = vmatprep.subr.mxu0 0.0
        %3126 = vmatpush2.msra.mxu0 0.0
        %3127 = vmatprep.subr.mxu0 0.0
        %3128 = vmatpush2.msra.mxu0 0.0
        %3129 = vmatprep.mubr.f32.mxu0 0.0
        %3130 = vmatmul.mubr.f32.gmra.mxu0 %v465
        %v3131 = vpop.f32.mrf.mxu0
        %v3132 = vadd.f32 %v461, %v3131
        %v3133 = vpop.f32.mrf.mxu0
        %v3134 = vadd.f32 %v461, %v3133
        %3135 = vdwg.mxu0
        %3136 = vmatprep.subr.mxu0 0.0
        %3137 = vmatpush1.msra.mxu0 0.0
        %3138 = vmatprep.subr.mxu0 0.0
        %3139 = vmatpush1.msra.mxu0 0.0
        %3140 = vmatprep.subr.mxu0 0.0
        %3141 = vmatpush1.msra.mxu0 0.0
        %3142 = vmatprep.subr.mxu0 0.0
        %3143 = vmatpush1.msra.mxu0 0.0
        %3144 = vmatprep.subr.mxu0 0.0
        %3145 = vmatpush1.msra.mxu0 0.0
        %3146 = vmatprep.subr.mxu0 0.0
        %3147 = vmatpush1.msra.mxu0 0.0
        %3148 = vmatprep.subr.mxu0 0.0
        %3149 = vmatpush1.msra.mxu0 0.0
        %3150 = vmatprep.subr.mxu0 0.0
        %3151 = vmatpush1.msra.mxu0 0.0
        %3152 = vmatprep.subr.mxu0 0.0
        %3153 = vmatpush1.msra.mxu0 0.0
        %3154 = vmatprep.subr.mxu0 0.0
        %3155 = vmatpush1.msra.mxu0 0.0
        %3156 = vmatprep.subr.mxu0 0.0
        %3157 = vmatpush1.msra.mxu0 0.0
        %3158 = vmatprep.subr.mxu0 0.0
        %3159 = vmatpush1.msra.mxu0 0.0
        %3160 = vmatprep.subr.mxu0 0.0
        %3161 = vmatpush1.msra.mxu0 0.0
        %3162 = vmatprep.subr.mxu0 0.0
        %3163 = vmatpush1.msra.mxu0 0.0
        %3164 = vmatprep.subr.mxu0 %v2057
        %3165 = vmatpush1.msra.mxu0 %v2054
        %3166 = vmatprep.subr.mxu0 %v1922
        %3167 = vmatpush1.msra.mxu0 %v1921
        %3168 = vmatprep.subr.mxu0 0.0
        %3169 = vmatpush2.msra.mxu0 0.0
        %3170 = vmatprep.subr.mxu0 0.0
        %3171 = vmatpush2.msra.mxu0 0.0
        %3172 = vmatprep.subr.mxu0 0.0
        %3173 = vmatpush2.msra.mxu0 0.0
        %3174 = vmatprep.subr.mxu0 0.0
        %3175 = vmatpush2.msra.mxu0 0.0
        %3176 = vmatprep.subr.mxu0 0.0
        %3177 = vmatpush2.msra.mxu0 0.0
        %3178 = vmatprep.subr.mxu0 0.0
        %3179 = vmatpush2.msra.mxu0 0.0
        %3180 = vmatprep.subr.mxu0 0.0
        %3181 = vmatpush2.msra.mxu0 0.0
        %3182 = vmatprep.subr.mxu0 0.0
        %3183 = vmatpush2.msra.mxu0 0.0
        %3184 = vmatprep.subr.mxu0 0.0
        %3185 = vmatpush2.msra.mxu0 0.0
        %3186 = vmatprep.subr.mxu0 0.0
        %3187 = vmatpush2.msra.mxu0 0.0
        %3188 = vmatprep.subr.mxu0 0.0
        %3189 = vmatpush2.msra.mxu0 0.0
        %3190 = vmatprep.subr.mxu0 0.0
        %3191 = vmatpush2.msra.mxu0 0.0
        %3192 = vmatprep.subr.mxu0 0.0
        %3193 = vmatpush2.msra.mxu0 0.0
        %3194 = vmatprep.subr.mxu0 0.0
        %3195 = vmatpush2.msra.mxu0 0.0
        %3196 = vmatprep.subr.mxu0 0.0
        %3197 = vmatpush2.msra.mxu0 0.0
        %3198 = vmatprep.subr.mxu0 0.0
        %3199 = vmatpush2.msra.mxu0 0.0
        %3200 = vmatprep.mubr.f32.mxu0 0.0
        %3201 = vmatmul.mubr.f32.gmra.mxu0 %v465
        %v3202 = vpop.f32.mrf.mxu0
        %v3203 = vadd.f32 %v461, %v3202
        %v3204 = vpop.f32.mrf.mxu0
        %v3205 = vadd.f32 %v461, %v3204
        %3206 = vdwg.mxu0
        %3207 = vmatprep.subr.mxu0 0.0
        %3208 = vmatpush1.msra.mxu0 0.0
        %3209 = vmatprep.subr.mxu0 0.0
        %3210 = vmatpush1.msra.mxu0 0.0
        %3211 = vmatprep.subr.mxu0 0.0
        %3212 = vmatpush1.msra.mxu0 0.0
        %3213 = vmatprep.subr.mxu0 0.0
        %3214 = vmatpush1.msra.mxu0 0.0
        %3215 = vmatprep.subr.mxu0 0.0
        %3216 = vmatpush1.msra.mxu0 0.0
        %3217 = vmatprep.subr.mxu0 0.0
        %3218 = vmatpush1.msra.mxu0 0.0
        %3219 = vmatprep.subr.mxu0 0.0
        %3220 = vmatpush1.msra.mxu0 0.0
        %3221 = vmatprep.subr.mxu0 0.0
        %3222 = vmatpush1.msra.mxu0 0.0
        %3223 = vmatprep.subr.mxu0 0.0
        %3224 = vmatpush1.msra.mxu0 0.0
        %3225 = vmatprep.subr.mxu0 0.0
        %3226 = vmatpush1.msra.mxu0 0.0
        %3227 = vmatprep.subr.mxu0 0.0
        %3228 = vmatpush1.msra.mxu0 0.0
        %3229 = vmatprep.subr.mxu0 0.0
        %3230 = vmatpush1.msra.mxu0 0.0
        %3231 = vmatprep.subr.mxu0 0.0
        %3232 = vmatpush1.msra.mxu0 0.0
        %3233 = vmatprep.subr.mxu0 0.0
        %3234 = vmatpush1.msra.mxu0 0.0
        %3235 = vmatprep.subr.mxu0 %v2063
        %3236 = vmatpush1.msra.mxu0 %v2060
        %3237 = vmatprep.subr.mxu0 %v1924
        %3238 = vmatpush1.msra.mxu0 %v1923
        %3239 = vmatprep.subr.mxu0 0.0
        %3240 = vmatpush2.msra.mxu0 0.0
        %3241 = vmatprep.subr.mxu0 0.0
        %3242 = vmatpush2.msra.mxu0 0.0
        %3243 = vmatprep.subr.mxu0 0.0
        %3244 = vmatpush2.msra.mxu0 0.0
        %3245 = vmatprep.subr.mxu0 0.0
        %3246 = vmatpush2.msra.mxu0 0.0
        %3247 = vmatprep.subr.mxu0 0.0
        %3248 = vmatpush2.msra.mxu0 0.0
        %3249 = vmatprep.subr.mxu0 0.0
        %3250 = vmatpush2.msra.mxu0 0.0
        %3251 = vmatprep.subr.mxu0 0.0
        %3252 = vmatpush2.msra.mxu0 0.0
        %3253 = vmatprep.subr.mxu0 0.0
        %3254 = vmatpush2.msra.mxu0 0.0
        %3255 = vmatprep.subr.mxu0 0.0
        %3256 = vmatpush2.msra.mxu0 0.0
        %3257 = vmatprep.subr.mxu0 0.0
        %3258 = vmatpush2.msra.mxu0 0.0
        %3259 = vmatprep.subr.mxu0 0.0
        %3260 = vmatpush2.msra.mxu0 0.0
        %3261 = vmatprep.subr.mxu0 0.0
        %3262 = vmatpush2.msra.mxu0 0.0
        %3263 = vmatprep.subr.mxu0 0.0
        %3264 = vmatpush2.msra.mxu0 0.0
        %3265 = vmatprep.subr.mxu0 0.0
        %3266 = vmatpush2.msra.mxu0 0.0
        %3267 = vmatprep.subr.mxu0 0.0
        %3268 = vmatpush2.msra.mxu0 0.0
        %3269 = vmatprep.subr.mxu0 0.0
        %3270 = vmatpush2.msra.mxu0 0.0
        %3271 = vmatprep.mubr.f32.mxu0 0.0
        %3272 = vmatmul.mubr.f32.gmra.mxu0 %v465
        %v3273 = vpop.f32.mrf.mxu0
        %v3274 = vadd.f32 %v461, %v3273
        %v3275 = vpop.f32.mrf.mxu0
        %v3276 = vadd.f32 %v461, %v3275
        %3277 = vdwg.mxu0
        %3278 = vmatprep.subr.mxu0 0.0
        %3279 = vmatpush1.msra.mxu0 0.0
        %3280 = vmatprep.subr.mxu0 0.0
        %3281 = vmatpush1.msra.mxu0 0.0
        %3282 = vmatprep.subr.mxu0 0.0
        %3283 = vmatpush1.msra.mxu0 0.0
        %3284 = vmatprep.subr.mxu0 0.0
        %3285 = vmatpush1.msra.mxu0 0.0
        %3286 = vmatprep.subr.mxu0 0.0
        %3287 = vmatpush1.msra.mxu0 0.0
        %3288 = vmatprep.subr.mxu0 0.0
        %3289 = vmatpush1.msra.mxu0 0.0
        %3290 = vmatprep.subr.mxu0 0.0
        %3291 = vmatpush1.msra.mxu0 0.0
        %3292 = vmatprep.subr.mxu0 0.0
        %3293 = vmatpush1.msra.mxu0 0.0
        %3294 = vmatprep.subr.mxu0 0.0
        %3295 = vmatpush1.msra.mxu0 0.0
        %3296 = vmatprep.subr.mxu0 0.0
        %3297 = vmatpush1.msra.mxu0 0.0
        %3298 = vmatprep.subr.mxu0 0.0
        %3299 = vmatpush1.msra.mxu0 0.0
        %3300 = vmatprep.subr.mxu0 0.0
        %3301 = vmatpush1.msra.mxu0 0.0
        %3302 = vmatprep.subr.mxu0 0.0
        %3303 = vmatpush1.msra.mxu0 0.0
        %3304 = vmatprep.subr.mxu0 0.0
        %3305 = vmatpush1.msra.mxu0 0.0
        %3306 = vmatprep.subr.mxu0 %v2069
        %3307 = vmatpush1.msra.mxu0 %v2066
        %3308 = vmatprep.subr.mxu0 %v1926
        %3309 = vmatpush1.msra.mxu0 %v1925
        %3310 = vmatprep.subr.mxu0 0.0
        %3311 = vmatpush2.msra.mxu0 0.0
        %3312 = vmatprep.subr.mxu0 0.0
        %3313 = vmatpush2.msra.mxu0 0.0
        %3314 = vmatprep.subr.mxu0 0.0
        %3315 = vmatpush2.msra.mxu0 0.0
        %3316 = vmatprep.subr.mxu0 0.0
        %3317 = vmatpush2.msra.mxu0 0.0
        %3318 = vmatprep.subr.mxu0 0.0
        %3319 = vmatpush2.msra.mxu0 0.0
        %3320 = vmatprep.subr.mxu0 0.0
        %3321 = vmatpush2.msra.mxu0 0.0
        %3322 = vmatprep.subr.mxu0 0.0
        %3323 = vmatpush2.msra.mxu0 0.0
        %3324 = vmatprep.subr.mxu0 0.0
        %3325 = vmatpush2.msra.mxu0 0.0
        %3326 = vmatprep.subr.mxu0 0.0
        %3327 = vmatpush2.msra.mxu0 0.0
        %3328 = vmatprep.subr.mxu0 0.0
        %3329 = vmatpush2.msra.mxu0 0.0
        %3330 = vmatprep.subr.mxu0 0.0
        %3331 = vmatpush2.msra.mxu0 0.0
        %3332 = vmatprep.subr.mxu0 0.0
        %3333 = vmatpush2.msra.mxu0 0.0
        %3334 = vmatprep.subr.mxu0 0.0
        %3335 = vmatpush2.msra.mxu0 0.0
        %3336 = vmatprep.subr.mxu0 0.0
        %3337 = vmatpush2.msra.mxu0 0.0
        %3338 = vmatprep.subr.mxu0 0.0
        %3339 = vmatpush2.msra.mxu0 0.0
        %3340 = vmatprep.subr.mxu0 0.0
        %3341 = vmatpush2.msra.mxu0 0.0
        %3342 = vmatprep.mubr.f32.mxu0 0.0
        %3343 = vmatmul.mubr.f32.gmra.mxu0 %v465
        %v3344 = vpop.f32.mrf.mxu0
        %v3345 = vadd.f32 %v461, %v3344
        %v3346 = vpop.f32.mrf.mxu0
        %v3347 = vadd.f32 %v461, %v3346
        %3348 = vdwg.mxu0
        %v3349 = vmax.f32 %v2138, 0.0
        %v3350 = vmax.f32 %v2140, 0.0
        %v3351 = vmax.f32 %v2209, 0.0
        %v3352 = vmax.f32 %v2211, 0.0
        %v3353 = vmax.f32 %v2280, 0.0
        %v3354 = vmax.f32 %v2282, 0.0
        %v3355 = vmax.f32 %v2351, 0.0
        %v3356 = vmax.f32 %v2353, 0.0
        %v3357 = vmax.f32 %v2422, 0.0
        %v3358 = vmax.f32 %v2424, 0.0
        %v3359 = vmax.f32 %v2493, 0.0
        %v3360 = vmax.f32 %v2495, 0.0
        %v3361 = vmax.f32 %v2564, 0.0
        %v3362 = vmax.f32 %v2566, 0.0
        %v3363 = vmax.f32 %v2635, 0.0
        %v3364 = vmax.f32 %v2637, 0.0
        %v3365 = vmax.f32 %v2706, 0.0
        %v3366 = vmax.f32 %v2708, 0.0
        %v3367 = vmax.f32 %v2777, 0.0
        %v3368 = vmax.f32 %v2779, 0.0
        %v3369 = vmax.f32 %v2848, 0.0
        %v3370 = vmax.f32 %v2850, 0.0
        %v3371 = vmax.f32 %v2919, 0.0
        %v3372 = vmax.f32 %v2921, 0.0
        %v3373 = vmax.f32 %v2990, 0.0
        %v3374 = vmax.f32 %v2992, 0.0
        %v3375 = vmax.f32 %v3061, 0.0
        %v3376 = vmax.f32 %v3063, 0.0
        %v3377 = vmax.f32 %v3132, 0.0
        %v3378 = vmax.f32 %v3134, 0.0
        %v3379 = vmax.f32 %v3203, 0.0
        %v3380 = vmax.f32 %v3205, 0.0
        %v3381 = vmax.f32 %v3274, 0.0
        %v3382 = vmax.f32 %v3276, 0.0
        %v3383 = vmax.f32 %v3345, 0.0
        %v3384 = vmax.f32 %v3347, 0.0
        %v3385 = vmax.f32 %v1854, %v3349
        %v3386 = vmax.f32 %v1855, %v3350
        %v3387 = vmax.f32 %v1856, %v3351
        %v3388 = vmax.f32 %v1857, %v3352
        %v3389 = vmax.f32 %v1858, %v3353
        %v3390 = vmax.f32 %v1859, %v3354
        %v3391 = vmax.f32 %v1860, %v3355
        %v3392 = vmax.f32 %v1861, %v3356
        %v3393 = vmax.f32 %v1862, %v3357
        %v3394 = vmax.f32 %v1863, %v3358
        %v3395 = vmax.f32 %v1864, %v3359
        %v3396 = vmax.f32 %v1865, %v3360
        %v3397 = vmax.f32 %v1866, %v3361
        %v3398 = vmax.f32 %v1867, %v3362
        %v3399 = vmax.f32 %v1868, %v3363
        %v3400 = vmax.f32 %v1869, %v3364
        %v3401 = vmax.f32 %v1870, %v3365
        %v3402 = vmax.f32 %v1871, %v3366
        %v3403 = vmax.f32 %v1872, %v3367
        %v3404 = vmax.f32 %v1873, %v3368
        %v3405 = vmax.f32 %v1874, %v3369
        %v3406 = vmax.f32 %v1875, %v3370
        %v3407 = vmax.f32 %v1876, %v3371
        %v3408 = vmax.f32 %v1877, %v3372
        %v3409 = vmax.f32 %v1878, %v3373
        %v3410 = vmax.f32 %v1879, %v3374
        %v3411 = vmax.f32 %v1880, %v3375
        %v3412 = vmax.f32 %v1881, %v3376
        %v3413 = vmax.f32 %v1882, %v3377
        %v3414 = vmax.f32 %v1883, %v3378
        %v3415 = vmax.f32 %v1884, %v3379
        %v3416 = vmax.f32 %v1885, %v3380
        %v3417 = vmax.f32 %v1886, %v3381
        %v3418 = vmax.f32 %v1887, %v3382
        %v3419 = vmax.f32 %v1888, %v3383
        %v3420 = vmax.f32 %v1889, %v3384
        %s3421 = scalar_lea.vmem %s383, 1152
        %v3422 = vld [vmem:[%s3421] sm:$0xff]
        %v3423 = vld [vmem:[%s3421 + $0x8] sm:$0xff]
        %v3424 = vld [vmem:[%s3421 + $0x10] sm:$0xff]
        %v3425 = vld [vmem:[%s3421 + $0x18] sm:$0xff]
        %v3426 = vld [vmem:[%s3421 + $0x20] sm:$0xff]
        %v3427 = vld [vmem:[%s3421 + $0x28] sm:$0xff]
        %v3428 = vld [vmem:[%s3421 + $0x30] sm:$0xff]
        %v3429 = vld [vmem:[%s3421 + $0x38] sm:$0xff]
        %v3430 = vld [vmem:[%s3421 + $0x40] sm:$0xff]
        %v3431 = vld [vmem:[%s3421 + $0x48] sm:$0xff]
        %v3432 = vld [vmem:[%s3421 + $0x50] sm:$0xff]
        %v3433 = vld [vmem:[%s3421 + $0x58] sm:$0xff]
        %v3434 = vld [vmem:[%s3421 + $0x60] sm:$0xff]
        %v3435 = vld [vmem:[%s3421 + $0x68] sm:$0xff]
        %v3436 = vld [vmem:[%s3421 + $0x70] sm:$0xff]
        %v3437 = vld [vmem:[%s3421 + $0x78] sm:$0xff]
        %v3438 = vld [vmem:[%s3421 + $0x80] sm:$0xff]
        %v3439 = vld [vmem:[%s3421 + $0x88] sm:$0xff]
        %v3440 = vld [vmem:[%s3421 + $0x90] sm:$0xff]
        %v3441 = vld [vmem:[%s3421 + $0x98] sm:$0xff]
        %v3442 = vld [vmem:[%s3421 + $0xa0] sm:$0xff]
        %v3443 = vld [vmem:[%s3421 + $0xa8] sm:$0xff]
        %v3444 = vld [vmem:[%s3421 + $0xb0] sm:$0xff]
        %v3445 = vld [vmem:[%s3421 + $0xb8] sm:$0xff]
        %v3446 = vld [vmem:[%s3421 + $0xc0] sm:$0xff]
        %v3447 = vld [vmem:[%s3421 + $0xc8] sm:$0xff]
        %v3448 = vld [vmem:[%s3421 + $0xd0] sm:$0xff]
        %v3449 = vld [vmem:[%s3421 + $0xd8] sm:$0xff]
        %v3450 = vld [vmem:[%s3421 + $0xe0] sm:$0xff]
        %v3451 = vld [vmem:[%s3421 + $0xe8] sm:$0xff]
        %v3452 = vld [vmem:[%s3421 + $0xf0] sm:$0xff]
        %v3453 = vld [vmem:[%s3421 + $0xf8] sm:$0xff]
        %v3454 = vld [vmem:[%s3421 + $0x100] sm:$0xff]
        %v3455 = vld [vmem:[%s3421 + $0x108] sm:$0xff]
        %v3456 = vld [vmem:[%s3421 + $0x110] sm:$0xff]
        %v3457 = vld [vmem:[%s3421 + $0x118] sm:$0xff]
        %v3458 = vld [vmem:[%s3421 + $0x120] sm:$0x1]
        %v3459 = vld [vmem:[%s3421 + $0x128] sm:$0x1]
        %v3460 = vld [vmem:[%s3421 + $0x130] sm:$0x1]
        %v3461 = vld [vmem:[%s3421 + $0x138] sm:$0x1]
        %v3462 = vld [vmem:[%s3421 + $0x140] sm:$0x1]
        %v3463 = vld [vmem:[%s3421 + $0x148] sm:$0x1]
        %v3464 = vld [vmem:[%s3421 + $0x150] sm:$0x1]
        %v3465 = vld [vmem:[%s3421 + $0x158] sm:$0x1]
        %v3466 = vld [vmem:[%s3421 + $0x160] sm:$0x1]
        %v3467 = vld [vmem:[%s3421 + $0x168] sm:$0x1]
        %v3468 = vld [vmem:[%s3421 + $0x170] sm:$0x1]
        %v3469 = vld [vmem:[%s3421 + $0x178] sm:$0x1]
        %v3470 = vld [vmem:[%s3421 + $0x180] sm:$0x1]
        %v3471 = vld [vmem:[%s3421 + $0x188] sm:$0x1]
        %v3472 = vld [vmem:[%s3421 + $0x190] sm:$0x1]
        %v3473 = vld [vmem:[%s3421 + $0x198] sm:$0x1]
        %v3474 = vld [vmem:[%s3421 + $0x1a0] sm:$0x1]
        %v3475 = vld [vmem:[%s3421 + $0x1a8] sm:$0x1]
        %v3476 = vld [vmem:[%s3421 + $0x1b0] sm:$0x1]
        %v3477 = vld [vmem:[%s3421 + $0x1b8] sm:$0x1]
        %v3478 = vld [vmem:[%s3421 + $0x1c0] sm:$0x1]
        %v3479 = vld [vmem:[%s3421 + $0x1c8] sm:$0x1]
        %v3480 = vld [vmem:[%s3421 + $0x1d0] sm:$0x1]
        %v3481 = vld [vmem:[%s3421 + $0x1d8] sm:$0x1]
        %v3482 = vld [vmem:[%s3421 + $0x1e0] sm:$0x1]
        %v3483 = vld [vmem:[%s3421 + $0x1e8] sm:$0x1]
        %v3484 = vld [vmem:[%s3421 + $0x1f0] sm:$0x1]
        %v3485 = vld [vmem:[%s3421 + $0x1f8] sm:$0x1]
        %v3486 = vld [vmem:[%s3421 + $0x200] sm:$0x1]
        %v3487 = vld [vmem:[%s3421 + $0x208] sm:$0x1]
        %v3488 = vld [vmem:[%s3421 + $0x210] sm:$0x1]
        %v3489 = vld [vmem:[%s3421 + $0x218] sm:$0x1]
        %v3490 = vld [vmem:[%s3421 + $0x220] sm:$0x1]
        %v3491 = vld [vmem:[%s3421 + $0x228] sm:$0x1]
        %v3492 = vld [vmem:[%s3421 + $0x230] sm:$0x1]
        %v3493 = vld [vmem:[%s3421 + $0x238] sm:$0x1]
        %v3495 = vsel %vm467, %v3458, 0
        %v3498 = vsel %vm467, %v3459, 0
        %v3501 = vsel %vm467, %v3460, 0
        %v3504 = vsel %vm467, %v3461, 0
        %v3507 = vsel %vm467, %v3462, 0
        %v3510 = vsel %vm467, %v3463, 0
        %v3513 = vsel %vm467, %v3464, 0
        %v3516 = vsel %vm467, %v3465, 0
        %v3519 = vsel %vm467, %v3466, 0
        %v3522 = vsel %vm467, %v3467, 0
        %v3525 = vsel %vm467, %v3468, 0
        %v3528 = vsel %vm467, %v3469, 0
        %v3531 = vsel %vm467, %v3470, 0
        %v3534 = vsel %vm467, %v3471, 0
        %v3537 = vsel %vm467, %v3472, 0
        %v3540 = vsel %vm467, %v3473, 0
        %v3543 = vsel %vm467, %v3474, 0
        %v3546 = vsel %vm467, %v3475, 0
        %v3549 = vsel %vm467, %v3476, 0
        %v3552 = vsel %vm467, %v3477, 0
        %v3555 = vsel %vm467, %v3478, 0
        %v3558 = vsel %vm467, %v3479, 0
        %v3561 = vsel %vm467, %v3480, 0
        %v3564 = vsel %vm467, %v3481, 0
        %v3567 = vsel %vm467, %v3482, 0
        %v3570 = vsel %vm467, %v3483, 0
        %v3573 = vsel %vm467, %v3484, 0
        %v3576 = vsel %vm467, %v3485, 0
        %v3579 = vsel %vm467, %v3486, 0
        %v3582 = vsel %vm467, %v3487, 0
        %v3585 = vsel %vm467, %v3488, 0
        %v3588 = vsel %vm467, %v3489, 0
        %v3591 = vsel %vm467, %v3490, 0
        %v3594 = vsel %vm467, %v3491, 0
        %v3597 = vsel %vm467, %v3492, 0
        %v3600 = vsel %vm467, %v3493, 0
        %3602 = vmatprep.subr.mxu0 0.0
        %3603 = vmatpush1.msra.mxu0 0.0
        %3604 = vmatprep.subr.mxu0 0.0
        %3605 = vmatpush1.msra.mxu0 0.0
        %3606 = vmatprep.subr.mxu0 0.0
        %3607 = vmatpush1.msra.mxu0 0.0
        %3608 = vmatprep.subr.mxu0 0.0
        %3609 = vmatpush1.msra.mxu0 0.0
        %3610 = vmatprep.subr.mxu0 0.0
        %3611 = vmatpush1.msra.mxu0 0.0
        %3612 = vmatprep.subr.mxu0 0.0
        %3613 = vmatpush1.msra.mxu0 0.0
        %3614 = vmatprep.subr.mxu0 0.0
        %3615 = vmatpush1.msra.mxu0 0.0
        %3616 = vmatprep.subr.mxu0 0.0
        %3617 = vmatpush1.msra.mxu0 0.0
        %3618 = vmatprep.subr.mxu0 0.0
        %3619 = vmatpush1.msra.mxu0 0.0
        %3620 = vmatprep.subr.mxu0 0.0
        %3621 = vmatpush1.msra.mxu0 0.0
        %3622 = vmatprep.subr.mxu0 0.0
        %3623 = vmatpush1.msra.mxu0 0.0
        %3624 = vmatprep.subr.mxu0 0.0
        %3625 = vmatpush1.msra.mxu0 0.0
        %3626 = vmatprep.subr.mxu0 0.0
        %3627 = vmatpush1.msra.mxu0 0.0
        %3628 = vmatprep.subr.mxu0 0.0
        %3629 = vmatpush1.msra.mxu0 0.0
        %3630 = vmatprep.subr.mxu0 %v3498
        %3631 = vmatpush1.msra.mxu0 %v3495
        %3632 = vmatprep.subr.mxu0 %v3423
        %3633 = vmatpush1.msra.mxu0 %v3422
        %3634 = vmatprep.subr.mxu0 0.0
        %3635 = vmatpush2.msra.mxu0 0.0
        %3636 = vmatprep.subr.mxu0 0.0
        %3637 = vmatpush2.msra.mxu0 0.0
        %3638 = vmatprep.subr.mxu0 0.0
        %3639 = vmatpush2.msra.mxu0 0.0
        %3640 = vmatprep.subr.mxu0 0.0
        %3641 = vmatpush2.msra.mxu0 0.0
        %3642 = vmatprep.subr.mxu0 0.0
        %3643 = vmatpush2.msra.mxu0 0.0
        %3644 = vmatprep.subr.mxu0 0.0
        %3645 = vmatpush2.msra.mxu0 0.0
        %3646 = vmatprep.subr.mxu0 0.0
        %3647 = vmatpush2.msra.mxu0 0.0
        %3648 = vmatprep.subr.mxu0 0.0
        %3649 = vmatpush2.msra.mxu0 0.0
        %3650 = vmatprep.subr.mxu0 0.0
        %3651 = vmatpush2.msra.mxu0 0.0
        %3652 = vmatprep.subr.mxu0 0.0
        %3653 = vmatpush2.msra.mxu0 0.0
        %3654 = vmatprep.subr.mxu0 0.0
        %3655 = vmatpush2.msra.mxu0 0.0
        %3656 = vmatprep.subr.mxu0 0.0
        %3657 = vmatpush2.msra.mxu0 0.0
        %3658 = vmatprep.subr.mxu0 0.0
        %3659 = vmatpush2.msra.mxu0 0.0
        %3660 = vmatprep.subr.mxu0 0.0
        %3661 = vmatpush2.msra.mxu0 0.0
        %3662 = vmatprep.subr.mxu0 0.0
        %3663 = vmatpush2.msra.mxu0 0.0
        %3664 = vmatprep.subr.mxu0 0.0
        %3665 = vmatpush2.msra.mxu0 0.0
        %3666 = vmatprep.mubr.f32.mxu0 0.0
        %3667 = vmatmul.mubr.f32.gmra.mxu0 %v465
        %v3668 = vpop.f32.mrf.mxu0
        %v3669 = vadd.f32 %v461, %v3668
        %v3670 = vpop.f32.mrf.mxu0
        %v3671 = vadd.f32 %v461, %v3670
        %3672 = vdwg.mxu0
        %3673 = vmatprep.subr.mxu0 0.0
        %3674 = vmatpush1.msra.mxu0 0.0
        %3675 = vmatprep.subr.mxu0 0.0
        %3676 = vmatpush1.msra.mxu0 0.0
        %3677 = vmatprep.subr.mxu0 0.0
        %3678 = vmatpush1.msra.mxu0 0.0
        %3679 = vmatprep.subr.mxu0 0.0
        %3680 = vmatpush1.msra.mxu0 0.0
        %3681 = vmatprep.subr.mxu0 0.0
        %3682 = vmatpush1.msra.mxu0 0.0
        %3683 = vmatprep.subr.mxu0 0.0
        %3684 = vmatpush1.msra.mxu0 0.0
        %3685 = vmatprep.subr.mxu0 0.0
        %3686 = vmatpush1.msra.mxu0 0.0
        %3687 = vmatprep.subr.mxu0 0.0
        %3688 = vmatpush1.msra.mxu0 0.0
        %3689 = vmatprep.subr.mxu0 0.0
        %3690 = vmatpush1.msra.mxu0 0.0
        %3691 = vmatprep.subr.mxu0 0.0
        %3692 = vmatpush1.msra.mxu0 0.0
        %3693 = vmatprep.subr.mxu0 0.0
        %3694 = vmatpush1.msra.mxu0 0.0
        %3695 = vmatprep.subr.mxu0 0.0
        %3696 = vmatpush1.msra.mxu0 0.0
        %3697 = vmatprep.subr.mxu0 0.0
        %3698 = vmatpush1.msra.mxu0 0.0
        %3699 = vmatprep.subr.mxu0 0.0
        %3700 = vmatpush1.msra.mxu0 0.0
        %3701 = vmatprep.subr.mxu0 %v3504
        %3702 = vmatpush1.msra.mxu0 %v3501
        %3703 = vmatprep.subr.mxu0 %v3425
        %3704 = vmatpush1.msra.mxu0 %v3424
        %3705 = vmatprep.subr.mxu0 0.0
        %3706 = vmatpush2.msra.mxu0 0.0
        %3707 = vmatprep.subr.mxu0 0.0
        %3708 = vmatpush2.msra.mxu0 0.0
        %3709 = vmatprep.subr.mxu0 0.0
        %3710 = vmatpush2.msra.mxu0 0.0
        %3711 = vmatprep.subr.mxu0 0.0
        %3712 = vmatpush2.msra.mxu0 0.0
        %3713 = vmatprep.subr.mxu0 0.0
        %3714 = vmatpush2.msra.mxu0 0.0
        %3715 = vmatprep.subr.mxu0 0.0
        %3716 = vmatpush2.msra.mxu0 0.0
        %3717 = vmatprep.subr.mxu0 0.0
        %3718 = vmatpush2.msra.mxu0 0.0
        %3719 = vmatprep.subr.mxu0 0.0
        %3720 = vmatpush2.msra.mxu0 0.0
        %3721 = vmatprep.subr.mxu0 0.0
        %3722 = vmatpush2.msra.mxu0 0.0
        %3723 = vmatprep.subr.mxu0 0.0
        %3724 = vmatpush2.msra.mxu0 0.0
        %3725 = vmatprep.subr.mxu0 0.0
        %3726 = vmatpush2.msra.mxu0 0.0
        %3727 = vmatprep.subr.mxu0 0.0
        %3728 = vmatpush2.msra.mxu0 0.0
        %3729 = vmatprep.subr.mxu0 0.0
        %3730 = vmatpush2.msra.mxu0 0.0
        %3731 = vmatprep.subr.mxu0 0.0
        %3732 = vmatpush2.msra.mxu0 0.0
        %3733 = vmatprep.subr.mxu0 0.0
        %3734 = vmatpush2.msra.mxu0 0.0
        %3735 = vmatprep.subr.mxu0 0.0
        %3736 = vmatpush2.msra.mxu0 0.0
        %3737 = vmatprep.mubr.f32.mxu0 0.0
        %3738 = vmatmul.mubr.f32.gmra.mxu0 %v465
        %v3739 = vpop.f32.mrf.mxu0
        %v3740 = vadd.f32 %v461, %v3739
        %v3741 = vpop.f32.mrf.mxu0
        %v3742 = vadd.f32 %v461, %v3741
        %3743 = vdwg.mxu0
        %3744 = vmatprep.subr.mxu0 0.0
        %3745 = vmatpush1.msra.mxu0 0.0
        %3746 = vmatprep.subr.mxu0 0.0
        %3747 = vmatpush1.msra.mxu0 0.0
        %3748 = vmatprep.subr.mxu0 0.0
        %3749 = vmatpush1.msra.mxu0 0.0
        %3750 = vmatprep.subr.mxu0 0.0
        %3751 = vmatpush1.msra.mxu0 0.0
        %3752 = vmatprep.subr.mxu0 0.0
        %3753 = vmatpush1.msra.mxu0 0.0
        %3754 = vmatprep.subr.mxu0 0.0
        %3755 = vmatpush1.msra.mxu0 0.0
        %3756 = vmatprep.subr.mxu0 0.0
        %3757 = vmatpush1.msra.mxu0 0.0
        %3758 = vmatprep.subr.mxu0 0.0
        %3759 = vmatpush1.msra.mxu0 0.0
        %3760 = vmatprep.subr.mxu0 0.0
        %3761 = vmatpush1.msra.mxu0 0.0
        %3762 = vmatprep.subr.mxu0 0.0
        %3763 = vmatpush1.msra.mxu0 0.0
        %3764 = vmatprep.subr.mxu0 0.0
        %3765 = vmatpush1.msra.mxu0 0.0
        %3766 = vmatprep.subr.mxu0 0.0
        %3767 = vmatpush1.msra.mxu0 0.0
        %3768 = vmatprep.subr.mxu0 0.0
        %3769 = vmatpush1.msra.mxu0 0.0
        %3770 = vmatprep.subr.mxu0 0.0
        %3771 = vmatpush1.msra.mxu0 0.0
        %3772 = vmatprep.subr.mxu0 %v3510
        %3773 = vmatpush1.msra.mxu0 %v3507
        %3774 = vmatprep.subr.mxu0 %v3427
        %3775 = vmatpush1.msra.mxu0 %v3426
        %3776 = vmatprep.subr.mxu0 0.0
        %3777 = vmatpush2.msra.mxu0 0.0
        %3778 = vmatprep.subr.mxu0 0.0
        %3779 = vmatpush2.msra.mxu0 0.0
        %3780 = vmatprep.subr.mxu0 0.0
        %3781 = vmatpush2.msra.mxu0 0.0
        %3782 = vmatprep.subr.mxu0 0.0
        %3783 = vmatpush2.msra.mxu0 0.0
        %3784 = vmatprep.subr.mxu0 0.0
        %3785 = vmatpush2.msra.mxu0 0.0
        %3786 = vmatprep.subr.mxu0 0.0
        %3787 = vmatpush2.msra.mxu0 0.0
        %3788 = vmatprep.subr.mxu0 0.0
        %3789 = vmatpush2.msra.mxu0 0.0
        %3790 = vmatprep.subr.mxu0 0.0
        %3791 = vmatpush2.msra.mxu0 0.0
        %3792 = vmatprep.subr.mxu0 0.0
        %3793 = vmatpush2.msra.mxu0 0.0
        %3794 = vmatprep.subr.mxu0 0.0
        %3795 = vmatpush2.msra.mxu0 0.0
        %3796 = vmatprep.subr.mxu0 0.0
        %3797 = vmatpush2.msra.mxu0 0.0
        %3798 = vmatprep.subr.mxu0 0.0
        %3799 = vmatpush2.msra.mxu0 0.0
        %3800 = vmatprep.subr.mxu0 0.0
        %3801 = vmatpush2.msra.mxu0 0.0
        %3802 = vmatprep.subr.mxu0 0.0
        %3803 = vmatpush2.msra.mxu0 0.0
        %3804 = vmatprep.subr.mxu0 0.0
        %3805 = vmatpush2.msra.mxu0 0.0
        %3806 = vmatprep.subr.mxu0 0.0
        %3807 = vmatpush2.msra.mxu0 0.0
        %3808 = vmatprep.mubr.f32.mxu0 0.0
        %3809 = vmatmul.mubr.f32.gmra.mxu0 %v465
        %v3810 = vpop.f32.mrf.mxu0
        %v3811 = vadd.f32 %v461, %v3810
        %v3812 = vpop.f32.mrf.mxu0
        %v3813 = vadd.f32 %v461, %v3812
        %3814 = vdwg.mxu0
        %3815 = vmatprep.subr.mxu0 0.0
        %3816 = vmatpush1.msra.mxu0 0.0
        %3817 = vmatprep.subr.mxu0 0.0
        %3818 = vmatpush1.msra.mxu0 0.0
        %3819 = vmatprep.subr.mxu0 0.0
        %3820 = vmatpush1.msra.mxu0 0.0
        %3821 = vmatprep.subr.mxu0 0.0
        %3822 = vmatpush1.msra.mxu0 0.0
        %3823 = vmatprep.subr.mxu0 0.0
        %3824 = vmatpush1.msra.mxu0 0.0
        %3825 = vmatprep.subr.mxu0 0.0
        %3826 = vmatpush1.msra.mxu0 0.0
        %3827 = vmatprep.subr.mxu0 0.0
        %3828 = vmatpush1.msra.mxu0 0.0
        %3829 = vmatprep.subr.mxu0 0.0
        %3830 = vmatpush1.msra.mxu0 0.0
        %3831 = vmatprep.subr.mxu0 0.0
        %3832 = vmatpush1.msra.mxu0 0.0
        %3833 = vmatprep.subr.mxu0 0.0
        %3834 = vmatpush1.msra.mxu0 0.0
        %3835 = vmatprep.subr.mxu0 0.0
        %3836 = vmatpush1.msra.mxu0 0.0
        %3837 = vmatprep.subr.mxu0 0.0
        %3838 = vmatpush1.msra.mxu0 0.0
        %3839 = vmatprep.subr.mxu0 0.0
        %3840 = vmatpush1.msra.mxu0 0.0
        %3841 = vmatprep.subr.mxu0 0.0
        %3842 = vmatpush1.msra.mxu0 0.0
        %3843 = vmatprep.subr.mxu0 %v3516
        %3844 = vmatpush1.msra.mxu0 %v3513
        %3845 = vmatprep.subr.mxu0 %v3429
        %3846 = vmatpush1.msra.mxu0 %v3428
        %3847 = vmatprep.subr.mxu0 0.0
        %3848 = vmatpush2.msra.mxu0 0.0
        %3849 = vmatprep.subr.mxu0 0.0
        %3850 = vmatpush2.msra.mxu0 0.0
        %3851 = vmatprep.subr.mxu0 0.0
        %3852 = vmatpush2.msra.mxu0 0.0
        %3853 = vmatprep.subr.mxu0 0.0
        %3854 = vmatpush2.msra.mxu0 0.0
        %3855 = vmatprep.subr.mxu0 0.0
        %3856 = vmatpush2.msra.mxu0 0.0
        %3857 = vmatprep.subr.mxu0 0.0
        %3858 = vmatpush2.msra.mxu0 0.0
        %3859 = vmatprep.subr.mxu0 0.0
        %3860 = vmatpush2.msra.mxu0 0.0
        %3861 = vmatprep.subr.mxu0 0.0
        %3862 = vmatpush2.msra.mxu0 0.0
        %3863 = vmatprep.subr.mxu0 0.0
        %3864 = vmatpush2.msra.mxu0 0.0
        %3865 = vmatprep.subr.mxu0 0.0
        %3866 = vmatpush2.msra.mxu0 0.0
        %3867 = vmatprep.subr.mxu0 0.0
        %3868 = vmatpush2.msra.mxu0 0.0
        %3869 = vmatprep.subr.mxu0 0.0
        %3870 = vmatpush2.msra.mxu0 0.0
        %3871 = vmatprep.subr.mxu0 0.0
        %3872 = vmatpush2.msra.mxu0 0.0
        %3873 = vmatprep.subr.mxu0 0.0
        %3874 = vmatpush2.msra.mxu0 0.0
        %3875 = vmatprep.subr.mxu0 0.0
        %3876 = vmatpush2.msra.mxu0 0.0
        %3877 = vmatprep.subr.mxu0 0.0
        %3878 = vmatpush2.msra.mxu0 0.0
        %3879 = vmatprep.mubr.f32.mxu0 0.0
        %3880 = vmatmul.mubr.f32.gmra.mxu0 %v465
        %v3881 = vpop.f32.mrf.mxu0
        %v3882 = vadd.f32 %v461, %v3881
        %v3883 = vpop.f32.mrf.mxu0
        %v3884 = vadd.f32 %v461, %v3883
        %3885 = vdwg.mxu0
        %3886 = vmatprep.subr.mxu0 0.0
        %3887 = vmatpush1.msra.mxu0 0.0
        %3888 = vmatprep.subr.mxu0 0.0
        %3889 = vmatpush1.msra.mxu0 0.0
        %3890 = vmatprep.subr.mxu0 0.0
        %3891 = vmatpush1.msra.mxu0 0.0
        %3892 = vmatprep.subr.mxu0 0.0
        %3893 = vmatpush1.msra.mxu0 0.0
        %3894 = vmatprep.subr.mxu0 0.0
        %3895 = vmatpush1.msra.mxu0 0.0
        %3896 = vmatprep.subr.mxu0 0.0
        %3897 = vmatpush1.msra.mxu0 0.0
        %3898 = vmatprep.subr.mxu0 0.0
        %3899 = vmatpush1.msra.mxu0 0.0
        %3900 = vmatprep.subr.mxu0 0.0
        %3901 = vmatpush1.msra.mxu0 0.0
        %3902 = vmatprep.subr.mxu0 0.0
        %3903 = vmatpush1.msra.mxu0 0.0
        %3904 = vmatprep.subr.mxu0 0.0
        %3905 = vmatpush1.msra.mxu0 0.0
        %3906 = vmatprep.subr.mxu0 0.0
        %3907 = vmatpush1.msra.mxu0 0.0
        %3908 = vmatprep.subr.mxu0 0.0
        %3909 = vmatpush1.msra.mxu0 0.0
        %3910 = vmatprep.subr.mxu0 0.0
        %3911 = vmatpush1.msra.mxu0 0.0
        %3912 = vmatprep.subr.mxu0 0.0
        %3913 = vmatpush1.msra.mxu0 0.0
        %3914 = vmatprep.subr.mxu0 %v3522
        %3915 = vmatpush1.msra.mxu0 %v3519
        %3916 = vmatprep.subr.mxu0 %v3431
        %3917 = vmatpush1.msra.mxu0 %v3430
        %3918 = vmatprep.subr.mxu0 0.0
        %3919 = vmatpush2.msra.mxu0 0.0
        %3920 = vmatprep.subr.mxu0 0.0
        %3921 = vmatpush2.msra.mxu0 0.0
        %3922 = vmatprep.subr.mxu0 0.0
        %3923 = vmatpush2.msra.mxu0 0.0
        %3924 = vmatprep.subr.mxu0 0.0
        %3925 = vmatpush2.msra.mxu0 0.0
        %3926 = vmatprep.subr.mxu0 0.0
        %3927 = vmatpush2.msra.mxu0 0.0
        %3928 = vmatprep.subr.mxu0 0.0
        %3929 = vmatpush2.msra.mxu0 0.0
        %3930 = vmatprep.subr.mxu0 0.0
        %3931 = vmatpush2.msra.mxu0 0.0
        %3932 = vmatprep.subr.mxu0 0.0
        %3933 = vmatpush2.msra.mxu0 0.0
        %3934 = vmatprep.subr.mxu0 0.0
        %3935 = vmatpush2.msra.mxu0 0.0
        %3936 = vmatprep.subr.mxu0 0.0
        %3937 = vmatpush2.msra.mxu0 0.0
        %3938 = vmatprep.subr.mxu0 0.0
        %3939 = vmatpush2.msra.mxu0 0.0
        %3940 = vmatprep.subr.mxu0 0.0
        %3941 = vmatpush2.msra.mxu0 0.0
        %3942 = vmatprep.subr.mxu0 0.0
        %3943 = vmatpush2.msra.mxu0 0.0
        %3944 = vmatprep.subr.mxu0 0.0
        %3945 = vmatpush2.msra.mxu0 0.0
        %3946 = vmatprep.subr.mxu0 0.0
        %3947 = vmatpush2.msra.mxu0 0.0
        %3948 = vmatprep.subr.mxu0 0.0
        %3949 = vmatpush2.msra.mxu0 0.0
        %3950 = vmatprep.mubr.f32.mxu0 0.0
        %3951 = vmatmul.mubr.f32.gmra.mxu0 %v465
        %v3952 = vpop.f32.mrf.mxu0
        %v3953 = vadd.f32 %v461, %v3952
        %v3954 = vpop.f32.mrf.mxu0
        %v3955 = vadd.f32 %v461, %v3954
        %3956 = vdwg.mxu0
        %3957 = vmatprep.subr.mxu0 0.0
        %3958 = vmatpush1.msra.mxu0 0.0
        %3959 = vmatprep.subr.mxu0 0.0
        %3960 = vmatpush1.msra.mxu0 0.0
        %3961 = vmatprep.subr.mxu0 0.0
        %3962 = vmatpush1.msra.mxu0 0.0
        %3963 = vmatprep.subr.mxu0 0.0
        %3964 = vmatpush1.msra.mxu0 0.0
        %3965 = vmatprep.subr.mxu0 0.0
        %3966 = vmatpush1.msra.mxu0 0.0
        %3967 = vmatprep.subr.mxu0 0.0
        %3968 = vmatpush1.msra.mxu0 0.0
        %3969 = vmatprep.subr.mxu0 0.0
        %3970 = vmatpush1.msra.mxu0 0.0
        %3971 = vmatprep.subr.mxu0 0.0
        %3972 = vmatpush1.msra.mxu0 0.0
        %3973 = vmatprep.subr.mxu0 0.0
        %3974 = vmatpush1.msra.mxu0 0.0
        %3975 = vmatprep.subr.mxu0 0.0
        %3976 = vmatpush1.msra.mxu0 0.0
        %3977 = vmatprep.subr.mxu0 0.0
        %3978 = vmatpush1.msra.mxu0 0.0
        %3979 = vmatprep.subr.mxu0 0.0
        %3980 = vmatpush1.msra.mxu0 0.0
        %3981 = vmatprep.subr.mxu0 0.0
        %3982 = vmatpush1.msra.mxu0 0.0
        %3983 = vmatprep.subr.mxu0 0.0
        %3984 = vmatpush1.msra.mxu0 0.0
        %3985 = vmatprep.subr.mxu0 %v3528
        %3986 = vmatpush1.msra.mxu0 %v3525
        %3987 = vmatprep.subr.mxu0 %v3433
        %3988 = vmatpush1.msra.mxu0 %v3432
        %3989 = vmatprep.subr.mxu0 0.0
        %3990 = vmatpush2.msra.mxu0 0.0
        %3991 = vmatprep.subr.mxu0 0.0
        %3992 = vmatpush2.msra.mxu0 0.0
        %3993 = vmatprep.subr.mxu0 0.0
        %3994 = vmatpush2.msra.mxu0 0.0
        %3995 = vmatprep.subr.mxu0 0.0
        %3996 = vmatpush2.msra.mxu0 0.0
        %3997 = vmatprep.subr.mxu0 0.0
        %3998 = vmatpush2.msra.mxu0 0.0
        %3999 = vmatprep.subr.mxu0 0.0
        %4000 = vmatpush2.msra.mxu0 0.0
        %4001 = vmatprep.subr.mxu0 0.0
        %4002 = vmatpush2.msra.mxu0 0.0
        %4003 = vmatprep.subr.mxu0 0.0
        %4004 = vmatpush2.msra.mxu0 0.0
        %4005 = vmatprep.subr.mxu0 0.0
        %4006 = vmatpush2.msra.mxu0 0.0
        %4007 = vmatprep.subr.mxu0 0.0
        %4008 = vmatpush2.msra.mxu0 0.0
        %4009 = vmatprep.subr.mxu0 0.0
        %4010 = vmatpush2.msra.mxu0 0.0
        %4011 = vmatprep.subr.mxu0 0.0
        %4012 = vmatpush2.msra.mxu0 0.0
        %4013 = vmatprep.subr.mxu0 0.0
        %4014 = vmatpush2.msra.mxu0 0.0
        %4015 = vmatprep.subr.mxu0 0.0
        %4016 = vmatpush2.msra.mxu0 0.0
        %4017 = vmatprep.subr.mxu0 0.0
        %4018 = vmatpush2.msra.mxu0 0.0
        %4019 = vmatprep.subr.mxu0 0.0
        %4020 = vmatpush2.msra.mxu0 0.0
        %4021 = vmatprep.mubr.f32.mxu0 0.0
        %4022 = vmatmul.mubr.f32.gmra.mxu0 %v465
        %v4023 = vpop.f32.mrf.mxu0
        %v4024 = vadd.f32 %v461, %v4023
        %v4025 = vpop.f32.mrf.mxu0
        %v4026 = vadd.f32 %v461, %v4025
        %4027 = vdwg.mxu0
        %4028 = vmatprep.subr.mxu0 0.0
        %4029 = vmatpush1.msra.mxu0 0.0
        %4030 = vmatprep.subr.mxu0 0.0
        %4031 = vmatpush1.msra.mxu0 0.0
        %4032 = vmatprep.subr.mxu0 0.0
        %4033 = vmatpush1.msra.mxu0 0.0
        %4034 = vmatprep.subr.mxu0 0.0
        %4035 = vmatpush1.msra.mxu0 0.0
        %4036 = vmatprep.subr.mxu0 0.0
        %4037 = vmatpush1.msra.mxu0 0.0
        %4038 = vmatprep.subr.mxu0 0.0
        %4039 = vmatpush1.msra.mxu0 0.0
        %4040 = vmatprep.subr.mxu0 0.0
        %4041 = vmatpush1.msra.mxu0 0.0
        %4042 = vmatprep.subr.mxu0 0.0
        %4043 = vmatpush1.msra.mxu0 0.0
        %4044 = vmatprep.subr.mxu0 0.0
        %4045 = vmatpush1.msra.mxu0 0.0
        %4046 = vmatprep.subr.mxu0 0.0
        %4047 = vmatpush1.msra.mxu0 0.0
        %4048 = vmatprep.subr.mxu0 0.0
        %4049 = vmatpush1.msra.mxu0 0.0
        %4050 = vmatprep.subr.mxu0 0.0
        %4051 = vmatpush1.msra.mxu0 0.0
        %4052 = vmatprep.subr.mxu0 0.0
        %4053 = vmatpush1.msra.mxu0 0.0
        %4054 = vmatprep.subr.mxu0 0.0
        %4055 = vmatpush1.msra.mxu0 0.0
        %4056 = vmatprep.subr.mxu0 %v3534
        %4057 = vmatpush1.msra.mxu0 %v3531
        %4058 = vmatprep.subr.mxu0 %v3435
        %4059 = vmatpush1.msra.mxu0 %v3434
        %4060 = vmatprep.subr.mxu0 0.0
        %4061 = vmatpush2.msra.mxu0 0.0
        %4062 = vmatprep.subr.mxu0 0.0
        %4063 = vmatpush2.msra.mxu0 0.0
        %4064 = vmatprep.subr.mxu0 0.0
        %4065 = vmatpush2.msra.mxu0 0.0
        %4066 = vmatprep.subr.mxu0 0.0
        %4067 = vmatpush2.msra.mxu0 0.0
        %4068 = vmatprep.subr.mxu0 0.0
        %4069 = vmatpush2.msra.mxu0 0.0
        %4070 = vmatprep.subr.mxu0 0.0
        %4071 = vmatpush2.msra.mxu0 0.0
        %4072 = vmatprep.subr.mxu0 0.0
        %4073 = vmatpush2.msra.mxu0 0.0
        %4074 = vmatprep.subr.mxu0 0.0
        %4075 = vmatpush2.msra.mxu0 0.0
        %4076 = vmatprep.subr.mxu0 0.0
        %4077 = vmatpush2.msra.mxu0 0.0
        %4078 = vmatprep.subr.mxu0 0.0
        %4079 = vmatpush2.msra.mxu0 0.0
        %4080 = vmatprep.subr.mxu0 0.0
        %4081 = vmatpush2.msra.mxu0 0.0
        %4082 = vmatprep.subr.mxu0 0.0
        %4083 = vmatpush2.msra.mxu0 0.0
        %4084 = vmatprep.subr.mxu0 0.0
        %4085 = vmatpush2.msra.mxu0 0.0
        %4086 = vmatprep.subr.mxu0 0.0
        %4087 = vmatpush2.msra.mxu0 0.0
        %4088 = vmatprep.subr.mxu0 0.0
        %4089 = vmatpush2.msra.mxu0 0.0
        %4090 = vmatprep.subr.mxu0 0.0
        %4091 = vmatpush2.msra.mxu0 0.0
        %4092 = vmatprep.mubr.f32.mxu0 0.0
        %4093 = vmatmul.mubr.f32.gmra.mxu0 %v465
        %v4094 = vpop.f32.mrf.mxu0
        %v4095 = vadd.f32 %v461, %v4094
        %v4096 = vpop.f32.mrf.mxu0
        %v4097 = vadd.f32 %v461, %v4096
        %4098 = vdwg.mxu0
        %4099 = vmatprep.subr.mxu0 0.0
        %4100 = vmatpush1.msra.mxu0 0.0
        %4101 = vmatprep.subr.mxu0 0.0
        %4102 = vmatpush1.msra.mxu0 0.0
        %4103 = vmatprep.subr.mxu0 0.0
        %4104 = vmatpush1.msra.mxu0 0.0
        %4105 = vmatprep.subr.mxu0 0.0
        %4106 = vmatpush1.msra.mxu0 0.0
        %4107 = vmatprep.subr.mxu0 0.0
        %4108 = vmatpush1.msra.mxu0 0.0
        %4109 = vmatprep.subr.mxu0 0.0
        %4110 = vmatpush1.msra.mxu0 0.0
        %4111 = vmatprep.subr.mxu0 0.0
        %4112 = vmatpush1.msra.mxu0 0.0
        %4113 = vmatprep.subr.mxu0 0.0
        %4114 = vmatpush1.msra.mxu0 0.0
        %4115 = vmatprep.subr.mxu0 0.0
        %4116 = vmatpush1.msra.mxu0 0.0
        %4117 = vmatprep.subr.mxu0 0.0
        %4118 = vmatpush1.msra.mxu0 0.0
        %4119 = vmatprep.subr.mxu0 0.0
        %4120 = vmatpush1.msra.mxu0 0.0
        %4121 = vmatprep.subr.mxu0 0.0
        %4122 = vmatpush1.msra.mxu0 0.0
        %4123 = vmatprep.subr.mxu0 0.0
        %4124 = vmatpush1.msra.mxu0 0.0
        %4125 = vmatprep.subr.mxu0 0.0
        %4126 = vmatpush1.msra.mxu0 0.0
        %4127 = vmatprep.subr.mxu0 %v3540
        %4128 = vmatpush1.msra.mxu0 %v3537
        %4129 = vmatprep.subr.mxu0 %v3437
        %4130 = vmatpush1.msra.mxu0 %v3436
        %4131 = vmatprep.subr.mxu0 0.0
        %4132 = vmatpush2.msra.mxu0 0.0
        %4133 = vmatprep.subr.mxu0 0.0
        %4134 = vmatpush2.msra.mxu0 0.0
        %4135 = vmatprep.subr.mxu0 0.0
        %4136 = vmatpush2.msra.mxu0 0.0
        %4137 = vmatprep.subr.mxu0 0.0
        %4138 = vmatpush2.msra.mxu0 0.0
        %4139 = vmatprep.subr.mxu0 0.0
        %4140 = vmatpush2.msra.mxu0 0.0
        %4141 = vmatprep.subr.mxu0 0.0
        %4142 = vmatpush2.msra.mxu0 0.0
        %4143 = vmatprep.subr.mxu0 0.0
        %4144 = vmatpush2.msra.mxu0 0.0
        %4145 = vmatprep.subr.mxu0 0.0
        %4146 = vmatpush2.msra.mxu0 0.0
        %4147 = vmatprep.subr.mxu0 0.0
        %4148 = vmatpush2.msra.mxu0 0.0
        %4149 = vmatprep.subr.mxu0 0.0
        %4150 = vmatpush2.msra.mxu0 0.0
        %4151 = vmatprep.subr.mxu0 0.0
        %4152 = vmatpush2.msra.mxu0 0.0
        %4153 = vmatprep.subr.mxu0 0.0
        %4154 = vmatpush2.msra.mxu0 0.0
        %4155 = vmatprep.subr.mxu0 0.0
        %4156 = vmatpush2.msra.mxu0 0.0
        %4157 = vmatprep.subr.mxu0 0.0
        %4158 = vmatpush2.msra.mxu0 0.0
        %4159 = vmatprep.subr.mxu0 0.0
        %4160 = vmatpush2.msra.mxu0 0.0
        %4161 = vmatprep.subr.mxu0 0.0
        %4162 = vmatpush2.msra.mxu0 0.0
        %4163 = vmatprep.mubr.f32.mxu0 0.0
        %4164 = vmatmul.mubr.f32.gmra.mxu0 %v465
        %v4165 = vpop.f32.mrf.mxu0
        %v4166 = vadd.f32 %v461, %v4165
        %v4167 = vpop.f32.mrf.mxu0
        %v4168 = vadd.f32 %v461, %v4167
        %4169 = vdwg.mxu0
        %4170 = vmatprep.subr.mxu0 0.0
        %4171 = vmatpush1.msra.mxu0 0.0
        %4172 = vmatprep.subr.mxu0 0.0
        %4173 = vmatpush1.msra.mxu0 0.0
        %4174 = vmatprep.subr.mxu0 0.0
        %4175 = vmatpush1.msra.mxu0 0.0
        %4176 = vmatprep.subr.mxu0 0.0
        %4177 = vmatpush1.msra.mxu0 0.0
        %4178 = vmatprep.subr.mxu0 0.0
        %4179 = vmatpush1.msra.mxu0 0.0
        %4180 = vmatprep.subr.mxu0 0.0
        %4181 = vmatpush1.msra.mxu0 0.0
        %4182 = vmatprep.subr.mxu0 0.0
        %4183 = vmatpush1.msra.mxu0 0.0
        %4184 = vmatprep.subr.mxu0 0.0
        %4185 = vmatpush1.msra.mxu0 0.0
        %4186 = vmatprep.subr.mxu0 0.0
        %4187 = vmatpush1.msra.mxu0 0.0
        %4188 = vmatprep.subr.mxu0 0.0
        %4189 = vmatpush1.msra.mxu0 0.0
        %4190 = vmatprep.subr.mxu0 0.0
        %4191 = vmatpush1.msra.mxu0 0.0
        %4192 = vmatprep.subr.mxu0 0.0
        %4193 = vmatpush1.msra.mxu0 0.0
        %4194 = vmatprep.subr.mxu0 0.0
        %4195 = vmatpush1.msra.mxu0 0.0
        %4196 = vmatprep.subr.mxu0 0.0
        %4197 = vmatpush1.msra.mxu0 0.0
        %4198 = vmatprep.subr.mxu0 %v3546
        %4199 = vmatpush1.msra.mxu0 %v3543
        %4200 = vmatprep.subr.mxu0 %v3439
        %4201 = vmatpush1.msra.mxu0 %v3438
        %4202 = vmatprep.subr.mxu0 0.0
        %4203 = vmatpush2.msra.mxu0 0.0
        %4204 = vmatprep.subr.mxu0 0.0
        %4205 = vmatpush2.msra.mxu0 0.0
        %4206 = vmatprep.subr.mxu0 0.0
        %4207 = vmatpush2.msra.mxu0 0.0
        %4208 = vmatprep.subr.mxu0 0.0
        %4209 = vmatpush2.msra.mxu0 0.0
        %4210 = vmatprep.subr.mxu0 0.0
        %4211 = vmatpush2.msra.mxu0 0.0
        %4212 = vmatprep.subr.mxu0 0.0
        %4213 = vmatpush2.msra.mxu0 0.0
        %4214 = vmatprep.subr.mxu0 0.0
        %4215 = vmatpush2.msra.mxu0 0.0
        %4216 = vmatprep.subr.mxu0 0.0
        %4217 = vmatpush2.msra.mxu0 0.0
        %4218 = vmatprep.subr.mxu0 0.0
        %4219 = vmatpush2.msra.mxu0 0.0
        %4220 = vmatprep.subr.mxu0 0.0
        %4221 = vmatpush2.msra.mxu0 0.0
        %4222 = vmatprep.subr.mxu0 0.0
        %4223 = vmatpush2.msra.mxu0 0.0
        %4224 = vmatprep.subr.mxu0 0.0
        %4225 = vmatpush2.msra.mxu0 0.0
        %4226 = vmatprep.subr.mxu0 0.0
        %4227 = vmatpush2.msra.mxu0 0.0
        %4228 = vmatprep.subr.mxu0 0.0
        %4229 = vmatpush2.msra.mxu0 0.0
        %4230 = vmatprep.subr.mxu0 0.0
        %4231 = vmatpush2.msra.mxu0 0.0
        %4232 = vmatprep.subr.mxu0 0.0
        %4233 = vmatpush2.msra.mxu0 0.0
        %4234 = vmatprep.mubr.f32.mxu0 0.0
        %4235 = vmatmul.mubr.f32.gmra.mxu0 %v465
        %v4236 = vpop.f32.mrf.mxu0
        %v4237 = vadd.f32 %v461, %v4236
        %v4238 = vpop.f32.mrf.mxu0
        %v4239 = vadd.f32 %v461, %v4238
        %4240 = vdwg.mxu0
        %4241 = vmatprep.subr.mxu0 0.0
        %4242 = vmatpush1.msra.mxu0 0.0
        %4243 = vmatprep.subr.mxu0 0.0
        %4244 = vmatpush1.msra.mxu0 0.0
        %4245 = vmatprep.subr.mxu0 0.0
        %4246 = vmatpush1.msra.mxu0 0.0
        %4247 = vmatprep.subr.mxu0 0.0
        %4248 = vmatpush1.msra.mxu0 0.0
        %4249 = vmatprep.subr.mxu0 0.0
        %4250 = vmatpush1.msra.mxu0 0.0
        %4251 = vmatprep.subr.mxu0 0.0
        %4252 = vmatpush1.msra.mxu0 0.0
        %4253 = vmatprep.subr.mxu0 0.0
        %4254 = vmatpush1.msra.mxu0 0.0
        %4255 = vmatprep.subr.mxu0 0.0
        %4256 = vmatpush1.msra.mxu0 0.0
        %4257 = vmatprep.subr.mxu0 0.0
        %4258 = vmatpush1.msra.mxu0 0.0
        %4259 = vmatprep.subr.mxu0 0.0
        %4260 = vmatpush1.msra.mxu0 0.0
        %4261 = vmatprep.subr.mxu0 0.0
        %4262 = vmatpush1.msra.mxu0 0.0
        %4263 = vmatprep.subr.mxu0 0.0
        %4264 = vmatpush1.msra.mxu0 0.0
        %4265 = vmatprep.subr.mxu0 0.0
        %4266 = vmatpush1.msra.mxu0 0.0
        %4267 = vmatprep.subr.mxu0 0.0
        %4268 = vmatpush1.msra.mxu0 0.0
        %4269 = vmatprep.subr.mxu0 %v3552
        %4270 = vmatpush1.msra.mxu0 %v3549
        %4271 = vmatprep.subr.mxu0 %v3441
        %4272 = vmatpush1.msra.mxu0 %v3440
        %4273 = vmatprep.subr.mxu0 0.0
        %4274 = vmatpush2.msra.mxu0 0.0
        %4275 = vmatprep.subr.mxu0 0.0
        %4276 = vmatpush2.msra.mxu0 0.0
        %4277 = vmatprep.subr.mxu0 0.0
        %4278 = vmatpush2.msra.mxu0 0.0
        %4279 = vmatprep.subr.mxu0 0.0
        %4280 = vmatpush2.msra.mxu0 0.0
        %4281 = vmatprep.subr.mxu0 0.0
        %4282 = vmatpush2.msra.mxu0 0.0
        %4283 = vmatprep.subr.mxu0 0.0
        %4284 = vmatpush2.msra.mxu0 0.0
        %4285 = vmatprep.subr.mxu0 0.0
        %4286 = vmatpush2.msra.mxu0 0.0
        %4287 = vmatprep.subr.mxu0 0.0
        %4288 = vmatpush2.msra.mxu0 0.0
        %4289 = vmatprep.subr.mxu0 0.0
        %4290 = vmatpush2.msra.mxu0 0.0
        %4291 = vmatprep.subr.mxu0 0.0
        %4292 = vmatpush2.msra.mxu0 0.0
        %4293 = vmatprep.subr.mxu0 0.0
        %4294 = vmatpush2.msra.mxu0 0.0
        %4295 = vmatprep.subr.mxu0 0.0
        %4296 = vmatpush2.msra.mxu0 0.0
        %4297 = vmatprep.subr.mxu0 0.0
        %4298 = vmatpush2.msra.mxu0 0.0
        %4299 = vmatprep.subr.mxu0 0.0
        %4300 = vmatpush2.msra.mxu0 0.0
        %4301 = vmatprep.subr.mxu0 0.0
        %4302 = vmatpush2.msra.mxu0 0.0
        %4303 = vmatprep.subr.mxu0 0.0
        %4304 = vmatpush2.msra.mxu0 0.0
        %4305 = vmatprep.mubr.f32.mxu0 0.0
        %4306 = vmatmul.mubr.f32.gmra.mxu0 %v465
        %v4307 = vpop.f32.mrf.mxu0
        %v4308 = vadd.f32 %v461, %v4307
        %v4309 = vpop.f32.mrf.mxu0
        %v4310 = vadd.f32 %v461, %v4309
        %4311 = vdwg.mxu0
        %4312 = vmatprep.subr.mxu0 0.0
        %4313 = vmatpush1.msra.mxu0 0.0
        %4314 = vmatprep.subr.mxu0 0.0
        %4315 = vmatpush1.msra.mxu0 0.0
        %4316 = vmatprep.subr.mxu0 0.0
        %4317 = vmatpush1.msra.mxu0 0.0
        %4318 = vmatprep.subr.mxu0 0.0
        %4319 = vmatpush1.msra.mxu0 0.0
        %4320 = vmatprep.subr.mxu0 0.0
        %4321 = vmatpush1.msra.mxu0 0.0
        %4322 = vmatprep.subr.mxu0 0.0
        %4323 = vmatpush1.msra.mxu0 0.0
        %4324 = vmatprep.subr.mxu0 0.0
        %4325 = vmatpush1.msra.mxu0 0.0
        %4326 = vmatprep.subr.mxu0 0.0
        %4327 = vmatpush1.msra.mxu0 0.0
        %4328 = vmatprep.subr.mxu0 0.0
        %4329 = vmatpush1.msra.mxu0 0.0
        %4330 = vmatprep.subr.mxu0 0.0
        %4331 = vmatpush1.msra.mxu0 0.0
        %4332 = vmatprep.subr.mxu0 0.0
        %4333 = vmatpush1.msra.mxu0 0.0
        %4334 = vmatprep.subr.mxu0 0.0
        %4335 = vmatpush1.msra.mxu0 0.0
        %4336 = vmatprep.subr.mxu0 0.0
        %4337 = vmatpush1.msra.mxu0 0.0
        %4338 = vmatprep.subr.mxu0 0.0
        %4339 = vmatpush1.msra.mxu0 0.0
        %4340 = vmatprep.subr.mxu0 %v3558
        %4341 = vmatpush1.msra.mxu0 %v3555
        %4342 = vmatprep.subr.mxu0 %v3443
        %4343 = vmatpush1.msra.mxu0 %v3442
        %4344 = vmatprep.subr.mxu0 0.0
        %4345 = vmatpush2.msra.mxu0 0.0
        %4346 = vmatprep.subr.mxu0 0.0
        %4347 = vmatpush2.msra.mxu0 0.0
        %4348 = vmatprep.subr.mxu0 0.0
        %4349 = vmatpush2.msra.mxu0 0.0
        %4350 = vmatprep.subr.mxu0 0.0
        %4351 = vmatpush2.msra.mxu0 0.0
        %4352 = vmatprep.subr.mxu0 0.0
        %4353 = vmatpush2.msra.mxu0 0.0
        %4354 = vmatprep.subr.mxu0 0.0
        %4355 = vmatpush2.msra.mxu0 0.0
        %4356 = vmatprep.subr.mxu0 0.0
        %4357 = vmatpush2.msra.mxu0 0.0
        %4358 = vmatprep.subr.mxu0 0.0
        %4359 = vmatpush2.msra.mxu0 0.0
        %4360 = vmatprep.subr.mxu0 0.0
        %4361 = vmatpush2.msra.mxu0 0.0
        %4362 = vmatprep.subr.mxu0 0.0
        %4363 = vmatpush2.msra.mxu0 0.0
        %4364 = vmatprep.subr.mxu0 0.0
        %4365 = vmatpush2.msra.mxu0 0.0
        %4366 = vmatprep.subr.mxu0 0.0
        %4367 = vmatpush2.msra.mxu0 0.0
        %4368 = vmatprep.subr.mxu0 0.0
        %4369 = vmatpush2.msra.mxu0 0.0
        %4370 = vmatprep.subr.mxu0 0.0
        %4371 = vmatpush2.msra.mxu0 0.0
        %4372 = vmatprep.subr.mxu0 0.0
        %4373 = vmatpush2.msra.mxu0 0.0
        %4374 = vmatprep.subr.mxu0 0.0
        %4375 = vmatpush2.msra.mxu0 0.0
        %4376 = vmatprep.mubr.f32.mxu0 0.0
        %4377 = vmatmul.mubr.f32.gmra.mxu0 %v465
        %v4378 = vpop.f32.mrf.mxu0
        %v4379 = vadd.f32 %v461, %v4378
        %v4380 = vpop.f32.mrf.mxu0
        %v4381 = vadd.f32 %v461, %v4380
        %4382 = vdwg.mxu0
        %4383 = vmatprep.subr.mxu0 0.0
        %4384 = vmatpush1.msra.mxu0 0.0
        %4385 = vmatprep.subr.mxu0 0.0
        %4386 = vmatpush1.msra.mxu0 0.0
        %4387 = vmatprep.subr.mxu0 0.0
        %4388 = vmatpush1.msra.mxu0 0.0
        %4389 = vmatprep.subr.mxu0 0.0
        %4390 = vmatpush1.msra.mxu0 0.0
        %4391 = vmatprep.subr.mxu0 0.0
        %4392 = vmatpush1.msra.mxu0 0.0
        %4393 = vmatprep.subr.mxu0 0.0
        %4394 = vmatpush1.msra.mxu0 0.0
        %4395 = vmatprep.subr.mxu0 0.0
        %4396 = vmatpush1.msra.mxu0 0.0
        %4397 = vmatprep.subr.mxu0 0.0
        %4398 = vmatpush1.msra.mxu0 0.0
        %4399 = vmatprep.subr.mxu0 0.0
        %4400 = vmatpush1.msra.mxu0 0.0
        %4401 = vmatprep.subr.mxu0 0.0
        %4402 = vmatpush1.msra.mxu0 0.0
        %4403 = vmatprep.subr.mxu0 0.0
        %4404 = vmatpush1.msra.mxu0 0.0
        %4405 = vmatprep.subr.mxu0 0.0
        %4406 = vmatpush1.msra.mxu0 0.0
        %4407 = vmatprep.subr.mxu0 0.0
        %4408 = vmatpush1.msra.mxu0 0.0
        %4409 = vmatprep.subr.mxu0 0.0
        %4410 = vmatpush1.msra.mxu0 0.0
        %4411 = vmatprep.subr.mxu0 %v3564
        %4412 = vmatpush1.msra.mxu0 %v3561
        %4413 = vmatprep.subr.mxu0 %v3445
        %4414 = vmatpush1.msra.mxu0 %v3444
        %4415 = vmatprep.subr.mxu0 0.0
        %4416 = vmatpush2.msra.mxu0 0.0
        %4417 = vmatprep.subr.mxu0 0.0
        %4418 = vmatpush2.msra.mxu0 0.0
        %4419 = vmatprep.subr.mxu0 0.0
        %4420 = vmatpush2.msra.mxu0 0.0
        %4421 = vmatprep.subr.mxu0 0.0
        %4422 = vmatpush2.msra.mxu0 0.0
        %4423 = vmatprep.subr.mxu0 0.0
        %4424 = vmatpush2.msra.mxu0 0.0
        %4425 = vmatprep.subr.mxu0 0.0
        %4426 = vmatpush2.msra.mxu0 0.0
        %4427 = vmatprep.subr.mxu0 0.0
        %4428 = vmatpush2.msra.mxu0 0.0
        %4429 = vmatprep.subr.mxu0 0.0
        %4430 = vmatpush2.msra.mxu0 0.0
        %4431 = vmatprep.subr.mxu0 0.0
        %4432 = vmatpush2.msra.mxu0 0.0
        %4433 = vmatprep.subr.mxu0 0.0
        %4434 = vmatpush2.msra.mxu0 0.0
        %4435 = vmatprep.subr.mxu0 0.0
        %4436 = vmatpush2.msra.mxu0 0.0
        %4437 = vmatprep.subr.mxu0 0.0
        %4438 = vmatpush2.msra.mxu0 0.0
        %4439 = vmatprep.subr.mxu0 0.0
        %4440 = vmatpush2.msra.mxu0 0.0
        %4441 = vmatprep.subr.mxu0 0.0
        %4442 = vmatpush2.msra.mxu0 0.0
        %4443 = vmatprep.subr.mxu0 0.0
        %4444 = vmatpush2.msra.mxu0 0.0
        %4445 = vmatprep.subr.mxu0 0.0
        %4446 = vmatpush2.msra.mxu0 0.0
        %4447 = vmatprep.mubr.f32.mxu0 0.0
        %4448 = vmatmul.mubr.f32.gmra.mxu0 %v465
        %v4449 = vpop.f32.mrf.mxu0
        %v4450 = vadd.f32 %v461, %v4449
        %v4451 = vpop.f32.mrf.mxu0
        %v4452 = vadd.f32 %v461, %v4451
        %4453 = vdwg.mxu0
        %4454 = vmatprep.subr.mxu0 0.0
        %4455 = vmatpush1.msra.mxu0 0.0
        %4456 = vmatprep.subr.mxu0 0.0
        %4457 = vmatpush1.msra.mxu0 0.0
        %4458 = vmatprep.subr.mxu0 0.0
        %4459 = vmatpush1.msra.mxu0 0.0
        %4460 = vmatprep.subr.mxu0 0.0
        %4461 = vmatpush1.msra.mxu0 0.0
        %4462 = vmatprep.subr.mxu0 0.0
        %4463 = vmatpush1.msra.mxu0 0.0
        %4464 = vmatprep.subr.mxu0 0.0
        %4465 = vmatpush1.msra.mxu0 0.0
        %4466 = vmatprep.subr.mxu0 0.0
        %4467 = vmatpush1.msra.mxu0 0.0
        %4468 = vmatprep.subr.mxu0 0.0
        %4469 = vmatpush1.msra.mxu0 0.0
        %4470 = vmatprep.subr.mxu0 0.0
        %4471 = vmatpush1.msra.mxu0 0.0
        %4472 = vmatprep.subr.mxu0 0.0
        %4473 = vmatpush1.msra.mxu0 0.0
        %4474 = vmatprep.subr.mxu0 0.0
        %4475 = vmatpush1.msra.mxu0 0.0
        %4476 = vmatprep.subr.mxu0 0.0
        %4477 = vmatpush1.msra.mxu0 0.0
        %4478 = vmatprep.subr.mxu0 0.0
        %4479 = vmatpush1.msra.mxu0 0.0
        %4480 = vmatprep.subr.mxu0 0.0
        %4481 = vmatpush1.msra.mxu0 0.0
        %4482 = vmatprep.subr.mxu0 %v3570
        %4483 = vmatpush1.msra.mxu0 %v3567
        %4484 = vmatprep.subr.mxu0 %v3447
        %4485 = vmatpush1.msra.mxu0 %v3446
        %4486 = vmatprep.subr.mxu0 0.0
        %4487 = vmatpush2.msra.mxu0 0.0
        %4488 = vmatprep.subr.mxu0 0.0
        %4489 = vmatpush2.msra.mxu0 0.0
        %4490 = vmatprep.subr.mxu0 0.0
        %4491 = vmatpush2.msra.mxu0 0.0
        %4492 = vmatprep.subr.mxu0 0.0
        %4493 = vmatpush2.msra.mxu0 0.0
        %4494 = vmatprep.subr.mxu0 0.0
        %4495 = vmatpush2.msra.mxu0 0.0
        %4496 = vmatprep.subr.mxu0 0.0
        %4497 = vmatpush2.msra.mxu0 0.0
        %4498 = vmatprep.subr.mxu0 0.0
        %4499 = vmatpush2.msra.mxu0 0.0
        %4500 = vmatprep.subr.mxu0 0.0
        %4501 = vmatpush2.msra.mxu0 0.0
        %4502 = vmatprep.subr.mxu0 0.0
        %4503 = vmatpush2.msra.mxu0 0.0
        %4504 = vmatprep.subr.mxu0 0.0
        %4505 = vmatpush2.msra.mxu0 0.0
        %4506 = vmatprep.subr.mxu0 0.0
        %4507 = vmatpush2.msra.mxu0 0.0
        %4508 = vmatprep.subr.mxu0 0.0
        %4509 = vmatpush2.msra.mxu0 0.0
        %4510 = vmatprep.subr.mxu0 0.0
        %4511 = vmatpush2.msra.mxu0 0.0
        %4512 = vmatprep.subr.mxu0 0.0
        %4513 = vmatpush2.msra.mxu0 0.0
        %4514 = vmatprep.subr.mxu0 0.0
        %4515 = vmatpush2.msra.mxu0 0.0
        %4516 = vmatprep.subr.mxu0 0.0
        %4517 = vmatpush2.msra.mxu0 0.0
        %4518 = vmatprep.mubr.f32.mxu0 0.0
        %4519 = vmatmul.mubr.f32.gmra.mxu0 %v465
        %v4520 = vpop.f32.mrf.mxu0
        %v4521 = vadd.f32 %v461, %v4520
        %v4522 = vpop.f32.mrf.mxu0
        %v4523 = vadd.f32 %v461, %v4522
        %4524 = vdwg.mxu0
        %4525 = vmatprep.subr.mxu0 0.0
        %4526 = vmatpush1.msra.mxu0 0.0
        %4527 = vmatprep.subr.mxu0 0.0
        %4528 = vmatpush1.msra.mxu0 0.0
        %4529 = vmatprep.subr.mxu0 0.0
        %4530 = vmatpush1.msra.mxu0 0.0
        %4531 = vmatprep.subr.mxu0 0.0
        %4532 = vmatpush1.msra.mxu0 0.0
        %4533 = vmatprep.subr.mxu0 0.0
        %4534 = vmatpush1.msra.mxu0 0.0
        %4535 = vmatprep.subr.mxu0 0.0
        %4536 = vmatpush1.msra.mxu0 0.0
        %4537 = vmatprep.subr.mxu0 0.0
        %4538 = vmatpush1.msra.mxu0 0.0
        %4539 = vmatprep.subr.mxu0 0.0
        %4540 = vmatpush1.msra.mxu0 0.0
        %4541 = vmatprep.subr.mxu0 0.0
        %4542 = vmatpush1.msra.mxu0 0.0
        %4543 = vmatprep.subr.mxu0 0.0
        %4544 = vmatpush1.msra.mxu0 0.0
        %4545 = vmatprep.subr.mxu0 0.0
        %4546 = vmatpush1.msra.mxu0 0.0
        %4547 = vmatprep.subr.mxu0 0.0
        %4548 = vmatpush1.msra.mxu0 0.0
        %4549 = vmatprep.subr.mxu0 0.0
        %4550 = vmatpush1.msra.mxu0 0.0
        %4551 = vmatprep.subr.mxu0 0.0
        %4552 = vmatpush1.msra.mxu0 0.0
        %4553 = vmatprep.subr.mxu0 %v3576
        %4554 = vmatpush1.msra.mxu0 %v3573
        %4555 = vmatprep.subr.mxu0 %v3449
        %4556 = vmatpush1.msra.mxu0 %v3448
        %4557 = vmatprep.subr.mxu0 0.0
        %4558 = vmatpush2.msra.mxu0 0.0
        %4559 = vmatprep.subr.mxu0 0.0
        %4560 = vmatpush2.msra.mxu0 0.0
        %4561 = vmatprep.subr.mxu0 0.0
        %4562 = vmatpush2.msra.mxu0 0.0
        %4563 = vmatprep.subr.mxu0 0.0
        %4564 = vmatpush2.msra.mxu0 0.0
        %4565 = vmatprep.subr.mxu0 0.0
        %4566 = vmatpush2.msra.mxu0 0.0
        %4567 = vmatprep.subr.mxu0 0.0
        %4568 = vmatpush2.msra.mxu0 0.0
        %4569 = vmatprep.subr.mxu0 0.0
        %4570 = vmatpush2.msra.mxu0 0.0
        %4571 = vmatprep.subr.mxu0 0.0
        %4572 = vmatpush2.msra.mxu0 0.0
        %4573 = vmatprep.subr.mxu0 0.0
        %4574 = vmatpush2.msra.mxu0 0.0
        %4575 = vmatprep.subr.mxu0 0.0
        %4576 = vmatpush2.msra.mxu0 0.0
        %4577 = vmatprep.subr.mxu0 0.0
        %4578 = vmatpush2.msra.mxu0 0.0
        %4579 = vmatprep.subr.mxu0 0.0
        %4580 = vmatpush2.msra.mxu0 0.0
        %4581 = vmatprep.subr.mxu0 0.0
        %4582 = vmatpush2.msra.mxu0 0.0
        %4583 = vmatprep.subr.mxu0 0.0
        %4584 = vmatpush2.msra.mxu0 0.0
        %4585 = vmatprep.subr.mxu0 0.0
        %4586 = vmatpush2.msra.mxu0 0.0
        %4587 = vmatprep.subr.mxu0 0.0
        %4588 = vmatpush2.msra.mxu0 0.0
        %4589 = vmatprep.mubr.f32.mxu0 0.0
        %4590 = vmatmul.mubr.f32.gmra.mxu0 %v465
        %v4591 = vpop.f32.mrf.mxu0
        %v4592 = vadd.f32 %v461, %v4591
        %v4593 = vpop.f32.mrf.mxu0
        %v4594 = vadd.f32 %v461, %v4593
        %4595 = vdwg.mxu0
        %4596 = vmatprep.subr.mxu0 0.0
        %4597 = vmatpush1.msra.mxu0 0.0
        %4598 = vmatprep.subr.mxu0 0.0
        %4599 = vmatpush1.msra.mxu0 0.0
        %4600 = vmatprep.subr.mxu0 0.0
        %4601 = vmatpush1.msra.mxu0 0.0
        %4602 = vmatprep.subr.mxu0 0.0
        %4603 = vmatpush1.msra.mxu0 0.0
        %4604 = vmatprep.subr.mxu0 0.0
        %4605 = vmatpush1.msra.mxu0 0.0
        %4606 = vmatprep.subr.mxu0 0.0
        %4607 = vmatpush1.msra.mxu0 0.0
        %4608 = vmatprep.subr.mxu0 0.0
        %4609 = vmatpush1.msra.mxu0 0.0
        %4610 = vmatprep.subr.mxu0 0.0
        %4611 = vmatpush1.msra.mxu0 0.0
        %4612 = vmatprep.subr.mxu0 0.0
        %4613 = vmatpush1.msra.mxu0 0.0
        %4614 = vmatprep.subr.mxu0 0.0
        %4615 = vmatpush1.msra.mxu0 0.0
        %4616 = vmatprep.subr.mxu0 0.0
        %4617 = vmatpush1.msra.mxu0 0.0
        %4618 = vmatprep.subr.mxu0 0.0
        %4619 = vmatpush1.msra.mxu0 0.0
        %4620 = vmatprep.subr.mxu0 0.0
        %4621 = vmatpush1.msra.mxu0 0.0
        %4622 = vmatprep.subr.mxu0 0.0
        %4623 = vmatpush1.msra.mxu0 0.0
        %4624 = vmatprep.subr.mxu0 %v3582
        %4625 = vmatpush1.msra.mxu0 %v3579
        %4626 = vmatprep.subr.mxu0 %v3451
        %4627 = vmatpush1.msra.mxu0 %v3450
        %4628 = vmatprep.subr.mxu0 0.0
        %4629 = vmatpush2.msra.mxu0 0.0
        %4630 = vmatprep.subr.mxu0 0.0
        %4631 = vmatpush2.msra.mxu0 0.0
        %4632 = vmatprep.subr.mxu0 0.0
        %4633 = vmatpush2.msra.mxu0 0.0
        %4634 = vmatprep.subr.mxu0 0.0
        %4635 = vmatpush2.msra.mxu0 0.0
        %4636 = vmatprep.subr.mxu0 0.0
        %4637 = vmatpush2.msra.mxu0 0.0
        %4638 = vmatprep.subr.mxu0 0.0
        %4639 = vmatpush2.msra.mxu0 0.0
        %4640 = vmatprep.subr.mxu0 0.0
        %4641 = vmatpush2.msra.mxu0 0.0
        %4642 = vmatprep.subr.mxu0 0.0
        %4643 = vmatpush2.msra.mxu0 0.0
        %4644 = vmatprep.subr.mxu0 0.0
        %4645 = vmatpush2.msra.mxu0 0.0
        %4646 = vmatprep.subr.mxu0 0.0
        %4647 = vmatpush2.msra.mxu0 0.0
        %4648 = vmatprep.subr.mxu0 0.0
        %4649 = vmatpush2.msra.mxu0 0.0
        %4650 = vmatprep.subr.mxu0 0.0
        %4651 = vmatpush2.msra.mxu0 0.0
        %4652 = vmatprep.subr.mxu0 0.0
        %4653 = vmatpush2.msra.mxu0 0.0
        %4654 = vmatprep.subr.mxu0 0.0
        %4655 = vmatpush2.msra.mxu0 0.0
        %4656 = vmatprep.subr.mxu0 0.0
        %4657 = vmatpush2.msra.mxu0 0.0
        %4658 = vmatprep.subr.mxu0 0.0
        %4659 = vmatpush2.msra.mxu0 0.0
        %4660 = vmatprep.mubr.f32.mxu0 0.0
        %4661 = vmatmul.mubr.f32.gmra.mxu0 %v465
        %v4662 = vpop.f32.mrf.mxu0
        %v4663 = vadd.f32 %v461, %v4662
        %v4664 = vpop.f32.mrf.mxu0
        %v4665 = vadd.f32 %v461, %v4664
        %4666 = vdwg.mxu0
        %4667 = vmatprep.subr.mxu0 0.0
        %4668 = vmatpush1.msra.mxu0 0.0
        %4669 = vmatprep.subr.mxu0 0.0
        %4670 = vmatpush1.msra.mxu0 0.0
        %4671 = vmatprep.subr.mxu0 0.0
        %4672 = vmatpush1.msra.mxu0 0.0
        %4673 = vmatprep.subr.mxu0 0.0
        %4674 = vmatpush1.msra.mxu0 0.0
        %4675 = vmatprep.subr.mxu0 0.0
        %4676 = vmatpush1.msra.mxu0 0.0
        %4677 = vmatprep.subr.mxu0 0.0
        %4678 = vmatpush1.msra.mxu0 0.0
        %4679 = vmatprep.subr.mxu0 0.0
        %4680 = vmatpush1.msra.mxu0 0.0
        %4681 = vmatprep.subr.mxu0 0.0
        %4682 = vmatpush1.msra.mxu0 0.0
        %4683 = vmatprep.subr.mxu0 0.0
        %4684 = vmatpush1.msra.mxu0 0.0
        %4685 = vmatprep.subr.mxu0 0.0
        %4686 = vmatpush1.msra.mxu0 0.0
        %4687 = vmatprep.subr.mxu0 0.0
        %4688 = vmatpush1.msra.mxu0 0.0
        %4689 = vmatprep.subr.mxu0 0.0
        %4690 = vmatpush1.msra.mxu0 0.0
        %4691 = vmatprep.subr.mxu0 0.0
        %4692 = vmatpush1.msra.mxu0 0.0
        %4693 = vmatprep.subr.mxu0 0.0
        %4694 = vmatpush1.msra.mxu0 0.0
        %4695 = vmatprep.subr.mxu0 %v3588
        %4696 = vmatpush1.msra.mxu0 %v3585
        %4697 = vmatprep.subr.mxu0 %v3453
        %4698 = vmatpush1.msra.mxu0 %v3452
        %4699 = vmatprep.subr.mxu0 0.0
        %4700 = vmatpush2.msra.mxu0 0.0
        %4701 = vmatprep.subr.mxu0 0.0
        %4702 = vmatpush2.msra.mxu0 0.0
        %4703 = vmatprep.subr.mxu0 0.0
        %4704 = vmatpush2.msra.mxu0 0.0
        %4705 = vmatprep.subr.mxu0 0.0
        %4706 = vmatpush2.msra.mxu0 0.0
        %4707 = vmatprep.subr.mxu0 0.0
        %4708 = vmatpush2.msra.mxu0 0.0
        %4709 = vmatprep.subr.mxu0 0.0
        %4710 = vmatpush2.msra.mxu0 0.0
        %4711 = vmatprep.subr.mxu0 0.0
        %4712 = vmatpush2.msra.mxu0 0.0
        %4713 = vmatprep.subr.mxu0 0.0
        %4714 = vmatpush2.msra.mxu0 0.0
        %4715 = vmatprep.subr.mxu0 0.0
        %4716 = vmatpush2.msra.mxu0 0.0
        %4717 = vmatprep.subr.mxu0 0.0
        %4718 = vmatpush2.msra.mxu0 0.0
        %4719 = vmatprep.subr.mxu0 0.0
        %4720 = vmatpush2.msra.mxu0 0.0
        %4721 = vmatprep.subr.mxu0 0.0
        %4722 = vmatpush2.msra.mxu0 0.0
        %4723 = vmatprep.subr.mxu0 0.0
        %4724 = vmatpush2.msra.mxu0 0.0
        %4725 = vmatprep.subr.mxu0 0.0
        %4726 = vmatpush2.msra.mxu0 0.0
        %4727 = vmatprep.subr.mxu0 0.0
        %4728 = vmatpush2.msra.mxu0 0.0
        %4729 = vmatprep.subr.mxu0 0.0
        %4730 = vmatpush2.msra.mxu0 0.0
        %4731 = vmatprep.mubr.f32.mxu0 0.0
        %4732 = vmatmul.mubr.f32.gmra.mxu0 %v465
        %v4733 = vpop.f32.mrf.mxu0
        %v4734 = vadd.f32 %v461, %v4733
        %v4735 = vpop.f32.mrf.mxu0
        %v4736 = vadd.f32 %v461, %v4735
        %4737 = vdwg.mxu0
        %4738 = vmatprep.subr.mxu0 0.0
        %4739 = vmatpush1.msra.mxu0 0.0
        %4740 = vmatprep.subr.mxu0 0.0
        %4741 = vmatpush1.msra.mxu0 0.0
        %4742 = vmatprep.subr.mxu0 0.0
        %4743 = vmatpush1.msra.mxu0 0.0
        %4744 = vmatprep.subr.mxu0 0.0
        %4745 = vmatpush1.msra.mxu0 0.0
        %4746 = vmatprep.subr.mxu0 0.0
        %4747 = vmatpush1.msra.mxu0 0.0
        %4748 = vmatprep.subr.mxu0 0.0
        %4749 = vmatpush1.msra.mxu0 0.0
        %4750 = vmatprep.subr.mxu0 0.0
        %4751 = vmatpush1.msra.mxu0 0.0
        %4752 = vmatprep.subr.mxu0 0.0
        %4753 = vmatpush1.msra.mxu0 0.0
        %4754 = vmatprep.subr.mxu0 0.0
        %4755 = vmatpush1.msra.mxu0 0.0
        %4756 = vmatprep.subr.mxu0 0.0
        %4757 = vmatpush1.msra.mxu0 0.0
        %4758 = vmatprep.subr.mxu0 0.0
        %4759 = vmatpush1.msra.mxu0 0.0
        %4760 = vmatprep.subr.mxu0 0.0
        %4761 = vmatpush1.msra.mxu0 0.0
        %4762 = vmatprep.subr.mxu0 0.0
        %4763 = vmatpush1.msra.mxu0 0.0
        %4764 = vmatprep.subr.mxu0 0.0
        %4765 = vmatpush1.msra.mxu0 0.0
        %4766 = vmatprep.subr.mxu0 %v3594
        %4767 = vmatpush1.msra.mxu0 %v3591
        %4768 = vmatprep.subr.mxu0 %v3455
        %4769 = vmatpush1.msra.mxu0 %v3454
        %4770 = vmatprep.subr.mxu0 0.0
        %4771 = vmatpush2.msra.mxu0 0.0
        %4772 = vmatprep.subr.mxu0 0.0
        %4773 = vmatpush2.msra.mxu0 0.0
        %4774 = vmatprep.subr.mxu0 0.0
        %4775 = vmatpush2.msra.mxu0 0.0
        %4776 = vmatprep.subr.mxu0 0.0
        %4777 = vmatpush2.msra.mxu0 0.0
        %4778 = vmatprep.subr.mxu0 0.0
        %4779 = vmatpush2.msra.mxu0 0.0
        %4780 = vmatprep.subr.mxu0 0.0
        %4781 = vmatpush2.msra.mxu0 0.0
        %4782 = vmatprep.subr.mxu0 0.0
        %4783 = vmatpush2.msra.mxu0 0.0
        %4784 = vmatprep.subr.mxu0 0.0
        %4785 = vmatpush2.msra.mxu0 0.0
        %4786 = vmatprep.subr.mxu0 0.0
        %4787 = vmatpush2.msra.mxu0 0.0
        %4788 = vmatprep.subr.mxu0 0.0
        %4789 = vmatpush2.msra.mxu0 0.0
        %4790 = vmatprep.subr.mxu0 0.0
        %4791 = vmatpush2.msra.mxu0 0.0
        %4792 = vmatprep.subr.mxu0 0.0
        %4793 = vmatpush2.msra.mxu0 0.0
        %4794 = vmatprep.subr.mxu0 0.0
        %4795 = vmatpush2.msra.mxu0 0.0
        %4796 = vmatprep.subr.mxu0 0.0
        %4797 = vmatpush2.msra.mxu0 0.0
        %4798 = vmatprep.subr.mxu0 0.0
        %4799 = vmatpush2.msra.mxu0 0.0
        %4800 = vmatprep.subr.mxu0 0.0
        %4801 = vmatpush2.msra.mxu0 0.0
        %4802 = vmatprep.mubr.f32.mxu0 0.0
        %4803 = vmatmul.mubr.f32.gmra.mxu0 %v465
        %v4804 = vpop.f32.mrf.mxu0
        %v4805 = vadd.f32 %v461, %v4804
        %v4806 = vpop.f32.mrf.mxu0
        %v4807 = vadd.f32 %v461, %v4806
        %4808 = vdwg.mxu0
        %4809 = vmatprep.subr.mxu0 0.0
        %4810 = vmatpush1.msra.mxu0 0.0
        %4811 = vmatprep.subr.mxu0 0.0
        %4812 = vmatpush1.msra.mxu0 0.0
        %4813 = vmatprep.subr.mxu0 0.0
        %4814 = vmatpush1.msra.mxu0 0.0
        %4815 = vmatprep.subr.mxu0 0.0
        %4816 = vmatpush1.msra.mxu0 0.0
        %4817 = vmatprep.subr.mxu0 0.0
        %4818 = vmatpush1.msra.mxu0 0.0
        %4819 = vmatprep.subr.mxu0 0.0
        %4820 = vmatpush1.msra.mxu0 0.0
        %4821 = vmatprep.subr.mxu0 0.0
        %4822 = vmatpush1.msra.mxu0 0.0
        %4823 = vmatprep.subr.mxu0 0.0
        %4824 = vmatpush1.msra.mxu0 0.0
        %4825 = vmatprep.subr.mxu0 0.0
        %4826 = vmatpush1.msra.mxu0 0.0
        %4827 = vmatprep.subr.mxu0 0.0
        %4828 = vmatpush1.msra.mxu0 0.0
        %4829 = vmatprep.subr.mxu0 0.0
        %4830 = vmatpush1.msra.mxu0 0.0
        %4831 = vmatprep.subr.mxu0 0.0
        %4832 = vmatpush1.msra.mxu0 0.0
        %4833 = vmatprep.subr.mxu0 0.0
        %4834 = vmatpush1.msra.mxu0 0.0
        %4835 = vmatprep.subr.mxu0 0.0
        %4836 = vmatpush1.msra.mxu0 0.0
        %4837 = vmatprep.subr.mxu0 %v3600
        %4838 = vmatpush1.msra.mxu0 %v3597
        %4839 = vmatprep.subr.mxu0 %v3457
        %4840 = vmatpush1.msra.mxu0 %v3456
        %4841 = vmatprep.subr.mxu0 0.0
        %4842 = vmatpush2.msra.mxu0 0.0
        %4843 = vmatprep.subr.mxu0 0.0
        %4844 = vmatpush2.msra.mxu0 0.0
        %4845 = vmatprep.subr.mxu0 0.0
        %4846 = vmatpush2.msra.mxu0 0.0
        %4847 = vmatprep.subr.mxu0 0.0
        %4848 = vmatpush2.msra.mxu0 0.0
        %4849 = vmatprep.subr.mxu0 0.0
        %4850 = vmatpush2.msra.mxu0 0.0
        %4851 = vmatprep.subr.mxu0 0.0
        %4852 = vmatpush2.msra.mxu0 0.0
        %4853 = vmatprep.subr.mxu0 0.0
        %4854 = vmatpush2.msra.mxu0 0.0
        %4855 = vmatprep.subr.mxu0 0.0
        %4856 = vmatpush2.msra.mxu0 0.0
        %4857 = vmatprep.subr.mxu0 0.0
        %4858 = vmatpush2.msra.mxu0 0.0
        %4859 = vmatprep.subr.mxu0 0.0
        %4860 = vmatpush2.msra.mxu0 0.0
        %4861 = vmatprep.subr.mxu0 0.0
        %4862 = vmatpush2.msra.mxu0 0.0
        %4863 = vmatprep.subr.mxu0 0.0
        %4864 = vmatpush2.msra.mxu0 0.0
        %4865 = vmatprep.subr.mxu0 0.0
        %4866 = vmatpush2.msra.mxu0 0.0
        %4867 = vmatprep.subr.mxu0 0.0
        %4868 = vmatpush2.msra.mxu0 0.0
        %4869 = vmatprep.subr.mxu0 0.0
        %4870 = vmatpush2.msra.mxu0 0.0
        %4871 = vmatprep.subr.mxu0 0.0
        %4872 = vmatpush2.msra.mxu0 0.0
        %4873 = vmatprep.mubr.f32.mxu0 0.0
        %4874 = vmatmul.mubr.f32.gmra.mxu0 %v465
        %v4875 = vpop.f32.mrf.mxu0
        %v4876 = vadd.f32 %v461, %v4875
        %v4877 = vpop.f32.mrf.mxu0
        %v4878 = vadd.f32 %v461, %v4877
        %4879 = vdwg.mxu0
        %v4880 = vmax.f32 %v3669, 0.0
        %v4881 = vmax.f32 %v3671, 0.0
        %v4882 = vmax.f32 %v3740, 0.0
        %v4883 = vmax.f32 %v3742, 0.0
        %v4884 = vmax.f32 %v3811, 0.0
        %v4885 = vmax.f32 %v3813, 0.0
        %v4886 = vmax.f32 %v3882, 0.0
        %v4887 = vmax.f32 %v3884, 0.0
        %v4888 = vmax.f32 %v3953, 0.0
        %v4889 = vmax.f32 %v3955, 0.0
        %v4890 = vmax.f32 %v4024, 0.0
        %v4891 = vmax.f32 %v4026, 0.0
        %v4892 = vmax.f32 %v4095, 0.0
        %v4893 = vmax.f32 %v4097, 0.0
        %v4894 = vmax.f32 %v4166, 0.0
        %v4895 = vmax.f32 %v4168, 0.0
        %v4896 = vmax.f32 %v4237, 0.0
        %v4897 = vmax.f32 %v4239, 0.0
        %v4898 = vmax.f32 %v4308, 0.0
        %v4899 = vmax.f32 %v4310, 0.0
        %v4900 = vmax.f32 %v4379, 0.0
        %v4901 = vmax.f32 %v4381, 0.0
        %v4902 = vmax.f32 %v4450, 0.0
        %v4903 = vmax.f32 %v4452, 0.0
        %v4904 = vmax.f32 %v4521, 0.0
        %v4905 = vmax.f32 %v4523, 0.0
        %v4906 = vmax.f32 %v4592, 0.0
        %v4907 = vmax.f32 %v4594, 0.0
        %v4908 = vmax.f32 %v4663, 0.0
        %v4909 = vmax.f32 %v4665, 0.0
        %v4910 = vmax.f32 %v4734, 0.0
        %v4911 = vmax.f32 %v4736, 0.0
        %v4912 = vmax.f32 %v4805, 0.0
        %v4913 = vmax.f32 %v4807, 0.0
        %v4914 = vmax.f32 %v4876, 0.0
        %v4915 = vmax.f32 %v4878, 0.0
        %v4916 = vmax.f32 %v3385, %v4880
        %v4917 = vmax.f32 %v3386, %v4881
        %v4918 = vmax.f32 %v3387, %v4882
        %v4919 = vmax.f32 %v3388, %v4883
        %v4920 = vmax.f32 %v3389, %v4884
        %v4921 = vmax.f32 %v3390, %v4885
        %v4922 = vmax.f32 %v3391, %v4886
        %v4923 = vmax.f32 %v3392, %v4887
        %v4924 = vmax.f32 %v3393, %v4888
        %v4925 = vmax.f32 %v3394, %v4889
        %v4926 = vmax.f32 %v3395, %v4890
        %v4927 = vmax.f32 %v3396, %v4891
        %v4928 = vmax.f32 %v3397, %v4892
        %v4929 = vmax.f32 %v3398, %v4893
        %v4930 = vmax.f32 %v3399, %v4894
        %v4931 = vmax.f32 %v3400, %v4895
        %v4932 = vmax.f32 %v3401, %v4896
        %v4933 = vmax.f32 %v3402, %v4897
        %v4934 = vmax.f32 %v3403, %v4898
        %v4935 = vmax.f32 %v3404, %v4899
        %v4936 = vmax.f32 %v3405, %v4900
        %v4937 = vmax.f32 %v3406, %v4901
        %v4938 = vmax.f32 %v3407, %v4902
        %v4939 = vmax.f32 %v3408, %v4903
        %v4940 = vmax.f32 %v3409, %v4904
        %v4941 = vmax.f32 %v3410, %v4905
        %v4942 = vmax.f32 %v3411, %v4906
        %v4943 = vmax.f32 %v3412, %v4907
        %v4944 = vmax.f32 %v3413, %v4908
        %v4945 = vmax.f32 %v3414, %v4909
        %v4946 = vmax.f32 %v3415, %v4910
        %v4947 = vmax.f32 %v3416, %v4911
        %v4948 = vmax.f32 %v3417, %v4912
        %v4949 = vmax.f32 %v3418, %v4913
        %v4950 = vmax.f32 %v3419, %v4914
        %v4951 = vmax.f32 %v3420, %v4915
        %s4952 = scalar_lea.vmem %s383, 1728
        %v4953 = vld [vmem:[%s4952] sm:$0xff]
        %v4954 = vld [vmem:[%s4952 + $0x8] sm:$0xff]
        %v4955 = vld [vmem:[%s4952 + $0x10] sm:$0xff]
        %v4956 = vld [vmem:[%s4952 + $0x18] sm:$0xff]
        %v4957 = vld [vmem:[%s4952 + $0x20] sm:$0xff]
        %v4958 = vld [vmem:[%s4952 + $0x28] sm:$0xff]
        %v4959 = vld [vmem:[%s4952 + $0x30] sm:$0xff]
        %v4960 = vld [vmem:[%s4952 + $0x38] sm:$0xff]
        %v4961 = vld [vmem:[%s4952 + $0x40] sm:$0xff]
        %v4962 = vld [vmem:[%s4952 + $0x48] sm:$0xff]
        %v4963 = vld [vmem:[%s4952 + $0x50] sm:$0xff]
        %v4964 = vld [vmem:[%s4952 + $0x58] sm:$0xff]
        %v4965 = vld [vmem:[%s4952 + $0x60] sm:$0xff]
        %v4966 = vld [vmem:[%s4952 + $0x68] sm:$0xff]
        %v4967 = vld [vmem:[%s4952 + $0x70] sm:$0xff]
        %v4968 = vld [vmem:[%s4952 + $0x78] sm:$0xff]
        %v4969 = vld [vmem:[%s4952 + $0x80] sm:$0xff]
        %v4970 = vld [vmem:[%s4952 + $0x88] sm:$0xff]
        %v4971 = vld [vmem:[%s4952 + $0x90] sm:$0xff]
        %v4972 = vld [vmem:[%s4952 + $0x98] sm:$0xff]
        %v4973 = vld [vmem:[%s4952 + $0xa0] sm:$0xff]
        %v4974 = vld [vmem:[%s4952 + $0xa8] sm:$0xff]
        %v4975 = vld [vmem:[%s4952 + $0xb0] sm:$0xff]
        %v4976 = vld [vmem:[%s4952 + $0xb8] sm:$0xff]
        %v4977 = vld [vmem:[%s4952 + $0xc0] sm:$0xff]
        %v4978 = vld [vmem:[%s4952 + $0xc8] sm:$0xff]
        %v4979 = vld [vmem:[%s4952 + $0xd0] sm:$0xff]
        %v4980 = vld [vmem:[%s4952 + $0xd8] sm:$0xff]
        %v4981 = vld [vmem:[%s4952 + $0xe0] sm:$0xff]
        %v4982 = vld [vmem:[%s4952 + $0xe8] sm:$0xff]
        %v4983 = vld [vmem:[%s4952 + $0xf0] sm:$0xff]
        %v4984 = vld [vmem:[%s4952 + $0xf8] sm:$0xff]
        %v4985 = vld [vmem:[%s4952 + $0x100] sm:$0xff]
        %v4986 = vld [vmem:[%s4952 + $0x108] sm:$0xff]
        %v4987 = vld [vmem:[%s4952 + $0x110] sm:$0xff]
        %v4988 = vld [vmem:[%s4952 + $0x118] sm:$0xff]
        %v4989 = vld [vmem:[%s4952 + $0x120] sm:$0x1]
        %v4990 = vld [vmem:[%s4952 + $0x128] sm:$0x1]
        %v4991 = vld [vmem:[%s4952 + $0x130] sm:$0x1]
        %v4992 = vld [vmem:[%s4952 + $0x138] sm:$0x1]
        %v4993 = vld [vmem:[%s4952 + $0x140] sm:$0x1]
        %v4994 = vld [vmem:[%s4952 + $0x148] sm:$0x1]
        %v4995 = vld [vmem:[%s4952 + $0x150] sm:$0x1]
        %v4996 = vld [vmem:[%s4952 + $0x158] sm:$0x1]
        %v4997 = vld [vmem:[%s4952 + $0x160] sm:$0x1]
        %v4998 = vld [vmem:[%s4952 + $0x168] sm:$0x1]
        %v4999 = vld [vmem:[%s4952 + $0x170] sm:$0x1]
        %v5000 = vld [vmem:[%s4952 + $0x178] sm:$0x1]
        %v5001 = vld [vmem:[%s4952 + $0x180] sm:$0x1]
        %v5002 = vld [vmem:[%s4952 + $0x188] sm:$0x1]
        %v5003 = vld [vmem:[%s4952 + $0x190] sm:$0x1]
        %v5004 = vld [vmem:[%s4952 + $0x198] sm:$0x1]
        %v5005 = vld [vmem:[%s4952 + $0x1a0] sm:$0x1]
        %v5006 = vld [vmem:[%s4952 + $0x1a8] sm:$0x1]
        %v5007 = vld [vmem:[%s4952 + $0x1b0] sm:$0x1]
        %v5008 = vld [vmem:[%s4952 + $0x1b8] sm:$0x1]
        %v5009 = vld [vmem:[%s4952 + $0x1c0] sm:$0x1]
        %v5010 = vld [vmem:[%s4952 + $0x1c8] sm:$0x1]
        %v5011 = vld [vmem:[%s4952 + $0x1d0] sm:$0x1]
        %v5012 = vld [vmem:[%s4952 + $0x1d8] sm:$0x1]
        %v5013 = vld [vmem:[%s4952 + $0x1e0] sm:$0x1]
        %v5014 = vld [vmem:[%s4952 + $0x1e8] sm:$0x1]
        %v5015 = vld [vmem:[%s4952 + $0x1f0] sm:$0x1]
        %v5016 = vld [vmem:[%s4952 + $0x1f8] sm:$0x1]
        %v5017 = vld [vmem:[%s4952 + $0x200] sm:$0x1]
        %v5018 = vld [vmem:[%s4952 + $0x208] sm:$0x1]
        %v5019 = vld [vmem:[%s4952 + $0x210] sm:$0x1]
        %v5020 = vld [vmem:[%s4952 + $0x218] sm:$0x1]
        %v5021 = vld [vmem:[%s4952 + $0x220] sm:$0x1]
        %v5022 = vld [vmem:[%s4952 + $0x228] sm:$0x1]
        %v5023 = vld [vmem:[%s4952 + $0x230] sm:$0x1]
        %v5024 = vld [vmem:[%s4952 + $0x238] sm:$0x1]
        %v5026 = vsel %vm467, %v4989, 0
        %v5029 = vsel %vm467, %v4990, 0
        %v5032 = vsel %vm467, %v4991, 0
        %v5035 = vsel %vm467, %v4992, 0
        %v5038 = vsel %vm467, %v4993, 0
        %v5041 = vsel %vm467, %v4994, 0
        %v5044 = vsel %vm467, %v4995, 0
        %v5047 = vsel %vm467, %v4996, 0
        %v5050 = vsel %vm467, %v4997, 0
        %v5053 = vsel %vm467, %v4998, 0
        %v5056 = vsel %vm467, %v4999, 0
        %v5059 = vsel %vm467, %v5000, 0
        %v5062 = vsel %vm467, %v5001, 0
        %v5065 = vsel %vm467, %v5002, 0
        %v5068 = vsel %vm467, %v5003, 0
        %v5071 = vsel %vm467, %v5004, 0
        %v5074 = vsel %vm467, %v5005, 0
        %v5077 = vsel %vm467, %v5006, 0
        %v5080 = vsel %vm467, %v5007, 0
        %v5083 = vsel %vm467, %v5008, 0
        %v5086 = vsel %vm467, %v5009, 0
        %v5089 = vsel %vm467, %v5010, 0
        %v5092 = vsel %vm467, %v5011, 0
        %v5095 = vsel %vm467, %v5012, 0
        %v5098 = vsel %vm467, %v5013, 0
        %v5101 = vsel %vm467, %v5014, 0
        %v5104 = vsel %vm467, %v5015, 0
        %v5107 = vsel %vm467, %v5016, 0
        %v5110 = vsel %vm467, %v5017, 0
        %v5113 = vsel %vm467, %v5018, 0
        %v5116 = vsel %vm467, %v5019, 0
        %v5119 = vsel %vm467, %v5020, 0
        %v5122 = vsel %vm467, %v5021, 0
        %v5125 = vsel %vm467, %v5022, 0
        %v5128 = vsel %vm467, %v5023, 0
        %v5131 = vsel %vm467, %v5024, 0
        %5133 = vmatprep.subr.mxu0 0.0
        %5134 = vmatpush1.msra.mxu0 0.0
        %5135 = vmatprep.subr.mxu0 0.0
        %5136 = vmatpush1.msra.mxu0 0.0
        %5137 = vmatprep.subr.mxu0 0.0
        %5138 = vmatpush1.msra.mxu0 0.0
        %5139 = vmatprep.subr.mxu0 0.0
        %5140 = vmatpush1.msra.mxu0 0.0
        %5141 = vmatprep.subr.mxu0 0.0
        %5142 = vmatpush1.msra.mxu0 0.0
        %5143 = vmatprep.subr.mxu0 0.0
        %5144 = vmatpush1.msra.mxu0 0.0
        %5145 = vmatprep.subr.mxu0 0.0
        %5146 = vmatpush1.msra.mxu0 0.0
        %5147 = vmatprep.subr.mxu0 0.0
        %5148 = vmatpush1.msra.mxu0 0.0
        %5149 = vmatprep.subr.mxu0 0.0
        %5150 = vmatpush1.msra.mxu0 0.0
        %5151 = vmatprep.subr.mxu0 0.0
        %5152 = vmatpush1.msra.mxu0 0.0
        %5153 = vmatprep.subr.mxu0 0.0
        %5154 = vmatpush1.msra.mxu0 0.0
        %5155 = vmatprep.subr.mxu0 0.0
        %5156 = vmatpush1.msra.mxu0 0.0
        %5157 = vmatprep.subr.mxu0 0.0
        %5158 = vmatpush1.msra.mxu0 0.0
        %5159 = vmatprep.subr.mxu0 0.0
        %5160 = vmatpush1.msra.mxu0 0.0
        %5161 = vmatprep.subr.mxu0 %v5029
        %5162 = vmatpush1.msra.mxu0 %v5026
        %5163 = vmatprep.subr.mxu0 %v4954
        %5164 = vmatpush1.msra.mxu0 %v4953
        %5165 = vmatprep.subr.mxu0 0.0
        %5166 = vmatpush2.msra.mxu0 0.0
        %5167 = vmatprep.subr.mxu0 0.0
        %5168 = vmatpush2.msra.mxu0 0.0
        %5169 = vmatprep.subr.mxu0 0.0
        %5170 = vmatpush2.msra.mxu0 0.0
        %5171 = vmatprep.subr.mxu0 0.0
        %5172 = vmatpush2.msra.mxu0 0.0
        %5173 = vmatprep.subr.mxu0 0.0
        %5174 = vmatpush2.msra.mxu0 0.0
        %5175 = vmatprep.subr.mxu0 0.0
        %5176 = vmatpush2.msra.mxu0 0.0
        %5177 = vmatprep.subr.mxu0 0.0
        %5178 = vmatpush2.msra.mxu0 0.0
        %5179 = vmatprep.subr.mxu0 0.0
        %5180 = vmatpush2.msra.mxu0 0.0
        %5181 = vmatprep.subr.mxu0 0.0
        %5182 = vmatpush2.msra.mxu0 0.0
        %5183 = vmatprep.subr.mxu0 0.0
        %5184 = vmatpush2.msra.mxu0 0.0
        %5185 = vmatprep.subr.mxu0 0.0
        %5186 = vmatpush2.msra.mxu0 0.0
        %5187 = vmatprep.subr.mxu0 0.0
        %5188 = vmatpush2.msra.mxu0 0.0
        %5189 = vmatprep.subr.mxu0 0.0
        %5190 = vmatpush2.msra.mxu0 0.0
        %5191 = vmatprep.subr.mxu0 0.0
        %5192 = vmatpush2.msra.mxu0 0.0
        %5193 = vmatprep.subr.mxu0 0.0
        %5194 = vmatpush2.msra.mxu0 0.0
        %5195 = vmatprep.subr.mxu0 0.0
        %5196 = vmatpush2.msra.mxu0 0.0
        %5197 = vmatprep.mubr.f32.mxu0 0.0
        %5198 = vmatmul.mubr.f32.gmra.mxu0 %v465
        %v5199 = vpop.f32.mrf.mxu0
        %v5200 = vadd.f32 %v461, %v5199
        %v5201 = vpop.f32.mrf.mxu0
        %v5202 = vadd.f32 %v461, %v5201
        %5203 = vdwg.mxu0
        %5204 = vmatprep.subr.mxu0 0.0
        %5205 = vmatpush1.msra.mxu0 0.0
        %5206 = vmatprep.subr.mxu0 0.0
        %5207 = vmatpush1.msra.mxu0 0.0
        %5208 = vmatprep.subr.mxu0 0.0
        %5209 = vmatpush1.msra.mxu0 0.0
        %5210 = vmatprep.subr.mxu0 0.0
        %5211 = vmatpush1.msra.mxu0 0.0
        %5212 = vmatprep.subr.mxu0 0.0
        %5213 = vmatpush1.msra.mxu0 0.0
        %5214 = vmatprep.subr.mxu0 0.0
        %5215 = vmatpush1.msra.mxu0 0.0
        %5216 = vmatprep.subr.mxu0 0.0
        %5217 = vmatpush1.msra.mxu0 0.0
        %5218 = vmatprep.subr.mxu0 0.0
        %5219 = vmatpush1.msra.mxu0 0.0
        %5220 = vmatprep.subr.mxu0 0.0
        %5221 = vmatpush1.msra.mxu0 0.0
        %5222 = vmatprep.subr.mxu0 0.0
        %5223 = vmatpush1.msra.mxu0 0.0
        %5224 = vmatprep.subr.mxu0 0.0
        %5225 = vmatpush1.msra.mxu0 0.0
        %5226 = vmatprep.subr.mxu0 0.0
        %5227 = vmatpush1.msra.mxu0 0.0
        %5228 = vmatprep.subr.mxu0 0.0
        %5229 = vmatpush1.msra.mxu0 0.0
        %5230 = vmatprep.subr.mxu0 0.0
        %5231 = vmatpush1.msra.mxu0 0.0
        %5232 = vmatprep.subr.mxu0 %v5035
        %5233 = vmatpush1.msra.mxu0 %v5032
        %5234 = vmatprep.subr.mxu0 %v4956
        %5235 = vmatpush1.msra.mxu0 %v4955
        %5236 = vmatprep.subr.mxu0 0.0
        %5237 = vmatpush2.msra.mxu0 0.0
        %5238 = vmatprep.subr.mxu0 0.0
        %5239 = vmatpush2.msra.mxu0 0.0
        %5240 = vmatprep.subr.mxu0 0.0
        %5241 = vmatpush2.msra.mxu0 0.0
        %5242 = vmatprep.subr.mxu0 0.0
        %5243 = vmatpush2.msra.mxu0 0.0
        %5244 = vmatprep.subr.mxu0 0.0
        %5245 = vmatpush2.msra.mxu0 0.0
        %5246 = vmatprep.subr.mxu0 0.0
        %5247 = vmatpush2.msra.mxu0 0.0
        %5248 = vmatprep.subr.mxu0 0.0
        %5249 = vmatpush2.msra.mxu0 0.0
        %5250 = vmatprep.subr.mxu0 0.0
        %5251 = vmatpush2.msra.mxu0 0.0
        %5252 = vmatprep.subr.mxu0 0.0
        %5253 = vmatpush2.msra.mxu0 0.0
        %5254 = vmatprep.subr.mxu0 0.0
        %5255 = vmatpush2.msra.mxu0 0.0
        %5256 = vmatprep.subr.mxu0 0.0
        %5257 = vmatpush2.msra.mxu0 0.0
        %5258 = vmatprep.subr.mxu0 0.0
        %5259 = vmatpush2.msra.mxu0 0.0
        %5260 = vmatprep.subr.mxu0 0.0
        %5261 = vmatpush2.msra.mxu0 0.0
        %5262 = vmatprep.subr.mxu0 0.0
        %5263 = vmatpush2.msra.mxu0 0.0
        %5264 = vmatprep.subr.mxu0 0.0
        %5265 = vmatpush2.msra.mxu0 0.0
        %5266 = vmatprep.subr.mxu0 0.0
        %5267 = vmatpush2.msra.mxu0 0.0
        %5268 = vmatprep.mubr.f32.mxu0 0.0
        %5269 = vmatmul.mubr.f32.gmra.mxu0 %v465
        %v5270 = vpop.f32.mrf.mxu0
        %v5271 = vadd.f32 %v461, %v5270
        %v5272 = vpop.f32.mrf.mxu0
        %v5273 = vadd.f32 %v461, %v5272
        %5274 = vdwg.mxu0
        %5275 = vmatprep.subr.mxu0 0.0
        %5276 = vmatpush1.msra.mxu0 0.0
        %5277 = vmatprep.subr.mxu0 0.0
        %5278 = vmatpush1.msra.mxu0 0.0
        %5279 = vmatprep.subr.mxu0 0.0
        %5280 = vmatpush1.msra.mxu0 0.0
        %5281 = vmatprep.subr.mxu0 0.0
        %5282 = vmatpush1.msra.mxu0 0.0
        %5283 = vmatprep.subr.mxu0 0.0
        %5284 = vmatpush1.msra.mxu0 0.0
        %5285 = vmatprep.subr.mxu0 0.0
        %5286 = vmatpush1.msra.mxu0 0.0
        %5287 = vmatprep.subr.mxu0 0.0
        %5288 = vmatpush1.msra.mxu0 0.0
        %5289 = vmatprep.subr.mxu0 0.0
        %5290 = vmatpush1.msra.mxu0 0.0
        %5291 = vmatprep.subr.mxu0 0.0
        %5292 = vmatpush1.msra.mxu0 0.0
        %5293 = vmatprep.subr.mxu0 0.0
        %5294 = vmatpush1.msra.mxu0 0.0
        %5295 = vmatprep.subr.mxu0 0.0
        %5296 = vmatpush1.msra.mxu0 0.0
        %5297 = vmatprep.subr.mxu0 0.0
        %5298 = vmatpush1.msra.mxu0 0.0
        %5299 = vmatprep.subr.mxu0 0.0
        %5300 = vmatpush1.msra.mxu0 0.0
        %5301 = vmatprep.subr.mxu0 0.0
        %5302 = vmatpush1.msra.mxu0 0.0
        %5303 = vmatprep.subr.mxu0 %v5041
        %5304 = vmatpush1.msra.mxu0 %v5038
        %5305 = vmatprep.subr.mxu0 %v4958
        %5306 = vmatpush1.msra.mxu0 %v4957
        %5307 = vmatprep.subr.mxu0 0.0
        %5308 = vmatpush2.msra.mxu0 0.0
        %5309 = vmatprep.subr.mxu0 0.0
        %5310 = vmatpush2.msra.mxu0 0.0
        %5311 = vmatprep.subr.mxu0 0.0
        %5312 = vmatpush2.msra.mxu0 0.0
        %5313 = vmatprep.subr.mxu0 0.0
        %5314 = vmatpush2.msra.mxu0 0.0
        %5315 = vmatprep.subr.mxu0 0.0
        %5316 = vmatpush2.msra.mxu0 0.0
        %5317 = vmatprep.subr.mxu0 0.0
        %5318 = vmatpush2.msra.mxu0 0.0
        %5319 = vmatprep.subr.mxu0 0.0
        %5320 = vmatpush2.msra.mxu0 0.0
        %5321 = vmatprep.subr.mxu0 0.0
        %5322 = vmatpush2.msra.mxu0 0.0
        %5323 = vmatprep.subr.mxu0 0.0
        %5324 = vmatpush2.msra.mxu0 0.0
        %5325 = vmatprep.subr.mxu0 0.0
        %5326 = vmatpush2.msra.mxu0 0.0
        %5327 = vmatprep.subr.mxu0 0.0
        %5328 = vmatpush2.msra.mxu0 0.0
        %5329 = vmatprep.subr.mxu0 0.0
        %5330 = vmatpush2.msra.mxu0 0.0
        %5331 = vmatprep.subr.mxu0 0.0
        %5332 = vmatpush2.msra.mxu0 0.0
        %5333 = vmatprep.subr.mxu0 0.0
        %5334 = vmatpush2.msra.mxu0 0.0
        %5335 = vmatprep.subr.mxu0 0.0
        %5336 = vmatpush2.msra.mxu0 0.0
        %5337 = vmatprep.subr.mxu0 0.0
        %5338 = vmatpush2.msra.mxu0 0.0
        %5339 = vmatprep.mubr.f32.mxu0 0.0
        %5340 = vmatmul.mubr.f32.gmra.mxu0 %v465
        %v5341 = vpop.f32.mrf.mxu0
        %v5342 = vadd.f32 %v461, %v5341
        %v5343 = vpop.f32.mrf.mxu0
        %v5344 = vadd.f32 %v461, %v5343
        %5345 = vdwg.mxu0
        %5346 = vmatprep.subr.mxu0 0.0
        %5347 = vmatpush1.msra.mxu0 0.0
        %5348 = vmatprep.subr.mxu0 0.0
        %5349 = vmatpush1.msra.mxu0 0.0
        %5350 = vmatprep.subr.mxu0 0.0
        %5351 = vmatpush1.msra.mxu0 0.0
        %5352 = vmatprep.subr.mxu0 0.0
        %5353 = vmatpush1.msra.mxu0 0.0
        %5354 = vmatprep.subr.mxu0 0.0
        %5355 = vmatpush1.msra.mxu0 0.0
        %5356 = vmatprep.subr.mxu0 0.0
        %5357 = vmatpush1.msra.mxu0 0.0
        %5358 = vmatprep.subr.mxu0 0.0
        %5359 = vmatpush1.msra.mxu0 0.0
        %5360 = vmatprep.subr.mxu0 0.0
        %5361 = vmatpush1.msra.mxu0 0.0
        %5362 = vmatprep.subr.mxu0 0.0
        %5363 = vmatpush1.msra.mxu0 0.0
        %5364 = vmatprep.subr.mxu0 0.0
        %5365 = vmatpush1.msra.mxu0 0.0
        %5366 = vmatprep.subr.mxu0 0.0
        %5367 = vmatpush1.msra.mxu0 0.0
        %5368 = vmatprep.subr.mxu0 0.0
        %5369 = vmatpush1.msra.mxu0 0.0
        %5370 = vmatprep.subr.mxu0 0.0
        %5371 = vmatpush1.msra.mxu0 0.0
        %5372 = vmatprep.subr.mxu0 0.0
        %5373 = vmatpush1.msra.mxu0 0.0
        %5374 = vmatprep.subr.mxu0 %v5047
        %5375 = vmatpush1.msra.mxu0 %v5044
        %5376 = vmatprep.subr.mxu0 %v4960
        %5377 = vmatpush1.msra.mxu0 %v4959
        %5378 = vmatprep.subr.mxu0 0.0
        %5379 = vmatpush2.msra.mxu0 0.0
        %5380 = vmatprep.subr.mxu0 0.0
        %5381 = vmatpush2.msra.mxu0 0.0
        %5382 = vmatprep.subr.mxu0 0.0
        %5383 = vmatpush2.msra.mxu0 0.0
        %5384 = vmatprep.subr.mxu0 0.0
        %5385 = vmatpush2.msra.mxu0 0.0
        %5386 = vmatprep.subr.mxu0 0.0
        %5387 = vmatpush2.msra.mxu0 0.0
        %5388 = vmatprep.subr.mxu0 0.0
        %5389 = vmatpush2.msra.mxu0 0.0
        %5390 = vmatprep.subr.mxu0 0.0
        %5391 = vmatpush2.msra.mxu0 0.0
        %5392 = vmatprep.subr.mxu0 0.0
        %5393 = vmatpush2.msra.mxu0 0.0
        %5394 = vmatprep.subr.mxu0 0.0
        %5395 = vmatpush2.msra.mxu0 0.0
        %5396 = vmatprep.subr.mxu0 0.0
        %5397 = vmatpush2.msra.mxu0 0.0
        %5398 = vmatprep.subr.mxu0 0.0
        %5399 = vmatpush2.msra.mxu0 0.0
        %5400 = vmatprep.subr.mxu0 0.0
        %5401 = vmatpush2.msra.mxu0 0.0
        %5402 = vmatprep.subr.mxu0 0.0
        %5403 = vmatpush2.msra.mxu0 0.0
        %5404 = vmatprep.subr.mxu0 0.0
        %5405 = vmatpush2.msra.mxu0 0.0
        %5406 = vmatprep.subr.mxu0 0.0
        %5407 = vmatpush2.msra.mxu0 0.0
        %5408 = vmatprep.subr.mxu0 0.0
        %5409 = vmatpush2.msra.mxu0 0.0
        %5410 = vmatprep.mubr.f32.mxu0 0.0
        %5411 = vmatmul.mubr.f32.gmra.mxu0 %v465
        %v5412 = vpop.f32.mrf.mxu0
        %v5413 = vadd.f32 %v461, %v5412
        %v5414 = vpop.f32.mrf.mxu0
        %v5415 = vadd.f32 %v461, %v5414
        %5416 = vdwg.mxu0
        %5417 = vmatprep.subr.mxu0 0.0
        %5418 = vmatpush1.msra.mxu0 0.0
        %5419 = vmatprep.subr.mxu0 0.0
        %5420 = vmatpush1.msra.mxu0 0.0
        %5421 = vmatprep.subr.mxu0 0.0
        %5422 = vmatpush1.msra.mxu0 0.0
        %5423 = vmatprep.subr.mxu0 0.0
        %5424 = vmatpush1.msra.mxu0 0.0
        %5425 = vmatprep.subr.mxu0 0.0
        %5426 = vmatpush1.msra.mxu0 0.0
        %5427 = vmatprep.subr.mxu0 0.0
        %5428 = vmatpush1.msra.mxu0 0.0
        %5429 = vmatprep.subr.mxu0 0.0
        %5430 = vmatpush1.msra.mxu0 0.0
        %5431 = vmatprep.subr.mxu0 0.0
        %5432 = vmatpush1.msra.mxu0 0.0
        %5433 = vmatprep.subr.mxu0 0.0
        %5434 = vmatpush1.msra.mxu0 0.0
        %5435 = vmatprep.subr.mxu0 0.0
        %5436 = vmatpush1.msra.mxu0 0.0
        %5437 = vmatprep.subr.mxu0 0.0
        %5438 = vmatpush1.msra.mxu0 0.0
        %5439 = vmatprep.subr.mxu0 0.0
        %5440 = vmatpush1.msra.mxu0 0.0
        %5441 = vmatprep.subr.mxu0 0.0
        %5442 = vmatpush1.msra.mxu0 0.0
        %5443 = vmatprep.subr.mxu0 0.0
        %5444 = vmatpush1.msra.mxu0 0.0
        %5445 = vmatprep.subr.mxu0 %v5053
        %5446 = vmatpush1.msra.mxu0 %v5050
        %5447 = vmatprep.subr.mxu0 %v4962
        %5448 = vmatpush1.msra.mxu0 %v4961
        %5449 = vmatprep.subr.mxu0 0.0
        %5450 = vmatpush2.msra.mxu0 0.0
        %5451 = vmatprep.subr.mxu0 0.0
        %5452 = vmatpush2.msra.mxu0 0.0
        %5453 = vmatprep.subr.mxu0 0.0
        %5454 = vmatpush2.msra.mxu0 0.0
        %5455 = vmatprep.subr.mxu0 0.0
        %5456 = vmatpush2.msra.mxu0 0.0
        %5457 = vmatprep.subr.mxu0 0.0
        %5458 = vmatpush2.msra.mxu0 0.0
        %5459 = vmatprep.subr.mxu0 0.0
        %5460 = vmatpush2.msra.mxu0 0.0
        %5461 = vmatprep.subr.mxu0 0.0
        %5462 = vmatpush2.msra.mxu0 0.0
        %5463 = vmatprep.subr.mxu0 0.0
        %5464 = vmatpush2.msra.mxu0 0.0
        %5465 = vmatprep.subr.mxu0 0.0
        %5466 = vmatpush2.msra.mxu0 0.0
        %5467 = vmatprep.subr.mxu0 0.0
        %5468 = vmatpush2.msra.mxu0 0.0
        %5469 = vmatprep.subr.mxu0 0.0
        %5470 = vmatpush2.msra.mxu0 0.0
        %5471 = vmatprep.subr.mxu0 0.0
        %5472 = vmatpush2.msra.mxu0 0.0
        %5473 = vmatprep.subr.mxu0 0.0
        %5474 = vmatpush2.msra.mxu0 0.0
        %5475 = vmatprep.subr.mxu0 0.0
        %5476 = vmatpush2.msra.mxu0 0.0
        %5477 = vmatprep.subr.mxu0 0.0
        %5478 = vmatpush2.msra.mxu0 0.0
        %5479 = vmatprep.subr.mxu0 0.0
        %5480 = vmatpush2.msra.mxu0 0.0
        %5481 = vmatprep.mubr.f32.mxu0 0.0
        %5482 = vmatmul.mubr.f32.gmra.mxu0 %v465
        %v5483 = vpop.f32.mrf.mxu0
        %v5484 = vadd.f32 %v461, %v5483
        %v5485 = vpop.f32.mrf.mxu0
        %v5486 = vadd.f32 %v461, %v5485
        %5487 = vdwg.mxu0
        %5488 = vmatprep.subr.mxu0 0.0
        %5489 = vmatpush1.msra.mxu0 0.0
        %5490 = vmatprep.subr.mxu0 0.0
        %5491 = vmatpush1.msra.mxu0 0.0
        %5492 = vmatprep.subr.mxu0 0.0
        %5493 = vmatpush1.msra.mxu0 0.0
        %5494 = vmatprep.subr.mxu0 0.0
        %5495 = vmatpush1.msra.mxu0 0.0
        %5496 = vmatprep.subr.mxu0 0.0
        %5497 = vmatpush1.msra.mxu0 0.0
        %5498 = vmatprep.subr.mxu0 0.0
        %5499 = vmatpush1.msra.mxu0 0.0
        %5500 = vmatprep.subr.mxu0 0.0
        %5501 = vmatpush1.msra.mxu0 0.0
        %5502 = vmatprep.subr.mxu0 0.0
        %5503 = vmatpush1.msra.mxu0 0.0
        %5504 = vmatprep.subr.mxu0 0.0
        %5505 = vmatpush1.msra.mxu0 0.0
        %5506 = vmatprep.subr.mxu0 0.0
        %5507 = vmatpush1.msra.mxu0 0.0
        %5508 = vmatprep.subr.mxu0 0.0
        %5509 = vmatpush1.msra.mxu0 0.0
        %5510 = vmatprep.subr.mxu0 0.0
        %5511 = vmatpush1.msra.mxu0 0.0
        %5512 = vmatprep.subr.mxu0 0.0
        %5513 = vmatpush1.msra.mxu0 0.0
        %5514 = vmatprep.subr.mxu0 0.0
        %5515 = vmatpush1.msra.mxu0 0.0
        %5516 = vmatprep.subr.mxu0 %v5059
        %5517 = vmatpush1.msra.mxu0 %v5056
        %5518 = vmatprep.subr.mxu0 %v4964
        %5519 = vmatpush1.msra.mxu0 %v4963
        %5520 = vmatprep.subr.mxu0 0.0
        %5521 = vmatpush2.msra.mxu0 0.0
        %5522 = vmatprep.subr.mxu0 0.0
        %5523 = vmatpush2.msra.mxu0 0.0
        %5524 = vmatprep.subr.mxu0 0.0
        %5525 = vmatpush2.msra.mxu0 0.0
        %5526 = vmatprep.subr.mxu0 0.0
        %5527 = vmatpush2.msra.mxu0 0.0
        %5528 = vmatprep.subr.mxu0 0.0
        %5529 = vmatpush2.msra.mxu0 0.0
        %5530 = vmatprep.subr.mxu0 0.0
        %5531 = vmatpush2.msra.mxu0 0.0
        %5532 = vmatprep.subr.mxu0 0.0
        %5533 = vmatpush2.msra.mxu0 0.0
        %5534 = vmatprep.subr.mxu0 0.0
        %5535 = vmatpush2.msra.mxu0 0.0
        %5536 = vmatprep.subr.mxu0 0.0
        %5537 = vmatpush2.msra.mxu0 0.0
        %5538 = vmatprep.subr.mxu0 0.0
        %5539 = vmatpush2.msra.mxu0 0.0
        %5540 = vmatprep.subr.mxu0 0.0
        %5541 = vmatpush2.msra.mxu0 0.0
        %5542 = vmatprep.subr.mxu0 0.0
        %5543 = vmatpush2.msra.mxu0 0.0
        %5544 = vmatprep.subr.mxu0 0.0
        %5545 = vmatpush2.msra.mxu0 0.0
        %5546 = vmatprep.subr.mxu0 0.0
        %5547 = vmatpush2.msra.mxu0 0.0
        %5548 = vmatprep.subr.mxu0 0.0
        %5549 = vmatpush2.msra.mxu0 0.0
        %5550 = vmatprep.subr.mxu0 0.0
        %5551 = vmatpush2.msra.mxu0 0.0
        %5552 = vmatprep.mubr.f32.mxu0 0.0
        %5553 = vmatmul.mubr.f32.gmra.mxu0 %v465
        %v5554 = vpop.f32.mrf.mxu0
        %v5555 = vadd.f32 %v461, %v5554
        %v5556 = vpop.f32.mrf.mxu0
        %v5557 = vadd.f32 %v461, %v5556
        %5558 = vdwg.mxu0
        %5559 = vmatprep.subr.mxu0 0.0
        %5560 = vmatpush1.msra.mxu0 0.0
        %5561 = vmatprep.subr.mxu0 0.0
        %5562 = vmatpush1.msra.mxu0 0.0
        %5563 = vmatprep.subr.mxu0 0.0
        %5564 = vmatpush1.msra.mxu0 0.0
        %5565 = vmatprep.subr.mxu0 0.0
        %5566 = vmatpush1.msra.mxu0 0.0
        %5567 = vmatprep.subr.mxu0 0.0
        %5568 = vmatpush1.msra.mxu0 0.0
        %5569 = vmatprep.subr.mxu0 0.0
        %5570 = vmatpush1.msra.mxu0 0.0
        %5571 = vmatprep.subr.mxu0 0.0
        %5572 = vmatpush1.msra.mxu0 0.0
        %5573 = vmatprep.subr.mxu0 0.0
        %5574 = vmatpush1.msra.mxu0 0.0
        %5575 = vmatprep.subr.mxu0 0.0
        %5576 = vmatpush1.msra.mxu0 0.0
        %5577 = vmatprep.subr.mxu0 0.0
        %5578 = vmatpush1.msra.mxu0 0.0
        %5579 = vmatprep.subr.mxu0 0.0
        %5580 = vmatpush1.msra.mxu0 0.0
        %5581 = vmatprep.subr.mxu0 0.0
        %5582 = vmatpush1.msra.mxu0 0.0
        %5583 = vmatprep.subr.mxu0 0.0
        %5584 = vmatpush1.msra.mxu0 0.0
        %5585 = vmatprep.subr.mxu0 0.0
        %5586 = vmatpush1.msra.mxu0 0.0
        %5587 = vmatprep.subr.mxu0 %v5065
        %5588 = vmatpush1.msra.mxu0 %v5062
        %5589 = vmatprep.subr.mxu0 %v4966
        %5590 = vmatpush1.msra.mxu0 %v4965
        %5591 = vmatprep.subr.mxu0 0.0
        %5592 = vmatpush2.msra.mxu0 0.0
        %5593 = vmatprep.subr.mxu0 0.0
        %5594 = vmatpush2.msra.mxu0 0.0
        %5595 = vmatprep.subr.mxu0 0.0
        %5596 = vmatpush2.msra.mxu0 0.0
        %5597 = vmatprep.subr.mxu0 0.0
        %5598 = vmatpush2.msra.mxu0 0.0
        %5599 = vmatprep.subr.mxu0 0.0
        %5600 = vmatpush2.msra.mxu0 0.0
        %5601 = vmatprep.subr.mxu0 0.0
        %5602 = vmatpush2.msra.mxu0 0.0
        %5603 = vmatprep.subr.mxu0 0.0
        %5604 = vmatpush2.msra.mxu0 0.0
        %5605 = vmatprep.subr.mxu0 0.0
        %5606 = vmatpush2.msra.mxu0 0.0
        %5607 = vmatprep.subr.mxu0 0.0
        %5608 = vmatpush2.msra.mxu0 0.0
        %5609 = vmatprep.subr.mxu0 0.0
        %5610 = vmatpush2.msra.mxu0 0.0
        %5611 = vmatprep.subr.mxu0 0.0
        %5612 = vmatpush2.msra.mxu0 0.0
        %5613 = vmatprep.subr.mxu0 0.0
        %5614 = vmatpush2.msra.mxu0 0.0
        %5615 = vmatprep.subr.mxu0 0.0
        %5616 = vmatpush2.msra.mxu0 0.0
        %5617 = vmatprep.subr.mxu0 0.0
        %5618 = vmatpush2.msra.mxu0 0.0
        %5619 = vmatprep.subr.mxu0 0.0
        %5620 = vmatpush2.msra.mxu0 0.0
        %5621 = vmatprep.subr.mxu0 0.0
        %5622 = vmatpush2.msra.mxu0 0.0
        %5623 = vmatprep.mubr.f32.mxu0 0.0
        %5624 = vmatmul.mubr.f32.gmra.mxu0 %v465
        %v5625 = vpop.f32.mrf.mxu0
        %v5626 = vadd.f32 %v461, %v5625
        %v5627 = vpop.f32.mrf.mxu0
        %v5628 = vadd.f32 %v461, %v5627
        %5629 = vdwg.mxu0
        %5630 = vmatprep.subr.mxu0 0.0
        %5631 = vmatpush1.msra.mxu0 0.0
        %5632 = vmatprep.subr.mxu0 0.0
        %5633 = vmatpush1.msra.mxu0 0.0
        %5634 = vmatprep.subr.mxu0 0.0
        %5635 = vmatpush1.msra.mxu0 0.0
        %5636 = vmatprep.subr.mxu0 0.0
        %5637 = vmatpush1.msra.mxu0 0.0
        %5638 = vmatprep.subr.mxu0 0.0
        %5639 = vmatpush1.msra.mxu0 0.0
        %5640 = vmatprep.subr.mxu0 0.0
        %5641 = vmatpush1.msra.mxu0 0.0
        %5642 = vmatprep.subr.mxu0 0.0
        %5643 = vmatpush1.msra.mxu0 0.0
        %5644 = vmatprep.subr.mxu0 0.0
        %5645 = vmatpush1.msra.mxu0 0.0
        %5646 = vmatprep.subr.mxu0 0.0
        %5647 = vmatpush1.msra.mxu0 0.0
        %5648 = vmatprep.subr.mxu0 0.0
        %5649 = vmatpush1.msra.mxu0 0.0
        %5650 = vmatprep.subr.mxu0 0.0
        %5651 = vmatpush1.msra.mxu0 0.0
        %5652 = vmatprep.subr.mxu0 0.0
        %5653 = vmatpush1.msra.mxu0 0.0
        %5654 = vmatprep.subr.mxu0 0.0
        %5655 = vmatpush1.msra.mxu0 0.0
        %5656 = vmatprep.subr.mxu0 0.0
        %5657 = vmatpush1.msra.mxu0 0.0
        %5658 = vmatprep.subr.mxu0 %v5071
        %5659 = vmatpush1.msra.mxu0 %v5068
        %5660 = vmatprep.subr.mxu0 %v4968
        %5661 = vmatpush1.msra.mxu0 %v4967
        %5662 = vmatprep.subr.mxu0 0.0
        %5663 = vmatpush2.msra.mxu0 0.0
        %5664 = vmatprep.subr.mxu0 0.0
        %5665 = vmatpush2.msra.mxu0 0.0
        %5666 = vmatprep.subr.mxu0 0.0
        %5667 = vmatpush2.msra.mxu0 0.0
        %5668 = vmatprep.subr.mxu0 0.0
        %5669 = vmatpush2.msra.mxu0 0.0
        %5670 = vmatprep.subr.mxu0 0.0
        %5671 = vmatpush2.msra.mxu0 0.0
        %5672 = vmatprep.subr.mxu0 0.0
        %5673 = vmatpush2.msra.mxu0 0.0
        %5674 = vmatprep.subr.mxu0 0.0
        %5675 = vmatpush2.msra.mxu0 0.0
        %5676 = vmatprep.subr.mxu0 0.0
        %5677 = vmatpush2.msra.mxu0 0.0
        %5678 = vmatprep.subr.mxu0 0.0
        %5679 = vmatpush2.msra.mxu0 0.0
        %5680 = vmatprep.subr.mxu0 0.0
        %5681 = vmatpush2.msra.mxu0 0.0
        %5682 = vmatprep.subr.mxu0 0.0
        %5683 = vmatpush2.msra.mxu0 0.0
        %5684 = vmatprep.subr.mxu0 0.0
        %5685 = vmatpush2.msra.mxu0 0.0
        %5686 = vmatprep.subr.mxu0 0.0
        %5687 = vmatpush2.msra.mxu0 0.0
        %5688 = vmatprep.subr.mxu0 0.0
        %5689 = vmatpush2.msra.mxu0 0.0
        %5690 = vmatprep.subr.mxu0 0.0
        %5691 = vmatpush2.msra.mxu0 0.0
        %5692 = vmatprep.subr.mxu0 0.0
        %5693 = vmatpush2.msra.mxu0 0.0
        %5694 = vmatprep.mubr.f32.mxu0 0.0
        %5695 = vmatmul.mubr.f32.gmra.mxu0 %v465
        %v5696 = vpop.f32.mrf.mxu0
        %v5697 = vadd.f32 %v461, %v5696
        %v5698 = vpop.f32.mrf.mxu0
        %v5699 = vadd.f32 %v461, %v5698
        %5700 = vdwg.mxu0
        %5701 = vmatprep.subr.mxu0 0.0
        %5702 = vmatpush1.msra.mxu0 0.0
        %5703 = vmatprep.subr.mxu0 0.0
        %5704 = vmatpush1.msra.mxu0 0.0
        %5705 = vmatprep.subr.mxu0 0.0
        %5706 = vmatpush1.msra.mxu0 0.0
        %5707 = vmatprep.subr.mxu0 0.0
        %5708 = vmatpush1.msra.mxu0 0.0
        %5709 = vmatprep.subr.mxu0 0.0
        %5710 = vmatpush1.msra.mxu0 0.0
        %5711 = vmatprep.subr.mxu0 0.0
        %5712 = vmatpush1.msra.mxu0 0.0
        %5713 = vmatprep.subr.mxu0 0.0
        %5714 = vmatpush1.msra.mxu0 0.0
        %5715 = vmatprep.subr.mxu0 0.0
        %5716 = vmatpush1.msra.mxu0 0.0
        %5717 = vmatprep.subr.mxu0 0.0
        %5718 = vmatpush1.msra.mxu0 0.0
        %5719 = vmatprep.subr.mxu0 0.0
        %5720 = vmatpush1.msra.mxu0 0.0
        %5721 = vmatprep.subr.mxu0 0.0
        %5722 = vmatpush1.msra.mxu0 0.0
        %5723 = vmatprep.subr.mxu0 0.0
        %5724 = vmatpush1.msra.mxu0 0.0
        %5725 = vmatprep.subr.mxu0 0.0
        %5726 = vmatpush1.msra.mxu0 0.0
        %5727 = vmatprep.subr.mxu0 0.0
        %5728 = vmatpush1.msra.mxu0 0.0
        %5729 = vmatprep.subr.mxu0 %v5077
        %5730 = vmatpush1.msra.mxu0 %v5074
        %5731 = vmatprep.subr.mxu0 %v4970
        %5732 = vmatpush1.msra.mxu0 %v4969
        %5733 = vmatprep.subr.mxu0 0.0
        %5734 = vmatpush2.msra.mxu0 0.0
        %5735 = vmatprep.subr.mxu0 0.0
        %5736 = vmatpush2.msra.mxu0 0.0
        %5737 = vmatprep.subr.mxu0 0.0
        %5738 = vmatpush2.msra.mxu0 0.0
        %5739 = vmatprep.subr.mxu0 0.0
        %5740 = vmatpush2.msra.mxu0 0.0
        %5741 = vmatprep.subr.mxu0 0.0
        %5742 = vmatpush2.msra.mxu0 0.0
        %5743 = vmatprep.subr.mxu0 0.0
        %5744 = vmatpush2.msra.mxu0 0.0
        %5745 = vmatprep.subr.mxu0 0.0
        %5746 = vmatpush2.msra.mxu0 0.0
        %5747 = vmatprep.subr.mxu0 0.0
        %5748 = vmatpush2.msra.mxu0 0.0
        %5749 = vmatprep.subr.mxu0 0.0
        %5750 = vmatpush2.msra.mxu0 0.0
        %5751 = vmatprep.subr.mxu0 0.0
        %5752 = vmatpush2.msra.mxu0 0.0
        %5753 = vmatprep.subr.mxu0 0.0
        %5754 = vmatpush2.msra.mxu0 0.0
        %5755 = vmatprep.subr.mxu0 0.0
        %5756 = vmatpush2.msra.mxu0 0.0
        %5757 = vmatprep.subr.mxu0 0.0
        %5758 = vmatpush2.msra.mxu0 0.0
        %5759 = vmatprep.subr.mxu0 0.0
        %5760 = vmatpush2.msra.mxu0 0.0
        %5761 = vmatprep.subr.mxu0 0.0
        %5762 = vmatpush2.msra.mxu0 0.0
        %5763 = vmatprep.subr.mxu0 0.0
        %5764 = vmatpush2.msra.mxu0 0.0
        %5765 = vmatprep.mubr.f32.mxu0 0.0
        %5766 = vmatmul.mubr.f32.gmra.mxu0 %v465
        %v5767 = vpop.f32.mrf.mxu0
        %v5768 = vadd.f32 %v461, %v5767
        %v5769 = vpop.f32.mrf.mxu0
        %v5770 = vadd.f32 %v461, %v5769
        %5771 = vdwg.mxu0
        %5772 = vmatprep.subr.mxu0 0.0
        %5773 = vmatpush1.msra.mxu0 0.0
        %5774 = vmatprep.subr.mxu0 0.0
        %5775 = vmatpush1.msra.mxu0 0.0
        %5776 = vmatprep.subr.mxu0 0.0
        %5777 = vmatpush1.msra.mxu0 0.0
        %5778 = vmatprep.subr.mxu0 0.0
        %5779 = vmatpush1.msra.mxu0 0.0
        %5780 = vmatprep.subr.mxu0 0.0
        %5781 = vmatpush1.msra.mxu0 0.0
        %5782 = vmatprep.subr.mxu0 0.0
        %5783 = vmatpush1.msra.mxu0 0.0
        %5784 = vmatprep.subr.mxu0 0.0
        %5785 = vmatpush1.msra.mxu0 0.0
        %5786 = vmatprep.subr.mxu0 0.0
        %5787 = vmatpush1.msra.mxu0 0.0
        %5788 = vmatprep.subr.mxu0 0.0
        %5789 = vmatpush1.msra.mxu0 0.0
        %5790 = vmatprep.subr.mxu0 0.0
        %5791 = vmatpush1.msra.mxu0 0.0
        %5792 = vmatprep.subr.mxu0 0.0
        %5793 = vmatpush1.msra.mxu0 0.0
        %5794 = vmatprep.subr.mxu0 0.0
        %5795 = vmatpush1.msra.mxu0 0.0
        %5796 = vmatprep.subr.mxu0 0.0
        %5797 = vmatpush1.msra.mxu0 0.0
        %5798 = vmatprep.subr.mxu0 0.0
        %5799 = vmatpush1.msra.mxu0 0.0
        %5800 = vmatprep.subr.mxu0 %v5083
        %5801 = vmatpush1.msra.mxu0 %v5080
        %5802 = vmatprep.subr.mxu0 %v4972
        %5803 = vmatpush1.msra.mxu0 %v4971
        %5804 = vmatprep.subr.mxu0 0.0
        %5805 = vmatpush2.msra.mxu0 0.0
        %5806 = vmatprep.subr.mxu0 0.0
        %5807 = vmatpush2.msra.mxu0 0.0
        %5808 = vmatprep.subr.mxu0 0.0
        %5809 = vmatpush2.msra.mxu0 0.0
        %5810 = vmatprep.subr.mxu0 0.0
        %5811 = vmatpush2.msra.mxu0 0.0
        %5812 = vmatprep.subr.mxu0 0.0
        %5813 = vmatpush2.msra.mxu0 0.0
        %5814 = vmatprep.subr.mxu0 0.0
        %5815 = vmatpush2.msra.mxu0 0.0
        %5816 = vmatprep.subr.mxu0 0.0
        %5817 = vmatpush2.msra.mxu0 0.0
        %5818 = vmatprep.subr.mxu0 0.0
        %5819 = vmatpush2.msra.mxu0 0.0
        %5820 = vmatprep.subr.mxu0 0.0
        %5821 = vmatpush2.msra.mxu0 0.0
        %5822 = vmatprep.subr.mxu0 0.0
        %5823 = vmatpush2.msra.mxu0 0.0
        %5824 = vmatprep.subr.mxu0 0.0
        %5825 = vmatpush2.msra.mxu0 0.0
        %5826 = vmatprep.subr.mxu0 0.0
        %5827 = vmatpush2.msra.mxu0 0.0
        %5828 = vmatprep.subr.mxu0 0.0
        %5829 = vmatpush2.msra.mxu0 0.0
        %5830 = vmatprep.subr.mxu0 0.0
        %5831 = vmatpush2.msra.mxu0 0.0
        %5832 = vmatprep.subr.mxu0 0.0
        %5833 = vmatpush2.msra.mxu0 0.0
        %5834 = vmatprep.subr.mxu0 0.0
        %5835 = vmatpush2.msra.mxu0 0.0
        %5836 = vmatprep.mubr.f32.mxu0 0.0
        %5837 = vmatmul.mubr.f32.gmra.mxu0 %v465
        %v5838 = vpop.f32.mrf.mxu0
        %v5839 = vadd.f32 %v461, %v5838
        %v5840 = vpop.f32.mrf.mxu0
        %v5841 = vadd.f32 %v461, %v5840
        %5842 = vdwg.mxu0
        %5843 = vmatprep.subr.mxu0 0.0
        %5844 = vmatpush1.msra.mxu0 0.0
        %5845 = vmatprep.subr.mxu0 0.0
        %5846 = vmatpush1.msra.mxu0 0.0
        %5847 = vmatprep.subr.mxu0 0.0
        %5848 = vmatpush1.msra.mxu0 0.0
        %5849 = vmatprep.subr.mxu0 0.0
        %5850 = vmatpush1.msra.mxu0 0.0
        %5851 = vmatprep.subr.mxu0 0.0
        %5852 = vmatpush1.msra.mxu0 0.0
        %5853 = vmatprep.subr.mxu0 0.0
        %5854 = vmatpush1.msra.mxu0 0.0
        %5855 = vmatprep.subr.mxu0 0.0
        %5856 = vmatpush1.msra.mxu0 0.0
        %5857 = vmatprep.subr.mxu0 0.0
        %5858 = vmatpush1.msra.mxu0 0.0
        %5859 = vmatprep.subr.mxu0 0.0
        %5860 = vmatpush1.msra.mxu0 0.0
        %5861 = vmatprep.subr.mxu0 0.0
        %5862 = vmatpush1.msra.mxu0 0.0
        %5863 = vmatprep.subr.mxu0 0.0
        %5864 = vmatpush1.msra.mxu0 0.0
        %5865 = vmatprep.subr.mxu0 0.0
        %5866 = vmatpush1.msra.mxu0 0.0
        %5867 = vmatprep.subr.mxu0 0.0
        %5868 = vmatpush1.msra.mxu0 0.0
        %5869 = vmatprep.subr.mxu0 0.0
        %5870 = vmatpush1.msra.mxu0 0.0
        %5871 = vmatprep.subr.mxu0 %v5089
        %5872 = vmatpush1.msra.mxu0 %v5086
        %5873 = vmatprep.subr.mxu0 %v4974
        %5874 = vmatpush1.msra.mxu0 %v4973
        %5875 = vmatprep.subr.mxu0 0.0
        %5876 = vmatpush2.msra.mxu0 0.0
        %5877 = vmatprep.subr.mxu0 0.0
        %5878 = vmatpush2.msra.mxu0 0.0
        %5879 = vmatprep.subr.mxu0 0.0
        %5880 = vmatpush2.msra.mxu0 0.0
        %5881 = vmatprep.subr.mxu0 0.0
        %5882 = vmatpush2.msra.mxu0 0.0
        %5883 = vmatprep.subr.mxu0 0.0
        %5884 = vmatpush2.msra.mxu0 0.0
        %5885 = vmatprep.subr.mxu0 0.0
        %5886 = vmatpush2.msra.mxu0 0.0
        %5887 = vmatprep.subr.mxu0 0.0
        %5888 = vmatpush2.msra.mxu0 0.0
        %5889 = vmatprep.subr.mxu0 0.0
        %5890 = vmatpush2.msra.mxu0 0.0
        %5891 = vmatprep.subr.mxu0 0.0
        %5892 = vmatpush2.msra.mxu0 0.0
        %5893 = vmatprep.subr.mxu0 0.0
        %5894 = vmatpush2.msra.mxu0 0.0
        %5895 = vmatprep.subr.mxu0 0.0
        %5896 = vmatpush2.msra.mxu0 0.0
        %5897 = vmatprep.subr.mxu0 0.0
        %5898 = vmatpush2.msra.mxu0 0.0
        %5899 = vmatprep.subr.mxu0 0.0
        %5900 = vmatpush2.msra.mxu0 0.0
        %5901 = vmatprep.subr.mxu0 0.0
        %5902 = vmatpush2.msra.mxu0 0.0
        %5903 = vmatprep.subr.mxu0 0.0
        %5904 = vmatpush2.msra.mxu0 0.0
        %5905 = vmatprep.subr.mxu0 0.0
        %5906 = vmatpush2.msra.mxu0 0.0
        %5907 = vmatprep.mubr.f32.mxu0 0.0
        %5908 = vmatmul.mubr.f32.gmra.mxu0 %v465
        %v5909 = vpop.f32.mrf.mxu0
        %v5910 = vadd.f32 %v461, %v5909
        %v5911 = vpop.f32.mrf.mxu0
        %v5912 = vadd.f32 %v461, %v5911
        %5913 = vdwg.mxu0
        %5914 = vmatprep.subr.mxu0 0.0
        %5915 = vmatpush1.msra.mxu0 0.0
        %5916 = vmatprep.subr.mxu0 0.0
        %5917 = vmatpush1.msra.mxu0 0.0
        %5918 = vmatprep.subr.mxu0 0.0
        %5919 = vmatpush1.msra.mxu0 0.0
        %5920 = vmatprep.subr.mxu0 0.0
        %5921 = vmatpush1.msra.mxu0 0.0
        %5922 = vmatprep.subr.mxu0 0.0
        %5923 = vmatpush1.msra.mxu0 0.0
        %5924 = vmatprep.subr.mxu0 0.0
        %5925 = vmatpush1.msra.mxu0 0.0
        %5926 = vmatprep.subr.mxu0 0.0
        %5927 = vmatpush1.msra.mxu0 0.0
        %5928 = vmatprep.subr.mxu0 0.0
        %5929 = vmatpush1.msra.mxu0 0.0
        %5930 = vmatprep.subr.mxu0 0.0
        %5931 = vmatpush1.msra.mxu0 0.0
        %5932 = vmatprep.subr.mxu0 0.0
        %5933 = vmatpush1.msra.mxu0 0.0
        %5934 = vmatprep.subr.mxu0 0.0
        %5935 = vmatpush1.msra.mxu0 0.0
        %5936 = vmatprep.subr.mxu0 0.0
        %5937 = vmatpush1.msra.mxu0 0.0
        %5938 = vmatprep.subr.mxu0 0.0
        %5939 = vmatpush1.msra.mxu0 0.0
        %5940 = vmatprep.subr.mxu0 0.0
        %5941 = vmatpush1.msra.mxu0 0.0
        %5942 = vmatprep.subr.mxu0 %v5095
        %5943 = vmatpush1.msra.mxu0 %v5092
        %5944 = vmatprep.subr.mxu0 %v4976
        %5945 = vmatpush1.msra.mxu0 %v4975
        %5946 = vmatprep.subr.mxu0 0.0
        %5947 = vmatpush2.msra.mxu0 0.0
        %5948 = vmatprep.subr.mxu0 0.0
        %5949 = vmatpush2.msra.mxu0 0.0
        %5950 = vmatprep.subr.mxu0 0.0
        %5951 = vmatpush2.msra.mxu0 0.0
        %5952 = vmatprep.subr.mxu0 0.0
        %5953 = vmatpush2.msra.mxu0 0.0
        %5954 = vmatprep.subr.mxu0 0.0
        %5955 = vmatpush2.msra.mxu0 0.0
        %5956 = vmatprep.subr.mxu0 0.0
        %5957 = vmatpush2.msra.mxu0 0.0
        %5958 = vmatprep.subr.mxu0 0.0
        %5959 = vmatpush2.msra.mxu0 0.0
        %5960 = vmatprep.subr.mxu0 0.0
        %5961 = vmatpush2.msra.mxu0 0.0
        %5962 = vmatprep.subr.mxu0 0.0
        %5963 = vmatpush2.msra.mxu0 0.0
        %5964 = vmatprep.subr.mxu0 0.0
        %5965 = vmatpush2.msra.mxu0 0.0
        %5966 = vmatprep.subr.mxu0 0.0
        %5967 = vmatpush2.msra.mxu0 0.0
        %5968 = vmatprep.subr.mxu0 0.0
        %5969 = vmatpush2.msra.mxu0 0.0
        %5970 = vmatprep.subr.mxu0 0.0
        %5971 = vmatpush2.msra.mxu0 0.0
        %5972 = vmatprep.subr.mxu0 0.0
        %5973 = vmatpush2.msra.mxu0 0.0
        %5974 = vmatprep.subr.mxu0 0.0
        %5975 = vmatpush2.msra.mxu0 0.0
        %5976 = vmatprep.subr.mxu0 0.0
        %5977 = vmatpush2.msra.mxu0 0.0
        %5978 = vmatprep.mubr.f32.mxu0 0.0
        %5979 = vmatmul.mubr.f32.gmra.mxu0 %v465
        %v5980 = vpop.f32.mrf.mxu0
        %v5981 = vadd.f32 %v461, %v5980
        %v5982 = vpop.f32.mrf.mxu0
        %v5983 = vadd.f32 %v461, %v5982
        %5984 = vdwg.mxu0
        %5985 = vmatprep.subr.mxu0 0.0
        %5986 = vmatpush1.msra.mxu0 0.0
        %5987 = vmatprep.subr.mxu0 0.0
        %5988 = vmatpush1.msra.mxu0 0.0
        %5989 = vmatprep.subr.mxu0 0.0
        %5990 = vmatpush1.msra.mxu0 0.0
        %5991 = vmatprep.subr.mxu0 0.0
        %5992 = vmatpush1.msra.mxu0 0.0
        %5993 = vmatprep.subr.mxu0 0.0
        %5994 = vmatpush1.msra.mxu0 0.0
        %5995 = vmatprep.subr.mxu0 0.0
        %5996 = vmatpush1.msra.mxu0 0.0
        %5997 = vmatprep.subr.mxu0 0.0
        %5998 = vmatpush1.msra.mxu0 0.0
        %5999 = vmatprep.subr.mxu0 0.0
        %6000 = vmatpush1.msra.mxu0 0.0
        %6001 = vmatprep.subr.mxu0 0.0
        %6002 = vmatpush1.msra.mxu0 0.0
        %6003 = vmatprep.subr.mxu0 0.0
        %6004 = vmatpush1.msra.mxu0 0.0
        %6005 = vmatprep.subr.mxu0 0.0
        %6006 = vmatpush1.msra.mxu0 0.0
        %6007 = vmatprep.subr.mxu0 0.0
        %6008 = vmatpush1.msra.mxu0 0.0
        %6009 = vmatprep.subr.mxu0 0.0
        %6010 = vmatpush1.msra.mxu0 0.0
        %6011 = vmatprep.subr.mxu0 0.0
        %6012 = vmatpush1.msra.mxu0 0.0
        %6013 = vmatprep.subr.mxu0 %v5101
        %6014 = vmatpush1.msra.mxu0 %v5098
        %6015 = vmatprep.subr.mxu0 %v4978
        %6016 = vmatpush1.msra.mxu0 %v4977
        %6017 = vmatprep.subr.mxu0 0.0
        %6018 = vmatpush2.msra.mxu0 0.0
        %6019 = vmatprep.subr.mxu0 0.0
        %6020 = vmatpush2.msra.mxu0 0.0
        %6021 = vmatprep.subr.mxu0 0.0
        %6022 = vmatpush2.msra.mxu0 0.0
        %6023 = vmatprep.subr.mxu0 0.0
        %6024 = vmatpush2.msra.mxu0 0.0
        %6025 = vmatprep.subr.mxu0 0.0
        %6026 = vmatpush2.msra.mxu0 0.0
        %6027 = vmatprep.subr.mxu0 0.0
        %6028 = vmatpush2.msra.mxu0 0.0
        %6029 = vmatprep.subr.mxu0 0.0
        %6030 = vmatpush2.msra.mxu0 0.0
        %6031 = vmatprep.subr.mxu0 0.0
        %6032 = vmatpush2.msra.mxu0 0.0
        %6033 = vmatprep.subr.mxu0 0.0
        %6034 = vmatpush2.msra.mxu0 0.0
        %6035 = vmatprep.subr.mxu0 0.0
        %6036 = vmatpush2.msra.mxu0 0.0
        %6037 = vmatprep.subr.mxu0 0.0
        %6038 = vmatpush2.msra.mxu0 0.0
        %6039 = vmatprep.subr.mxu0 0.0
        %6040 = vmatpush2.msra.mxu0 0.0
        %6041 = vmatprep.subr.mxu0 0.0
        %6042 = vmatpush2.msra.mxu0 0.0
        %6043 = vmatprep.subr.mxu0 0.0
        %6044 = vmatpush2.msra.mxu0 0.0
        %6045 = vmatprep.subr.mxu0 0.0
        %6046 = vmatpush2.msra.mxu0 0.0
        %6047 = vmatprep.subr.mxu0 0.0
        %6048 = vmatpush2.msra.mxu0 0.0
        %6049 = vmatprep.mubr.f32.mxu0 0.0
        %6050 = vmatmul.mubr.f32.gmra.mxu0 %v465
        %v6051 = vpop.f32.mrf.mxu0
        %v6052 = vadd.f32 %v461, %v6051
        %v6053 = vpop.f32.mrf.mxu0
        %v6054 = vadd.f32 %v461, %v6053
        %6055 = vdwg.mxu0
        %6056 = vmatprep.subr.mxu0 0.0
        %6057 = vmatpush1.msra.mxu0 0.0
        %6058 = vmatprep.subr.mxu0 0.0
        %6059 = vmatpush1.msra.mxu0 0.0
        %6060 = vmatprep.subr.mxu0 0.0
        %6061 = vmatpush1.msra.mxu0 0.0
        %6062 = vmatprep.subr.mxu0 0.0
        %6063 = vmatpush1.msra.mxu0 0.0
        %6064 = vmatprep.subr.mxu0 0.0
        %6065 = vmatpush1.msra.mxu0 0.0
        %6066 = vmatprep.subr.mxu0 0.0
        %6067 = vmatpush1.msra.mxu0 0.0
        %6068 = vmatprep.subr.mxu0 0.0
        %6069 = vmatpush1.msra.mxu0 0.0
        %6070 = vmatprep.subr.mxu0 0.0
        %6071 = vmatpush1.msra.mxu0 0.0
        %6072 = vmatprep.subr.mxu0 0.0
        %6073 = vmatpush1.msra.mxu0 0.0
        %6074 = vmatprep.subr.mxu0 0.0
        %6075 = vmatpush1.msra.mxu0 0.0
        %6076 = vmatprep.subr.mxu0 0.0
        %6077 = vmatpush1.msra.mxu0 0.0
        %6078 = vmatprep.subr.mxu0 0.0
        %6079 = vmatpush1.msra.mxu0 0.0
        %6080 = vmatprep.subr.mxu0 0.0
        %6081 = vmatpush1.msra.mxu0 0.0
        %6082 = vmatprep.subr.mxu0 0.0
        %6083 = vmatpush1.msra.mxu0 0.0
        %6084 = vmatprep.subr.mxu0 %v5107
        %6085 = vmatpush1.msra.mxu0 %v5104
        %6086 = vmatprep.subr.mxu0 %v4980
        %6087 = vmatpush1.msra.mxu0 %v4979
        %6088 = vmatprep.subr.mxu0 0.0
        %6089 = vmatpush2.msra.mxu0 0.0
        %6090 = vmatprep.subr.mxu0 0.0
        %6091 = vmatpush2.msra.mxu0 0.0
        %6092 = vmatprep.subr.mxu0 0.0
        %6093 = vmatpush2.msra.mxu0 0.0
        %6094 = vmatprep.subr.mxu0 0.0
        %6095 = vmatpush2.msra.mxu0 0.0
        %6096 = vmatprep.subr.mxu0 0.0
        %6097 = vmatpush2.msra.mxu0 0.0
        %6098 = vmatprep.subr.mxu0 0.0
        %6099 = vmatpush2.msra.mxu0 0.0
        %6100 = vmatprep.subr.mxu0 0.0
        %6101 = vmatpush2.msra.mxu0 0.0
        %6102 = vmatprep.subr.mxu0 0.0
        %6103 = vmatpush2.msra.mxu0 0.0
        %6104 = vmatprep.subr.mxu0 0.0
        %6105 = vmatpush2.msra.mxu0 0.0
        %6106 = vmatprep.subr.mxu0 0.0
        %6107 = vmatpush2.msra.mxu0 0.0
        %6108 = vmatprep.subr.mxu0 0.0
        %6109 = vmatpush2.msra.mxu0 0.0
        %6110 = vmatprep.subr.mxu0 0.0
        %6111 = vmatpush2.msra.mxu0 0.0
        %6112 = vmatprep.subr.mxu0 0.0
        %6113 = vmatpush2.msra.mxu0 0.0
        %6114 = vmatprep.subr.mxu0 0.0
        %6115 = vmatpush2.msra.mxu0 0.0
        %6116 = vmatprep.subr.mxu0 0.0
        %6117 = vmatpush2.msra.mxu0 0.0
        %6118 = vmatprep.subr.mxu0 0.0
        %6119 = vmatpush2.msra.mxu0 0.0
        %6120 = vmatprep.mubr.f32.mxu0 0.0
        %6121 = vmatmul.mubr.f32.gmra.mxu0 %v465
        %v6122 = vpop.f32.mrf.mxu0
        %v6123 = vadd.f32 %v461, %v6122
        %v6124 = vpop.f32.mrf.mxu0
        %v6125 = vadd.f32 %v461, %v6124
        %6126 = vdwg.mxu0
        %6127 = vmatprep.subr.mxu0 0.0
        %6128 = vmatpush1.msra.mxu0 0.0
        %6129 = vmatprep.subr.mxu0 0.0
        %6130 = vmatpush1.msra.mxu0 0.0
        %6131 = vmatprep.subr.mxu0 0.0
        %6132 = vmatpush1.msra.mxu0 0.0
        %6133 = vmatprep.subr.mxu0 0.0
        %6134 = vmatpush1.msra.mxu0 0.0
        %6135 = vmatprep.subr.mxu0 0.0
        %6136 = vmatpush1.msra.mxu0 0.0
        %6137 = vmatprep.subr.mxu0 0.0
        %6138 = vmatpush1.msra.mxu0 0.0
        %6139 = vmatprep.subr.mxu0 0.0
        %6140 = vmatpush1.msra.mxu0 0.0
        %6141 = vmatprep.subr.mxu0 0.0
        %6142 = vmatpush1.msra.mxu0 0.0
        %6143 = vmatprep.subr.mxu0 0.0
        %6144 = vmatpush1.msra.mxu0 0.0
        %6145 = vmatprep.subr.mxu0 0.0
        %6146 = vmatpush1.msra.mxu0 0.0
        %6147 = vmatprep.subr.mxu0 0.0
        %6148 = vmatpush1.msra.mxu0 0.0
        %6149 = vmatprep.subr.mxu0 0.0
        %6150 = vmatpush1.msra.mxu0 0.0
        %6151 = vmatprep.subr.mxu0 0.0
        %6152 = vmatpush1.msra.mxu0 0.0
        %6153 = vmatprep.subr.mxu0 0.0
        %6154 = vmatpush1.msra.mxu0 0.0
        %6155 = vmatprep.subr.mxu0 %v5113
        %6156 = vmatpush1.msra.mxu0 %v5110
        %6157 = vmatprep.subr.mxu0 %v4982
        %6158 = vmatpush1.msra.mxu0 %v4981
        %6159 = vmatprep.subr.mxu0 0.0
        %6160 = vmatpush2.msra.mxu0 0.0
        %6161 = vmatprep.subr.mxu0 0.0
        %6162 = vmatpush2.msra.mxu0 0.0
        %6163 = vmatprep.subr.mxu0 0.0
        %6164 = vmatpush2.msra.mxu0 0.0
        %6165 = vmatprep.subr.mxu0 0.0
        %6166 = vmatpush2.msra.mxu0 0.0
        %6167 = vmatprep.subr.mxu0 0.0
        %6168 = vmatpush2.msra.mxu0 0.0
        %6169 = vmatprep.subr.mxu0 0.0
        %6170 = vmatpush2.msra.mxu0 0.0
        %6171 = vmatprep.subr.mxu0 0.0
        %6172 = vmatpush2.msra.mxu0 0.0
        %6173 = vmatprep.subr.mxu0 0.0
        %6174 = vmatpush2.msra.mxu0 0.0
        %6175 = vmatprep.subr.mxu0 0.0
        %6176 = vmatpush2.msra.mxu0 0.0
        %6177 = vmatprep.subr.mxu0 0.0
        %6178 = vmatpush2.msra.mxu0 0.0
        %6179 = vmatprep.subr.mxu0 0.0
        %6180 = vmatpush2.msra.mxu0 0.0
        %6181 = vmatprep.subr.mxu0 0.0
        %6182 = vmatpush2.msra.mxu0 0.0
        %6183 = vmatprep.subr.mxu0 0.0
        %6184 = vmatpush2.msra.mxu0 0.0
        %6185 = vmatprep.subr.mxu0 0.0
        %6186 = vmatpush2.msra.mxu0 0.0
        %6187 = vmatprep.subr.mxu0 0.0
        %6188 = vmatpush2.msra.mxu0 0.0
        %6189 = vmatprep.subr.mxu0 0.0
        %6190 = vmatpush2.msra.mxu0 0.0
        %6191 = vmatprep.mubr.f32.mxu0 0.0
        %6192 = vmatmul.mubr.f32.gmra.mxu0 %v465
        %v6193 = vpop.f32.mrf.mxu0
        %v6194 = vadd.f32 %v461, %v6193
        %v6195 = vpop.f32.mrf.mxu0
        %v6196 = vadd.f32 %v461, %v6195
        %6197 = vdwg.mxu0
        %6198 = vmatprep.subr.mxu0 0.0
        %6199 = vmatpush1.msra.mxu0 0.0
        %6200 = vmatprep.subr.mxu0 0.0
        %6201 = vmatpush1.msra.mxu0 0.0
        %6202 = vmatprep.subr.mxu0 0.0
        %6203 = vmatpush1.msra.mxu0 0.0
        %6204 = vmatprep.subr.mxu0 0.0
        %6205 = vmatpush1.msra.mxu0 0.0
        %6206 = vmatprep.subr.mxu0 0.0
        %6207 = vmatpush1.msra.mxu0 0.0
        %6208 = vmatprep.subr.mxu0 0.0
        %6209 = vmatpush1.msra.mxu0 0.0
        %6210 = vmatprep.subr.mxu0 0.0
        %6211 = vmatpush1.msra.mxu0 0.0
        %6212 = vmatprep.subr.mxu0 0.0
        %6213 = vmatpush1.msra.mxu0 0.0
        %6214 = vmatprep.subr.mxu0 0.0
        %6215 = vmatpush1.msra.mxu0 0.0
        %6216 = vmatprep.subr.mxu0 0.0
        %6217 = vmatpush1.msra.mxu0 0.0
        %6218 = vmatprep.subr.mxu0 0.0
        %6219 = vmatpush1.msra.mxu0 0.0
        %6220 = vmatprep.subr.mxu0 0.0
        %6221 = vmatpush1.msra.mxu0 0.0
        %6222 = vmatprep.subr.mxu0 0.0
        %6223 = vmatpush1.msra.mxu0 0.0
        %6224 = vmatprep.subr.mxu0 0.0
        %6225 = vmatpush1.msra.mxu0 0.0
        %6226 = vmatprep.subr.mxu0 %v5119
        %6227 = vmatpush1.msra.mxu0 %v5116
        %6228 = vmatprep.subr.mxu0 %v4984
        %6229 = vmatpush1.msra.mxu0 %v4983
        %6230 = vmatprep.subr.mxu0 0.0
        %6231 = vmatpush2.msra.mxu0 0.0
        %6232 = vmatprep.subr.mxu0 0.0
        %6233 = vmatpush2.msra.mxu0 0.0
        %6234 = vmatprep.subr.mxu0 0.0
        %6235 = vmatpush2.msra.mxu0 0.0
        %6236 = vmatprep.subr.mxu0 0.0
        %6237 = vmatpush2.msra.mxu0 0.0
        %6238 = vmatprep.subr.mxu0 0.0
        %6239 = vmatpush2.msra.mxu0 0.0
        %6240 = vmatprep.subr.mxu0 0.0
        %6241 = vmatpush2.msra.mxu0 0.0
        %6242 = vmatprep.subr.mxu0 0.0
        %6243 = vmatpush2.msra.mxu0 0.0
        %6244 = vmatprep.subr.mxu0 0.0
        %6245 = vmatpush2.msra.mxu0 0.0
        %6246 = vmatprep.subr.mxu0 0.0
        %6247 = vmatpush2.msra.mxu0 0.0
        %6248 = vmatprep.subr.mxu0 0.0
        %6249 = vmatpush2.msra.mxu0 0.0
        %6250 = vmatprep.subr.mxu0 0.0
        %6251 = vmatpush2.msra.mxu0 0.0
        %6252 = vmatprep.subr.mxu0 0.0
        %6253 = vmatpush2.msra.mxu0 0.0
        %6254 = vmatprep.subr.mxu0 0.0
        %6255 = vmatpush2.msra.mxu0 0.0
        %6256 = vmatprep.subr.mxu0 0.0
        %6257 = vmatpush2.msra.mxu0 0.0
        %6258 = vmatprep.subr.mxu0 0.0
        %6259 = vmatpush2.msra.mxu0 0.0
        %6260 = vmatprep.subr.mxu0 0.0
        %6261 = vmatpush2.msra.mxu0 0.0
        %6262 = vmatprep.mubr.f32.mxu0 0.0
        %6263 = vmatmul.mubr.f32.gmra.mxu0 %v465
        %v6264 = vpop.f32.mrf.mxu0
        %v6265 = vadd.f32 %v461, %v6264
        %v6266 = vpop.f32.mrf.mxu0
        %v6267 = vadd.f32 %v461, %v6266
        %6268 = vdwg.mxu0
        %6269 = vmatprep.subr.mxu0 0.0
        %6270 = vmatpush1.msra.mxu0 0.0
        %6271 = vmatprep.subr.mxu0 0.0
        %6272 = vmatpush1.msra.mxu0 0.0
        %6273 = vmatprep.subr.mxu0 0.0
        %6274 = vmatpush1.msra.mxu0 0.0
        %6275 = vmatprep.subr.mxu0 0.0
        %6276 = vmatpush1.msra.mxu0 0.0
        %6277 = vmatprep.subr.mxu0 0.0
        %6278 = vmatpush1.msra.mxu0 0.0
        %6279 = vmatprep.subr.mxu0 0.0
        %6280 = vmatpush1.msra.mxu0 0.0
        %6281 = vmatprep.subr.mxu0 0.0
        %6282 = vmatpush1.msra.mxu0 0.0
        %6283 = vmatprep.subr.mxu0 0.0
        %6284 = vmatpush1.msra.mxu0 0.0
        %6285 = vmatprep.subr.mxu0 0.0
        %6286 = vmatpush1.msra.mxu0 0.0
        %6287 = vmatprep.subr.mxu0 0.0
        %6288 = vmatpush1.msra.mxu0 0.0
        %6289 = vmatprep.subr.mxu0 0.0
        %6290 = vmatpush1.msra.mxu0 0.0
        %6291 = vmatprep.subr.mxu0 0.0
        %6292 = vmatpush1.msra.mxu0 0.0
        %6293 = vmatprep.subr.mxu0 0.0
        %6294 = vmatpush1.msra.mxu0 0.0
        %6295 = vmatprep.subr.mxu0 0.0
        %6296 = vmatpush1.msra.mxu0 0.0
        %6297 = vmatprep.subr.mxu0 %v5125
        %6298 = vmatpush1.msra.mxu0 %v5122
        %6299 = vmatprep.subr.mxu0 %v4986
        %6300 = vmatpush1.msra.mxu0 %v4985
        %6301 = vmatprep.subr.mxu0 0.0
        %6302 = vmatpush2.msra.mxu0 0.0
        %6303 = vmatprep.subr.mxu0 0.0
        %6304 = vmatpush2.msra.mxu0 0.0
        %6305 = vmatprep.subr.mxu0 0.0
        %6306 = vmatpush2.msra.mxu0 0.0
        %6307 = vmatprep.subr.mxu0 0.0
        %6308 = vmatpush2.msra.mxu0 0.0
        %6309 = vmatprep.subr.mxu0 0.0
        %6310 = vmatpush2.msra.mxu0 0.0
        %6311 = vmatprep.subr.mxu0 0.0
        %6312 = vmatpush2.msra.mxu0 0.0
        %6313 = vmatprep.subr.mxu0 0.0
        %6314 = vmatpush2.msra.mxu0 0.0
        %6315 = vmatprep.subr.mxu0 0.0
        %6316 = vmatpush2.msra.mxu0 0.0
        %6317 = vmatprep.subr.mxu0 0.0
        %6318 = vmatpush2.msra.mxu0 0.0
        %6319 = vmatprep.subr.mxu0 0.0
        %6320 = vmatpush2.msra.mxu0 0.0
        %6321 = vmatprep.subr.mxu0 0.0
        %6322 = vmatpush2.msra.mxu0 0.0
        %6323 = vmatprep.subr.mxu0 0.0
        %6324 = vmatpush2.msra.mxu0 0.0
        %6325 = vmatprep.subr.mxu0 0.0
        %6326 = vmatpush2.msra.mxu0 0.0
        %6327 = vmatprep.subr.mxu0 0.0
        %6328 = vmatpush2.msra.mxu0 0.0
        %6329 = vmatprep.subr.mxu0 0.0
        %6330 = vmatpush2.msra.mxu0 0.0
        %6331 = vmatprep.subr.mxu0 0.0
        %6332 = vmatpush2.msra.mxu0 0.0
        %6333 = vmatprep.mubr.f32.mxu0 0.0
        %6334 = vmatmul.mubr.f32.gmra.mxu0 %v465
        %v6335 = vpop.f32.mrf.mxu0
        %v6336 = vadd.f32 %v461, %v6335
        %v6337 = vpop.f32.mrf.mxu0
        %v6338 = vadd.f32 %v461, %v6337
        %6339 = vdwg.mxu0
        %6340 = vmatprep.subr.mxu0 0.0
        %6341 = vmatpush1.msra.mxu0 0.0
        %6342 = vmatprep.subr.mxu0 0.0
        %6343 = vmatpush1.msra.mxu0 0.0
        %6344 = vmatprep.subr.mxu0 0.0
        %6345 = vmatpush1.msra.mxu0 0.0
        %6346 = vmatprep.subr.mxu0 0.0
        %6347 = vmatpush1.msra.mxu0 0.0
        %6348 = vmatprep.subr.mxu0 0.0
        %6349 = vmatpush1.msra.mxu0 0.0
        %6350 = vmatprep.subr.mxu0 0.0
        %6351 = vmatpush1.msra.mxu0 0.0
        %6352 = vmatprep.subr.mxu0 0.0
        %6353 = vmatpush1.msra.mxu0 0.0
        %6354 = vmatprep.subr.mxu0 0.0
        %6355 = vmatpush1.msra.mxu0 0.0
        %6356 = vmatprep.subr.mxu0 0.0
        %6357 = vmatpush1.msra.mxu0 0.0
        %6358 = vmatprep.subr.mxu0 0.0
        %6359 = vmatpush1.msra.mxu0 0.0
        %6360 = vmatprep.subr.mxu0 0.0
        %6361 = vmatpush1.msra.mxu0 0.0
        %6362 = vmatprep.subr.mxu0 0.0
        %6363 = vmatpush1.msra.mxu0 0.0
        %6364 = vmatprep.subr.mxu0 0.0
        %6365 = vmatpush1.msra.mxu0 0.0
        %6366 = vmatprep.subr.mxu0 0.0
        %6367 = vmatpush1.msra.mxu0 0.0
        %6368 = vmatprep.subr.mxu0 %v5131
        %6369 = vmatpush1.msra.mxu0 %v5128
        %6370 = vmatprep.subr.mxu0 %v4988
        %6371 = vmatpush1.msra.mxu0 %v4987
        %6372 = vmatprep.subr.mxu0 0.0
        %6373 = vmatpush2.msra.mxu0 0.0
        %6374 = vmatprep.subr.mxu0 0.0
        %6375 = vmatpush2.msra.mxu0 0.0
        %6376 = vmatprep.subr.mxu0 0.0
        %6377 = vmatpush2.msra.mxu0 0.0
        %6378 = vmatprep.subr.mxu0 0.0
        %6379 = vmatpush2.msra.mxu0 0.0
        %6380 = vmatprep.subr.mxu0 0.0
        %6381 = vmatpush2.msra.mxu0 0.0
        %6382 = vmatprep.subr.mxu0 0.0
        %6383 = vmatpush2.msra.mxu0 0.0
        %6384 = vmatprep.subr.mxu0 0.0
        %6385 = vmatpush2.msra.mxu0 0.0
        %6386 = vmatprep.subr.mxu0 0.0
        %6387 = vmatpush2.msra.mxu0 0.0
        %6388 = vmatprep.subr.mxu0 0.0
        %6389 = vmatpush2.msra.mxu0 0.0
        %6390 = vmatprep.subr.mxu0 0.0
        %6391 = vmatpush2.msra.mxu0 0.0
        %6392 = vmatprep.subr.mxu0 0.0
        %6393 = vmatpush2.msra.mxu0 0.0
        %6394 = vmatprep.subr.mxu0 0.0
        %6395 = vmatpush2.msra.mxu0 0.0
        %6396 = vmatprep.subr.mxu0 0.0
        %6397 = vmatpush2.msra.mxu0 0.0
        %6398 = vmatprep.subr.mxu0 0.0
        %6399 = vmatpush2.msra.mxu0 0.0
        %6400 = vmatprep.subr.mxu0 0.0
        %6401 = vmatpush2.msra.mxu0 0.0
        %6402 = vmatprep.subr.mxu0 0.0
        %6403 = vmatpush2.msra.mxu0 0.0
        %6404 = vmatprep.mubr.f32.mxu0 0.0
        %6405 = vmatmul.mubr.f32.gmra.mxu0 %v465
        %v6406 = vpop.f32.mrf.mxu0
        %v6407 = vadd.f32 %v461, %v6406
        %v6408 = vpop.f32.mrf.mxu0
        %v6409 = vadd.f32 %v461, %v6408
        %6410 = vdwg.mxu0
        %v6411 = vmax.f32 %v5200, 0.0
        %v6412 = vmax.f32 %v5202, 0.0
        %v6413 = vmax.f32 %v5271, 0.0
        %v6414 = vmax.f32 %v5273, 0.0
        %v6415 = vmax.f32 %v5342, 0.0
        %v6416 = vmax.f32 %v5344, 0.0
        %v6417 = vmax.f32 %v5413, 0.0
        %v6418 = vmax.f32 %v5415, 0.0
        %v6419 = vmax.f32 %v5484, 0.0
        %v6420 = vmax.f32 %v5486, 0.0
        %v6421 = vmax.f32 %v5555, 0.0
        %v6422 = vmax.f32 %v5557, 0.0
        %v6423 = vmax.f32 %v5626, 0.0
        %v6424 = vmax.f32 %v5628, 0.0
        %v6425 = vmax.f32 %v5697, 0.0
        %v6426 = vmax.f32 %v5699, 0.0
        %v6427 = vmax.f32 %v5768, 0.0
        %v6428 = vmax.f32 %v5770, 0.0
        %v6429 = vmax.f32 %v5839, 0.0
        %v6430 = vmax.f32 %v5841, 0.0
        %v6431 = vmax.f32 %v5910, 0.0
        %v6432 = vmax.f32 %v5912, 0.0
        %v6433 = vmax.f32 %v5981, 0.0
        %v6434 = vmax.f32 %v5983, 0.0
        %v6435 = vmax.f32 %v6052, 0.0
        %v6436 = vmax.f32 %v6054, 0.0
        %v6437 = vmax.f32 %v6123, 0.0
        %v6438 = vmax.f32 %v6125, 0.0
        %v6439 = vmax.f32 %v6194, 0.0
        %v6440 = vmax.f32 %v6196, 0.0
        %v6441 = vmax.f32 %v6265, 0.0
        %v6442 = vmax.f32 %v6267, 0.0
        %v6443 = vmax.f32 %v6336, 0.0
        %v6444 = vmax.f32 %v6338, 0.0
        %v6445 = vmax.f32 %v6407, 0.0
        %v6446 = vmax.f32 %v6409, 0.0
        %v6447 = vmax.f32 %v4916, %v6411
        %v6448 = vmax.f32 %v4917, %v6412
        %v6449 = vmax.f32 %v4918, %v6413
        %v6450 = vmax.f32 %v4919, %v6414
        %v6451 = vmax.f32 %v4920, %v6415
        %v6452 = vmax.f32 %v4921, %v6416
        %v6453 = vmax.f32 %v4922, %v6417
        %v6454 = vmax.f32 %v4923, %v6418
        %v6455 = vmax.f32 %v4924, %v6419
        %v6456 = vmax.f32 %v4925, %v6420
        %v6457 = vmax.f32 %v4926, %v6421
        %v6458 = vmax.f32 %v4927, %v6422
        %v6459 = vmax.f32 %v4928, %v6423
        %v6460 = vmax.f32 %v4929, %v6424
        %v6461 = vmax.f32 %v4930, %v6425
        %v6462 = vmax.f32 %v4931, %v6426
        %v6463 = vmax.f32 %v4932, %v6427
        %v6464 = vmax.f32 %v4933, %v6428
        %v6465 = vmax.f32 %v4934, %v6429
        %v6466 = vmax.f32 %v4935, %v6430
        %v6467 = vmax.f32 %v4936, %v6431
        %v6468 = vmax.f32 %v4937, %v6432
        %v6469 = vmax.f32 %v4938, %v6433
        %v6470 = vmax.f32 %v4939, %v6434
        %v6471 = vmax.f32 %v4940, %v6435
        %v6472 = vmax.f32 %v4941, %v6436
        %v6473 = vmax.f32 %v4942, %v6437
        %v6474 = vmax.f32 %v4943, %v6438
        %v6475 = vmax.f32 %v4944, %v6439
        %v6476 = vmax.f32 %v4945, %v6440
        %v6477 = vmax.f32 %v4946, %v6441
        %v6478 = vmax.f32 %v4947, %v6442
        %v6479 = vmax.f32 %v4948, %v6443
        %v6480 = vmax.f32 %v4949, %v6444
        %v6481 = vmax.f32 %v4950, %v6445
        %v6482 = vmax.f32 %v4951, %v6446
        %v6483 = vld [vmem:[%s3] sm:$0xff]
        %v6484 = vld [vmem:[%s3 + $0x8] sm:$0xff]
        %s6485 = scalar_lea.vmem %s3, 16
        %v6486 = vld [vmem:[%s6485] sm:$0xff]
        %v6487 = vld [vmem:[%s6485 + $0x8] sm:$0xff]
        %vm6488 = vcmask 48128
        %v6490 = vsel %vm6488, %v6486, 0
        %v6493 = vsel %vm6488, %v6487, 0
        %vm6495 = vcmask 1045504
        %v6497 = vsel %vm6495, %v6451, 0
        %v6500 = vsel %vm6495, %v6452, 0
        %v6503 = vsel %vm6495, %v6453, 0
        %v6506 = vsel %vm6495, %v6454, 0
        %6508 = vmatprep.subr.mxu0 0.0
        %6509 = vmatpush1.msra.mxu0 0.0
        %6510 = vmatprep.subr.mxu0 0.0
        %6511 = vmatpush1.msra.mxu0 0.0
        %6512 = vmatprep.subr.mxu0 0.0
        %6513 = vmatpush1.msra.mxu0 0.0
        %6514 = vmatprep.subr.mxu0 0.0
        %6515 = vmatpush1.msra.mxu0 0.0
        %6516 = vmatprep.subr.mxu0 0.0
        %6517 = vmatpush1.msra.mxu0 0.0
        %6518 = vmatprep.subr.mxu0 0.0
        %6519 = vmatpush1.msra.mxu0 0.0
        %6520 = vmatprep.subr.mxu0 0.0
        %6521 = vmatpush1.msra.mxu0 0.0
        %6522 = vmatprep.subr.mxu0 0.0
        %6523 = vmatpush1.msra.mxu0 0.0
        %6524 = vmatprep.subr.mxu0 0.0
        %6525 = vmatpush1.msra.mxu0 0.0
        %6526 = vmatprep.subr.mxu0 0.0
        %6527 = vmatpush1.msra.mxu0 0.0
        %6528 = vmatprep.subr.mxu0 0.0
        %6529 = vmatpush1.msra.mxu0 0.0
        %6530 = vmatprep.subr.mxu0 0.0
        %6531 = vmatpush1.msra.mxu0 0.0
        %6532 = vmatprep.subr.mxu0 0.0
        %6533 = vmatpush1.msra.mxu0 0.0
        %6534 = vmatprep.subr.mxu0 0.0
        %6535 = vmatpush1.msra.mxu0 0.0
        %6536 = vmatprep.subr.mxu0 0.0
        %6537 = vmatpush1.msra.mxu0 0.0
        %6538 = vmatprep.subr.mxu0 %v6500
        %6539 = vmatpush1.msra.mxu0 %v6497
        %6540 = vmatprep.subr.mxu0 0.0
        %6541 = vmatpush2.msra.mxu0 0.0
        %6542 = vmatprep.subr.mxu0 0.0
        %6543 = vmatpush2.msra.mxu0 0.0
        %6544 = vmatprep.subr.mxu0 0.0
        %6545 = vmatpush2.msra.mxu0 0.0
        %6546 = vmatprep.subr.mxu0 0.0
        %6547 = vmatpush2.msra.mxu0 0.0
        %6548 = vmatprep.subr.mxu0 0.0
        %6549 = vmatpush2.msra.mxu0 0.0
        %6550 = vmatprep.subr.mxu0 0.0
        %6551 = vmatpush2.msra.mxu0 0.0
        %6552 = vmatprep.subr.mxu0 0.0
        %6553 = vmatpush2.msra.mxu0 0.0
        %6554 = vmatprep.subr.mxu0 0.0
        %6555 = vmatpush2.msra.mxu0 0.0
        %6556 = vmatprep.subr.mxu0 0.0
        %6557 = vmatpush2.msra.mxu0 0.0
        %6558 = vmatprep.subr.mxu0 0.0
        %6559 = vmatpush2.msra.mxu0 0.0
        %6560 = vmatprep.subr.mxu0 0.0
        %6561 = vmatpush2.msra.mxu0 0.0
        %6562 = vmatprep.subr.mxu0 0.0
        %6563 = vmatpush2.msra.mxu0 0.0
        %6564 = vmatprep.subr.mxu0 0.0
        %6565 = vmatpush2.msra.mxu0 0.0
        %6566 = vmatprep.subr.mxu0 0.0
        %6567 = vmatpush2.msra.mxu0 0.0
        %6568 = vmatprep.subr.mxu0 0.0
        %6569 = vmatpush2.msra.mxu0 0.0
        %6570 = vmatprep.subr.mxu0 0.0
        %6571 = vmatpush2.msra.mxu0 0.0
        %6572 = vmatprep.mubr.f32.mxu0 0.0
        %6573 = vmatmul.mubr.f32.gmra.mxu0 %v6490
        %v6574 = vpop.f32.mrf.mxu0
        %v6575 = vadd.f32 0.0, %v6574
        %v6576 = vpop.f32.mrf.mxu0
        %v6577 = vadd.f32 0.0, %v6576
        %6578 = vmatprep.mubr.f32.mxu0 0.0
        %6579 = vmatmul.mubr.f32.gmra.mxu0 %v6493
        %v6580 = vpop.f32.mrf.mxu0
        %v6581 = vadd.f32 0.0, %v6580
        %v6582 = vpop.f32.mrf.mxu0
        %v6583 = vadd.f32 0.0, %v6582
        %6584 = vdwg.mxu0
        %6585 = vmatprep.subr.mxu0 0.0
        %6586 = vmatpush1.msra.mxu0 0.0
        %6587 = vmatprep.subr.mxu0 0.0
        %6588 = vmatpush1.msra.mxu0 0.0
        %6589 = vmatprep.subr.mxu0 0.0
        %6590 = vmatpush1.msra.mxu0 0.0
        %6591 = vmatprep.subr.mxu0 0.0
        %6592 = vmatpush1.msra.mxu0 0.0
        %6593 = vmatprep.subr.mxu0 0.0
        %6594 = vmatpush1.msra.mxu0 0.0
        %6595 = vmatprep.subr.mxu0 0.0
        %6596 = vmatpush1.msra.mxu0 0.0
        %6597 = vmatprep.subr.mxu0 0.0
        %6598 = vmatpush1.msra.mxu0 0.0
        %6599 = vmatprep.subr.mxu0 0.0
        %6600 = vmatpush1.msra.mxu0 0.0
        %6601 = vmatprep.subr.mxu0 0.0
        %6602 = vmatpush1.msra.mxu0 0.0
        %6603 = vmatprep.subr.mxu0 0.0
        %6604 = vmatpush1.msra.mxu0 0.0
        %6605 = vmatprep.subr.mxu0 0.0
        %6606 = vmatpush1.msra.mxu0 0.0
        %6607 = vmatprep.subr.mxu0 0.0
        %6608 = vmatpush1.msra.mxu0 0.0
        %6609 = vmatprep.subr.mxu0 0.0
        %6610 = vmatpush1.msra.mxu0 0.0
        %6611 = vmatprep.subr.mxu0 0.0
        %6612 = vmatpush1.msra.mxu0 0.0
        %6613 = vmatprep.subr.mxu0 0.0
        %6614 = vmatpush1.msra.mxu0 0.0
        %6615 = vmatprep.subr.mxu0 %v6506
        %6616 = vmatpush1.msra.mxu0 %v6503
        %6617 = vmatprep.subr.mxu0 0.0
        %6618 = vmatpush2.msra.mxu0 0.0
        %6619 = vmatprep.subr.mxu0 0.0
        %6620 = vmatpush2.msra.mxu0 0.0
        %6621 = vmatprep.subr.mxu0 0.0
        %6622 = vmatpush2.msra.mxu0 0.0
        %6623 = vmatprep.subr.mxu0 0.0
        %6624 = vmatpush2.msra.mxu0 0.0
        %6625 = vmatprep.subr.mxu0 0.0
        %6626 = vmatpush2.msra.mxu0 0.0
        %6627 = vmatprep.subr.mxu0 0.0
        %6628 = vmatpush2.msra.mxu0 0.0
        %6629 = vmatprep.subr.mxu0 0.0
        %6630 = vmatpush2.msra.mxu0 0.0
        %6631 = vmatprep.subr.mxu0 0.0
        %6632 = vmatpush2.msra.mxu0 0.0
        %6633 = vmatprep.subr.mxu0 0.0
        %6634 = vmatpush2.msra.mxu0 0.0
        %6635 = vmatprep.subr.mxu0 0.0
        %6636 = vmatpush2.msra.mxu0 0.0
        %6637 = vmatprep.subr.mxu0 0.0
        %6638 = vmatpush2.msra.mxu0 0.0
        %6639 = vmatprep.subr.mxu0 0.0
        %6640 = vmatpush2.msra.mxu0 0.0
        %6641 = vmatprep.subr.mxu0 0.0
        %6642 = vmatpush2.msra.mxu0 0.0
        %6643 = vmatprep.subr.mxu0 0.0
        %6644 = vmatpush2.msra.mxu0 0.0
        %6645 = vmatprep.subr.mxu0 0.0
        %6646 = vmatpush2.msra.mxu0 0.0
        %6647 = vmatprep.subr.mxu0 0.0
        %6648 = vmatpush2.msra.mxu0 0.0
        %6649 = vmatprep.mubr.f32.mxu0 0.0
        %6650 = vmatmul.mubr.f32.gmra.mxu0 %v6490
        %v6651 = vpop.f32.mrf.mxu0
        %v6652 = vadd.f32 0.0, %v6651
        %v6653 = vpop.f32.mrf.mxu0
        %v6654 = vadd.f32 0.0, %v6653
        %6655 = vmatprep.mubr.f32.mxu0 0.0
        %6656 = vmatmul.mubr.f32.gmra.mxu0 %v6493
        %v6657 = vpop.f32.mrf.mxu0
        %v6658 = vadd.f32 0.0, %v6657
        %v6659 = vpop.f32.mrf.mxu0
        %v6660 = vadd.f32 0.0, %v6659
        %6661 = vdwg.mxu0
        %v6663 = vsel %vm6488, %v6483, 0
        %v6666 = vsel %vm6488, %v6484, 0
        %v6669 = vsel %vm6495, %v6447, 0
        %v6672 = vsel %vm6495, %v6448, 0
        %v6675 = vsel %vm6495, %v6449, 0
        %v6678 = vsel %vm6495, %v6450, 0
        %6680 = vmatprep.subr.mxu0 0.0
        %6681 = vmatpush1.msra.mxu0 0.0
        %6682 = vmatprep.subr.mxu0 0.0
        %6683 = vmatpush1.msra.mxu0 0.0
        %6684 = vmatprep.subr.mxu0 0.0
        %6685 = vmatpush1.msra.mxu0 0.0
        %6686 = vmatprep.subr.mxu0 0.0
        %6687 = vmatpush1.msra.mxu0 0.0
        %6688 = vmatprep.subr.mxu0 0.0
        %6689 = vmatpush1.msra.mxu0 0.0
        %6690 = vmatprep.subr.mxu0 0.0
        %6691 = vmatpush1.msra.mxu0 0.0
        %6692 = vmatprep.subr.mxu0 0.0
        %6693 = vmatpush1.msra.mxu0 0.0
        %6694 = vmatprep.subr.mxu0 0.0
        %6695 = vmatpush1.msra.mxu0 0.0
        %6696 = vmatprep.subr.mxu0 0.0
        %6697 = vmatpush1.msra.mxu0 0.0
        %6698 = vmatprep.subr.mxu0 0.0
        %6699 = vmatpush1.msra.mxu0 0.0
        %6700 = vmatprep.subr.mxu0 0.0
        %6701 = vmatpush1.msra.mxu0 0.0
        %6702 = vmatprep.subr.mxu0 0.0
        %6703 = vmatpush1.msra.mxu0 0.0
        %6704 = vmatprep.subr.mxu0 0.0
        %6705 = vmatpush1.msra.mxu0 0.0
        %6706 = vmatprep.subr.mxu0 0.0
        %6707 = vmatpush1.msra.mxu0 0.0
        %6708 = vmatprep.subr.mxu0 0.0
        %6709 = vmatpush1.msra.mxu0 0.0
        %6710 = vmatprep.subr.mxu0 %v6672
        %6711 = vmatpush1.msra.mxu0 %v6669
        %6712 = vmatprep.subr.mxu0 0.0
        %6713 = vmatpush2.msra.mxu0 0.0
        %6714 = vmatprep.subr.mxu0 0.0
        %6715 = vmatpush2.msra.mxu0 0.0
        %6716 = vmatprep.subr.mxu0 0.0
        %6717 = vmatpush2.msra.mxu0 0.0
        %6718 = vmatprep.subr.mxu0 0.0
        %6719 = vmatpush2.msra.mxu0 0.0
        %6720 = vmatprep.subr.mxu0 0.0
        %6721 = vmatpush2.msra.mxu0 0.0
        %6722 = vmatprep.subr.mxu0 0.0
        %6723 = vmatpush2.msra.mxu0 0.0
        %6724 = vmatprep.subr.mxu0 0.0
        %6725 = vmatpush2.msra.mxu0 0.0
        %6726 = vmatprep.subr.mxu0 0.0
        %6727 = vmatpush2.msra.mxu0 0.0
        %6728 = vmatprep.subr.mxu0 0.0
        %6729 = vmatpush2.msra.mxu0 0.0
        %6730 = vmatprep.subr.mxu0 0.0
        %6731 = vmatpush2.msra.mxu0 0.0
        %6732 = vmatprep.subr.mxu0 0.0
        %6733 = vmatpush2.msra.mxu0 0.0
        %6734 = vmatprep.subr.mxu0 0.0
        %6735 = vmatpush2.msra.mxu0 0.0
        %6736 = vmatprep.subr.mxu0 0.0
        %6737 = vmatpush2.msra.mxu0 0.0
        %6738 = vmatprep.subr.mxu0 0.0
        %6739 = vmatpush2.msra.mxu0 0.0
        %6740 = vmatprep.subr.mxu0 0.0
        %6741 = vmatpush2.msra.mxu0 0.0
        %6742 = vmatprep.subr.mxu0 0.0
        %6743 = vmatpush2.msra.mxu0 0.0
        %6744 = vmatprep.mubr.f32.mxu0 0.0
        %6745 = vmatmul.mubr.f32.gmra.mxu0 %v6663
        %v6746 = vpop.f32.mrf.mxu0
        %v6747 = vadd.f32 %v6575, %v6746
        %v6748 = vpop.f32.mrf.mxu0
        %v6749 = vadd.f32 %v6577, %v6748
        %6750 = vmatprep.mubr.f32.mxu0 0.0
        %6751 = vmatmul.mubr.f32.gmra.mxu0 %v6666
        %v6752 = vpop.f32.mrf.mxu0
        %v6753 = vadd.f32 %v6581, %v6752
        %v6754 = vpop.f32.mrf.mxu0
        %v6755 = vadd.f32 %v6583, %v6754
        %6756 = vdwg.mxu0
        %6757 = vmatprep.subr.mxu0 0.0
        %6758 = vmatpush1.msra.mxu0 0.0
        %6759 = vmatprep.subr.mxu0 0.0
        %6760 = vmatpush1.msra.mxu0 0.0
        %6761 = vmatprep.subr.mxu0 0.0
        %6762 = vmatpush1.msra.mxu0 0.0
        %6763 = vmatprep.subr.mxu0 0.0
        %6764 = vmatpush1.msra.mxu0 0.0
        %6765 = vmatprep.subr.mxu0 0.0
        %6766 = vmatpush1.msra.mxu0 0.0
        %6767 = vmatprep.subr.mxu0 0.0
        %6768 = vmatpush1.msra.mxu0 0.0
        %6769 = vmatprep.subr.mxu0 0.0
        %6770 = vmatpush1.msra.mxu0 0.0
        %6771 = vmatprep.subr.mxu0 0.0
        %6772 = vmatpush1.msra.mxu0 0.0
        %6773 = vmatprep.subr.mxu0 0.0
        %6774 = vmatpush1.msra.mxu0 0.0
        %6775 = vmatprep.subr.mxu0 0.0
        %6776 = vmatpush1.msra.mxu0 0.0
        %6777 = vmatprep.subr.mxu0 0.0
        %6778 = vmatpush1.msra.mxu0 0.0
        %6779 = vmatprep.subr.mxu0 0.0
        %6780 = vmatpush1.msra.mxu0 0.0
        %6781 = vmatprep.subr.mxu0 0.0
        %6782 = vmatpush1.msra.mxu0 0.0
        %6783 = vmatprep.subr.mxu0 0.0
        %6784 = vmatpush1.msra.mxu0 0.0
        %6785 = vmatprep.subr.mxu0 0.0
        %6786 = vmatpush1.msra.mxu0 0.0
        %6787 = vmatprep.subr.mxu0 %v6678
        %6788 = vmatpush1.msra.mxu0 %v6675
        %6789 = vmatprep.subr.mxu0 0.0
        %6790 = vmatpush2.msra.mxu0 0.0
        %6791 = vmatprep.subr.mxu0 0.0
        %6792 = vmatpush2.msra.mxu0 0.0
        %6793 = vmatprep.subr.mxu0 0.0
        %6794 = vmatpush2.msra.mxu0 0.0
        %6795 = vmatprep.subr.mxu0 0.0
        %6796 = vmatpush2.msra.mxu0 0.0
        %6797 = vmatprep.subr.mxu0 0.0
        %6798 = vmatpush2.msra.mxu0 0.0
        %6799 = vmatprep.subr.mxu0 0.0
        %6800 = vmatpush2.msra.mxu0 0.0
        %6801 = vmatprep.subr.mxu0 0.0
        %6802 = vmatpush2.msra.mxu0 0.0
        %6803 = vmatprep.subr.mxu0 0.0
        %6804 = vmatpush2.msra.mxu0 0.0
        %6805 = vmatprep.subr.mxu0 0.0
        %6806 = vmatpush2.msra.mxu0 0.0
        %6807 = vmatprep.subr.mxu0 0.0
        %6808 = vmatpush2.msra.mxu0 0.0
        %6809 = vmatprep.subr.mxu0 0.0
        %6810 = vmatpush2.msra.mxu0 0.0
        %6811 = vmatprep.subr.mxu0 0.0
        %6812 = vmatpush2.msra.mxu0 0.0
        %6813 = vmatprep.subr.mxu0 0.0
        %6814 = vmatpush2.msra.mxu0 0.0
        %6815 = vmatprep.subr.mxu0 0.0
        %6816 = vmatpush2.msra.mxu0 0.0
        %6817 = vmatprep.subr.mxu0 0.0
        %6818 = vmatpush2.msra.mxu0 0.0
        %6819 = vmatprep.subr.mxu0 0.0
        %6820 = vmatpush2.msra.mxu0 0.0
        %6821 = vmatprep.mubr.f32.mxu0 0.0
        %6822 = vmatmul.mubr.f32.gmra.mxu0 %v6663
        %v6823 = vpop.f32.mrf.mxu0
        %v6824 = vadd.f32 %v6652, %v6823
        %v6825 = vpop.f32.mrf.mxu0
        %v6826 = vadd.f32 %v6654, %v6825
        %6827 = vmatprep.mubr.f32.mxu0 0.0
        %6828 = vmatmul.mubr.f32.gmra.mxu0 %v6666
        %v6829 = vpop.f32.mrf.mxu0
        %v6830 = vadd.f32 %v6658, %v6829
        %v6831 = vpop.f32.mrf.mxu0
        %v6832 = vadd.f32 %v6660, %v6831
        %6833 = vdwg.mxu0
        %s6834 = scalar_lea.vmem %s3, 32
        %v6835 = vld [vmem:[%s6834] sm:$0xff]
        %v6836 = vld [vmem:[%s6834 + $0x8] sm:$0xff]
        %v6838 = vsel %vm6488, %v6835, 0
        %v6841 = vsel %vm6488, %v6836, 0
        %v6844 = vsel %vm6495, %v6455, 0
        %v6847 = vsel %vm6495, %v6456, 0
        %v6850 = vsel %vm6495, %v6457, 0
        %v6853 = vsel %vm6495, %v6458, 0
        %6855 = vmatprep.subr.mxu0 0.0
        %6856 = vmatpush1.msra.mxu0 0.0
        %6857 = vmatprep.subr.mxu0 0.0
        %6858 = vmatpush1.msra.mxu0 0.0
        %6859 = vmatprep.subr.mxu0 0.0
        %6860 = vmatpush1.msra.mxu0 0.0
        %6861 = vmatprep.subr.mxu0 0.0
        %6862 = vmatpush1.msra.mxu0 0.0
        %6863 = vmatprep.subr.mxu0 0.0
        %6864 = vmatpush1.msra.mxu0 0.0
        %6865 = vmatprep.subr.mxu0 0.0
        %6866 = vmatpush1.msra.mxu0 0.0
        %6867 = vmatprep.subr.mxu0 0.0
        %6868 = vmatpush1.msra.mxu0 0.0
        %6869 = vmatprep.subr.mxu0 0.0
        %6870 = vmatpush1.msra.mxu0 0.0
        %6871 = vmatprep.subr.mxu0 0.0
        %6872 = vmatpush1.msra.mxu0 0.0
        %6873 = vmatprep.subr.mxu0 0.0
        %6874 = vmatpush1.msra.mxu0 0.0
        %6875 = vmatprep.subr.mxu0 0.0
        %6876 = vmatpush1.msra.mxu0 0.0
        %6877 = vmatprep.subr.mxu0 0.0
        %6878 = vmatpush1.msra.mxu0 0.0
        %6879 = vmatprep.subr.mxu0 0.0
        %6880 = vmatpush1.msra.mxu0 0.0
        %6881 = vmatprep.subr.mxu0 0.0
        %6882 = vmatpush1.msra.mxu0 0.0
        %6883 = vmatprep.subr.mxu0 0.0
        %6884 = vmatpush1.msra.mxu0 0.0
        %6885 = vmatprep.subr.mxu0 %v6847
        %6886 = vmatpush1.msra.mxu0 %v6844
        %6887 = vmatprep.subr.mxu0 0.0
        %6888 = vmatpush2.msra.mxu0 0.0
        %6889 = vmatprep.subr.mxu0 0.0
        %6890 = vmatpush2.msra.mxu0 0.0
        %6891 = vmatprep.subr.mxu0 0.0
        %6892 = vmatpush2.msra.mxu0 0.0
        %6893 = vmatprep.subr.mxu0 0.0
        %6894 = vmatpush2.msra.mxu0 0.0
        %6895 = vmatprep.subr.mxu0 0.0
        %6896 = vmatpush2.msra.mxu0 0.0
        %6897 = vmatprep.subr.mxu0 0.0
        %6898 = vmatpush2.msra.mxu0 0.0
        %6899 = vmatprep.subr.mxu0 0.0
        %6900 = vmatpush2.msra.mxu0 0.0
        %6901 = vmatprep.subr.mxu0 0.0
        %6902 = vmatpush2.msra.mxu0 0.0
        %6903 = vmatprep.subr.mxu0 0.0
        %6904 = vmatpush2.msra.mxu0 0.0
        %6905 = vmatprep.subr.mxu0 0.0
        %6906 = vmatpush2.msra.mxu0 0.0
        %6907 = vmatprep.subr.mxu0 0.0
        %6908 = vmatpush2.msra.mxu0 0.0
        %6909 = vmatprep.subr.mxu0 0.0
        %6910 = vmatpush2.msra.mxu0 0.0
        %6911 = vmatprep.subr.mxu0 0.0
        %6912 = vmatpush2.msra.mxu0 0.0
        %6913 = vmatprep.subr.mxu0 0.0
        %6914 = vmatpush2.msra.mxu0 0.0
        %6915 = vmatprep.subr.mxu0 0.0
        %6916 = vmatpush2.msra.mxu0 0.0
        %6917 = vmatprep.subr.mxu0 0.0
        %6918 = vmatpush2.msra.mxu0 0.0
        %6919 = vmatprep.mubr.f32.mxu0 0.0
        %6920 = vmatmul.mubr.f32.gmra.mxu0 %v6838
        %v6921 = vpop.f32.mrf.mxu0
        %v6922 = vadd.f32 0.0, %v6921
        %v6923 = vpop.f32.mrf.mxu0
        %v6924 = vadd.f32 0.0, %v6923
        %6925 = vmatprep.mubr.f32.mxu0 0.0
        %6926 = vmatmul.mubr.f32.gmra.mxu0 %v6841
        %v6927 = vpop.f32.mrf.mxu0
        %v6928 = vadd.f32 0.0, %v6927
        %v6929 = vpop.f32.mrf.mxu0
        %v6930 = vadd.f32 0.0, %v6929
        %6931 = vdwg.mxu0
        %6932 = vmatprep.subr.mxu0 0.0
        %6933 = vmatpush1.msra.mxu0 0.0
        %6934 = vmatprep.subr.mxu0 0.0
        %6935 = vmatpush1.msra.mxu0 0.0
        %6936 = vmatprep.subr.mxu0 0.0
        %6937 = vmatpush1.msra.mxu0 0.0
        %6938 = vmatprep.subr.mxu0 0.0
        %6939 = vmatpush1.msra.mxu0 0.0
        %6940 = vmatprep.subr.mxu0 0.0
        %6941 = vmatpush1.msra.mxu0 0.0
        %6942 = vmatprep.subr.mxu0 0.0
        %6943 = vmatpush1.msra.mxu0 0.0
        %6944 = vmatprep.subr.mxu0 0.0
        %6945 = vmatpush1.msra.mxu0 0.0
        %6946 = vmatprep.subr.mxu0 0.0
        %6947 = vmatpush1.msra.mxu0 0.0
        %6948 = vmatprep.subr.mxu0 0.0
        %6949 = vmatpush1.msra.mxu0 0.0
        %6950 = vmatprep.subr.mxu0 0.0
        %6951 = vmatpush1.msra.mxu0 0.0
        %6952 = vmatprep.subr.mxu0 0.0
        %6953 = vmatpush1.msra.mxu0 0.0
        %6954 = vmatprep.subr.mxu0 0.0
        %6955 = vmatpush1.msra.mxu0 0.0
        %6956 = vmatprep.subr.mxu0 0.0
        %6957 = vmatpush1.msra.mxu0 0.0
        %6958 = vmatprep.subr.mxu0 0.0
        %6959 = vmatpush1.msra.mxu0 0.0
        %6960 = vmatprep.subr.mxu0 0.0
        %6961 = vmatpush1.msra.mxu0 0.0
        %6962 = vmatprep.subr.mxu0 %v6853
        %6963 = vmatpush1.msra.mxu0 %v6850
        %6964 = vmatprep.subr.mxu0 0.0
        %6965 = vmatpush2.msra.mxu0 0.0
        %6966 = vmatprep.subr.mxu0 0.0
        %6967 = vmatpush2.msra.mxu0 0.0
        %6968 = vmatprep.subr.mxu0 0.0
        %6969 = vmatpush2.msra.mxu0 0.0
        %6970 = vmatprep.subr.mxu0 0.0
        %6971 = vmatpush2.msra.mxu0 0.0
        %6972 = vmatprep.subr.mxu0 0.0
        %6973 = vmatpush2.msra.mxu0 0.0
        %6974 = vmatprep.subr.mxu0 0.0
        %6975 = vmatpush2.msra.mxu0 0.0
        %6976 = vmatprep.subr.mxu0 0.0
        %6977 = vmatpush2.msra.mxu0 0.0
        %6978 = vmatprep.subr.mxu0 0.0
        %6979 = vmatpush2.msra.mxu0 0.0
        %6980 = vmatprep.subr.mxu0 0.0
        %6981 = vmatpush2.msra.mxu0 0.0
        %6982 = vmatprep.subr.mxu0 0.0
        %6983 = vmatpush2.msra.mxu0 0.0
        %6984 = vmatprep.subr.mxu0 0.0
        %6985 = vmatpush2.msra.mxu0 0.0
        %6986 = vmatprep.subr.mxu0 0.0
        %6987 = vmatpush2.msra.mxu0 0.0
        %6988 = vmatprep.subr.mxu0 0.0
        %6989 = vmatpush2.msra.mxu0 0.0
        %6990 = vmatprep.subr.mxu0 0.0
        %6991 = vmatpush2.msra.mxu0 0.0
        %6992 = vmatprep.subr.mxu0 0.0
        %6993 = vmatpush2.msra.mxu0 0.0
        %6994 = vmatprep.subr.mxu0 0.0
        %6995 = vmatpush2.msra.mxu0 0.0
        %6996 = vmatprep.mubr.f32.mxu0 0.0
        %6997 = vmatmul.mubr.f32.gmra.mxu0 %v6838
        %v6998 = vpop.f32.mrf.mxu0
        %v6999 = vadd.f32 0.0, %v6998
        %v7000 = vpop.f32.mrf.mxu0
        %v7001 = vadd.f32 0.0, %v7000
        %7002 = vmatprep.mubr.f32.mxu0 0.0
        %7003 = vmatmul.mubr.f32.gmra.mxu0 %v6841
        %v7004 = vpop.f32.mrf.mxu0
        %v7005 = vadd.f32 0.0, %v7004
        %v7006 = vpop.f32.mrf.mxu0
        %v7007 = vadd.f32 0.0, %v7006
        %7008 = vdwg.mxu0
        %v7009 = vadd.f32 %v6747, %v6922
        %v7010 = vadd.f32 %v6749, %v6924
        %v7011 = vadd.f32 %v6824, %v6999
        %v7012 = vadd.f32 %v6826, %v7001
        %v7013 = vadd.f32 %v6753, %v6928
        %v7014 = vadd.f32 %v6755, %v6930
        %v7015 = vadd.f32 %v6830, %v7005
        %v7016 = vadd.f32 %v6832, %v7007
        %s7017 = scalar_lea.vmem %s3, 48
        %v7018 = vld [vmem:[%s7017] sm:$0xff]
        %v7019 = vld [vmem:[%s7017 + $0x8] sm:$0xff]
        %v7021 = vsel %vm6488, %v7018, 0
        %v7024 = vsel %vm6488, %v7019, 0
        %v7027 = vsel %vm6495, %v6459, 0
        %v7030 = vsel %vm6495, %v6460, 0
        %v7033 = vsel %vm6495, %v6461, 0
        %v7036 = vsel %vm6495, %v6462, 0
        %7038 = vmatprep.subr.mxu0 0.0
        %7039 = vmatpush1.msra.mxu0 0.0
        %7040 = vmatprep.subr.mxu0 0.0
        %7041 = vmatpush1.msra.mxu0 0.0
        %7042 = vmatprep.subr.mxu0 0.0
        %7043 = vmatpush1.msra.mxu0 0.0
        %7044 = vmatprep.subr.mxu0 0.0
        %7045 = vmatpush1.msra.mxu0 0.0
        %7046 = vmatprep.subr.mxu0 0.0
        %7047 = vmatpush1.msra.mxu0 0.0
        %7048 = vmatprep.subr.mxu0 0.0
        %7049 = vmatpush1.msra.mxu0 0.0
        %7050 = vmatprep.subr.mxu0 0.0
        %7051 = vmatpush1.msra.mxu0 0.0
        %7052 = vmatprep.subr.mxu0 0.0
        %7053 = vmatpush1.msra.mxu0 0.0
        %7054 = vmatprep.subr.mxu0 0.0
        %7055 = vmatpush1.msra.mxu0 0.0
        %7056 = vmatprep.subr.mxu0 0.0
        %7057 = vmatpush1.msra.mxu0 0.0
        %7058 = vmatprep.subr.mxu0 0.0
        %7059 = vmatpush1.msra.mxu0 0.0
        %7060 = vmatprep.subr.mxu0 0.0
        %7061 = vmatpush1.msra.mxu0 0.0
        %7062 = vmatprep.subr.mxu0 0.0
        %7063 = vmatpush1.msra.mxu0 0.0
        %7064 = vmatprep.subr.mxu0 0.0
        %7065 = vmatpush1.msra.mxu0 0.0
        %7066 = vmatprep.subr.mxu0 0.0
        %7067 = vmatpush1.msra.mxu0 0.0
        %7068 = vmatprep.subr.mxu0 %v7030
        %7069 = vmatpush1.msra.mxu0 %v7027
        %7070 = vmatprep.subr.mxu0 0.0
        %7071 = vmatpush2.msra.mxu0 0.0
        %7072 = vmatprep.subr.mxu0 0.0
        %7073 = vmatpush2.msra.mxu0 0.0
        %7074 = vmatprep.subr.mxu0 0.0
        %7075 = vmatpush2.msra.mxu0 0.0
        %7076 = vmatprep.subr.mxu0 0.0
        %7077 = vmatpush2.msra.mxu0 0.0
        %7078 = vmatprep.subr.mxu0 0.0
        %7079 = vmatpush2.msra.mxu0 0.0
        %7080 = vmatprep.subr.mxu0 0.0
        %7081 = vmatpush2.msra.mxu0 0.0
        %7082 = vmatprep.subr.mxu0 0.0
        %7083 = vmatpush2.msra.mxu0 0.0
        %7084 = vmatprep.subr.mxu0 0.0
        %7085 = vmatpush2.msra.mxu0 0.0
        %7086 = vmatprep.subr.mxu0 0.0
        %7087 = vmatpush2.msra.mxu0 0.0
        %7088 = vmatprep.subr.mxu0 0.0
        %7089 = vmatpush2.msra.mxu0 0.0
        %7090 = vmatprep.subr.mxu0 0.0
        %7091 = vmatpush2.msra.mxu0 0.0
        %7092 = vmatprep.subr.mxu0 0.0
        %7093 = vmatpush2.msra.mxu0 0.0
        %7094 = vmatprep.subr.mxu0 0.0
        %7095 = vmatpush2.msra.mxu0 0.0
        %7096 = vmatprep.subr.mxu0 0.0
        %7097 = vmatpush2.msra.mxu0 0.0
        %7098 = vmatprep.subr.mxu0 0.0
        %7099 = vmatpush2.msra.mxu0 0.0
        %7100 = vmatprep.subr.mxu0 0.0
        %7101 = vmatpush2.msra.mxu0 0.0
        %7102 = vmatprep.mubr.f32.mxu0 0.0
        %7103 = vmatmul.mubr.f32.gmra.mxu0 %v7021
        %v7104 = vpop.f32.mrf.mxu0
        %v7105 = vadd.f32 0.0, %v7104
        %v7106 = vpop.f32.mrf.mxu0
        %v7107 = vadd.f32 0.0, %v7106
        %7108 = vmatprep.mubr.f32.mxu0 0.0
        %7109 = vmatmul.mubr.f32.gmra.mxu0 %v7024
        %v7110 = vpop.f32.mrf.mxu0
        %v7111 = vadd.f32 0.0, %v7110
        %v7112 = vpop.f32.mrf.mxu0
        %v7113 = vadd.f32 0.0, %v7112
        %7114 = vdwg.mxu0
        %7115 = vmatprep.subr.mxu0 0.0
        %7116 = vmatpush1.msra.mxu0 0.0
        %7117 = vmatprep.subr.mxu0 0.0
        %7118 = vmatpush1.msra.mxu0 0.0
        %7119 = vmatprep.subr.mxu0 0.0
        %7120 = vmatpush1.msra.mxu0 0.0
        %7121 = vmatprep.subr.mxu0 0.0
        %7122 = vmatpush1.msra.mxu0 0.0
        %7123 = vmatprep.subr.mxu0 0.0
        %7124 = vmatpush1.msra.mxu0 0.0
        %7125 = vmatprep.subr.mxu0 0.0
        %7126 = vmatpush1.msra.mxu0 0.0
        %7127 = vmatprep.subr.mxu0 0.0
        %7128 = vmatpush1.msra.mxu0 0.0
        %7129 = vmatprep.subr.mxu0 0.0
        %7130 = vmatpush1.msra.mxu0 0.0
        %7131 = vmatprep.subr.mxu0 0.0
        %7132 = vmatpush1.msra.mxu0 0.0
        %7133 = vmatprep.subr.mxu0 0.0
        %7134 = vmatpush1.msra.mxu0 0.0
        %7135 = vmatprep.subr.mxu0 0.0
        %7136 = vmatpush1.msra.mxu0 0.0
        %7137 = vmatprep.subr.mxu0 0.0
        %7138 = vmatpush1.msra.mxu0 0.0
        %7139 = vmatprep.subr.mxu0 0.0
        %7140 = vmatpush1.msra.mxu0 0.0
        %7141 = vmatprep.subr.mxu0 0.0
        %7142 = vmatpush1.msra.mxu0 0.0
        %7143 = vmatprep.subr.mxu0 0.0
        %7144 = vmatpush1.msra.mxu0 0.0
        %7145 = vmatprep.subr.mxu0 %v7036
        %7146 = vmatpush1.msra.mxu0 %v7033
        %7147 = vmatprep.subr.mxu0 0.0
        %7148 = vmatpush2.msra.mxu0 0.0
        %7149 = vmatprep.subr.mxu0 0.0
        %7150 = vmatpush2.msra.mxu0 0.0
        %7151 = vmatprep.subr.mxu0 0.0
        %7152 = vmatpush2.msra.mxu0 0.0
        %7153 = vmatprep.subr.mxu0 0.0
        %7154 = vmatpush2.msra.mxu0 0.0
        %7155 = vmatprep.subr.mxu0 0.0
        %7156 = vmatpush2.msra.mxu0 0.0
        %7157 = vmatprep.subr.mxu0 0.0
        %7158 = vmatpush2.msra.mxu0 0.0
        %7159 = vmatprep.subr.mxu0 0.0
        %7160 = vmatpush2.msra.mxu0 0.0
        %7161 = vmatprep.subr.mxu0 0.0
        %7162 = vmatpush2.msra.mxu0 0.0
        %7163 = vmatprep.subr.mxu0 0.0
        %7164 = vmatpush2.msra.mxu0 0.0
        %7165 = vmatprep.subr.mxu0 0.0
        %7166 = vmatpush2.msra.mxu0 0.0
        %7167 = vmatprep.subr.mxu0 0.0
        %7168 = vmatpush2.msra.mxu0 0.0
        %7169 = vmatprep.subr.mxu0 0.0
        %7170 = vmatpush2.msra.mxu0 0.0
        %7171 = vmatprep.subr.mxu0 0.0
        %7172 = vmatpush2.msra.mxu0 0.0
        %7173 = vmatprep.subr.mxu0 0.0
        %7174 = vmatpush2.msra.mxu0 0.0
        %7175 = vmatprep.subr.mxu0 0.0
        %7176 = vmatpush2.msra.mxu0 0.0
        %7177 = vmatprep.subr.mxu0 0.0
        %7178 = vmatpush2.msra.mxu0 0.0
        %7179 = vmatprep.mubr.f32.mxu0 0.0
        %7180 = vmatmul.mubr.f32.gmra.mxu0 %v7021
        %v7181 = vpop.f32.mrf.mxu0
        %v7182 = vadd.f32 0.0, %v7181
        %v7183 = vpop.f32.mrf.mxu0
        %v7184 = vadd.f32 0.0, %v7183
        %7185 = vmatprep.mubr.f32.mxu0 0.0
        %7186 = vmatmul.mubr.f32.gmra.mxu0 %v7024
        %v7187 = vpop.f32.mrf.mxu0
        %v7188 = vadd.f32 0.0, %v7187
        %v7189 = vpop.f32.mrf.mxu0
        %v7190 = vadd.f32 0.0, %v7189
        %7191 = vdwg.mxu0
        %v7192 = vadd.f32 %v7009, %v7105
        %v7193 = vadd.f32 %v7010, %v7107
        %v7194 = vadd.f32 %v7011, %v7182
        %v7195 = vadd.f32 %v7012, %v7184
        %v7196 = vadd.f32 %v7013, %v7111
        %v7197 = vadd.f32 %v7014, %v7113
        %v7198 = vadd.f32 %v7015, %v7188
        %v7199 = vadd.f32 %v7016, %v7190
        %s7200 = scalar_lea.vmem %s3, 64
        %v7201 = vld [vmem:[%s7200] sm:$0xff]
        %v7202 = vld [vmem:[%s7200 + $0x8] sm:$0xff]
        %v7204 = vsel %vm6488, %v7201, 0
        %v7207 = vsel %vm6488, %v7202, 0
        %v7210 = vsel %vm6495, %v6463, 0
        %v7213 = vsel %vm6495, %v6464, 0
        %v7216 = vsel %vm6495, %v6465, 0
        %v7219 = vsel %vm6495, %v6466, 0
        %7221 = vmatprep.subr.mxu0 0.0
        %7222 = vmatpush1.msra.mxu0 0.0
        %7223 = vmatprep.subr.mxu0 0.0
        %7224 = vmatpush1.msra.mxu0 0.0
        %7225 = vmatprep.subr.mxu0 0.0
        %7226 = vmatpush1.msra.mxu0 0.0
        %7227 = vmatprep.subr.mxu0 0.0
        %7228 = vmatpush1.msra.mxu0 0.0
        %7229 = vmatprep.subr.mxu0 0.0
        %7230 = vmatpush1.msra.mxu0 0.0
        %7231 = vmatprep.subr.mxu0 0.0
        %7232 = vmatpush1.msra.mxu0 0.0
        %7233 = vmatprep.subr.mxu0 0.0
        %7234 = vmatpush1.msra.mxu0 0.0
        %7235 = vmatprep.subr.mxu0 0.0
        %7236 = vmatpush1.msra.mxu0 0.0
        %7237 = vmatprep.subr.mxu0 0.0
        %7238 = vmatpush1.msra.mxu0 0.0
        %7239 = vmatprep.subr.mxu0 0.0
        %7240 = vmatpush1.msra.mxu0 0.0
        %7241 = vmatprep.subr.mxu0 0.0
        %7242 = vmatpush1.msra.mxu0 0.0
        %7243 = vmatprep.subr.mxu0 0.0
        %7244 = vmatpush1.msra.mxu0 0.0
        %7245 = vmatprep.subr.mxu0 0.0
        %7246 = vmatpush1.msra.mxu0 0.0
        %7247 = vmatprep.subr.mxu0 0.0
        %7248 = vmatpush1.msra.mxu0 0.0
        %7249 = vmatprep.subr.mxu0 0.0
        %7250 = vmatpush1.msra.mxu0 0.0
        %7251 = vmatprep.subr.mxu0 %v7213
        %7252 = vmatpush1.msra.mxu0 %v7210
        %7253 = vmatprep.subr.mxu0 0.0
        %7254 = vmatpush2.msra.mxu0 0.0
        %7255 = vmatprep.subr.mxu0 0.0
        %7256 = vmatpush2.msra.mxu0 0.0
        %7257 = vmatprep.subr.mxu0 0.0
        %7258 = vmatpush2.msra.mxu0 0.0
        %7259 = vmatprep.subr.mxu0 0.0
        %7260 = vmatpush2.msra.mxu0 0.0
        %7261 = vmatprep.subr.mxu0 0.0
        %7262 = vmatpush2.msra.mxu0 0.0
        %7263 = vmatprep.subr.mxu0 0.0
        %7264 = vmatpush2.msra.mxu0 0.0
        %7265 = vmatprep.subr.mxu0 0.0
        %7266 = vmatpush2.msra.mxu0 0.0
        %7267 = vmatprep.subr.mxu0 0.0
        %7268 = vmatpush2.msra.mxu0 0.0
        %7269 = vmatprep.subr.mxu0 0.0
        %7270 = vmatpush2.msra.mxu0 0.0
        %7271 = vmatprep.subr.mxu0 0.0
        %7272 = vmatpush2.msra.mxu0 0.0
        %7273 = vmatprep.subr.mxu0 0.0
        %7274 = vmatpush2.msra.mxu0 0.0
        %7275 = vmatprep.subr.mxu0 0.0
        %7276 = vmatpush2.msra.mxu0 0.0
        %7277 = vmatprep.subr.mxu0 0.0
        %7278 = vmatpush2.msra.mxu0 0.0
        %7279 = vmatprep.subr.mxu0 0.0
        %7280 = vmatpush2.msra.mxu0 0.0
        %7281 = vmatprep.subr.mxu0 0.0
        %7282 = vmatpush2.msra.mxu0 0.0
        %7283 = vmatprep.subr.mxu0 0.0
        %7284 = vmatpush2.msra.mxu0 0.0
        %7285 = vmatprep.mubr.f32.mxu0 0.0
        %7286 = vmatmul.mubr.f32.gmra.mxu0 %v7204
        %v7287 = vpop.f32.mrf.mxu0
        %v7288 = vadd.f32 0.0, %v7287
        %v7289 = vpop.f32.mrf.mxu0
        %v7290 = vadd.f32 0.0, %v7289
        %7291 = vmatprep.mubr.f32.mxu0 0.0
        %7292 = vmatmul.mubr.f32.gmra.mxu0 %v7207
        %v7293 = vpop.f32.mrf.mxu0
        %v7294 = vadd.f32 0.0, %v7293
        %v7295 = vpop.f32.mrf.mxu0
        %v7296 = vadd.f32 0.0, %v7295
        %7297 = vdwg.mxu0
        %7298 = vmatprep.subr.mxu0 0.0
        %7299 = vmatpush1.msra.mxu0 0.0
        %7300 = vmatprep.subr.mxu0 0.0
        %7301 = vmatpush1.msra.mxu0 0.0
        %7302 = vmatprep.subr.mxu0 0.0
        %7303 = vmatpush1.msra.mxu0 0.0
        %7304 = vmatprep.subr.mxu0 0.0
        %7305 = vmatpush1.msra.mxu0 0.0
        %7306 = vmatprep.subr.mxu0 0.0
        %7307 = vmatpush1.msra.mxu0 0.0
        %7308 = vmatprep.subr.mxu0 0.0
        %7309 = vmatpush1.msra.mxu0 0.0
        %7310 = vmatprep.subr.mxu0 0.0
        %7311 = vmatpush1.msra.mxu0 0.0
        %7312 = vmatprep.subr.mxu0 0.0
        %7313 = vmatpush1.msra.mxu0 0.0
        %7314 = vmatprep.subr.mxu0 0.0
        %7315 = vmatpush1.msra.mxu0 0.0
        %7316 = vmatprep.subr.mxu0 0.0
        %7317 = vmatpush1.msra.mxu0 0.0
        %7318 = vmatprep.subr.mxu0 0.0
        %7319 = vmatpush1.msra.mxu0 0.0
        %7320 = vmatprep.subr.mxu0 0.0
        %7321 = vmatpush1.msra.mxu0 0.0
        %7322 = vmatprep.subr.mxu0 0.0
        %7323 = vmatpush1.msra.mxu0 0.0
        %7324 = vmatprep.subr.mxu0 0.0
        %7325 = vmatpush1.msra.mxu0 0.0
        %7326 = vmatprep.subr.mxu0 0.0
        %7327 = vmatpush1.msra.mxu0 0.0
        %7328 = vmatprep.subr.mxu0 %v7219
        %7329 = vmatpush1.msra.mxu0 %v7216
        %7330 = vmatprep.subr.mxu0 0.0
        %7331 = vmatpush2.msra.mxu0 0.0
        %7332 = vmatprep.subr.mxu0 0.0
        %7333 = vmatpush2.msra.mxu0 0.0
        %7334 = vmatprep.subr.mxu0 0.0
        %7335 = vmatpush2.msra.mxu0 0.0
        %7336 = vmatprep.subr.mxu0 0.0
        %7337 = vmatpush2.msra.mxu0 0.0
        %7338 = vmatprep.subr.mxu0 0.0
        %7339 = vmatpush2.msra.mxu0 0.0
        %7340 = vmatprep.subr.mxu0 0.0
        %7341 = vmatpush2.msra.mxu0 0.0
        %7342 = vmatprep.subr.mxu0 0.0
        %7343 = vmatpush2.msra.mxu0 0.0
        %7344 = vmatprep.subr.mxu0 0.0
        %7345 = vmatpush2.msra.mxu0 0.0
        %7346 = vmatprep.subr.mxu0 0.0
        %7347 = vmatpush2.msra.mxu0 0.0
        %7348 = vmatprep.subr.mxu0 0.0
        %7349 = vmatpush2.msra.mxu0 0.0
        %7350 = vmatprep.subr.mxu0 0.0
        %7351 = vmatpush2.msra.mxu0 0.0
        %7352 = vmatprep.subr.mxu0 0.0
        %7353 = vmatpush2.msra.mxu0 0.0
        %7354 = vmatprep.subr.mxu0 0.0
        %7355 = vmatpush2.msra.mxu0 0.0
        %7356 = vmatprep.subr.mxu0 0.0
        %7357 = vmatpush2.msra.mxu0 0.0
        %7358 = vmatprep.subr.mxu0 0.0
        %7359 = vmatpush2.msra.mxu0 0.0
        %7360 = vmatprep.subr.mxu0 0.0
        %7361 = vmatpush2.msra.mxu0 0.0
        %7362 = vmatprep.mubr.f32.mxu0 0.0
        %7363 = vmatmul.mubr.f32.gmra.mxu0 %v7204
        %v7364 = vpop.f32.mrf.mxu0
        %v7365 = vadd.f32 0.0, %v7364
        %v7366 = vpop.f32.mrf.mxu0
        %v7367 = vadd.f32 0.0, %v7366
        %7368 = vmatprep.mubr.f32.mxu0 0.0
        %7369 = vmatmul.mubr.f32.gmra.mxu0 %v7207
        %v7370 = vpop.f32.mrf.mxu0
        %v7371 = vadd.f32 0.0, %v7370
        %v7372 = vpop.f32.mrf.mxu0
        %v7373 = vadd.f32 0.0, %v7372
        %7374 = vdwg.mxu0
        %v7375 = vadd.f32 %v7192, %v7288
        %v7376 = vadd.f32 %v7193, %v7290
        %v7377 = vadd.f32 %v7194, %v7365
        %v7378 = vadd.f32 %v7195, %v7367
        %v7379 = vadd.f32 %v7196, %v7294
        %v7380 = vadd.f32 %v7197, %v7296
        %v7381 = vadd.f32 %v7198, %v7371
        %v7382 = vadd.f32 %v7199, %v7373
        %s7383 = scalar_lea.vmem %s3, 80
        %v7384 = vld [vmem:[%s7383] sm:$0xff]
        %v7385 = vld [vmem:[%s7383 + $0x8] sm:$0xff]
        %v7387 = vsel %vm6488, %v7384, 0
        %v7390 = vsel %vm6488, %v7385, 0
        %v7393 = vsel %vm6495, %v6467, 0
        %v7396 = vsel %vm6495, %v6468, 0
        %v7399 = vsel %vm6495, %v6469, 0
        %v7402 = vsel %vm6495, %v6470, 0
        %7404 = vmatprep.subr.mxu0 0.0
        %7405 = vmatpush1.msra.mxu0 0.0
        %7406 = vmatprep.subr.mxu0 0.0
        %7407 = vmatpush1.msra.mxu0 0.0
        %7408 = vmatprep.subr.mxu0 0.0
        %7409 = vmatpush1.msra.mxu0 0.0
        %7410 = vmatprep.subr.mxu0 0.0
        %7411 = vmatpush1.msra.mxu0 0.0
        %7412 = vmatprep.subr.mxu0 0.0
        %7413 = vmatpush1.msra.mxu0 0.0
        %7414 = vmatprep.subr.mxu0 0.0
        %7415 = vmatpush1.msra.mxu0 0.0
        %7416 = vmatprep.subr.mxu0 0.0
        %7417 = vmatpush1.msra.mxu0 0.0
        %7418 = vmatprep.subr.mxu0 0.0
        %7419 = vmatpush1.msra.mxu0 0.0
        %7420 = vmatprep.subr.mxu0 0.0
        %7421 = vmatpush1.msra.mxu0 0.0
        %7422 = vmatprep.subr.mxu0 0.0
        %7423 = vmatpush1.msra.mxu0 0.0
        %7424 = vmatprep.subr.mxu0 0.0
        %7425 = vmatpush1.msra.mxu0 0.0
        %7426 = vmatprep.subr.mxu0 0.0
        %7427 = vmatpush1.msra.mxu0 0.0
        %7428 = vmatprep.subr.mxu0 0.0
        %7429 = vmatpush1.msra.mxu0 0.0
        %7430 = vmatprep.subr.mxu0 0.0
        %7431 = vmatpush1.msra.mxu0 0.0
        %7432 = vmatprep.subr.mxu0 0.0
        %7433 = vmatpush1.msra.mxu0 0.0
        %7434 = vmatprep.subr.mxu0 %v7396
        %7435 = vmatpush1.msra.mxu0 %v7393
        %7436 = vmatprep.subr.mxu0 0.0
        %7437 = vmatpush2.msra.mxu0 0.0
        %7438 = vmatprep.subr.mxu0 0.0
        %7439 = vmatpush2.msra.mxu0 0.0
        %7440 = vmatprep.subr.mxu0 0.0
        %7441 = vmatpush2.msra.mxu0 0.0
        %7442 = vmatprep.subr.mxu0 0.0
        %7443 = vmatpush2.msra.mxu0 0.0
        %7444 = vmatprep.subr.mxu0 0.0
        %7445 = vmatpush2.msra.mxu0 0.0
        %7446 = vmatprep.subr.mxu0 0.0
        %7447 = vmatpush2.msra.mxu0 0.0
        %7448 = vmatprep.subr.mxu0 0.0
        %7449 = vmatpush2.msra.mxu0 0.0
        %7450 = vmatprep.subr.mxu0 0.0
        %7451 = vmatpush2.msra.mxu0 0.0
        %7452 = vmatprep.subr.mxu0 0.0
        %7453 = vmatpush2.msra.mxu0 0.0
        %7454 = vmatprep.subr.mxu0 0.0
        %7455 = vmatpush2.msra.mxu0 0.0
        %7456 = vmatprep.subr.mxu0 0.0
        %7457 = vmatpush2.msra.mxu0 0.0
        %7458 = vmatprep.subr.mxu0 0.0
        %7459 = vmatpush2.msra.mxu0 0.0
        %7460 = vmatprep.subr.mxu0 0.0
        %7461 = vmatpush2.msra.mxu0 0.0
        %7462 = vmatprep.subr.mxu0 0.0
        %7463 = vmatpush2.msra.mxu0 0.0
        %7464 = vmatprep.subr.mxu0 0.0
        %7465 = vmatpush2.msra.mxu0 0.0
        %7466 = vmatprep.subr.mxu0 0.0
        %7467 = vmatpush2.msra.mxu0 0.0
        %7468 = vmatprep.mubr.f32.mxu0 0.0
        %7469 = vmatmul.mubr.f32.gmra.mxu0 %v7387
        %v7470 = vpop.f32.mrf.mxu0
        %v7471 = vadd.f32 0.0, %v7470
        %v7472 = vpop.f32.mrf.mxu0
        %v7473 = vadd.f32 0.0, %v7472
        %7474 = vmatprep.mubr.f32.mxu0 0.0
        %7475 = vmatmul.mubr.f32.gmra.mxu0 %v7390
        %v7476 = vpop.f32.mrf.mxu0
        %v7477 = vadd.f32 0.0, %v7476
        %v7478 = vpop.f32.mrf.mxu0
        %v7479 = vadd.f32 0.0, %v7478
        %7480 = vdwg.mxu0
        %7481 = vmatprep.subr.mxu0 0.0
        %7482 = vmatpush1.msra.mxu0 0.0
        %7483 = vmatprep.subr.mxu0 0.0
        %7484 = vmatpush1.msra.mxu0 0.0
        %7485 = vmatprep.subr.mxu0 0.0
        %7486 = vmatpush1.msra.mxu0 0.0
        %7487 = vmatprep.subr.mxu0 0.0
        %7488 = vmatpush1.msra.mxu0 0.0
        %7489 = vmatprep.subr.mxu0 0.0
        %7490 = vmatpush1.msra.mxu0 0.0
        %7491 = vmatprep.subr.mxu0 0.0
        %7492 = vmatpush1.msra.mxu0 0.0
        %7493 = vmatprep.subr.mxu0 0.0
        %7494 = vmatpush1.msra.mxu0 0.0
        %7495 = vmatprep.subr.mxu0 0.0
        %7496 = vmatpush1.msra.mxu0 0.0
        %7497 = vmatprep.subr.mxu0 0.0
        %7498 = vmatpush1.msra.mxu0 0.0
        %7499 = vmatprep.subr.mxu0 0.0
        %7500 = vmatpush1.msra.mxu0 0.0
        %7501 = vmatprep.subr.mxu0 0.0
        %7502 = vmatpush1.msra.mxu0 0.0
        %7503 = vmatprep.subr.mxu0 0.0
        %7504 = vmatpush1.msra.mxu0 0.0
        %7505 = vmatprep.subr.mxu0 0.0
        %7506 = vmatpush1.msra.mxu0 0.0
        %7507 = vmatprep.subr.mxu0 0.0
        %7508 = vmatpush1.msra.mxu0 0.0
        %7509 = vmatprep.subr.mxu0 0.0
        %7510 = vmatpush1.msra.mxu0 0.0
        %7511 = vmatprep.subr.mxu0 %v7402
        %7512 = vmatpush1.msra.mxu0 %v7399
        %7513 = vmatprep.subr.mxu0 0.0
        %7514 = vmatpush2.msra.mxu0 0.0
        %7515 = vmatprep.subr.mxu0 0.0
        %7516 = vmatpush2.msra.mxu0 0.0
        %7517 = vmatprep.subr.mxu0 0.0
        %7518 = vmatpush2.msra.mxu0 0.0
        %7519 = vmatprep.subr.mxu0 0.0
        %7520 = vmatpush2.msra.mxu0 0.0
        %7521 = vmatprep.subr.mxu0 0.0
        %7522 = vmatpush2.msra.mxu0 0.0
        %7523 = vmatprep.subr.mxu0 0.0
        %7524 = vmatpush2.msra.mxu0 0.0
        %7525 = vmatprep.subr.mxu0 0.0
        %7526 = vmatpush2.msra.mxu0 0.0
        %7527 = vmatprep.subr.mxu0 0.0
        %7528 = vmatpush2.msra.mxu0 0.0
        %7529 = vmatprep.subr.mxu0 0.0
        %7530 = vmatpush2.msra.mxu0 0.0
        %7531 = vmatprep.subr.mxu0 0.0
        %7532 = vmatpush2.msra.mxu0 0.0
        %7533 = vmatprep.subr.mxu0 0.0
        %7534 = vmatpush2.msra.mxu0 0.0
        %7535 = vmatprep.subr.mxu0 0.0
        %7536 = vmatpush2.msra.mxu0 0.0
        %7537 = vmatprep.subr.mxu0 0.0
        %7538 = vmatpush2.msra.mxu0 0.0
        %7539 = vmatprep.subr.mxu0 0.0
        %7540 = vmatpush2.msra.mxu0 0.0
        %7541 = vmatprep.subr.mxu0 0.0
        %7542 = vmatpush2.msra.mxu0 0.0
        %7543 = vmatprep.subr.mxu0 0.0
        %7544 = vmatpush2.msra.mxu0 0.0
        %7545 = vmatprep.mubr.f32.mxu0 0.0
        %7546 = vmatmul.mubr.f32.gmra.mxu0 %v7387
        %v7547 = vpop.f32.mrf.mxu0
        %v7548 = vadd.f32 0.0, %v7547
        %v7549 = vpop.f32.mrf.mxu0
        %v7550 = vadd.f32 0.0, %v7549
        %7551 = vmatprep.mubr.f32.mxu0 0.0
        %7552 = vmatmul.mubr.f32.gmra.mxu0 %v7390
        %v7553 = vpop.f32.mrf.mxu0
        %v7554 = vadd.f32 0.0, %v7553
        %v7555 = vpop.f32.mrf.mxu0
        %v7556 = vadd.f32 0.0, %v7555
        %7557 = vdwg.mxu0
        %v7558 = vadd.f32 %v7375, %v7471
        %v7559 = vadd.f32 %v7376, %v7473
        %v7560 = vadd.f32 %v7377, %v7548
        %v7561 = vadd.f32 %v7378, %v7550
        %v7562 = vadd.f32 %v7379, %v7477
        %v7563 = vadd.f32 %v7380, %v7479
        %v7564 = vadd.f32 %v7381, %v7554
        %v7565 = vadd.f32 %v7382, %v7556
        %s7566 = scalar_lea.vmem %s3, 96
        %v7567 = vld [vmem:[%s7566] sm:$0xff]
        %v7568 = vld [vmem:[%s7566 + $0x8] sm:$0xff]
        %v7570 = vsel %vm6488, %v7567, 0
        %v7573 = vsel %vm6488, %v7568, 0
        %v7576 = vsel %vm6495, %v6471, 0
        %v7579 = vsel %vm6495, %v6472, 0
        %v7582 = vsel %vm6495, %v6473, 0
        %v7585 = vsel %vm6495, %v6474, 0
        %7587 = vmatprep.subr.mxu0 0.0
        %7588 = vmatpush1.msra.mxu0 0.0
        %7589 = vmatprep.subr.mxu0 0.0
        %7590 = vmatpush1.msra.mxu0 0.0
        %7591 = vmatprep.subr.mxu0 0.0
        %7592 = vmatpush1.msra.mxu0 0.0
        %7593 = vmatprep.subr.mxu0 0.0
        %7594 = vmatpush1.msra.mxu0 0.0
        %7595 = vmatprep.subr.mxu0 0.0
        %7596 = vmatpush1.msra.mxu0 0.0
        %7597 = vmatprep.subr.mxu0 0.0
        %7598 = vmatpush1.msra.mxu0 0.0
        %7599 = vmatprep.subr.mxu0 0.0
        %7600 = vmatpush1.msra.mxu0 0.0
        %7601 = vmatprep.subr.mxu0 0.0
        %7602 = vmatpush1.msra.mxu0 0.0
        %7603 = vmatprep.subr.mxu0 0.0
        %7604 = vmatpush1.msra.mxu0 0.0
        %7605 = vmatprep.subr.mxu0 0.0
        %7606 = vmatpush1.msra.mxu0 0.0
        %7607 = vmatprep.subr.mxu0 0.0
        %7608 = vmatpush1.msra.mxu0 0.0
        %7609 = vmatprep.subr.mxu0 0.0
        %7610 = vmatpush1.msra.mxu0 0.0
        %7611 = vmatprep.subr.mxu0 0.0
        %7612 = vmatpush1.msra.mxu0 0.0
        %7613 = vmatprep.subr.mxu0 0.0
        %7614 = vmatpush1.msra.mxu0 0.0
        %7615 = vmatprep.subr.mxu0 0.0
        %7616 = vmatpush1.msra.mxu0 0.0
        %7617 = vmatprep.subr.mxu0 %v7579
        %7618 = vmatpush1.msra.mxu0 %v7576
        %7619 = vmatprep.subr.mxu0 0.0
        %7620 = vmatpush2.msra.mxu0 0.0
        %7621 = vmatprep.subr.mxu0 0.0
        %7622 = vmatpush2.msra.mxu0 0.0
        %7623 = vmatprep.subr.mxu0 0.0
        %7624 = vmatpush2.msra.mxu0 0.0
        %7625 = vmatprep.subr.mxu0 0.0
        %7626 = vmatpush2.msra.mxu0 0.0
        %7627 = vmatprep.subr.mxu0 0.0
        %7628 = vmatpush2.msra.mxu0 0.0
        %7629 = vmatprep.subr.mxu0 0.0
        %7630 = vmatpush2.msra.mxu0 0.0
        %7631 = vmatprep.subr.mxu0 0.0
        %7632 = vmatpush2.msra.mxu0 0.0
        %7633 = vmatprep.subr.mxu0 0.0
        %7634 = vmatpush2.msra.mxu0 0.0
        %7635 = vmatprep.subr.mxu0 0.0
        %7636 = vmatpush2.msra.mxu0 0.0
        %7637 = vmatprep.subr.mxu0 0.0
        %7638 = vmatpush2.msra.mxu0 0.0
        %7639 = vmatprep.subr.mxu0 0.0
        %7640 = vmatpush2.msra.mxu0 0.0
        %7641 = vmatprep.subr.mxu0 0.0
        %7642 = vmatpush2.msra.mxu0 0.0
        %7643 = vmatprep.subr.mxu0 0.0
        %7644 = vmatpush2.msra.mxu0 0.0
        %7645 = vmatprep.subr.mxu0 0.0
        %7646 = vmatpush2.msra.mxu0 0.0
        %7647 = vmatprep.subr.mxu0 0.0
        %7648 = vmatpush2.msra.mxu0 0.0
        %7649 = vmatprep.subr.mxu0 0.0
        %7650 = vmatpush2.msra.mxu0 0.0
        %7651 = vmatprep.mubr.f32.mxu0 0.0
        %7652 = vmatmul.mubr.f32.gmra.mxu0 %v7570
        %v7653 = vpop.f32.mrf.mxu0
        %v7654 = vadd.f32 0.0, %v7653
        %v7655 = vpop.f32.mrf.mxu0
        %v7656 = vadd.f32 0.0, %v7655
        %7657 = vmatprep.mubr.f32.mxu0 0.0
        %7658 = vmatmul.mubr.f32.gmra.mxu0 %v7573
        %v7659 = vpop.f32.mrf.mxu0
        %v7660 = vadd.f32 0.0, %v7659
        %v7661 = vpop.f32.mrf.mxu0
        %v7662 = vadd.f32 0.0, %v7661
        %7663 = vdwg.mxu0
        %7664 = vmatprep.subr.mxu0 0.0
        %7665 = vmatpush1.msra.mxu0 0.0
        %7666 = vmatprep.subr.mxu0 0.0
        %7667 = vmatpush1.msra.mxu0 0.0
        %7668 = vmatprep.subr.mxu0 0.0
        %7669 = vmatpush1.msra.mxu0 0.0
        %7670 = vmatprep.subr.mxu0 0.0
        %7671 = vmatpush1.msra.mxu0 0.0
        %7672 = vmatprep.subr.mxu0 0.0
        %7673 = vmatpush1.msra.mxu0 0.0
        %7674 = vmatprep.subr.mxu0 0.0
        %7675 = vmatpush1.msra.mxu0 0.0
        %7676 = vmatprep.subr.mxu0 0.0
        %7677 = vmatpush1.msra.mxu0 0.0
        %7678 = vmatprep.subr.mxu0 0.0
        %7679 = vmatpush1.msra.mxu0 0.0
        %7680 = vmatprep.subr.mxu0 0.0
        %7681 = vmatpush1.msra.mxu0 0.0
        %7682 = vmatprep.subr.mxu0 0.0
        %7683 = vmatpush1.msra.mxu0 0.0
        %7684 = vmatprep.subr.mxu0 0.0
        %7685 = vmatpush1.msra.mxu0 0.0
        %7686 = vmatprep.subr.mxu0 0.0
        %7687 = vmatpush1.msra.mxu0 0.0
        %7688 = vmatprep.subr.mxu0 0.0
        %7689 = vmatpush1.msra.mxu0 0.0
        %7690 = vmatprep.subr.mxu0 0.0
        %7691 = vmatpush1.msra.mxu0 0.0
        %7692 = vmatprep.subr.mxu0 0.0
        %7693 = vmatpush1.msra.mxu0 0.0
        %7694 = vmatprep.subr.mxu0 %v7585
        %7695 = vmatpush1.msra.mxu0 %v7582
        %7696 = vmatprep.subr.mxu0 0.0
        %7697 = vmatpush2.msra.mxu0 0.0
        %7698 = vmatprep.subr.mxu0 0.0
        %7699 = vmatpush2.msra.mxu0 0.0
        %7700 = vmatprep.subr.mxu0 0.0
        %7701 = vmatpush2.msra.mxu0 0.0
        %7702 = vmatprep.subr.mxu0 0.0
        %7703 = vmatpush2.msra.mxu0 0.0
        %7704 = vmatprep.subr.mxu0 0.0
        %7705 = vmatpush2.msra.mxu0 0.0
        %7706 = vmatprep.subr.mxu0 0.0
        %7707 = vmatpush2.msra.mxu0 0.0
        %7708 = vmatprep.subr.mxu0 0.0
        %7709 = vmatpush2.msra.mxu0 0.0
        %7710 = vmatprep.subr.mxu0 0.0
        %7711 = vmatpush2.msra.mxu0 0.0
        %7712 = vmatprep.subr.mxu0 0.0
        %7713 = vmatpush2.msra.mxu0 0.0
        %7714 = vmatprep.subr.mxu0 0.0
        %7715 = vmatpush2.msra.mxu0 0.0
        %7716 = vmatprep.subr.mxu0 0.0
        %7717 = vmatpush2.msra.mxu0 0.0
        %7718 = vmatprep.subr.mxu0 0.0
        %7719 = vmatpush2.msra.mxu0 0.0
        %7720 = vmatprep.subr.mxu0 0.0
        %7721 = vmatpush2.msra.mxu0 0.0
        %7722 = vmatprep.subr.mxu0 0.0
        %7723 = vmatpush2.msra.mxu0 0.0
        %7724 = vmatprep.subr.mxu0 0.0
        %7725 = vmatpush2.msra.mxu0 0.0
        %7726 = vmatprep.subr.mxu0 0.0
        %7727 = vmatpush2.msra.mxu0 0.0
        %7728 = vmatprep.mubr.f32.mxu0 0.0
        %7729 = vmatmul.mubr.f32.gmra.mxu0 %v7570
        %v7730 = vpop.f32.mrf.mxu0
        %v7731 = vadd.f32 0.0, %v7730
        %v7732 = vpop.f32.mrf.mxu0
        %v7733 = vadd.f32 0.0, %v7732
        %7734 = vmatprep.mubr.f32.mxu0 0.0
        %7735 = vmatmul.mubr.f32.gmra.mxu0 %v7573
        %v7736 = vpop.f32.mrf.mxu0
        %v7737 = vadd.f32 0.0, %v7736
        %v7738 = vpop.f32.mrf.mxu0
        %v7739 = vadd.f32 0.0, %v7738
        %7740 = vdwg.mxu0
        %v7741 = vadd.f32 %v7558, %v7654
        %v7742 = vadd.f32 %v7559, %v7656
        %v7743 = vadd.f32 %v7560, %v7731
        %v7744 = vadd.f32 %v7561, %v7733
        %v7745 = vadd.f32 %v7562, %v7660
        %v7746 = vadd.f32 %v7563, %v7662
        %v7747 = vadd.f32 %v7564, %v7737
        %v7748 = vadd.f32 %v7565, %v7739
        %s7749 = scalar_lea.vmem %s3, 112
        %v7750 = vld [vmem:[%s7749] sm:$0xff]
        %v7751 = vld [vmem:[%s7749 + $0x8] sm:$0xff]
        %v7753 = vsel %vm6488, %v7750, 0
        %v7756 = vsel %vm6488, %v7751, 0
        %v7759 = vsel %vm6495, %v6475, 0
        %v7762 = vsel %vm6495, %v6476, 0
        %v7765 = vsel %vm6495, %v6477, 0
        %v7768 = vsel %vm6495, %v6478, 0
        %7770 = vmatprep.subr.mxu0 0.0
        %7771 = vmatpush1.msra.mxu0 0.0
        %7772 = vmatprep.subr.mxu0 0.0
        %7773 = vmatpush1.msra.mxu0 0.0
        %7774 = vmatprep.subr.mxu0 0.0
        %7775 = vmatpush1.msra.mxu0 0.0
        %7776 = vmatprep.subr.mxu0 0.0
        %7777 = vmatpush1.msra.mxu0 0.0
        %7778 = vmatprep.subr.mxu0 0.0
        %7779 = vmatpush1.msra.mxu0 0.0
        %7780 = vmatprep.subr.mxu0 0.0
        %7781 = vmatpush1.msra.mxu0 0.0
        %7782 = vmatprep.subr.mxu0 0.0
        %7783 = vmatpush1.msra.mxu0 0.0
        %7784 = vmatprep.subr.mxu0 0.0
        %7785 = vmatpush1.msra.mxu0 0.0
        %7786 = vmatprep.subr.mxu0 0.0
        %7787 = vmatpush1.msra.mxu0 0.0
        %7788 = vmatprep.subr.mxu0 0.0
        %7789 = vmatpush1.msra.mxu0 0.0
        %7790 = vmatprep.subr.mxu0 0.0
        %7791 = vmatpush1.msra.mxu0 0.0
        %7792 = vmatprep.subr.mxu0 0.0
        %7793 = vmatpush1.msra.mxu0 0.0
        %7794 = vmatprep.subr.mxu0 0.0
        %7795 = vmatpush1.msra.mxu0 0.0
        %7796 = vmatprep.subr.mxu0 0.0
        %7797 = vmatpush1.msra.mxu0 0.0
        %7798 = vmatprep.subr.mxu0 0.0
        %7799 = vmatpush1.msra.mxu0 0.0
        %7800 = vmatprep.subr.mxu0 %v7762
        %7801 = vmatpush1.msra.mxu0 %v7759
        %7802 = vmatprep.subr.mxu0 0.0
        %7803 = vmatpush2.msra.mxu0 0.0
        %7804 = vmatprep.subr.mxu0 0.0
        %7805 = vmatpush2.msra.mxu0 0.0
        %7806 = vmatprep.subr.mxu0 0.0
        %7807 = vmatpush2.msra.mxu0 0.0
        %7808 = vmatprep.subr.mxu0 0.0
        %7809 = vmatpush2.msra.mxu0 0.0
        %7810 = vmatprep.subr.mxu0 0.0
        %7811 = vmatpush2.msra.mxu0 0.0
        %7812 = vmatprep.subr.mxu0 0.0
        %7813 = vmatpush2.msra.mxu0 0.0
        %7814 = vmatprep.subr.mxu0 0.0
        %7815 = vmatpush2.msra.mxu0 0.0
        %7816 = vmatprep.subr.mxu0 0.0
        %7817 = vmatpush2.msra.mxu0 0.0
        %7818 = vmatprep.subr.mxu0 0.0
        %7819 = vmatpush2.msra.mxu0 0.0
        %7820 = vmatprep.subr.mxu0 0.0
        %7821 = vmatpush2.msra.mxu0 0.0
        %7822 = vmatprep.subr.mxu0 0.0
        %7823 = vmatpush2.msra.mxu0 0.0
        %7824 = vmatprep.subr.mxu0 0.0
        %7825 = vmatpush2.msra.mxu0 0.0
        %7826 = vmatprep.subr.mxu0 0.0
        %7827 = vmatpush2.msra.mxu0 0.0
        %7828 = vmatprep.subr.mxu0 0.0
        %7829 = vmatpush2.msra.mxu0 0.0
        %7830 = vmatprep.subr.mxu0 0.0
        %7831 = vmatpush2.msra.mxu0 0.0
        %7832 = vmatprep.subr.mxu0 0.0
        %7833 = vmatpush2.msra.mxu0 0.0
        %7834 = vmatprep.mubr.f32.mxu0 0.0
        %7835 = vmatmul.mubr.f32.gmra.mxu0 %v7753
        %v7836 = vpop.f32.mrf.mxu0
        %v7837 = vadd.f32 0.0, %v7836
        %v7838 = vpop.f32.mrf.mxu0
        %v7839 = vadd.f32 0.0, %v7838
        %7840 = vmatprep.mubr.f32.mxu0 0.0
        %7841 = vmatmul.mubr.f32.gmra.mxu0 %v7756
        %v7842 = vpop.f32.mrf.mxu0
        %v7843 = vadd.f32 0.0, %v7842
        %v7844 = vpop.f32.mrf.mxu0
        %v7845 = vadd.f32 0.0, %v7844
        %7846 = vdwg.mxu0
        %7847 = vmatprep.subr.mxu0 0.0
        %7848 = vmatpush1.msra.mxu0 0.0
        %7849 = vmatprep.subr.mxu0 0.0
        %7850 = vmatpush1.msra.mxu0 0.0
        %7851 = vmatprep.subr.mxu0 0.0
        %7852 = vmatpush1.msra.mxu0 0.0
        %7853 = vmatprep.subr.mxu0 0.0
        %7854 = vmatpush1.msra.mxu0 0.0
        %7855 = vmatprep.subr.mxu0 0.0
        %7856 = vmatpush1.msra.mxu0 0.0
        %7857 = vmatprep.subr.mxu0 0.0
        %7858 = vmatpush1.msra.mxu0 0.0
        %7859 = vmatprep.subr.mxu0 0.0
        %7860 = vmatpush1.msra.mxu0 0.0
        %7861 = vmatprep.subr.mxu0 0.0
        %7862 = vmatpush1.msra.mxu0 0.0
        %7863 = vmatprep.subr.mxu0 0.0
        %7864 = vmatpush1.msra.mxu0 0.0
        %7865 = vmatprep.subr.mxu0 0.0
        %7866 = vmatpush1.msra.mxu0 0.0
        %7867 = vmatprep.subr.mxu0 0.0
        %7868 = vmatpush1.msra.mxu0 0.0
        %7869 = vmatprep.subr.mxu0 0.0
        %7870 = vmatpush1.msra.mxu0 0.0
        %7871 = vmatprep.subr.mxu0 0.0
        %7872 = vmatpush1.msra.mxu0 0.0
        %7873 = vmatprep.subr.mxu0 0.0
        %7874 = vmatpush1.msra.mxu0 0.0
        %7875 = vmatprep.subr.mxu0 0.0
        %7876 = vmatpush1.msra.mxu0 0.0
        %7877 = vmatprep.subr.mxu0 %v7768
        %7878 = vmatpush1.msra.mxu0 %v7765
        %7879 = vmatprep.subr.mxu0 0.0
        %7880 = vmatpush2.msra.mxu0 0.0
        %7881 = vmatprep.subr.mxu0 0.0
        %7882 = vmatpush2.msra.mxu0 0.0
        %7883 = vmatprep.subr.mxu0 0.0
        %7884 = vmatpush2.msra.mxu0 0.0
        %7885 = vmatprep.subr.mxu0 0.0
        %7886 = vmatpush2.msra.mxu0 0.0
        %7887 = vmatprep.subr.mxu0 0.0
        %7888 = vmatpush2.msra.mxu0 0.0
        %7889 = vmatprep.subr.mxu0 0.0
        %7890 = vmatpush2.msra.mxu0 0.0
        %7891 = vmatprep.subr.mxu0 0.0
        %7892 = vmatpush2.msra.mxu0 0.0
        %7893 = vmatprep.subr.mxu0 0.0
        %7894 = vmatpush2.msra.mxu0 0.0
        %7895 = vmatprep.subr.mxu0 0.0
        %7896 = vmatpush2.msra.mxu0 0.0
        %7897 = vmatprep.subr.mxu0 0.0
        %7898 = vmatpush2.msra.mxu0 0.0
        %7899 = vmatprep.subr.mxu0 0.0
        %7900 = vmatpush2.msra.mxu0 0.0
        %7901 = vmatprep.subr.mxu0 0.0
        %7902 = vmatpush2.msra.mxu0 0.0
        %7903 = vmatprep.subr.mxu0 0.0
        %7904 = vmatpush2.msra.mxu0 0.0
        %7905 = vmatprep.subr.mxu0 0.0
        %7906 = vmatpush2.msra.mxu0 0.0
        %7907 = vmatprep.subr.mxu0 0.0
        %7908 = vmatpush2.msra.mxu0 0.0
        %7909 = vmatprep.subr.mxu0 0.0
        %7910 = vmatpush2.msra.mxu0 0.0
        %7911 = vmatprep.mubr.f32.mxu0 0.0
        %7912 = vmatmul.mubr.f32.gmra.mxu0 %v7753
        %v7913 = vpop.f32.mrf.mxu0
        %v7914 = vadd.f32 0.0, %v7913
        %v7915 = vpop.f32.mrf.mxu0
        %v7916 = vadd.f32 0.0, %v7915
        %7917 = vmatprep.mubr.f32.mxu0 0.0
        %7918 = vmatmul.mubr.f32.gmra.mxu0 %v7756
        %v7919 = vpop.f32.mrf.mxu0
        %v7920 = vadd.f32 0.0, %v7919
        %v7921 = vpop.f32.mrf.mxu0
        %v7922 = vadd.f32 0.0, %v7921
        %7923 = vdwg.mxu0
        %v7924 = vadd.f32 %v7741, %v7837
        %v7925 = vadd.f32 %v7742, %v7839
        %v7926 = vadd.f32 %v7743, %v7914
        %v7927 = vadd.f32 %v7744, %v7916
        %v7928 = vadd.f32 %v7745, %v7843
        %v7929 = vadd.f32 %v7746, %v7845
        %v7930 = vadd.f32 %v7747, %v7920
        %v7931 = vadd.f32 %v7748, %v7922
        %s7932 = scalar_lea.vmem %s3, 128
        %v7933 = vld [vmem:[%s7932] sm:$0xff]
        %v7934 = vld [vmem:[%s7932 + $0x8] sm:$0xff]
        %v7936 = vsel %vm6488, %v7933, 0
        %v7939 = vsel %vm6488, %v7934, 0
        %v7942 = vsel %vm6495, %v6479, 0
        %v7945 = vsel %vm6495, %v6480, 0
        %v7948 = vsel %vm6495, %v6481, 0
        %v7951 = vsel %vm6495, %v6482, 0
        %7953 = vmatprep.subr.mxu0 0.0
        %7954 = vmatpush1.msra.mxu0 0.0
        %7955 = vmatprep.subr.mxu0 0.0
        %7956 = vmatpush1.msra.mxu0 0.0
        %7957 = vmatprep.subr.mxu0 0.0
        %7958 = vmatpush1.msra.mxu0 0.0
        %7959 = vmatprep.subr.mxu0 0.0
        %7960 = vmatpush1.msra.mxu0 0.0
        %7961 = vmatprep.subr.mxu0 0.0
        %7962 = vmatpush1.msra.mxu0 0.0
        %7963 = vmatprep.subr.mxu0 0.0
        %7964 = vmatpush1.msra.mxu0 0.0
        %7965 = vmatprep.subr.mxu0 0.0
        %7966 = vmatpush1.msra.mxu0 0.0
        %7967 = vmatprep.subr.mxu0 0.0
        %7968 = vmatpush1.msra.mxu0 0.0
        %7969 = vmatprep.subr.mxu0 0.0
        %7970 = vmatpush1.msra.mxu0 0.0
        %7971 = vmatprep.subr.mxu0 0.0
        %7972 = vmatpush1.msra.mxu0 0.0
        %7973 = vmatprep.subr.mxu0 0.0
        %7974 = vmatpush1.msra.mxu0 0.0
        %7975 = vmatprep.subr.mxu0 0.0
        %7976 = vmatpush1.msra.mxu0 0.0
        %7977 = vmatprep.subr.mxu0 0.0
        %7978 = vmatpush1.msra.mxu0 0.0
        %7979 = vmatprep.subr.mxu0 0.0
        %7980 = vmatpush1.msra.mxu0 0.0
        %7981 = vmatprep.subr.mxu0 0.0
        %7982 = vmatpush1.msra.mxu0 0.0
        %7983 = vmatprep.subr.mxu0 %v7945
        %7984 = vmatpush1.msra.mxu0 %v7942
        %7985 = vmatprep.subr.mxu0 0.0
        %7986 = vmatpush2.msra.mxu0 0.0
        %7987 = vmatprep.subr.mxu0 0.0
        %7988 = vmatpush2.msra.mxu0 0.0
        %7989 = vmatprep.subr.mxu0 0.0
        %7990 = vmatpush2.msra.mxu0 0.0
        %7991 = vmatprep.subr.mxu0 0.0
        %7992 = vmatpush2.msra.mxu0 0.0
        %7993 = vmatprep.subr.mxu0 0.0
        %7994 = vmatpush2.msra.mxu0 0.0
        %7995 = vmatprep.subr.mxu0 0.0
        %7996 = vmatpush2.msra.mxu0 0.0
        %7997 = vmatprep.subr.mxu0 0.0
        %7998 = vmatpush2.msra.mxu0 0.0
        %7999 = vmatprep.subr.mxu0 0.0
        %8000 = vmatpush2.msra.mxu0 0.0
        %8001 = vmatprep.subr.mxu0 0.0
        %8002 = vmatpush2.msra.mxu0 0.0
        %8003 = vmatprep.subr.mxu0 0.0
        %8004 = vmatpush2.msra.mxu0 0.0
        %8005 = vmatprep.subr.mxu0 0.0
        %8006 = vmatpush2.msra.mxu0 0.0
        %8007 = vmatprep.subr.mxu0 0.0
        %8008 = vmatpush2.msra.mxu0 0.0
        %8009 = vmatprep.subr.mxu0 0.0
        %8010 = vmatpush2.msra.mxu0 0.0
        %8011 = vmatprep.subr.mxu0 0.0
        %8012 = vmatpush2.msra.mxu0 0.0
        %8013 = vmatprep.subr.mxu0 0.0
        %8014 = vmatpush2.msra.mxu0 0.0
        %8015 = vmatprep.subr.mxu0 0.0
        %8016 = vmatpush2.msra.mxu0 0.0
        %8017 = vmatprep.mubr.f32.mxu0 0.0
        %8018 = vmatmul.mubr.f32.gmra.mxu0 %v7936
        %v8019 = vpop.f32.mrf.mxu0
        %v8020 = vadd.f32 0.0, %v8019
        %v8021 = vpop.f32.mrf.mxu0
        %v8022 = vadd.f32 0.0, %v8021
        %8023 = vmatprep.mubr.f32.mxu0 0.0
        %8024 = vmatmul.mubr.f32.gmra.mxu0 %v7939
        %v8025 = vpop.f32.mrf.mxu0
        %v8026 = vadd.f32 0.0, %v8025
        %v8027 = vpop.f32.mrf.mxu0
        %v8028 = vadd.f32 0.0, %v8027
        %8029 = vdwg.mxu0
        %8030 = vmatprep.subr.mxu0 0.0
        %8031 = vmatpush1.msra.mxu0 0.0
        %8032 = vmatprep.subr.mxu0 0.0
        %8033 = vmatpush1.msra.mxu0 0.0
        %8034 = vmatprep.subr.mxu0 0.0
        %8035 = vmatpush1.msra.mxu0 0.0
        %8036 = vmatprep.subr.mxu0 0.0
        %8037 = vmatpush1.msra.mxu0 0.0
        %8038 = vmatprep.subr.mxu0 0.0
        %8039 = vmatpush1.msra.mxu0 0.0
        %8040 = vmatprep.subr.mxu0 0.0
        %8041 = vmatpush1.msra.mxu0 0.0
        %8042 = vmatprep.subr.mxu0 0.0
        %8043 = vmatpush1.msra.mxu0 0.0
        %8044 = vmatprep.subr.mxu0 0.0
        %8045 = vmatpush1.msra.mxu0 0.0
        %8046 = vmatprep.subr.mxu0 0.0
        %8047 = vmatpush1.msra.mxu0 0.0
        %8048 = vmatprep.subr.mxu0 0.0
        %8049 = vmatpush1.msra.mxu0 0.0
        %8050 = vmatprep.subr.mxu0 0.0
        %8051 = vmatpush1.msra.mxu0 0.0
        %8052 = vmatprep.subr.mxu0 0.0
        %8053 = vmatpush1.msra.mxu0 0.0
        %8054 = vmatprep.subr.mxu0 0.0
        %8055 = vmatpush1.msra.mxu0 0.0
        %8056 = vmatprep.subr.mxu0 0.0
        %8057 = vmatpush1.msra.mxu0 0.0
        %8058 = vmatprep.subr.mxu0 0.0
        %8059 = vmatpush1.msra.mxu0 0.0
        %8060 = vmatprep.subr.mxu0 %v7951
        %8061 = vmatpush1.msra.mxu0 %v7948
        %8062 = vmatprep.subr.mxu0 0.0
        %8063 = vmatpush2.msra.mxu0 0.0
        %8064 = vmatprep.subr.mxu0 0.0
        %8065 = vmatpush2.msra.mxu0 0.0
        %8066 = vmatprep.subr.mxu0 0.0
        %8067 = vmatpush2.msra.mxu0 0.0
        %8068 = vmatprep.subr.mxu0 0.0
        %8069 = vmatpush2.msra.mxu0 0.0
        %8070 = vmatprep.subr.mxu0 0.0
        %8071 = vmatpush2.msra.mxu0 0.0
        %8072 = vmatprep.subr.mxu0 0.0
        %8073 = vmatpush2.msra.mxu0 0.0
        %8074 = vmatprep.subr.mxu0 0.0
        %8075 = vmatpush2.msra.mxu0 0.0
        %8076 = vmatprep.subr.mxu0 0.0
        %8077 = vmatpush2.msra.mxu0 0.0
        %8078 = vmatprep.subr.mxu0 0.0
        %8079 = vmatpush2.msra.mxu0 0.0
        %8080 = vmatprep.subr.mxu0 0.0
        %8081 = vmatpush2.msra.mxu0 0.0
        %8082 = vmatprep.subr.mxu0 0.0
        %8083 = vmatpush2.msra.mxu0 0.0
        %8084 = vmatprep.subr.mxu0 0.0
        %8085 = vmatpush2.msra.mxu0 0.0
        %8086 = vmatprep.subr.mxu0 0.0
        %8087 = vmatpush2.msra.mxu0 0.0
        %8088 = vmatprep.subr.mxu0 0.0
        %8089 = vmatpush2.msra.mxu0 0.0
        %8090 = vmatprep.subr.mxu0 0.0
        %8091 = vmatpush2.msra.mxu0 0.0
        %8092 = vmatprep.subr.mxu0 0.0
        %8093 = vmatpush2.msra.mxu0 0.0
        %8094 = vmatprep.mubr.f32.mxu0 0.0
        %8095 = vmatmul.mubr.f32.gmra.mxu0 %v7936
        %v8096 = vpop.f32.mrf.mxu0
        %v8097 = vadd.f32 0.0, %v8096
        %v8098 = vpop.f32.mrf.mxu0
        %v8099 = vadd.f32 0.0, %v8098
        %8100 = vmatprep.mubr.f32.mxu0 0.0
        %8101 = vmatmul.mubr.f32.gmra.mxu0 %v7939
        %v8102 = vpop.f32.mrf.mxu0
        %v8103 = vadd.f32 0.0, %v8102
        %v8104 = vpop.f32.mrf.mxu0
        %v8105 = vadd.f32 0.0, %v8104
        %8106 = vdwg.mxu0
        %v8107 = vadd.f32 %v7924, %v8020
        %v8108 = vadd.f32 %v7925, %v8022
        %v8109 = vadd.f32 %v7926, %v8097
        %v8110 = vadd.f32 %v7927, %v8099
        %v8111 = vadd.f32 %v7928, %v8026
        %v8112 = vadd.f32 %v7929, %v8028
        %v8113 = vadd.f32 %v7930, %v8103
        %v8114 = vadd.f32 %v7931, %v8105
        %v8115 = vld [vmem:[%s4] sm:$0xff]
        %v8116 = vld [vmem:[%s4 + $0x8] sm:$0xff]
        %8118 = vset.pattern.permute.xlu0 0
        %8119 = vperm.xlu0 %8118, %v8115
        %v8120 = vpop.permute.xlu0 %8119
        %8123 = vset.pattern.permute.xlu0 0
        %8124 = vperm.xlu0 %8123, %v8116
        %v8125 = vpop.permute.xlu0 %8124
        %v8127 = vadd.f32 %v8107, %v8120
        %v8128 = vadd.f32 %v8108, %v8120
        %v8129 = vadd.f32 %v8109, %v8120
        %v8130 = vadd.f32 %v8110, %v8120
        %v8131 = vadd.f32 %v8111, %v8125
        %v8132 = vadd.f32 %v8112, %v8125
        %v8133 = vadd.f32 %v8113, %v8125
        %v8134 = vadd.f32 %v8114, %v8125
        %v8135 = vmax.f32 %v8127, 0.0
        %v8136 = vmax.f32 %v8128, 0.0
        %v8137 = vmax.f32 %v8129, 0.0
        %v8138 = vmax.f32 %v8130, 0.0
        %v8139 = vmax.f32 %v8131, 0.0
        %v8140 = vmax.f32 %v8132, 0.0
        %v8141 = vmax.f32 %v8133, 0.0
        %v8142 = vmax.f32 %v8134, 0.0
        %v8143 = vmax.f32 %v8135, %v8136
        %v8144 = vmax.f32 %v8139, %v8140
        %v8145 = vmax.f32 %v8137, %v8138
        %v8146 = vmax.f32 %v8141, %v8142
        %v8147 = vmax.f32 %v8143, %v8145
        %v8148 = vmax.f32 %v8144, %v8146
        %v8149 = vld [vmem:[%s5] sm:$0xff]
        %v8150 = vld [vmem:[%s5 + $0x8] sm:$0xff]
        %v8151 = vld [vmem:[%s5 + $0x10] sm:$0xff]
        %v8152 = vld [vmem:[%s5 + $0x18] sm:$0xff]
        %v8153 = vld [vmem:[%s5 + $0x20] sm:$0xff]
        %v8154 = vld [vmem:[%s5 + $0x28] sm:$0xff]
        %v8155 = vld [vmem:[%s5 + $0x30] sm:$0xff]
        %v8156 = vld [vmem:[%s5 + $0x38] sm:$0xff]
        %v8157 = vld [vmem:[%s5 + $0x40] sm:$0xff]
        %v8158 = vld [vmem:[%s5 + $0x48] sm:$0xff]
        %v8159 = vld [vmem:[%s5 + $0x50] sm:$0xff]
        %v8160 = vld [vmem:[%s5 + $0x58] sm:$0xff]
        %v8161 = vld [vmem:[%s5 + $0x60] sm:$0xff]
        %v8162 = vld [vmem:[%s5 + $0x68] sm:$0xff]
        %v8163 = vld [vmem:[%s5 + $0x70] sm:$0xff]
        %v8164 = vld [vmem:[%s5 + $0x78] sm:$0xff]
        %s8165 = scalar_lea.vmem %s5, 128
        %v8166 = vld [vmem:[%s8165] sm:$0xff]
        %v8167 = vld [vmem:[%s8165 + $0x8] sm:$0xff]
        %v8168 = vld [vmem:[%s8165 + $0x10] sm:$0xff]
        %v8169 = vld [vmem:[%s8165 + $0x18] sm:$0xff]
        %v8170 = vld [vmem:[%s8165 + $0x20] sm:$0xff]
        %v8171 = vld [vmem:[%s8165 + $0x28] sm:$0xff]
        %v8172 = vld [vmem:[%s8165 + $0x30] sm:$0xff]
        %v8173 = vld [vmem:[%s8165 + $0x38] sm:$0xff]
        %v8174 = vld [vmem:[%s8165 + $0x40] sm:$0xff]
        %v8175 = vld [vmem:[%s8165 + $0x48] sm:$0xff]
        %v8176 = vld [vmem:[%s8165 + $0x50] sm:$0xff]
        %v8177 = vld [vmem:[%s8165 + $0x58] sm:$0xff]
        %v8178 = vld [vmem:[%s8165 + $0x60] sm:$0xff]
        %v8179 = vld [vmem:[%s8165 + $0x68] sm:$0xff]
        %v8180 = vld [vmem:[%s8165 + $0x70] sm:$0xff]
        %v8181 = vld [vmem:[%s8165 + $0x78] sm:$0xff]
        %v8183 = vrot.slane %v8147, 1
        %8185 = vmatprep.subr.mxu0 0.0
        %8186 = vmatpush1.msra.mxu0 %v8181
        %8187 = vmatprep.subr.mxu0 0.0
        %8188 = vmatpush1.msra.mxu0 %v8180
        %8189 = vmatprep.subr.mxu0 0.0
        %8190 = vmatpush1.msra.mxu0 %v8179
        %8191 = vmatprep.subr.mxu0 0.0
        %8192 = vmatpush1.msra.mxu0 %v8178
        %8193 = vmatprep.subr.mxu0 0.0
        %8194 = vmatpush1.msra.mxu0 %v8177
        %8195 = vmatprep.subr.mxu0 0.0
        %8196 = vmatpush1.msra.mxu0 %v8176
        %8197 = vmatprep.subr.mxu0 0.0
        %8198 = vmatpush1.msra.mxu0 %v8175
        %8199 = vmatprep.subr.mxu0 0.0
        %8200 = vmatpush1.msra.mxu0 %v8174
        %8201 = vmatprep.subr.mxu0 0.0
        %8202 = vmatpush1.msra.mxu0 %v8173
        %8203 = vmatprep.subr.mxu0 0.0
        %8204 = vmatpush1.msra.mxu0 %v8172
        %8205 = vmatprep.subr.mxu0 0.0
        %8206 = vmatpush1.msra.mxu0 %v8171
        %8207 = vmatprep.subr.mxu0 0.0
        %8208 = vmatpush1.msra.mxu0 %v8170
        %8209 = vmatprep.subr.mxu0 0.0
        %8210 = vmatpush1.msra.mxu0 %v8169
        %8211 = vmatprep.subr.mxu0 0.0
        %8212 = vmatpush1.msra.mxu0 %v8168
        %8213 = vmatprep.subr.mxu0 0.0
        %8214 = vmatpush1.msra.mxu0 %v8167
        %8215 = vmatprep.subr.mxu0 0.0
        %8216 = vmatpush1.msra.mxu0 %v8166
        %8217 = vmatprep.subr.mxu0 0.0
        %8218 = vmatpush2.msra.mxu0 0.0
        %8219 = vmatprep.subr.mxu0 0.0
        %8220 = vmatpush2.msra.mxu0 0.0
        %8221 = vmatprep.subr.mxu0 0.0
        %8222 = vmatpush2.msra.mxu0 0.0
        %8223 = vmatprep.subr.mxu0 0.0
        %8224 = vmatpush2.msra.mxu0 0.0
        %8225 = vmatprep.subr.mxu0 0.0
        %8226 = vmatpush2.msra.mxu0 0.0
        %8227 = vmatprep.subr.mxu0 0.0
        %8228 = vmatpush2.msra.mxu0 0.0
        %8229 = vmatprep.subr.mxu0 0.0
        %8230 = vmatpush2.msra.mxu0 0.0
        %8231 = vmatprep.subr.mxu0 0.0
        %8232 = vmatpush2.msra.mxu0 0.0
        %8233 = vmatprep.subr.mxu0 0.0
        %8234 = vmatpush2.msra.mxu0 0.0
        %8235 = vmatprep.subr.mxu0 0.0
        %8236 = vmatpush2.msra.mxu0 0.0
        %8237 = vmatprep.subr.mxu0 0.0
        %8238 = vmatpush2.msra.mxu0 0.0
        %8239 = vmatprep.subr.mxu0 0.0
        %8240 = vmatpush2.msra.mxu0 0.0
        %8241 = vmatprep.subr.mxu0 0.0
        %8242 = vmatpush2.msra.mxu0 0.0
        %8243 = vmatprep.subr.mxu0 0.0
        %8244 = vmatpush2.msra.mxu0 0.0
        %8245 = vmatprep.subr.mxu0 0.0
        %8246 = vmatpush2.msra.mxu0 0.0
        %8247 = vmatprep.subr.mxu0 0.0
        %8248 = vmatpush2.msra.mxu0 0.0
        %8249 = vmatprep.mubr.f32.mxu0 0.0
        %8250 = vmatmul.mubr.f32.gmra.mxu0 %v8183
        %v8251 = vpop.f32.mrf.mxu0
        %v8252 = vadd.f32 0.0, %v8251
        %v8253 = vpop.f32.mrf.mxu0
        %8254 = vdwg.mxu0
        %8255 = vmatprep.subr.mxu0 0.0
        %8256 = vmatpush1.msra.mxu0 %v8164
        %8257 = vmatprep.subr.mxu0 0.0
        %8258 = vmatpush1.msra.mxu0 %v8163
        %8259 = vmatprep.subr.mxu0 0.0
        %8260 = vmatpush1.msra.mxu0 %v8162
        %8261 = vmatprep.subr.mxu0 0.0
        %8262 = vmatpush1.msra.mxu0 %v8161
        %8263 = vmatprep.subr.mxu0 0.0
        %8264 = vmatpush1.msra.mxu0 %v8160
        %8265 = vmatprep.subr.mxu0 0.0
        %8266 = vmatpush1.msra.mxu0 %v8159
        %8267 = vmatprep.subr.mxu0 0.0
        %8268 = vmatpush1.msra.mxu0 %v8158
        %8269 = vmatprep.subr.mxu0 0.0
        %8270 = vmatpush1.msra.mxu0 %v8157
        %8271 = vmatprep.subr.mxu0 0.0
        %8272 = vmatpush1.msra.mxu0 %v8156
        %8273 = vmatprep.subr.mxu0 0.0
        %8274 = vmatpush1.msra.mxu0 %v8155
        %8275 = vmatprep.subr.mxu0 0.0
        %8276 = vmatpush1.msra.mxu0 %v8154
        %8277 = vmatprep.subr.mxu0 0.0
        %8278 = vmatpush1.msra.mxu0 %v8153
        %8279 = vmatprep.subr.mxu0 0.0
        %8280 = vmatpush1.msra.mxu0 %v8152
        %8281 = vmatprep.subr.mxu0 0.0
        %8282 = vmatpush1.msra.mxu0 %v8151
        %8283 = vmatprep.subr.mxu0 0.0
        %8284 = vmatpush1.msra.mxu0 %v8150
        %8285 = vmatprep.subr.mxu0 0.0
        %8286 = vmatpush1.msra.mxu0 %v8149
        %8287 = vmatprep.subr.mxu0 0.0
        %8288 = vmatpush2.msra.mxu0 0.0
        %8289 = vmatprep.subr.mxu0 0.0
        %8290 = vmatpush2.msra.mxu0 0.0
        %8291 = vmatprep.subr.mxu0 0.0
        %8292 = vmatpush2.msra.mxu0 0.0
        %8293 = vmatprep.subr.mxu0 0.0
        %8294 = vmatpush2.msra.mxu0 0.0
        %8295 = vmatprep.subr.mxu0 0.0
        %8296 = vmatpush2.msra.mxu0 0.0
        %8297 = vmatprep.subr.mxu0 0.0
        %8298 = vmatpush2.msra.mxu0 0.0
        %8299 = vmatprep.subr.mxu0 0.0
        %8300 = vmatpush2.msra.mxu0 0.0
        %8301 = vmatprep.subr.mxu0 0.0
        %8302 = vmatpush2.msra.mxu0 0.0
        %8303 = vmatprep.subr.mxu0 0.0
        %8304 = vmatpush2.msra.mxu0 0.0
        %8305 = vmatprep.subr.mxu0 0.0
        %8306 = vmatpush2.msra.mxu0 0.0
        %8307 = vmatprep.subr.mxu0 0.0
        %8308 = vmatpush2.msra.mxu0 0.0
        %8309 = vmatprep.subr.mxu0 0.0
        %8310 = vmatpush2.msra.mxu0 0.0
        %8311 = vmatprep.subr.mxu0 0.0
        %8312 = vmatpush2.msra.mxu0 0.0
        %8313 = vmatprep.subr.mxu0 0.0
        %8314 = vmatpush2.msra.mxu0 0.0
        %8315 = vmatprep.subr.mxu0 0.0
        %8316 = vmatpush2.msra.mxu0 0.0
        %8317 = vmatprep.subr.mxu0 0.0
        %8318 = vmatpush2.msra.mxu0 0.0
        %8319 = vmatprep.mubr.f32.mxu0 0.0
        %8320 = vmatmul.mubr.f32.gmra.mxu0 %v8147
        %v8321 = vpop.f32.mrf.mxu0
        %v8322 = vadd.f32 %v8252, %v8321
        %v8323 = vpop.f32.mrf.mxu0
        %8324 = vdwg.mxu0
        %s8325 = scalar_lea.vmem %s5, 256
        %v8326 = vld [vmem:[%s8325] sm:$0xff]
        %v8327 = vld [vmem:[%s8325 + $0x8] sm:$0xff]
        %v8328 = vld [vmem:[%s8325 + $0x10] sm:$0xff]
        %v8329 = vld [vmem:[%s8325 + $0x18] sm:$0xff]
        %v8330 = vld [vmem:[%s8325 + $0x20] sm:$0xff]
        %v8331 = vld [vmem:[%s8325 + $0x28] sm:$0xff]
        %v8332 = vld [vmem:[%s8325 + $0x30] sm:$0xff]
        %v8333 = vld [vmem:[%s8325 + $0x38] sm:$0xff]
        %v8334 = vld [vmem:[%s8325 + $0x40] sm:$0xff]
        %v8335 = vld [vmem:[%s8325 + $0x48] sm:$0xff]
        %v8336 = vld [vmem:[%s8325 + $0x50] sm:$0xff]
        %v8337 = vld [vmem:[%s8325 + $0x58] sm:$0xff]
        %v8338 = vld [vmem:[%s8325 + $0x60] sm:$0xff]
        %v8339 = vld [vmem:[%s8325 + $0x68] sm:$0xff]
        %v8340 = vld [vmem:[%s8325 + $0x70] sm:$0xff]
        %v8341 = vld [vmem:[%s8325 + $0x78] sm:$0xff]
        %v8342 = vrot.slane %v8147, 2
        %8344 = vmatprep.subr.mxu0 0.0
        %8345 = vmatpush1.msra.mxu0 %v8341
        %8346 = vmatprep.subr.mxu0 0.0
        %8347 = vmatpush1.msra.mxu0 %v8340
        %8348 = vmatprep.subr.mxu0 0.0
        %8349 = vmatpush1.msra.mxu0 %v8339
        %8350 = vmatprep.subr.mxu0 0.0
        %8351 = vmatpush1.msra.mxu0 %v8338
        %8352 = vmatprep.subr.mxu0 0.0
        %8353 = vmatpush1.msra.mxu0 %v8337
        %8354 = vmatprep.subr.mxu0 0.0
        %8355 = vmatpush1.msra.mxu0 %v8336
        %8356 = vmatprep.subr.mxu0 0.0
        %8357 = vmatpush1.msra.mxu0 %v8335
        %8358 = vmatprep.subr.mxu0 0.0
        %8359 = vmatpush1.msra.mxu0 %v8334
        %8360 = vmatprep.subr.mxu0 0.0
        %8361 = vmatpush1.msra.mxu0 %v8333
        %8362 = vmatprep.subr.mxu0 0.0
        %8363 = vmatpush1.msra.mxu0 %v8332
        %8364 = vmatprep.subr.mxu0 0.0
        %8365 = vmatpush1.msra.mxu0 %v8331
        %8366 = vmatprep.subr.mxu0 0.0
        %8367 = vmatpush1.msra.mxu0 %v8330
        %8368 = vmatprep.subr.mxu0 0.0
        %8369 = vmatpush1.msra.mxu0 %v8329
        %8370 = vmatprep.subr.mxu0 0.0
        %8371 = vmatpush1.msra.mxu0 %v8328
        %8372 = vmatprep.subr.mxu0 0.0
        %8373 = vmatpush1.msra.mxu0 %v8327
        %8374 = vmatprep.subr.mxu0 0.0
        %8375 = vmatpush1.msra.mxu0 %v8326
        %8376 = vmatprep.subr.mxu0 0.0
        %8377 = vmatpush2.msra.mxu0 0.0
        %8378 = vmatprep.subr.mxu0 0.0
        %8379 = vmatpush2.msra.mxu0 0.0
        %8380 = vmatprep.subr.mxu0 0.0
        %8381 = vmatpush2.msra.mxu0 0.0
        %8382 = vmatprep.subr.mxu0 0.0
        %8383 = vmatpush2.msra.mxu0 0.0
        %8384 = vmatprep.subr.mxu0 0.0
        %8385 = vmatpush2.msra.mxu0 0.0
        %8386 = vmatprep.subr.mxu0 0.0
        %8387 = vmatpush2.msra.mxu0 0.0
        %8388 = vmatprep.subr.mxu0 0.0
        %8389 = vmatpush2.msra.mxu0 0.0
        %8390 = vmatprep.subr.mxu0 0.0
        %8391 = vmatpush2.msra.mxu0 0.0
        %8392 = vmatprep.subr.mxu0 0.0
        %8393 = vmatpush2.msra.mxu0 0.0
        %8394 = vmatprep.subr.mxu0 0.0
        %8395 = vmatpush2.msra.mxu0 0.0
        %8396 = vmatprep.subr.mxu0 0.0
        %8397 = vmatpush2.msra.mxu0 0.0
        %8398 = vmatprep.subr.mxu0 0.0
        %8399 = vmatpush2.msra.mxu0 0.0
        %8400 = vmatprep.subr.mxu0 0.0
        %8401 = vmatpush2.msra.mxu0 0.0
        %8402 = vmatprep.subr.mxu0 0.0
        %8403 = vmatpush2.msra.mxu0 0.0
        %8404 = vmatprep.subr.mxu0 0.0
        %8405 = vmatpush2.msra.mxu0 0.0
        %8406 = vmatprep.subr.mxu0 0.0
        %8407 = vmatpush2.msra.mxu0 0.0
        %8408 = vmatprep.mubr.f32.mxu0 0.0
        %8409 = vmatmul.mubr.f32.gmra.mxu0 %v8342
        %v8410 = vpop.f32.mrf.mxu0
        %v8411 = vadd.f32 0.0, %v8410
        %v8412 = vpop.f32.mrf.mxu0
        %8413 = vdwg.mxu0
        %v8414 = vadd.f32 %v8322, %v8411
        %s8415 = scalar_lea.vmem %s5, 384
        %v8416 = vld [vmem:[%s8415] sm:$0xff]
        %v8417 = vld [vmem:[%s8415 + $0x8] sm:$0xff]
        %v8418 = vld [vmem:[%s8415 + $0x10] sm:$0xff]
        %v8419 = vld [vmem:[%s8415 + $0x18] sm:$0xff]
        %v8420 = vld [vmem:[%s8415 + $0x20] sm:$0xff]
        %v8421 = vld [vmem:[%s8415 + $0x28] sm:$0xff]
        %v8422 = vld [vmem:[%s8415 + $0x30] sm:$0xff]
        %v8423 = vld [vmem:[%s8415 + $0x38] sm:$0xff]
        %v8424 = vld [vmem:[%s8415 + $0x40] sm:$0xff]
        %v8425 = vld [vmem:[%s8415 + $0x48] sm:$0xff]
        %v8426 = vld [vmem:[%s8415 + $0x50] sm:$0xff]
        %v8427 = vld [vmem:[%s8415 + $0x58] sm:$0xff]
        %v8428 = vld [vmem:[%s8415 + $0x60] sm:$0xff]
        %v8429 = vld [vmem:[%s8415 + $0x68] sm:$0xff]
        %v8430 = vld [vmem:[%s8415 + $0x70] sm:$0xff]
        %v8431 = vld [vmem:[%s8415 + $0x78] sm:$0xff]
        %v8432 = vrot.slane %v8147, 3
        %8434 = vmatprep.subr.mxu0 0.0
        %8435 = vmatpush1.msra.mxu0 %v8431
        %8436 = vmatprep.subr.mxu0 0.0
        %8437 = vmatpush1.msra.mxu0 %v8430
        %8438 = vmatprep.subr.mxu0 0.0
        %8439 = vmatpush1.msra.mxu0 %v8429
        %8440 = vmatprep.subr.mxu0 0.0
        %8441 = vmatpush1.msra.mxu0 %v8428
        %8442 = vmatprep.subr.mxu0 0.0
        %8443 = vmatpush1.msra.mxu0 %v8427
        %8444 = vmatprep.subr.mxu0 0.0
        %8445 = vmatpush1.msra.mxu0 %v8426
        %8446 = vmatprep.subr.mxu0 0.0
        %8447 = vmatpush1.msra.mxu0 %v8425
        %8448 = vmatprep.subr.mxu0 0.0
        %8449 = vmatpush1.msra.mxu0 %v8424
        %8450 = vmatprep.subr.mxu0 0.0
        %8451 = vmatpush1.msra.mxu0 %v8423
        %8452 = vmatprep.subr.mxu0 0.0
        %8453 = vmatpush1.msra.mxu0 %v8422
        %8454 = vmatprep.subr.mxu0 0.0
        %8455 = vmatpush1.msra.mxu0 %v8421
        %8456 = vmatprep.subr.mxu0 0.0
        %8457 = vmatpush1.msra.mxu0 %v8420
        %8458 = vmatprep.subr.mxu0 0.0
        %8459 = vmatpush1.msra.mxu0 %v8419
        %8460 = vmatprep.subr.mxu0 0.0
        %8461 = vmatpush1.msra.mxu0 %v8418
        %8462 = vmatprep.subr.mxu0 0.0
        %8463 = vmatpush1.msra.mxu0 %v8417
        %8464 = vmatprep.subr.mxu0 0.0
        %8465 = vmatpush1.msra.mxu0 %v8416
        %8466 = vmatprep.subr.mxu0 0.0
        %8467 = vmatpush2.msra.mxu0 0.0
        %8468 = vmatprep.subr.mxu0 0.0
        %8469 = vmatpush2.msra.mxu0 0.0
        %8470 = vmatprep.subr.mxu0 0.0
        %8471 = vmatpush2.msra.mxu0 0.0
        %8472 = vmatprep.subr.mxu0 0.0
        %8473 = vmatpush2.msra.mxu0 0.0
        %8474 = vmatprep.subr.mxu0 0.0
        %8475 = vmatpush2.msra.mxu0 0.0
        %8476 = vmatprep.subr.mxu0 0.0
        %8477 = vmatpush2.msra.mxu0 0.0
        %8478 = vmatprep.subr.mxu0 0.0
        %8479 = vmatpush2.msra.mxu0 0.0
        %8480 = vmatprep.subr.mxu0 0.0
        %8481 = vmatpush2.msra.mxu0 0.0
        %8482 = vmatprep.subr.mxu0 0.0
        %8483 = vmatpush2.msra.mxu0 0.0
        %8484 = vmatprep.subr.mxu0 0.0
        %8485 = vmatpush2.msra.mxu0 0.0
        %8486 = vmatprep.subr.mxu0 0.0
        %8487 = vmatpush2.msra.mxu0 0.0
        %8488 = vmatprep.subr.mxu0 0.0
        %8489 = vmatpush2.msra.mxu0 0.0
        %8490 = vmatprep.subr.mxu0 0.0
        %8491 = vmatpush2.msra.mxu0 0.0
        %8492 = vmatprep.subr.mxu0 0.0
        %8493 = vmatpush2.msra.mxu0 0.0
        %8494 = vmatprep.subr.mxu0 0.0
        %8495 = vmatpush2.msra.mxu0 0.0
        %8496 = vmatprep.subr.mxu0 0.0
        %8497 = vmatpush2.msra.mxu0 0.0
        %8498 = vmatprep.mubr.f32.mxu0 0.0
        %8499 = vmatmul.mubr.f32.gmra.mxu0 %v8432
        %v8500 = vpop.f32.mrf.mxu0
        %v8501 = vadd.f32 0.0, %v8500
        %v8502 = vpop.f32.mrf.mxu0
        %8503 = vdwg.mxu0
        %v8504 = vadd.f32 %v8414, %v8501
        %s8505 = scalar_lea.vmem %s5, 512
        %v8506 = vld [vmem:[%s8505] sm:$0xff]
        %v8507 = vld [vmem:[%s8505 + $0x8] sm:$0xff]
        %v8508 = vld [vmem:[%s8505 + $0x10] sm:$0xff]
        %v8509 = vld [vmem:[%s8505 + $0x18] sm:$0xff]
        %v8510 = vld [vmem:[%s8505 + $0x20] sm:$0xff]
        %v8511 = vld [vmem:[%s8505 + $0x28] sm:$0xff]
        %v8512 = vld [vmem:[%s8505 + $0x30] sm:$0xff]
        %v8513 = vld [vmem:[%s8505 + $0x38] sm:$0xff]
        %v8514 = vld [vmem:[%s8505 + $0x40] sm:$0xff]
        %v8515 = vld [vmem:[%s8505 + $0x48] sm:$0xff]
        %v8516 = vld [vmem:[%s8505 + $0x50] sm:$0xff]
        %v8517 = vld [vmem:[%s8505 + $0x58] sm:$0xff]
        %v8518 = vld [vmem:[%s8505 + $0x60] sm:$0xff]
        %v8519 = vld [vmem:[%s8505 + $0x68] sm:$0xff]
        %v8520 = vld [vmem:[%s8505 + $0x70] sm:$0xff]
        %v8521 = vld [vmem:[%s8505 + $0x78] sm:$0xff]
        %v8522 = vrot.slane %v8147, 4
        %8524 = vmatprep.subr.mxu0 0.0
        %8525 = vmatpush1.msra.mxu0 %v8521
        %8526 = vmatprep.subr.mxu0 0.0
        %8527 = vmatpush1.msra.mxu0 %v8520
        %8528 = vmatprep.subr.mxu0 0.0
        %8529 = vmatpush1.msra.mxu0 %v8519
        %8530 = vmatprep.subr.mxu0 0.0
        %8531 = vmatpush1.msra.mxu0 %v8518
        %8532 = vmatprep.subr.mxu0 0.0
        %8533 = vmatpush1.msra.mxu0 %v8517
        %8534 = vmatprep.subr.mxu0 0.0
        %8535 = vmatpush1.msra.mxu0 %v8516
        %8536 = vmatprep.subr.mxu0 0.0
        %8537 = vmatpush1.msra.mxu0 %v8515
        %8538 = vmatprep.subr.mxu0 0.0
        %8539 = vmatpush1.msra.mxu0 %v8514
        %8540 = vmatprep.subr.mxu0 0.0
        %8541 = vmatpush1.msra.mxu0 %v8513
        %8542 = vmatprep.subr.mxu0 0.0
        %8543 = vmatpush1.msra.mxu0 %v8512
        %8544 = vmatprep.subr.mxu0 0.0
        %8545 = vmatpush1.msra.mxu0 %v8511
        %8546 = vmatprep.subr.mxu0 0.0
        %8547 = vmatpush1.msra.mxu0 %v8510
        %8548 = vmatprep.subr.mxu0 0.0
        %8549 = vmatpush1.msra.mxu0 %v8509
        %8550 = vmatprep.subr.mxu0 0.0
        %8551 = vmatpush1.msra.mxu0 %v8508
        %8552 = vmatprep.subr.mxu0 0.0
        %8553 = vmatpush1.msra.mxu0 %v8507
        %8554 = vmatprep.subr.mxu0 0.0
        %8555 = vmatpush1.msra.mxu0 %v8506
        %8556 = vmatprep.subr.mxu0 0.0
        %8557 = vmatpush2.msra.mxu0 0.0
        %8558 = vmatprep.subr.mxu0 0.0
        %8559 = vmatpush2.msra.mxu0 0.0
        %8560 = vmatprep.subr.mxu0 0.0
        %8561 = vmatpush2.msra.mxu0 0.0
        %8562 = vmatprep.subr.mxu0 0.0
        %8563 = vmatpush2.msra.mxu0 0.0
        %8564 = vmatprep.subr.mxu0 0.0
        %8565 = vmatpush2.msra.mxu0 0.0
        %8566 = vmatprep.subr.mxu0 0.0
        %8567 = vmatpush2.msra.mxu0 0.0
        %8568 = vmatprep.subr.mxu0 0.0
        %8569 = vmatpush2.msra.mxu0 0.0
        %8570 = vmatprep.subr.mxu0 0.0
        %8571 = vmatpush2.msra.mxu0 0.0
        %8572 = vmatprep.subr.mxu0 0.0
        %8573 = vmatpush2.msra.mxu0 0.0
        %8574 = vmatprep.subr.mxu0 0.0
        %8575 = vmatpush2.msra.mxu0 0.0
        %8576 = vmatprep.subr.mxu0 0.0
        %8577 = vmatpush2.msra.mxu0 0.0
        %8578 = vmatprep.subr.mxu0 0.0
        %8579 = vmatpush2.msra.mxu0 0.0
        %8580 = vmatprep.subr.mxu0 0.0
        %8581 = vmatpush2.msra.mxu0 0.0
        %8582 = vmatprep.subr.mxu0 0.0
        %8583 = vmatpush2.msra.mxu0 0.0
        %8584 = vmatprep.subr.mxu0 0.0
        %8585 = vmatpush2.msra.mxu0 0.0
        %8586 = vmatprep.subr.mxu0 0.0
        %8587 = vmatpush2.msra.mxu0 0.0
        %8588 = vmatprep.mubr.f32.mxu0 0.0
        %8589 = vmatmul.mubr.f32.gmra.mxu0 %v8522
        %v8590 = vpop.f32.mrf.mxu0
        %v8591 = vadd.f32 0.0, %v8590
        %v8592 = vpop.f32.mrf.mxu0
        %8593 = vdwg.mxu0
        %v8594 = vadd.f32 %v8504, %v8591
        %s8595 = scalar_lea.vmem %s5, 640
        %v8596 = vld [vmem:[%s8595] sm:$0xff]
        %v8597 = vld [vmem:[%s8595 + $0x8] sm:$0xff]
        %v8598 = vld [vmem:[%s8595 + $0x10] sm:$0xff]
        %v8599 = vld [vmem:[%s8595 + $0x18] sm:$0xff]
        %v8600 = vld [vmem:[%s8595 + $0x20] sm:$0xff]
        %v8601 = vld [vmem:[%s8595 + $0x28] sm:$0xff]
        %v8602 = vld [vmem:[%s8595 + $0x30] sm:$0xff]
        %v8603 = vld [vmem:[%s8595 + $0x38] sm:$0xff]
        %v8604 = vld [vmem:[%s8595 + $0x40] sm:$0xff]
        %v8605 = vld [vmem:[%s8595 + $0x48] sm:$0xff]
        %v8606 = vld [vmem:[%s8595 + $0x50] sm:$0xff]
        %v8607 = vld [vmem:[%s8595 + $0x58] sm:$0xff]
        %v8608 = vld [vmem:[%s8595 + $0x60] sm:$0xff]
        %v8609 = vld [vmem:[%s8595 + $0x68] sm:$0xff]
        %v8610 = vld [vmem:[%s8595 + $0x70] sm:$0xff]
        %v8611 = vld [vmem:[%s8595 + $0x78] sm:$0xff]
        %v8612 = vrot.slane %v8147, 5
        %8614 = vmatprep.subr.mxu0 0.0
        %8615 = vmatpush1.msra.mxu0 %v8611
        %8616 = vmatprep.subr.mxu0 0.0
        %8617 = vmatpush1.msra.mxu0 %v8610
        %8618 = vmatprep.subr.mxu0 0.0
        %8619 = vmatpush1.msra.mxu0 %v8609
        %8620 = vmatprep.subr.mxu0 0.0
        %8621 = vmatpush1.msra.mxu0 %v8608
        %8622 = vmatprep.subr.mxu0 0.0
        %8623 = vmatpush1.msra.mxu0 %v8607
        %8624 = vmatprep.subr.mxu0 0.0
        %8625 = vmatpush1.msra.mxu0 %v8606
        %8626 = vmatprep.subr.mxu0 0.0
        %8627 = vmatpush1.msra.mxu0 %v8605
        %8628 = vmatprep.subr.mxu0 0.0
        %8629 = vmatpush1.msra.mxu0 %v8604
        %8630 = vmatprep.subr.mxu0 0.0
        %8631 = vmatpush1.msra.mxu0 %v8603
        %8632 = vmatprep.subr.mxu0 0.0
        %8633 = vmatpush1.msra.mxu0 %v8602
        %8634 = vmatprep.subr.mxu0 0.0
        %8635 = vmatpush1.msra.mxu0 %v8601
        %8636 = vmatprep.subr.mxu0 0.0
        %8637 = vmatpush1.msra.mxu0 %v8600
        %8638 = vmatprep.subr.mxu0 0.0
        %8639 = vmatpush1.msra.mxu0 %v8599
        %8640 = vmatprep.subr.mxu0 0.0
        %8641 = vmatpush1.msra.mxu0 %v8598
        %8642 = vmatprep.subr.mxu0 0.0
        %8643 = vmatpush1.msra.mxu0 %v8597
        %8644 = vmatprep.subr.mxu0 0.0
        %8645 = vmatpush1.msra.mxu0 %v8596
        %8646 = vmatprep.subr.mxu0 0.0
        %8647 = vmatpush2.msra.mxu0 0.0
        %8648 = vmatprep.subr.mxu0 0.0
        %8649 = vmatpush2.msra.mxu0 0.0
        %8650 = vmatprep.subr.mxu0 0.0
        %8651 = vmatpush2.msra.mxu0 0.0
        %8652 = vmatprep.subr.mxu0 0.0
        %8653 = vmatpush2.msra.mxu0 0.0
        %8654 = vmatprep.subr.mxu0 0.0
        %8655 = vmatpush2.msra.mxu0 0.0
        %8656 = vmatprep.subr.mxu0 0.0
        %8657 = vmatpush2.msra.mxu0 0.0
        %8658 = vmatprep.subr.mxu0 0.0
        %8659 = vmatpush2.msra.mxu0 0.0
        %8660 = vmatprep.subr.mxu0 0.0
        %8661 = vmatpush2.msra.mxu0 0.0
        %8662 = vmatprep.subr.mxu0 0.0
        %8663 = vmatpush2.msra.mxu0 0.0
        %8664 = vmatprep.subr.mxu0 0.0
        %8665 = vmatpush2.msra.mxu0 0.0
        %8666 = vmatprep.subr.mxu0 0.0
        %8667 = vmatpush2.msra.mxu0 0.0
        %8668 = vmatprep.subr.mxu0 0.0
        %8669 = vmatpush2.msra.mxu0 0.0
        %8670 = vmatprep.subr.mxu0 0.0
        %8671 = vmatpush2.msra.mxu0 0.0
        %8672 = vmatprep.subr.mxu0 0.0
        %8673 = vmatpush2.msra.mxu0 0.0
        %8674 = vmatprep.subr.mxu0 0.0
        %8675 = vmatpush2.msra.mxu0 0.0
        %8676 = vmatprep.subr.mxu0 0.0
        %8677 = vmatpush2.msra.mxu0 0.0
        %8678 = vmatprep.mubr.f32.mxu0 0.0
        %8679 = vmatmul.mubr.f32.gmra.mxu0 %v8612
        %v8680 = vpop.f32.mrf.mxu0
        %v8681 = vadd.f32 0.0, %v8680
        %v8682 = vpop.f32.mrf.mxu0
        %8683 = vdwg.mxu0
        %v8684 = vadd.f32 %v8594, %v8681
        %s8685 = scalar_lea.vmem %s5, 768
        %v8686 = vld [vmem:[%s8685] sm:$0xff]
        %v8687 = vld [vmem:[%s8685 + $0x8] sm:$0xff]
        %v8688 = vld [vmem:[%s8685 + $0x10] sm:$0xff]
        %v8689 = vld [vmem:[%s8685 + $0x18] sm:$0xff]
        %v8690 = vld [vmem:[%s8685 + $0x20] sm:$0xff]
        %v8691 = vld [vmem:[%s8685 + $0x28] sm:$0xff]
        %v8692 = vld [vmem:[%s8685 + $0x30] sm:$0xff]
        %v8693 = vld [vmem:[%s8685 + $0x38] sm:$0xff]
        %v8694 = vld [vmem:[%s8685 + $0x40] sm:$0xff]
        %v8695 = vld [vmem:[%s8685 + $0x48] sm:$0xff]
        %v8696 = vld [vmem:[%s8685 + $0x50] sm:$0xff]
        %v8697 = vld [vmem:[%s8685 + $0x58] sm:$0xff]
        %v8698 = vld [vmem:[%s8685 + $0x60] sm:$0xff]
        %v8699 = vld [vmem:[%s8685 + $0x68] sm:$0xff]
        %v8700 = vld [vmem:[%s8685 + $0x70] sm:$0xff]
        %v8701 = vld [vmem:[%s8685 + $0x78] sm:$0xff]
        %v8702 = vrot.slane %v8147, 6
        %8704 = vmatprep.subr.mxu0 0.0
        %8705 = vmatpush1.msra.mxu0 %v8701
        %8706 = vmatprep.subr.mxu0 0.0
        %8707 = vmatpush1.msra.mxu0 %v8700
        %8708 = vmatprep.subr.mxu0 0.0
        %8709 = vmatpush1.msra.mxu0 %v8699
        %8710 = vmatprep.subr.mxu0 0.0
        %8711 = vmatpush1.msra.mxu0 %v8698
        %8712 = vmatprep.subr.mxu0 0.0
        %8713 = vmatpush1.msra.mxu0 %v8697
        %8714 = vmatprep.subr.mxu0 0.0
        %8715 = vmatpush1.msra.mxu0 %v8696
        %8716 = vmatprep.subr.mxu0 0.0
        %8717 = vmatpush1.msra.mxu0 %v8695
        %8718 = vmatprep.subr.mxu0 0.0
        %8719 = vmatpush1.msra.mxu0 %v8694
        %8720 = vmatprep.subr.mxu0 0.0
        %8721 = vmatpush1.msra.mxu0 %v8693
        %8722 = vmatprep.subr.mxu0 0.0
        %8723 = vmatpush1.msra.mxu0 %v8692
        %8724 = vmatprep.subr.mxu0 0.0
        %8725 = vmatpush1.msra.mxu0 %v8691
        %8726 = vmatprep.subr.mxu0 0.0
        %8727 = vmatpush1.msra.mxu0 %v8690
        %8728 = vmatprep.subr.mxu0 0.0
        %8729 = vmatpush1.msra.mxu0 %v8689
        %8730 = vmatprep.subr.mxu0 0.0
        %8731 = vmatpush1.msra.mxu0 %v8688
        %8732 = vmatprep.subr.mxu0 0.0
        %8733 = vmatpush1.msra.mxu0 %v8687
        %8734 = vmatprep.subr.mxu0 0.0
        %8735 = vmatpush1.msra.mxu0 %v8686
        %8736 = vmatprep.subr.mxu0 0.0
        %8737 = vmatpush2.msra.mxu0 0.0
        %8738 = vmatprep.subr.mxu0 0.0
        %8739 = vmatpush2.msra.mxu0 0.0
        %8740 = vmatprep.subr.mxu0 0.0
        %8741 = vmatpush2.msra.mxu0 0.0
        %8742 = vmatprep.subr.mxu0 0.0
        %8743 = vmatpush2.msra.mxu0 0.0
        %8744 = vmatprep.subr.mxu0 0.0
        %8745 = vmatpush2.msra.mxu0 0.0
        %8746 = vmatprep.subr.mxu0 0.0
        %8747 = vmatpush2.msra.mxu0 0.0
        %8748 = vmatprep.subr.mxu0 0.0
        %8749 = vmatpush2.msra.mxu0 0.0
        %8750 = vmatprep.subr.mxu0 0.0
        %8751 = vmatpush2.msra.mxu0 0.0
        %8752 = vmatprep.subr.mxu0 0.0
        %8753 = vmatpush2.msra.mxu0 0.0
        %8754 = vmatprep.subr.mxu0 0.0
        %8755 = vmatpush2.msra.mxu0 0.0
        %8756 = vmatprep.subr.mxu0 0.0
        %8757 = vmatpush2.msra.mxu0 0.0
        %8758 = vmatprep.subr.mxu0 0.0
        %8759 = vmatpush2.msra.mxu0 0.0
        %8760 = vmatprep.subr.mxu0 0.0
        %8761 = vmatpush2.msra.mxu0 0.0
        %8762 = vmatprep.subr.mxu0 0.0
        %8763 = vmatpush2.msra.mxu0 0.0
        %8764 = vmatprep.subr.mxu0 0.0
        %8765 = vmatpush2.msra.mxu0 0.0
        %8766 = vmatprep.subr.mxu0 0.0
        %8767 = vmatpush2.msra.mxu0 0.0
        %8768 = vmatprep.mubr.f32.mxu0 0.0
        %8769 = vmatmul.mubr.f32.gmra.mxu0 %v8702
        %v8770 = vpop.f32.mrf.mxu0
        %v8771 = vadd.f32 0.0, %v8770
        %v8772 = vpop.f32.mrf.mxu0
        %8773 = vdwg.mxu0
        %v8774 = vadd.f32 %v8684, %v8771
        %s8775 = scalar_lea.vmem %s5, 896
        %v8776 = vld [vmem:[%s8775] sm:$0xff]
        %v8777 = vld [vmem:[%s8775 + $0x8] sm:$0xff]
        %v8778 = vld [vmem:[%s8775 + $0x10] sm:$0xff]
        %v8779 = vld [vmem:[%s8775 + $0x18] sm:$0xff]
        %v8780 = vld [vmem:[%s8775 + $0x20] sm:$0xff]
        %v8781 = vld [vmem:[%s8775 + $0x28] sm:$0xff]
        %v8782 = vld [vmem:[%s8775 + $0x30] sm:$0xff]
        %v8783 = vld [vmem:[%s8775 + $0x38] sm:$0xff]
        %v8784 = vld [vmem:[%s8775 + $0x40] sm:$0xff]
        %v8785 = vld [vmem:[%s8775 + $0x48] sm:$0xff]
        %v8786 = vld [vmem:[%s8775 + $0x50] sm:$0xff]
        %v8787 = vld [vmem:[%s8775 + $0x58] sm:$0xff]
        %v8788 = vld [vmem:[%s8775 + $0x60] sm:$0xff]
        %v8789 = vld [vmem:[%s8775 + $0x68] sm:$0xff]
        %v8790 = vld [vmem:[%s8775 + $0x70] sm:$0xff]
        %v8791 = vld [vmem:[%s8775 + $0x78] sm:$0xff]
        %v8792 = vrot.slane %v8147, 7
        %8794 = vmatprep.subr.mxu0 0.0
        %8795 = vmatpush1.msra.mxu0 %v8791
        %8796 = vmatprep.subr.mxu0 0.0
        %8797 = vmatpush1.msra.mxu0 %v8790
        %8798 = vmatprep.subr.mxu0 0.0
        %8799 = vmatpush1.msra.mxu0 %v8789
        %8800 = vmatprep.subr.mxu0 0.0
        %8801 = vmatpush1.msra.mxu0 %v8788
        %8802 = vmatprep.subr.mxu0 0.0
        %8803 = vmatpush1.msra.mxu0 %v8787
        %8804 = vmatprep.subr.mxu0 0.0
        %8805 = vmatpush1.msra.mxu0 %v8786
        %8806 = vmatprep.subr.mxu0 0.0
        %8807 = vmatpush1.msra.mxu0 %v8785
        %8808 = vmatprep.subr.mxu0 0.0
        %8809 = vmatpush1.msra.mxu0 %v8784
        %8810 = vmatprep.subr.mxu0 0.0
        %8811 = vmatpush1.msra.mxu0 %v8783
        %8812 = vmatprep.subr.mxu0 0.0
        %8813 = vmatpush1.msra.mxu0 %v8782
        %8814 = vmatprep.subr.mxu0 0.0
        %8815 = vmatpush1.msra.mxu0 %v8781
        %8816 = vmatprep.subr.mxu0 0.0
        %8817 = vmatpush1.msra.mxu0 %v8780
        %8818 = vmatprep.subr.mxu0 0.0
        %8819 = vmatpush1.msra.mxu0 %v8779
        %8820 = vmatprep.subr.mxu0 0.0
        %8821 = vmatpush1.msra.mxu0 %v8778
        %8822 = vmatprep.subr.mxu0 0.0
        %8823 = vmatpush1.msra.mxu0 %v8777
        %8824 = vmatprep.subr.mxu0 0.0
        %8825 = vmatpush1.msra.mxu0 %v8776
        %8826 = vmatprep.subr.mxu0 0.0
        %8827 = vmatpush2.msra.mxu0 0.0
        %8828 = vmatprep.subr.mxu0 0.0
        %8829 = vmatpush2.msra.mxu0 0.0
        %8830 = vmatprep.subr.mxu0 0.0
        %8831 = vmatpush2.msra.mxu0 0.0
        %8832 = vmatprep.subr.mxu0 0.0
        %8833 = vmatpush2.msra.mxu0 0.0
        %8834 = vmatprep.subr.mxu0 0.0
        %8835 = vmatpush2.msra.mxu0 0.0
        %8836 = vmatprep.subr.mxu0 0.0
        %8837 = vmatpush2.msra.mxu0 0.0
        %8838 = vmatprep.subr.mxu0 0.0
        %8839 = vmatpush2.msra.mxu0 0.0
        %8840 = vmatprep.subr.mxu0 0.0
        %8841 = vmatpush2.msra.mxu0 0.0
        %8842 = vmatprep.subr.mxu0 0.0
        %8843 = vmatpush2.msra.mxu0 0.0
        %8844 = vmatprep.subr.mxu0 0.0
        %8845 = vmatpush2.msra.mxu0 0.0
        %8846 = vmatprep.subr.mxu0 0.0
        %8847 = vmatpush2.msra.mxu0 0.0
        %8848 = vmatprep.subr.mxu0 0.0
        %8849 = vmatpush2.msra.mxu0 0.0
        %8850 = vmatprep.subr.mxu0 0.0
        %8851 = vmatpush2.msra.mxu0 0.0
        %8852 = vmatprep.subr.mxu0 0.0
        %8853 = vmatpush2.msra.mxu0 0.0
        %8854 = vmatprep.subr.mxu0 0.0
        %8855 = vmatpush2.msra.mxu0 0.0
        %8856 = vmatprep.subr.mxu0 0.0
        %8857 = vmatpush2.msra.mxu0 0.0
        %8858 = vmatprep.mubr.f32.mxu0 0.0
        %8859 = vmatmul.mubr.f32.gmra.mxu0 %v8792
        %v8860 = vpop.f32.mrf.mxu0
        %v8861 = vadd.f32 0.0, %v8860
        %v8862 = vpop.f32.mrf.mxu0
        %8863 = vdwg.mxu0
        %v8864 = vadd.f32 %v8774, %v8861
        %s8865 = scalar_lea.vmem %s5, 1024
        %v8866 = vld [vmem:[%s8865] sm:$0xff]
        %v8867 = vld [vmem:[%s8865 + $0x8] sm:$0xff]
        %v8868 = vld [vmem:[%s8865 + $0x10] sm:$0xff]
        %v8869 = vld [vmem:[%s8865 + $0x18] sm:$0xff]
        %v8870 = vld [vmem:[%s8865 + $0x20] sm:$0xff]
        %v8871 = vld [vmem:[%s8865 + $0x28] sm:$0xff]
        %v8872 = vld [vmem:[%s8865 + $0x30] sm:$0xff]
        %v8873 = vld [vmem:[%s8865 + $0x38] sm:$0xff]
        %v8874 = vld [vmem:[%s8865 + $0x40] sm:$0xff]
        %v8875 = vld [vmem:[%s8865 + $0x48] sm:$0xff]
        %v8876 = vld [vmem:[%s8865 + $0x50] sm:$0xff]
        %v8877 = vld [vmem:[%s8865 + $0x58] sm:$0xff]
        %v8878 = vld [vmem:[%s8865 + $0x60] sm:$0xff]
        %v8879 = vld [vmem:[%s8865 + $0x68] sm:$0xff]
        %v8880 = vld [vmem:[%s8865 + $0x70] sm:$0xff]
        %v8881 = vld [vmem:[%s8865 + $0x78] sm:$0xff]
        %8882 = vmatprep.subr.mxu0 0.0
        %8883 = vmatpush1.msra.mxu0 %v8881
        %8884 = vmatprep.subr.mxu0 0.0
        %8885 = vmatpush1.msra.mxu0 %v8880
        %8886 = vmatprep.subr.mxu0 0.0
        %8887 = vmatpush1.msra.mxu0 %v8879
        %8888 = vmatprep.subr.mxu0 0.0
        %8889 = vmatpush1.msra.mxu0 %v8878
        %8890 = vmatprep.subr.mxu0 0.0
        %8891 = vmatpush1.msra.mxu0 %v8877
        %8892 = vmatprep.subr.mxu0 0.0
        %8893 = vmatpush1.msra.mxu0 %v8876
        %8894 = vmatprep.subr.mxu0 0.0
        %8895 = vmatpush1.msra.mxu0 %v8875
        %8896 = vmatprep.subr.mxu0 0.0
        %8897 = vmatpush1.msra.mxu0 %v8874
        %8898 = vmatprep.subr.mxu0 0.0
        %8899 = vmatpush1.msra.mxu0 %v8873
        %8900 = vmatprep.subr.mxu0 0.0
        %8901 = vmatpush1.msra.mxu0 %v8872
        %8902 = vmatprep.subr.mxu0 0.0
        %8903 = vmatpush1.msra.mxu0 %v8871
        %8904 = vmatprep.subr.mxu0 0.0
        %8905 = vmatpush1.msra.mxu0 %v8870
        %8906 = vmatprep.subr.mxu0 0.0
        %8907 = vmatpush1.msra.mxu0 %v8869
        %8908 = vmatprep.subr.mxu0 0.0
        %8909 = vmatpush1.msra.mxu0 %v8868
        %8910 = vmatprep.subr.mxu0 0.0
        %8911 = vmatpush1.msra.mxu0 %v8867
        %8912 = vmatprep.subr.mxu0 0.0
        %8913 = vmatpush1.msra.mxu0 %v8866
        %8914 = vmatprep.subr.mxu0 0.0
        %8915 = vmatpush2.msra.mxu0 0.0
        %8916 = vmatprep.subr.mxu0 0.0
        %8917 = vmatpush2.msra.mxu0 0.0
        %8918 = vmatprep.subr.mxu0 0.0
        %8919 = vmatpush2.msra.mxu0 0.0
        %8920 = vmatprep.subr.mxu0 0.0
        %8921 = vmatpush2.msra.mxu0 0.0
        %8922 = vmatprep.subr.mxu0 0.0
        %8923 = vmatpush2.msra.mxu0 0.0
        %8924 = vmatprep.subr.mxu0 0.0
        %8925 = vmatpush2.msra.mxu0 0.0
        %8926 = vmatprep.subr.mxu0 0.0
        %8927 = vmatpush2.msra.mxu0 0.0
        %8928 = vmatprep.subr.mxu0 0.0
        %8929 = vmatpush2.msra.mxu0 0.0
        %8930 = vmatprep.subr.mxu0 0.0
        %8931 = vmatpush2.msra.mxu0 0.0
        %8932 = vmatprep.subr.mxu0 0.0
        %8933 = vmatpush2.msra.mxu0 0.0
        %8934 = vmatprep.subr.mxu0 0.0
        %8935 = vmatpush2.msra.mxu0 0.0
        %8936 = vmatprep.subr.mxu0 0.0
        %8937 = vmatpush2.msra.mxu0 0.0
        %8938 = vmatprep.subr.mxu0 0.0
        %8939 = vmatpush2.msra.mxu0 0.0
        %8940 = vmatprep.subr.mxu0 0.0
        %8941 = vmatpush2.msra.mxu0 0.0
        %8942 = vmatprep.subr.mxu0 0.0
        %8943 = vmatpush2.msra.mxu0 0.0
        %8944 = vmatprep.subr.mxu0 0.0
        %8945 = vmatpush2.msra.mxu0 0.0
        %8946 = vmatprep.mubr.f32.mxu0 0.0
        %8947 = vmatmul.mubr.f32.gmra.mxu0 %v8148
        %v8948 = vpop.f32.mrf.mxu0
        %v8949 = vadd.f32 0.0, %v8948
        %v8950 = vpop.f32.mrf.mxu0
        %8951 = vdwg.mxu0
        %v8952 = vadd.f32 %v8864, %v8949
        %s8953 = scalar_lea.vmem %s5, 1152
        %v8954 = vld [vmem:[%s8953] sm:$0xff]
        %v8955 = vld [vmem:[%s8953 + $0x8] sm:$0xff]
        %v8956 = vld [vmem:[%s8953 + $0x10] sm:$0xff]
        %v8957 = vld [vmem:[%s8953 + $0x18] sm:$0xff]
        %v8958 = vld [vmem:[%s8953 + $0x20] sm:$0xff]
        %v8959 = vld [vmem:[%s8953 + $0x28] sm:$0xff]
        %v8960 = vld [vmem:[%s8953 + $0x30] sm:$0xff]
        %v8961 = vld [vmem:[%s8953 + $0x38] sm:$0xff]
        %v8962 = vld [vmem:[%s8953 + $0x40] sm:$0xff]
        %v8963 = vld [vmem:[%s8953 + $0x48] sm:$0xff]
        %v8964 = vld [vmem:[%s8953 + $0x50] sm:$0xff]
        %v8965 = vld [vmem:[%s8953 + $0x58] sm:$0xff]
        %v8966 = vld [vmem:[%s8953 + $0x60] sm:$0xff]
        %v8967 = vld [vmem:[%s8953 + $0x68] sm:$0xff]
        %v8968 = vld [vmem:[%s8953 + $0x70] sm:$0xff]
        %v8969 = vld [vmem:[%s8953 + $0x78] sm:$0xff]
        %v8971 = vrot.slane %v8148, 1
        %8973 = vmatprep.subr.mxu0 0.0
        %8974 = vmatpush1.msra.mxu0 %v8969
        %8975 = vmatprep.subr.mxu0 0.0
        %8976 = vmatpush1.msra.mxu0 %v8968
        %8977 = vmatprep.subr.mxu0 0.0
        %8978 = vmatpush1.msra.mxu0 %v8967
        %8979 = vmatprep.subr.mxu0 0.0
        %8980 = vmatpush1.msra.mxu0 %v8966
        %8981 = vmatprep.subr.mxu0 0.0
        %8982 = vmatpush1.msra.mxu0 %v8965
        %8983 = vmatprep.subr.mxu0 0.0
        %8984 = vmatpush1.msra.mxu0 %v8964
        %8985 = vmatprep.subr.mxu0 0.0
        %8986 = vmatpush1.msra.mxu0 %v8963
        %8987 = vmatprep.subr.mxu0 0.0
        %8988 = vmatpush1.msra.mxu0 %v8962
        %8989 = vmatprep.subr.mxu0 0.0
        %8990 = vmatpush1.msra.mxu0 %v8961
        %8991 = vmatprep.subr.mxu0 0.0
        %8992 = vmatpush1.msra.mxu0 %v8960
        %8993 = vmatprep.subr.mxu0 0.0
        %8994 = vmatpush1.msra.mxu0 %v8959
        %8995 = vmatprep.subr.mxu0 0.0
        %8996 = vmatpush1.msra.mxu0 %v8958
        %8997 = vmatprep.subr.mxu0 0.0
        %8998 = vmatpush1.msra.mxu0 %v8957
        %8999 = vmatprep.subr.mxu0 0.0
        %9000 = vmatpush1.msra.mxu0 %v8956
        %9001 = vmatprep.subr.mxu0 0.0
        %9002 = vmatpush1.msra.mxu0 %v8955
        %9003 = vmatprep.subr.mxu0 0.0
        %9004 = vmatpush1.msra.mxu0 %v8954
        %9005 = vmatprep.subr.mxu0 0.0
        %9006 = vmatpush2.msra.mxu0 0.0
        %9007 = vmatprep.subr.mxu0 0.0
        %9008 = vmatpush2.msra.mxu0 0.0
        %9009 = vmatprep.subr.mxu0 0.0
        %9010 = vmatpush2.msra.mxu0 0.0
        %9011 = vmatprep.subr.mxu0 0.0
        %9012 = vmatpush2.msra.mxu0 0.0
        %9013 = vmatprep.subr.mxu0 0.0
        %9014 = vmatpush2.msra.mxu0 0.0
        %9015 = vmatprep.subr.mxu0 0.0
        %9016 = vmatpush2.msra.mxu0 0.0
        %9017 = vmatprep.subr.mxu0 0.0
        %9018 = vmatpush2.msra.mxu0 0.0
        %9019 = vmatprep.subr.mxu0 0.0
        %9020 = vmatpush2.msra.mxu0 0.0
        %9021 = vmatprep.subr.mxu0 0.0
        %9022 = vmatpush2.msra.mxu0 0.0
        %9023 = vmatprep.subr.mxu0 0.0
        %9024 = vmatpush2.msra.mxu0 0.0
        %9025 = vmatprep.subr.mxu0 0.0
        %9026 = vmatpush2.msra.mxu0 0.0
        %9027 = vmatprep.subr.mxu0 0.0
        %9028 = vmatpush2.msra.mxu0 0.0
        %9029 = vmatprep.subr.mxu0 0.0
        %9030 = vmatpush2.msra.mxu0 0.0
        %9031 = vmatprep.subr.mxu0 0.0
        %9032 = vmatpush2.msra.mxu0 0.0
        %9033 = vmatprep.subr.mxu0 0.0
        %9034 = vmatpush2.msra.mxu0 0.0
        %9035 = vmatprep.subr.mxu0 0.0
        %9036 = vmatpush2.msra.mxu0 0.0
        %9037 = vmatprep.mubr.f32.mxu0 0.0
        %9038 = vmatmul.mubr.f32.gmra.mxu0 %v8971
        %v9039 = vpop.f32.mrf.mxu0
        %v9040 = vadd.f32 0.0, %v9039
        %v9041 = vpop.f32.mrf.mxu0
        %9042 = vdwg.mxu0
        %v9043 = vadd.f32 %v8952, %v9040
        %s9044 = scalar_lea.vmem %s5, 1280
        %v9045 = vld [vmem:[%s9044] sm:$0xff]
        %v9046 = vld [vmem:[%s9044 + $0x8] sm:$0xff]
        %v9047 = vld [vmem:[%s9044 + $0x10] sm:$0xff]
        %v9048 = vld [vmem:[%s9044 + $0x18] sm:$0xff]
        %v9049 = vld [vmem:[%s9044 + $0x20] sm:$0xff]
        %v9050 = vld [vmem:[%s9044 + $0x28] sm:$0xff]
        %v9051 = vld [vmem:[%s9044 + $0x30] sm:$0xff]
        %v9052 = vld [vmem:[%s9044 + $0x38] sm:$0xff]
        %v9053 = vld [vmem:[%s9044 + $0x40] sm:$0xff]
        %v9054 = vld [vmem:[%s9044 + $0x48] sm:$0xff]
        %v9055 = vld [vmem:[%s9044 + $0x50] sm:$0xff]
        %v9056 = vld [vmem:[%s9044 + $0x58] sm:$0xff]
        %v9057 = vld [vmem:[%s9044 + $0x60] sm:$0xff]
        %v9058 = vld [vmem:[%s9044 + $0x68] sm:$0xff]
        %v9059 = vld [vmem:[%s9044 + $0x70] sm:$0xff]
        %v9060 = vld [vmem:[%s9044 + $0x78] sm:$0xff]
        %v9061 = vrot.slane %v8148, 2
        %9063 = vmatprep.subr.mxu0 0.0
        %9064 = vmatpush1.msra.mxu0 %v9060
        %9065 = vmatprep.subr.mxu0 0.0
        %9066 = vmatpush1.msra.mxu0 %v9059
        %9067 = vmatprep.subr.mxu0 0.0
        %9068 = vmatpush1.msra.mxu0 %v9058
        %9069 = vmatprep.subr.mxu0 0.0
        %9070 = vmatpush1.msra.mxu0 %v9057
        %9071 = vmatprep.subr.mxu0 0.0
        %9072 = vmatpush1.msra.mxu0 %v9056
        %9073 = vmatprep.subr.mxu0 0.0
        %9074 = vmatpush1.msra.mxu0 %v9055
        %9075 = vmatprep.subr.mxu0 0.0
        %9076 = vmatpush1.msra.mxu0 %v9054
        %9077 = vmatprep.subr.mxu0 0.0
        %9078 = vmatpush1.msra.mxu0 %v9053
        %9079 = vmatprep.subr.mxu0 0.0
        %9080 = vmatpush1.msra.mxu0 %v9052
        %9081 = vmatprep.subr.mxu0 0.0
        %9082 = vmatpush1.msra.mxu0 %v9051
        %9083 = vmatprep.subr.mxu0 0.0
        %9084 = vmatpush1.msra.mxu0 %v9050
        %9085 = vmatprep.subr.mxu0 0.0
        %9086 = vmatpush1.msra.mxu0 %v9049
        %9087 = vmatprep.subr.mxu0 0.0
        %9088 = vmatpush1.msra.mxu0 %v9048
        %9089 = vmatprep.subr.mxu0 0.0
        %9090 = vmatpush1.msra.mxu0 %v9047
        %9091 = vmatprep.subr.mxu0 0.0
        %9092 = vmatpush1.msra.mxu0 %v9046
        %9093 = vmatprep.subr.mxu0 0.0
        %9094 = vmatpush1.msra.mxu0 %v9045
        %9095 = vmatprep.subr.mxu0 0.0
        %9096 = vmatpush2.msra.mxu0 0.0
        %9097 = vmatprep.subr.mxu0 0.0
        %9098 = vmatpush2.msra.mxu0 0.0
        %9099 = vmatprep.subr.mxu0 0.0
        %9100 = vmatpush2.msra.mxu0 0.0
        %9101 = vmatprep.subr.mxu0 0.0
        %9102 = vmatpush2.msra.mxu0 0.0
        %9103 = vmatprep.subr.mxu0 0.0
        %9104 = vmatpush2.msra.mxu0 0.0
        %9105 = vmatprep.subr.mxu0 0.0
        %9106 = vmatpush2.msra.mxu0 0.0
        %9107 = vmatprep.subr.mxu0 0.0
        %9108 = vmatpush2.msra.mxu0 0.0
        %9109 = vmatprep.subr.mxu0 0.0
        %9110 = vmatpush2.msra.mxu0 0.0
        %9111 = vmatprep.subr.mxu0 0.0
        %9112 = vmatpush2.msra.mxu0 0.0
        %9113 = vmatprep.subr.mxu0 0.0
        %9114 = vmatpush2.msra.mxu0 0.0
        %9115 = vmatprep.subr.mxu0 0.0
        %9116 = vmatpush2.msra.mxu0 0.0
        %9117 = vmatprep.subr.mxu0 0.0
        %9118 = vmatpush2.msra.mxu0 0.0
        %9119 = vmatprep.subr.mxu0 0.0
        %9120 = vmatpush2.msra.mxu0 0.0
        %9121 = vmatprep.subr.mxu0 0.0
        %9122 = vmatpush2.msra.mxu0 0.0
        %9123 = vmatprep.subr.mxu0 0.0
        %9124 = vmatpush2.msra.mxu0 0.0
        %9125 = vmatprep.subr.mxu0 0.0
        %9126 = vmatpush2.msra.mxu0 0.0
        %9127 = vmatprep.mubr.f32.mxu0 0.0
        %9128 = vmatmul.mubr.f32.gmra.mxu0 %v9061
        %v9129 = vpop.f32.mrf.mxu0
        %v9130 = vadd.f32 0.0, %v9129
        %v9131 = vpop.f32.mrf.mxu0
        %9132 = vdwg.mxu0
        %v9133 = vadd.f32 %v9043, %v9130
        %s9134 = scalar_lea.vmem %s5, 1408
        %v9135 = vld [vmem:[%s9134] sm:$0xff]
        %v9136 = vld [vmem:[%s9134 + $0x8] sm:$0xff]
        %v9137 = vld [vmem:[%s9134 + $0x10] sm:$0xff]
        %v9138 = vld [vmem:[%s9134 + $0x18] sm:$0xff]
        %v9139 = vld [vmem:[%s9134 + $0x20] sm:$0xff]
        %v9140 = vld [vmem:[%s9134 + $0x28] sm:$0xff]
        %v9141 = vld [vmem:[%s9134 + $0x30] sm:$0xff]
        %v9142 = vld [vmem:[%s9134 + $0x38] sm:$0xff]
        %v9143 = vld [vmem:[%s9134 + $0x40] sm:$0xff]
        %v9144 = vld [vmem:[%s9134 + $0x48] sm:$0xff]
        %v9145 = vld [vmem:[%s9134 + $0x50] sm:$0xff]
        %v9146 = vld [vmem:[%s9134 + $0x58] sm:$0xff]
        %v9147 = vld [vmem:[%s9134 + $0x60] sm:$0xff]
        %v9148 = vld [vmem:[%s9134 + $0x68] sm:$0xff]
        %v9149 = vld [vmem:[%s9134 + $0x70] sm:$0xff]
        %v9150 = vld [vmem:[%s9134 + $0x78] sm:$0xff]
        %v9151 = vrot.slane %v8148, 3
        %9153 = vmatprep.subr.mxu0 0.0
        %9154 = vmatpush1.msra.mxu0 %v9150
        %9155 = vmatprep.subr.mxu0 0.0
        %9156 = vmatpush1.msra.mxu0 %v9149
        %9157 = vmatprep.subr.mxu0 0.0
        %9158 = vmatpush1.msra.mxu0 %v9148
        %9159 = vmatprep.subr.mxu0 0.0
        %9160 = vmatpush1.msra.mxu0 %v9147
        %9161 = vmatprep.subr.mxu0 0.0
        %9162 = vmatpush1.msra.mxu0 %v9146
        %9163 = vmatprep.subr.mxu0 0.0
        %9164 = vmatpush1.msra.mxu0 %v9145
        %9165 = vmatprep.subr.mxu0 0.0
        %9166 = vmatpush1.msra.mxu0 %v9144
        %9167 = vmatprep.subr.mxu0 0.0
        %9168 = vmatpush1.msra.mxu0 %v9143
        %9169 = vmatprep.subr.mxu0 0.0
        %9170 = vmatpush1.msra.mxu0 %v9142
        %9171 = vmatprep.subr.mxu0 0.0
        %9172 = vmatpush1.msra.mxu0 %v9141
        %9173 = vmatprep.subr.mxu0 0.0
        %9174 = vmatpush1.msra.mxu0 %v9140
        %9175 = vmatprep.subr.mxu0 0.0
        %9176 = vmatpush1.msra.mxu0 %v9139
        %9177 = vmatprep.subr.mxu0 0.0
        %9178 = vmatpush1.msra.mxu0 %v9138
        %9179 = vmatprep.subr.mxu0 0.0
        %9180 = vmatpush1.msra.mxu0 %v9137
        %9181 = vmatprep.subr.mxu0 0.0
        %9182 = vmatpush1.msra.mxu0 %v9136
        %9183 = vmatprep.subr.mxu0 0.0
        %9184 = vmatpush1.msra.mxu0 %v9135
        %9185 = vmatprep.subr.mxu0 0.0
        %9186 = vmatpush2.msra.mxu0 0.0
        %9187 = vmatprep.subr.mxu0 0.0
        %9188 = vmatpush2.msra.mxu0 0.0
        %9189 = vmatprep.subr.mxu0 0.0
        %9190 = vmatpush2.msra.mxu0 0.0
        %9191 = vmatprep.subr.mxu0 0.0
        %9192 = vmatpush2.msra.mxu0 0.0
        %9193 = vmatprep.subr.mxu0 0.0
        %9194 = vmatpush2.msra.mxu0 0.0
        %9195 = vmatprep.subr.mxu0 0.0
        %9196 = vmatpush2.msra.mxu0 0.0
        %9197 = vmatprep.subr.mxu0 0.0
        %9198 = vmatpush2.msra.mxu0 0.0
        %9199 = vmatprep.subr.mxu0 0.0
        %9200 = vmatpush2.msra.mxu0 0.0
        %9201 = vmatprep.subr.mxu0 0.0
        %9202 = vmatpush2.msra.mxu0 0.0
        %9203 = vmatprep.subr.mxu0 0.0
        %9204 = vmatpush2.msra.mxu0 0.0
        %9205 = vmatprep.subr.mxu0 0.0
        %9206 = vmatpush2.msra.mxu0 0.0
        %9207 = vmatprep.subr.mxu0 0.0
        %9208 = vmatpush2.msra.mxu0 0.0
        %9209 = vmatprep.subr.mxu0 0.0
        %9210 = vmatpush2.msra.mxu0 0.0
        %9211 = vmatprep.subr.mxu0 0.0
        %9212 = vmatpush2.msra.mxu0 0.0
        %9213 = vmatprep.subr.mxu0 0.0
        %9214 = vmatpush2.msra.mxu0 0.0
        %9215 = vmatprep.subr.mxu0 0.0
        %9216 = vmatpush2.msra.mxu0 0.0
        %9217 = vmatprep.mubr.f32.mxu0 0.0
        %9218 = vmatmul.mubr.f32.gmra.mxu0 %v9151
        %v9219 = vpop.f32.mrf.mxu0
        %v9220 = vadd.f32 0.0, %v9219
        %v9221 = vpop.f32.mrf.mxu0
        %9222 = vdwg.mxu0
        %v9223 = vadd.f32 %v9133, %v9220
        %s9224 = scalar_lea.vmem %s5, 1536
        %v9225 = vld [vmem:[%s9224] sm:$0xff]
        %v9226 = vld [vmem:[%s9224 + $0x8] sm:$0xff]
        %v9227 = vld [vmem:[%s9224 + $0x10] sm:$0xff]
        %v9228 = vld [vmem:[%s9224 + $0x18] sm:$0xff]
        %v9229 = vld [vmem:[%s9224 + $0x20] sm:$0xff]
        %v9230 = vld [vmem:[%s9224 + $0x28] sm:$0xff]
        %v9231 = vld [vmem:[%s9224 + $0x30] sm:$0xff]
        %v9232 = vld [vmem:[%s9224 + $0x38] sm:$0xff]
        %v9233 = vld [vmem:[%s9224 + $0x40] sm:$0xff]
        %v9234 = vld [vmem:[%s9224 + $0x48] sm:$0xff]
        %v9235 = vld [vmem:[%s9224 + $0x50] sm:$0xff]
        %v9236 = vld [vmem:[%s9224 + $0x58] sm:$0xff]
        %v9237 = vld [vmem:[%s9224 + $0x60] sm:$0xff]
        %v9238 = vld [vmem:[%s9224 + $0x68] sm:$0xff]
        %v9239 = vld [vmem:[%s9224 + $0x70] sm:$0xff]
        %v9240 = vld [vmem:[%s9224 + $0x78] sm:$0xff]
        %v9241 = vrot.slane %v8148, 4
        %9243 = vmatprep.subr.mxu0 0.0
        %9244 = vmatpush1.msra.mxu0 %v9240
        %9245 = vmatprep.subr.mxu0 0.0
        %9246 = vmatpush1.msra.mxu0 %v9239
        %9247 = vmatprep.subr.mxu0 0.0
        %9248 = vmatpush1.msra.mxu0 %v9238
        %9249 = vmatprep.subr.mxu0 0.0
        %9250 = vmatpush1.msra.mxu0 %v9237
        %9251 = vmatprep.subr.mxu0 0.0
        %9252 = vmatpush1.msra.mxu0 %v9236
        %9253 = vmatprep.subr.mxu0 0.0
        %9254 = vmatpush1.msra.mxu0 %v9235
        %9255 = vmatprep.subr.mxu0 0.0
        %9256 = vmatpush1.msra.mxu0 %v9234
        %9257 = vmatprep.subr.mxu0 0.0
        %9258 = vmatpush1.msra.mxu0 %v9233
        %9259 = vmatprep.subr.mxu0 0.0
        %9260 = vmatpush1.msra.mxu0 %v9232
        %9261 = vmatprep.subr.mxu0 0.0
        %9262 = vmatpush1.msra.mxu0 %v9231
        %9263 = vmatprep.subr.mxu0 0.0
        %9264 = vmatpush1.msra.mxu0 %v9230
        %9265 = vmatprep.subr.mxu0 0.0
        %9266 = vmatpush1.msra.mxu0 %v9229
        %9267 = vmatprep.subr.mxu0 0.0
        %9268 = vmatpush1.msra.mxu0 %v9228
        %9269 = vmatprep.subr.mxu0 0.0
        %9270 = vmatpush1.msra.mxu0 %v9227
        %9271 = vmatprep.subr.mxu0 0.0
        %9272 = vmatpush1.msra.mxu0 %v9226
        %9273 = vmatprep.subr.mxu0 0.0
        %9274 = vmatpush1.msra.mxu0 %v9225
        %9275 = vmatprep.subr.mxu0 0.0
        %9276 = vmatpush2.msra.mxu0 0.0
        %9277 = vmatprep.subr.mxu0 0.0
        %9278 = vmatpush2.msra.mxu0 0.0
        %9279 = vmatprep.subr.mxu0 0.0
        %9280 = vmatpush2.msra.mxu0 0.0
        %9281 = vmatprep.subr.mxu0 0.0
        %9282 = vmatpush2.msra.mxu0 0.0
        %9283 = vmatprep.subr.mxu0 0.0
        %9284 = vmatpush2.msra.mxu0 0.0
        %9285 = vmatprep.subr.mxu0 0.0
        %9286 = vmatpush2.msra.mxu0 0.0
        %9287 = vmatprep.subr.mxu0 0.0
        %9288 = vmatpush2.msra.mxu0 0.0
        %9289 = vmatprep.subr.mxu0 0.0
        %9290 = vmatpush2.msra.mxu0 0.0
        %9291 = vmatprep.subr.mxu0 0.0
        %9292 = vmatpush2.msra.mxu0 0.0
        %9293 = vmatprep.subr.mxu0 0.0
        %9294 = vmatpush2.msra.mxu0 0.0
        %9295 = vmatprep.subr.mxu0 0.0
        %9296 = vmatpush2.msra.mxu0 0.0
        %9297 = vmatprep.subr.mxu0 0.0
        %9298 = vmatpush2.msra.mxu0 0.0
        %9299 = vmatprep.subr.mxu0 0.0
        %9300 = vmatpush2.msra.mxu0 0.0
        %9301 = vmatprep.subr.mxu0 0.0
        %9302 = vmatpush2.msra.mxu0 0.0
        %9303 = vmatprep.subr.mxu0 0.0
        %9304 = vmatpush2.msra.mxu0 0.0
        %9305 = vmatprep.subr.mxu0 0.0
        %9306 = vmatpush2.msra.mxu0 0.0
        %9307 = vmatprep.mubr.f32.mxu0 0.0
        %9308 = vmatmul.mubr.f32.gmra.mxu0 %v9241
        %v9309 = vpop.f32.mrf.mxu0
        %v9310 = vadd.f32 0.0, %v9309
        %v9311 = vpop.f32.mrf.mxu0
        %9312 = vdwg.mxu0
        %v9313 = vadd.f32 %v9223, %v9310
        %s9314 = scalar_lea.vmem %s5, 1664
        %v9315 = vld [vmem:[%s9314] sm:$0xff]
        %v9316 = vld [vmem:[%s9314 + $0x8] sm:$0xff]
        %v9317 = vld [vmem:[%s9314 + $0x10] sm:$0xff]
        %v9318 = vld [vmem:[%s9314 + $0x18] sm:$0xff]
        %v9319 = vld [vmem:[%s9314 + $0x20] sm:$0xff]
        %v9320 = vld [vmem:[%s9314 + $0x28] sm:$0xff]
        %v9321 = vld [vmem:[%s9314 + $0x30] sm:$0xff]
        %v9322 = vld [vmem:[%s9314 + $0x38] sm:$0xff]
        %v9323 = vld [vmem:[%s9314 + $0x40] sm:$0xff]
        %v9324 = vld [vmem:[%s9314 + $0x48] sm:$0xff]
        %v9325 = vld [vmem:[%s9314 + $0x50] sm:$0xff]
        %v9326 = vld [vmem:[%s9314 + $0x58] sm:$0xff]
        %v9327 = vld [vmem:[%s9314 + $0x60] sm:$0xff]
        %v9328 = vld [vmem:[%s9314 + $0x68] sm:$0xff]
        %v9329 = vld [vmem:[%s9314 + $0x70] sm:$0xff]
        %v9330 = vld [vmem:[%s9314 + $0x78] sm:$0xff]
        %v9331 = vrot.slane %v8148, 5
        %9333 = vmatprep.subr.mxu0 0.0
        %9334 = vmatpush1.msra.mxu0 %v9330
        %9335 = vmatprep.subr.mxu0 0.0
        %9336 = vmatpush1.msra.mxu0 %v9329
        %9337 = vmatprep.subr.mxu0 0.0
        %9338 = vmatpush1.msra.mxu0 %v9328
        %9339 = vmatprep.subr.mxu0 0.0
        %9340 = vmatpush1.msra.mxu0 %v9327
        %9341 = vmatprep.subr.mxu0 0.0
        %9342 = vmatpush1.msra.mxu0 %v9326
        %9343 = vmatprep.subr.mxu0 0.0
        %9344 = vmatpush1.msra.mxu0 %v9325
        %9345 = vmatprep.subr.mxu0 0.0
        %9346 = vmatpush1.msra.mxu0 %v9324
        %9347 = vmatprep.subr.mxu0 0.0
        %9348 = vmatpush1.msra.mxu0 %v9323
        %9349 = vmatprep.subr.mxu0 0.0
        %9350 = vmatpush1.msra.mxu0 %v9322
        %9351 = vmatprep.subr.mxu0 0.0
        %9352 = vmatpush1.msra.mxu0 %v9321
        %9353 = vmatprep.subr.mxu0 0.0
        %9354 = vmatpush1.msra.mxu0 %v9320
        %9355 = vmatprep.subr.mxu0 0.0
        %9356 = vmatpush1.msra.mxu0 %v9319
        %9357 = vmatprep.subr.mxu0 0.0
        %9358 = vmatpush1.msra.mxu0 %v9318
        %9359 = vmatprep.subr.mxu0 0.0
        %9360 = vmatpush1.msra.mxu0 %v9317
        %9361 = vmatprep.subr.mxu0 0.0
        %9362 = vmatpush1.msra.mxu0 %v9316
        %9363 = vmatprep.subr.mxu0 0.0
        %9364 = vmatpush1.msra.mxu0 %v9315
        %9365 = vmatprep.subr.mxu0 0.0
        %9366 = vmatpush2.msra.mxu0 0.0
        %9367 = vmatprep.subr.mxu0 0.0
        %9368 = vmatpush2.msra.mxu0 0.0
        %9369 = vmatprep.subr.mxu0 0.0
        %9370 = vmatpush2.msra.mxu0 0.0
        %9371 = vmatprep.subr.mxu0 0.0
        %9372 = vmatpush2.msra.mxu0 0.0
        %9373 = vmatprep.subr.mxu0 0.0
        %9374 = vmatpush2.msra.mxu0 0.0
        %9375 = vmatprep.subr.mxu0 0.0
        %9376 = vmatpush2.msra.mxu0 0.0
        %9377 = vmatprep.subr.mxu0 0.0
        %9378 = vmatpush2.msra.mxu0 0.0
        %9379 = vmatprep.subr.mxu0 0.0
        %9380 = vmatpush2.msra.mxu0 0.0
        %9381 = vmatprep.subr.mxu0 0.0
        %9382 = vmatpush2.msra.mxu0 0.0
        %9383 = vmatprep.subr.mxu0 0.0
        %9384 = vmatpush2.msra.mxu0 0.0
        %9385 = vmatprep.subr.mxu0 0.0
        %9386 = vmatpush2.msra.mxu0 0.0
        %9387 = vmatprep.subr.mxu0 0.0
        %9388 = vmatpush2.msra.mxu0 0.0
        %9389 = vmatprep.subr.mxu0 0.0
        %9390 = vmatpush2.msra.mxu0 0.0
        %9391 = vmatprep.subr.mxu0 0.0
        %9392 = vmatpush2.msra.mxu0 0.0
        %9393 = vmatprep.subr.mxu0 0.0
        %9394 = vmatpush2.msra.mxu0 0.0
        %9395 = vmatprep.subr.mxu0 0.0
        %9396 = vmatpush2.msra.mxu0 0.0
        %9397 = vmatprep.mubr.f32.mxu0 0.0
        %9398 = vmatmul.mubr.f32.gmra.mxu0 %v9331
        %v9399 = vpop.f32.mrf.mxu0
        %v9400 = vadd.f32 0.0, %v9399
        %v9401 = vpop.f32.mrf.mxu0
        %9402 = vdwg.mxu0
        %v9403 = vadd.f32 %v9313, %v9400
        %s9404 = scalar_lea.vmem %s5, 1792
        %v9405 = vld [vmem:[%s9404] sm:$0xff]
        %v9406 = vld [vmem:[%s9404 + $0x8] sm:$0xff]
        %v9407 = vld [vmem:[%s9404 + $0x10] sm:$0xff]
        %v9408 = vld [vmem:[%s9404 + $0x18] sm:$0xff]
        %v9409 = vld [vmem:[%s9404 + $0x20] sm:$0xff]
        %v9410 = vld [vmem:[%s9404 + $0x28] sm:$0xff]
        %v9411 = vld [vmem:[%s9404 + $0x30] sm:$0xff]
        %v9412 = vld [vmem:[%s9404 + $0x38] sm:$0xff]
        %v9413 = vld [vmem:[%s9404 + $0x40] sm:$0xff]
        %v9414 = vld [vmem:[%s9404 + $0x48] sm:$0xff]
        %v9415 = vld [vmem:[%s9404 + $0x50] sm:$0xff]
        %v9416 = vld [vmem:[%s9404 + $0x58] sm:$0xff]
        %v9417 = vld [vmem:[%s9404 + $0x60] sm:$0xff]
        %v9418 = vld [vmem:[%s9404 + $0x68] sm:$0xff]
        %v9419 = vld [vmem:[%s9404 + $0x70] sm:$0xff]
        %v9420 = vld [vmem:[%s9404 + $0x78] sm:$0xff]
        %v9421 = vrot.slane %v8148, 6
        %9423 = vmatprep.subr.mxu0 0.0
        %9424 = vmatpush1.msra.mxu0 %v9420
        %9425 = vmatprep.subr.mxu0 0.0
        %9426 = vmatpush1.msra.mxu0 %v9419
        %9427 = vmatprep.subr.mxu0 0.0
        %9428 = vmatpush1.msra.mxu0 %v9418
        %9429 = vmatprep.subr.mxu0 0.0
        %9430 = vmatpush1.msra.mxu0 %v9417
        %9431 = vmatprep.subr.mxu0 0.0
        %9432 = vmatpush1.msra.mxu0 %v9416
        %9433 = vmatprep.subr.mxu0 0.0
        %9434 = vmatpush1.msra.mxu0 %v9415
        %9435 = vmatprep.subr.mxu0 0.0
        %9436 = vmatpush1.msra.mxu0 %v9414
        %9437 = vmatprep.subr.mxu0 0.0
        %9438 = vmatpush1.msra.mxu0 %v9413
        %9439 = vmatprep.subr.mxu0 0.0
        %9440 = vmatpush1.msra.mxu0 %v9412
        %9441 = vmatprep.subr.mxu0 0.0
        %9442 = vmatpush1.msra.mxu0 %v9411
        %9443 = vmatprep.subr.mxu0 0.0
        %9444 = vmatpush1.msra.mxu0 %v9410
        %9445 = vmatprep.subr.mxu0 0.0
        %9446 = vmatpush1.msra.mxu0 %v9409
        %9447 = vmatprep.subr.mxu0 0.0
        %9448 = vmatpush1.msra.mxu0 %v9408
        %9449 = vmatprep.subr.mxu0 0.0
        %9450 = vmatpush1.msra.mxu0 %v9407
        %9451 = vmatprep.subr.mxu0 0.0
        %9452 = vmatpush1.msra.mxu0 %v9406
        %9453 = vmatprep.subr.mxu0 0.0
        %9454 = vmatpush1.msra.mxu0 %v9405
        %9455 = vmatprep.subr.mxu0 0.0
        %9456 = vmatpush2.msra.mxu0 0.0
        %9457 = vmatprep.subr.mxu0 0.0
        %9458 = vmatpush2.msra.mxu0 0.0
        %9459 = vmatprep.subr.mxu0 0.0
        %9460 = vmatpush2.msra.mxu0 0.0
        %9461 = vmatprep.subr.mxu0 0.0
        %9462 = vmatpush2.msra.mxu0 0.0
        %9463 = vmatprep.subr.mxu0 0.0
        %9464 = vmatpush2.msra.mxu0 0.0
        %9465 = vmatprep.subr.mxu0 0.0
        %9466 = vmatpush2.msra.mxu0 0.0
        %9467 = vmatprep.subr.mxu0 0.0
        %9468 = vmatpush2.msra.mxu0 0.0
        %9469 = vmatprep.subr.mxu0 0.0
        %9470 = vmatpush2.msra.mxu0 0.0
        %9471 = vmatprep.subr.mxu0 0.0
        %9472 = vmatpush2.msra.mxu0 0.0
        %9473 = vmatprep.subr.mxu0 0.0
        %9474 = vmatpush2.msra.mxu0 0.0
        %9475 = vmatprep.subr.mxu0 0.0
        %9476 = vmatpush2.msra.mxu0 0.0
        %9477 = vmatprep.subr.mxu0 0.0
        %9478 = vmatpush2.msra.mxu0 0.0
        %9479 = vmatprep.subr.mxu0 0.0
        %9480 = vmatpush2.msra.mxu0 0.0
        %9481 = vmatprep.subr.mxu0 0.0
        %9482 = vmatpush2.msra.mxu0 0.0
        %9483 = vmatprep.subr.mxu0 0.0
        %9484 = vmatpush2.msra.mxu0 0.0
        %9485 = vmatprep.subr.mxu0 0.0
        %9486 = vmatpush2.msra.mxu0 0.0
        %9487 = vmatprep.mubr.f32.mxu0 0.0
        %9488 = vmatmul.mubr.f32.gmra.mxu0 %v9421
        %v9489 = vpop.f32.mrf.mxu0
        %v9490 = vadd.f32 0.0, %v9489
        %v9491 = vpop.f32.mrf.mxu0
        %9492 = vdwg.mxu0
        %v9493 = vadd.f32 %v9403, %v9490
        %s9494 = scalar_lea.vmem %s5, 1920
        %v9495 = vld [vmem:[%s9494] sm:$0xff]
        %v9496 = vld [vmem:[%s9494 + $0x8] sm:$0xff]
        %v9497 = vld [vmem:[%s9494 + $0x10] sm:$0xff]
        %v9498 = vld [vmem:[%s9494 + $0x18] sm:$0xff]
        %v9499 = vld [vmem:[%s9494 + $0x20] sm:$0xff]
        %v9500 = vld [vmem:[%s9494 + $0x28] sm:$0xff]
        %v9501 = vld [vmem:[%s9494 + $0x30] sm:$0xff]
        %v9502 = vld [vmem:[%s9494 + $0x38] sm:$0xff]
        %v9503 = vld [vmem:[%s9494 + $0x40] sm:$0xff]
        %v9504 = vld [vmem:[%s9494 + $0x48] sm:$0xff]
        %v9505 = vld [vmem:[%s9494 + $0x50] sm:$0xff]
        %v9506 = vld [vmem:[%s9494 + $0x58] sm:$0xff]
        %v9507 = vld [vmem:[%s9494 + $0x60] sm:$0xff]
        %v9508 = vld [vmem:[%s9494 + $0x68] sm:$0xff]
        %v9509 = vld [vmem:[%s9494 + $0x70] sm:$0xff]
        %v9510 = vld [vmem:[%s9494 + $0x78] sm:$0xff]
        %v9511 = vrot.slane %v8148, 7
        %9513 = vmatprep.subr.mxu0 0.0
        %9514 = vmatpush1.msra.mxu0 %v9510
        %9515 = vmatprep.subr.mxu0 0.0
        %9516 = vmatpush1.msra.mxu0 %v9509
        %9517 = vmatprep.subr.mxu0 0.0
        %9518 = vmatpush1.msra.mxu0 %v9508
        %9519 = vmatprep.subr.mxu0 0.0
        %9520 = vmatpush1.msra.mxu0 %v9507
        %9521 = vmatprep.subr.mxu0 0.0
        %9522 = vmatpush1.msra.mxu0 %v9506
        %9523 = vmatprep.subr.mxu0 0.0
        %9524 = vmatpush1.msra.mxu0 %v9505
        %9525 = vmatprep.subr.mxu0 0.0
        %9526 = vmatpush1.msra.mxu0 %v9504
        %9527 = vmatprep.subr.mxu0 0.0
        %9528 = vmatpush1.msra.mxu0 %v9503
        %9529 = vmatprep.subr.mxu0 0.0
        %9530 = vmatpush1.msra.mxu0 %v9502
        %9531 = vmatprep.subr.mxu0 0.0
        %9532 = vmatpush1.msra.mxu0 %v9501
        %9533 = vmatprep.subr.mxu0 0.0
        %9534 = vmatpush1.msra.mxu0 %v9500
        %9535 = vmatprep.subr.mxu0 0.0
        %9536 = vmatpush1.msra.mxu0 %v9499
        %9537 = vmatprep.subr.mxu0 0.0
        %9538 = vmatpush1.msra.mxu0 %v9498
        %9539 = vmatprep.subr.mxu0 0.0
        %9540 = vmatpush1.msra.mxu0 %v9497
        %9541 = vmatprep.subr.mxu0 0.0
        %9542 = vmatpush1.msra.mxu0 %v9496
        %9543 = vmatprep.subr.mxu0 0.0
        %9544 = vmatpush1.msra.mxu0 %v9495
        %9545 = vmatprep.subr.mxu0 0.0
        %9546 = vmatpush2.msra.mxu0 0.0
        %9547 = vmatprep.subr.mxu0 0.0
        %9548 = vmatpush2.msra.mxu0 0.0
        %9549 = vmatprep.subr.mxu0 0.0
        %9550 = vmatpush2.msra.mxu0 0.0
        %9551 = vmatprep.subr.mxu0 0.0
        %9552 = vmatpush2.msra.mxu0 0.0
        %9553 = vmatprep.subr.mxu0 0.0
        %9554 = vmatpush2.msra.mxu0 0.0
        %9555 = vmatprep.subr.mxu0 0.0
        %9556 = vmatpush2.msra.mxu0 0.0
        %9557 = vmatprep.subr.mxu0 0.0
        %9558 = vmatpush2.msra.mxu0 0.0
        %9559 = vmatprep.subr.mxu0 0.0
        %9560 = vmatpush2.msra.mxu0 0.0
        %9561 = vmatprep.subr.mxu0 0.0
        %9562 = vmatpush2.msra.mxu0 0.0
        %9563 = vmatprep.subr.mxu0 0.0
        %9564 = vmatpush2.msra.mxu0 0.0
        %9565 = vmatprep.subr.mxu0 0.0
        %9566 = vmatpush2.msra.mxu0 0.0
        %9567 = vmatprep.subr.mxu0 0.0
        %9568 = vmatpush2.msra.mxu0 0.0
        %9569 = vmatprep.subr.mxu0 0.0
        %9570 = vmatpush2.msra.mxu0 0.0
        %9571 = vmatprep.subr.mxu0 0.0
        %9572 = vmatpush2.msra.mxu0 0.0
        %9573 = vmatprep.subr.mxu0 0.0
        %9574 = vmatpush2.msra.mxu0 0.0
        %9575 = vmatprep.subr.mxu0 0.0
        %9576 = vmatpush2.msra.mxu0 0.0
        %9577 = vmatprep.mubr.f32.mxu0 0.0
        %9578 = vmatmul.mubr.f32.gmra.mxu0 %v9511
        %v9579 = vpop.f32.mrf.mxu0
        %v9580 = vadd.f32 0.0, %v9579
        %v9581 = vpop.f32.mrf.mxu0
        %9582 = vdwg.mxu0
        %v9583 = vadd.f32 %v9493, %v9580
        %v9584 = vld [vmem:[%s6] sm:$0x1]
        %v9585 = vadd.f32 %v9583, %v9584
        %v9586 = vmax.f32 %v9585, 0.0
        %v9587 = vld [vmem:[%s7] sm:$0xff]
        %v9588 = vld [vmem:[%s7 + $0x8] sm:$0xff]
        %v9589 = vld [vmem:[%s7 + $0x10] sm:$0xff]
        %v9590 = vld [vmem:[%s7 + $0x18] sm:$0xff]
        %v9591 = vld [vmem:[%s7 + $0x20] sm:$0xff]
        %v9592 = vld [vmem:[%s7 + $0x28] sm:$0xff]
        %v9593 = vld [vmem:[%s7 + $0x30] sm:$0xff]
        %v9594 = vld [vmem:[%s7 + $0x38] sm:$0xff]
        %v9595 = vld [vmem:[%s7 + $0x40] sm:$0xff]
        %v9596 = vld [vmem:[%s7 + $0x48] sm:$0xff]
        %v9597 = vld [vmem:[%s7 + $0x50] sm:$0xff]
        %v9598 = vld [vmem:[%s7 + $0x58] sm:$0xff]
        %v9599 = vld [vmem:[%s7 + $0x60] sm:$0xff]
        %v9600 = vld [vmem:[%s7 + $0x68] sm:$0xff]
        %v9601 = vld [vmem:[%s7 + $0x70] sm:$0xff]
        %v9602 = vld [vmem:[%s8] sm:$0x1]
        %vm9603 = vcmask 982016
        %v9605 = vsel %vm9603, %v9586, 0
        %9607 = vmatprep.subr.mxu0 0.0
        %9608 = vmatpush1.msra.mxu0 0.0
        %9609 = vmatprep.subr.mxu0 0.0
        %9610 = vmatpush1.msra.mxu0 %v9601
        %9611 = vmatprep.subr.mxu0 0.0
        %9612 = vmatpush1.msra.mxu0 %v9600
        %9613 = vmatprep.subr.mxu0 0.0
        %9614 = vmatpush1.msra.mxu0 %v9599
        %9615 = vmatprep.subr.mxu0 0.0
        %9616 = vmatpush1.msra.mxu0 %v9598
        %9617 = vmatprep.subr.mxu0 0.0
        %9618 = vmatpush1.msra.mxu0 %v9597
        %9619 = vmatprep.subr.mxu0 0.0
        %9620 = vmatpush1.msra.mxu0 %v9596
        %9621 = vmatprep.subr.mxu0 0.0
        %9622 = vmatpush1.msra.mxu0 %v9595
        %9623 = vmatprep.subr.mxu0 0.0
        %9624 = vmatpush1.msra.mxu0 %v9594
        %9625 = vmatprep.subr.mxu0 0.0
        %9626 = vmatpush1.msra.mxu0 %v9593
        %9627 = vmatprep.subr.mxu0 0.0
        %9628 = vmatpush1.msra.mxu0 %v9592
        %9629 = vmatprep.subr.mxu0 0.0
        %9630 = vmatpush1.msra.mxu0 %v9591
        %9631 = vmatprep.subr.mxu0 0.0
        %9632 = vmatpush1.msra.mxu0 %v9590
        %9633 = vmatprep.subr.mxu0 0.0
        %9634 = vmatpush1.msra.mxu0 %v9589
        %9635 = vmatprep.subr.mxu0 0.0
        %9636 = vmatpush1.msra.mxu0 %v9588
        %9637 = vmatprep.subr.mxu0 0.0
        %9638 = vmatpush1.msra.mxu0 %v9587
        %9639 = vmatprep.subr.mxu0 0.0
        %9640 = vmatpush2.msra.mxu0 0.0
        %9641 = vmatprep.subr.mxu0 0.0
        %9642 = vmatpush2.msra.mxu0 0.0
        %9643 = vmatprep.subr.mxu0 0.0
        %9644 = vmatpush2.msra.mxu0 0.0
        %9645 = vmatprep.subr.mxu0 0.0
        %9646 = vmatpush2.msra.mxu0 0.0
        %9647 = vmatprep.subr.mxu0 0.0
        %9648 = vmatpush2.msra.mxu0 0.0
        %9649 = vmatprep.subr.mxu0 0.0
        %9650 = vmatpush2.msra.mxu0 0.0
        %9651 = vmatprep.subr.mxu0 0.0
        %9652 = vmatpush2.msra.mxu0 0.0
        %9653 = vmatprep.subr.mxu0 0.0
        %9654 = vmatpush2.msra.mxu0 0.0
        %9655 = vmatprep.subr.mxu0 0.0
        %9656 = vmatpush2.msra.mxu0 0.0
        %9657 = vmatprep.subr.mxu0 0.0
        %9658 = vmatpush2.msra.mxu0 0.0
        %9659 = vmatprep.subr.mxu0 0.0
        %9660 = vmatpush2.msra.mxu0 0.0
        %9661 = vmatprep.subr.mxu0 0.0
        %9662 = vmatpush2.msra.mxu0 0.0
        %9663 = vmatprep.subr.mxu0 0.0
        %9664 = vmatpush2.msra.mxu0 0.0
        %9665 = vmatprep.subr.mxu0 0.0
        %9666 = vmatpush2.msra.mxu0 0.0
        %9667 = vmatprep.subr.mxu0 0.0
        %9668 = vmatpush2.msra.mxu0 0.0
        %9669 = vmatprep.subr.mxu0 0.0
        %9670 = vmatpush2.msra.mxu0 0.0
        %9671 = vmatprep.mubr.f32.mxu0 0.0
        %9672 = vmatmul.mubr.f32.gmra.mxu0 %v9605
        %v9673 = vpop.f32.mrf.mxu0
        %v9674 = vadd.f32 %v9602, %v9673
        %v9675 = vpop.f32.mrf.mxu0
        %9676 = vdwg.mxu0
        %v9677 = vmax.f32 %v9674, 0.0
        %v9678 = vld [vmem:[%s9] sm:$0xff]
        %v9679 = vld [vmem:[%s9 + $0x8] sm:$0xff]
        %v9680 = vld [vmem:[%s9 + $0x10] sm:$0xff]
        %v9681 = vld [vmem:[%s9 + $0x18] sm:$0xff]
        %v9682 = vld [vmem:[%s9 + $0x20] sm:$0xff]
        %v9683 = vld [vmem:[%s9 + $0x28] sm:$0xff]
        %v9684 = vld [vmem:[%s9 + $0x30] sm:$0xff]
        %v9685 = vld [vmem:[%s9 + $0x38] sm:$0xff]
        %v9686 = vld [vmem:[%s9 + $0x40] sm:$0xff]
        %v9687 = vld [vmem:[%s9 + $0x48] sm:$0xff]
        %v9688 = vld [vmem:[%s9 + $0x50] sm:$0xf]
        %v9689 = vld [vmem:[%s10] sm:$0x1]
        %vm9690 = vcmask 687104
        %v9692 = vsel %vm9690, %v9677, 0
        %vm9694 = vcmask 1043456
        %v9696 = vsel %vm9694, %v9688, 0
        %9698 = vmatprep.subr.mxu0 0.0
        %9699 = vmatpush1.msra.mxu0 0.0
        %9700 = vmatprep.subr.mxu0 0.0
        %9701 = vmatpush1.msra.mxu0 0.0
        %9702 = vmatprep.subr.mxu0 0.0
        %9703 = vmatpush1.msra.mxu0 0.0
        %9704 = vmatprep.subr.mxu0 0.0
        %9705 = vmatpush1.msra.mxu0 0.0
        %9706 = vmatprep.subr.mxu0 0.0
        %9707 = vmatpush1.msra.mxu0 0.0
        %9708 = vmatprep.subr.mxu0 0.0
        %9709 = vmatpush1.msra.mxu0 %v9696
        %9710 = vmatprep.subr.mxu0 0.0
        %9711 = vmatpush1.msra.mxu0 %v9687
        %9712 = vmatprep.subr.mxu0 0.0
        %9713 = vmatpush1.msra.mxu0 %v9686
        %9714 = vmatprep.subr.mxu0 0.0
        %9715 = vmatpush1.msra.mxu0 %v9685
        %9716 = vmatprep.subr.mxu0 0.0
        %9717 = vmatpush1.msra.mxu0 %v9684
        %9718 = vmatprep.subr.mxu0 0.0
        %9719 = vmatpush1.msra.mxu0 %v9683
        %9720 = vmatprep.subr.mxu0 0.0
        %9721 = vmatpush1.msra.mxu0 %v9682
        %9722 = vmatprep.subr.mxu0 0.0
        %9723 = vmatpush1.msra.mxu0 %v9681
        %9724 = vmatprep.subr.mxu0 0.0
        %9725 = vmatpush1.msra.mxu0 %v9680
        %9726 = vmatprep.subr.mxu0 0.0
        %9727 = vmatpush1.msra.mxu0 %v9679
        %9728 = vmatprep.subr.mxu0 0.0
        %9729 = vmatpush1.msra.mxu0 %v9678
        %9730 = vmatprep.subr.mxu0 0.0
        %9731 = vmatpush2.msra.mxu0 0.0
        %9732 = vmatprep.subr.mxu0 0.0
        %9733 = vmatpush2.msra.mxu0 0.0
        %9734 = vmatprep.subr.mxu0 0.0
        %9735 = vmatpush2.msra.mxu0 0.0
        %9736 = vmatprep.subr.mxu0 0.0
        %9737 = vmatpush2.msra.mxu0 0.0
        %9738 = vmatprep.subr.mxu0 0.0
        %9739 = vmatpush2.msra.mxu0 0.0
        %9740 = vmatprep.subr.mxu0 0.0
        %9741 = vmatpush2.msra.mxu0 0.0
        %9742 = vmatprep.subr.mxu0 0.0
        %9743 = vmatpush2.msra.mxu0 0.0
        %9744 = vmatprep.subr.mxu0 0.0
        %9745 = vmatpush2.msra.mxu0 0.0
        %9746 = vmatprep.subr.mxu0 0.0
        %9747 = vmatpush2.msra.mxu0 0.0
        %9748 = vmatprep.subr.mxu0 0.0
        %9749 = vmatpush2.msra.mxu0 0.0
        %9750 = vmatprep.subr.mxu0 0.0
        %9751 = vmatpush2.msra.mxu0 0.0
        %9752 = vmatprep.subr.mxu0 0.0
        %9753 = vmatpush2.msra.mxu0 0.0
        %9754 = vmatprep.subr.mxu0 0.0
        %9755 = vmatpush2.msra.mxu0 0.0
        %9756 = vmatprep.subr.mxu0 0.0
        %9757 = vmatpush2.msra.mxu0 0.0
        %9758 = vmatprep.subr.mxu0 0.0
        %9759 = vmatpush2.msra.mxu0 0.0
        %9760 = vmatprep.subr.mxu0 0.0
        %9761 = vmatpush2.msra.mxu0 0.0
        %9762 = vmatprep.mubr.f32.mxu0 0.0
        %9763 = vmatmul.mubr.f32.gmra.mxu0 %v9692
        %v9764 = vpop.f32.mrf.mxu0
        %v9765 = vadd.f32 %v9689, %v9764
        %v9766 = vpop.f32.mrf.mxu0
        %9767 = vdwg.mxu0
        %9768 = vst [vmem:[%s378] sm:$0x1] %v9765
        %s9769 = sand.u32 %s269, 1
        %s9770 = scalar_lea.sflag [#allocation3], %s9769
        %s9771 = sand.u32 %s269, 1
        %s9772 = scalar_lea.vmem [#allocation2], %s9771
        // Predicated region
        $region65: #{net_forward.1} parent=63 // pred_check
          %p9773 = pneg %p279
        $region66: #{net_forward.1} parent=63 // pred_check_branch
          %9775 = sbr.rel (%p9773) target = $region68
        $region67: #{net_forward.1} parent=63 // pred_region
          %s9777 = ssub.s32 16, 16
          %9778 = vsyncadd %s9770, %s9777
          %s9779 = smul.addr %s25, 16
          %s9780 = scalar_lea.hbm %s11, %s9779
          %s9782 = sshll.u32 %s9772, 4
          %s9783 = int_to_ptr.vmem [resolvable:$true] %s9782
          %9785 = dma.vmem_to_hbm [thread:$0]  %s9783, 16, %s9780, %s9770
        $region68: #{net_forward.1} parent=63 // pred_fallthru
          _
      $region64: #{net_forward.1} parent=5 // pred_fallthru
        _
      %p9786 = scmp.le.s32.totalorder 2, %s20
      // Predicated region
      $region69: #{net_forward.1} parent=5 // pred_check
        %p9787 = pneg %p9786
      $region70: #{net_forward.1} parent=5 // pred_check_branch
        %9789 = sbr.rel (%p9787) target = $region72
      $region71: #{net_forward.1} parent=5 // pred_region
        %s9790 = ssub.s32 %s20, 2
        // Predicated region
        $region73: #{net_forward.1} parent=71 // pred_check
          %p9791 = pneg %p285
        $region74: #{net_forward.1} parent=71 // pred_check_branch
          %9793 = sbr.rel (%p9791) target = $region76
        $region75: #{net_forward.1} parent=71 // pred_region
          %s9794 = sand.u32 %s270, 1
          %s9795 = scalar_lea.sflag [#allocation3], %s9794
          %s9796 = sand.u32 %s270, 1
          %s9797 = scalar_lea.vmem [#allocation2], %s9796
          %9798 = dma.done %s9795, 16
        $region76: #{net_forward.1} parent=71 // pred_fallthru
          _
      $region72: #{net_forward.1} parent=5 // pred_fallthru
        _
    $region6: #{net_forward.1} parent=1 // loop_footer
      %s24 = sadd.s32 1, %s20
    $region7: #{net_forward.1} parent=1 // loop_footer_branch
      %19 = sbr.rel target = $region3
    $region8: #{net_forward.1} parent=1 // loop_exit
      _
    %9799 = vsyncpa [#allocation3], 1
    %s9800 = scalar_lea.sflag [#allocation3], 1
    %9801 = vsyncpa %s9800, 1

</llo_original>
